<compile_context>
chip_gen: v7x
topology: tpu7x:2x2x1
jax: 0.10.0
libtpu: 0.0.40
codegen_flags: <defaults>
</compile_context>

<pallas_src>
import numpy as np
import jax
import jax.numpy as jnp
from jax import lax
from jax.experimental import pallas as pl
from jax.experimental.pallas import tpu as pltpu


def _round_up(x, m):
    return (x + m - 1) // m * m


def _make_ffb_kernel(*, has_downsample, H, W, cin, cout, cact, TH, OFF):
    """Builds the fused FeatureFusionBlock kernel (static structure per config)."""
    Wp = W + 2
    Np = (H + 2) * Wp               # flat size of the spatially padded image
    CL = TH * Wp                    # flat rows handled per chunk
    n_chunks = H // TH
    rows_total = Np + 2 * OFF
    top_rows = OFF + Wp             # slack + padded row 0
    bot_start = OFF + (H + 1) * Wp  # padded row H+1 + slack

    def kernel(x_ref, mask_ref, *args):
        if has_downsample:
            (w11, b11, w12, b12, wds, bds,
             w21, b21, w22, b22, o_ref, A, B, C) = args
        else:
            (w11, b11, w12, b12,
             w21, b21, w22, b22, o_ref, A, B, C) = args
            wds = bds = None

        # The spatial top/bottom padding rows are never written by the chunk stores;
        # zero them every grid step (scratch persists across steps and across megacore
        # shards, so a program_id==0 guard would be unsafe on a "parallel" axis).
        zero_top = jnp.zeros((top_rows, cact), jnp.float32)
        zero_bot = jnp.zeros((rows_total - bot_start, cact), jnp.float32)
        for buf in (A, B, C):
            buf[0:top_rows, :] = zero_top
            buf[bot_start:rows_total, :] = zero_bot

        # Stage the spatially padded, flattened input into channels [0:cin) of A.
        A[pl.ds(OFF, Np), :cin] = x_ref[...].astype(jnp.float32)

        mask = mask_ref[...]        # (CL, 1): 1.0 on real columns, 0.0 on halo columns

        def tap_accum(src, w_ref, k, base, relu_taps):
            # 9 taps as CONTIGUOUS flat slices; the accumulator stays in registers
            # for the whole chunk (no VMEM read-modify-write).
            acc = None
            for kh in range(3):                   # static unroll over taps
                for kw in range(3):
                    start = base + (kh - 1) * Wp + (kw - 1)
                    win = src[pl.ds(start, CL), :k]
                    if relu_taps:                 # relu(x) taps == taps of relu(x)
                        win = jnp.maximum(win, 0.0)
                    t = jnp.dot(win, w_ref[kh, kw],
                                preferred_element_type=jnp.float32)
                    acc = t if acc is None else acc + t
            return acc

        def chunk_base(ci):
            return OFF + (ci * TH + 1) * Wp

        # ---- ResBlock 1 : r = conv2(relu(conv1(relu(x0)))) ; x1 = skip + r ----
        def p1(ci, c):              # conv1(relu(x0)) -> stage relu(.) into B
            base = chunk_base(ci)
            r = tap_accum(A, w11, cin, base, True) + b11[...]
            B[pl.ds(base, CL), :cout] = jnp.maximum(r, 0.0) * mask
            return c
        lax.fori_loop(0, n_chunks, p1, 0)

        def p2(ci, c):              # conv2(.) + skip -> stage x1 into C
            base = chunk_base(ci)
            r = tap_accum(B, w12, cout, base, False) + b12[...]
            if has_downsample:
                skip = tap_accum(A, wds, cin, base, False) + bds[...]
            else:                   # indim == outdim: identity skip
                skip = A[pl.ds(base, CL), :cin]
            C[pl.ds(base, CL), :cout] = (skip + r) * mask
            return c
        lax.fori_loop(0, n_chunks, p2, 0)

        # ---- ResBlock 2 (indim == outdim -> no downsample) ----
        def p3(ci, c):              # conv1(relu(x1)) -> stage relu(.) into A (A is free now)
            base = chunk_base(ci)
            r = tap_accum(C, w21, cout, base, True) + b21[...]
            A[pl.ds(base, CL), :cout] = jnp.maximum(r, 0.0) * mask
            return c
        lax.fori_loop(0, n_chunks, p3, 0)

        def p4(ci, c):              # conv2(.) + x1 -> output (flat padded coords, cout ch)
            base = chunk_base(ci)
            r = tap_accum(A, w22, cout, base, False) + b22[...]
            x2 = C[pl.ds(base, CL), :cout] + r
            o_ref[pl.ds(base - OFF, CL), :] = x2
            return c
        lax.fori_loop(0, n_chunks, p4, 0)

    return kernel


def feature_fusion_forward(value_key, key_f16, params):
    """Pallas equivalent of FeatureFusionBlock.forward.

    value_key, key_f16 : NCHW float32 arrays (same N, H, W).
    params             : dict of PyTorch-layout conv weights (OIHW) and biases.
    """
    N, c1, H, W = value_key.shape
    c2 = key_f16.shape[1]
    cin = c1 + c2
    cout = params["b1_c1_w"].shape[0]
    cact = max(cin, cout)
    has_downsample = cin != cout
    Hp, Wp = H + 2, W + 2
    Np = Hp * Wp
    OFF = 8                                     # sublane-aligned slack before padded row 0

    # Chunk height: largest divisor of H whose flat chunk (TH*Wp rows of f32) keeps the
    # 9-tap accumulator comfortably inside the vreg file.
    cands = [d for d in range(1, H + 1) if H % d == 0 and d * Wp <= 128]
    TH = max(cands) if cands else 1
    CL = TH * Wp

    # Boundary glue at the real cin channels: NCHW->NHWC, concat, 1px spatial zero pad,
    # flatten the padded image.  (No 128-channel HBM slabs, no padded weights.)
    x = jnp.concatenate([jnp.transpose(value_key, (0, 2, 3, 1)),
                         jnp.transpose(key_f16, (0, 2, 3, 1))], axis=-1)
    x = jnp.pad(x, ((0, 0), (1, 1), (1, 1), (0, 0)))
    x = x.reshape(N, Np, cin).astype(jnp.float32)

    # Halo-column mask for one flat chunk (1.0 on real columns, 0.0 on the left/right
    # padding columns); the row padding is handled in-kernel.
    col = np.arange(CL) % Wp
    mask = jnp.asarray(((col >= 1) & (col <= W)).reshape(CL, 1).astype(np.float32))

    def prep_w(w):      # OIHW -> (KH, KW, Cin, Cout), true channel sizes
        return jnp.transpose(w, (2, 3, 1, 0)).astype(jnp.float32)

    def prep_b(b):
        return b.reshape(1, -1).astype(jnp.float32)

    conv_names = ["b1_c1", "b1_c2"]
    if has_downsample:
        conv_names.append("b1_ds")
    conv_names += ["b2_c1", "b2_c2"]

    operands = [x, mask]
    in_specs = [pl.BlockSpec((None, Np, cin), lambda n: (n, 0, 0)),
                pl.BlockSpec((CL, 1), lambda n: (0, 0))]
    for name in conv_names:
        w = prep_w(params[name + "_w"])
        b = prep_b(params[name + "_b"])
        operands += [w, b]
        in_specs += [pl.BlockSpec(w.shape, lambda n: (0, 0, 0, 0)),
                     pl.BlockSpec(b.shape, lambda n: (0, 0))]

    scratch = [pltpu.VMEM((Np + 2 * OFF, cact), jnp.float32) for _ in range(3)]

    # Explicit VMEM budget: double-buffered I/O blocks + weights + scratch (with
    # lane/sublane padding), plus slack for compiler temporaries.
    def padded_bytes(shape, elt=4):
        s = list(shape)
        s[-1] = _round_up(s[-1], 128)
        if len(s) >= 2:
            s[-2] = _round_up(s[-2], 8)
        n = 1
        for d in s:
            n *= d
        return n * elt

    vmem_bytes = (2 * padded_bytes((Np, cin)) + 2 * padded_bytes((CL, 1))
                  + 2 * padded_bytes((Np, cout))
                  + sum(2 * padded_bytes(op.shape) for op in operands[2:])
                  + 3 * padded_bytes((Np + 2 * OFF, cact)))
    vmem_limit = int(min(1.5 * vmem_bytes + (16 << 20), 100 << 20))

    grid_spec = pltpu.PrefetchScalarGridSpec(
        num_scalar_prefetch=0,
        grid=(N,),
        in_specs=in_specs,
        out_specs=pl.BlockSpec((None, Np, cout), lambda n: (n, 0, 0)),
        scratch_shapes=scratch,
    )

    out_flat = pl.pallas_call(
        _make_ffb_kernel(has_downsample=has_downsample, H=H, W=W, cin=cin,
                         cout=cout, cact=cact, TH=TH, OFF=OFF),
        out_shape=jax.ShapeDtypeStruct((N, Np, cout), jnp.float32),
        grid_spec=grid_spec,
        compiler_params=pltpu.CompilerParams(
            dimension_semantics=("parallel",),
            vmem_limit_bytes=vmem_limit),
    )(*operands)

    # Flat padded output -> valid pixels, back to NCHW.
    out = out_flat.reshape(N, Hp, Wp, cout)[:, 1:H + 1, 1:W + 1, :]
    return jnp.transpose(out, (0, 3, 1, 2)).astype(value_key.dtype)


if __name__ == "__main__":
    # FeatureFusionBlock(in_channel=8, out_channel=16) on small inputs:
    # value_key (2,4,16,16) + key_f16 (2,4,16,16) -> concat channels = 8.
    N, C1, C2, H, W = 2, 4, 4, 16, 16
    in_channel, out_channel = C1 + C2, 16

    key = jax.random.PRNGKey(0)
    keys = jax.random.split(key, 12)

    value_key = jax.random.normal(keys[0], (N, C1, H, W), dtype=jnp.float32)
    key_f16 = jax.random.normal(keys[1], (N, C2, H, W), dtype=jnp.float32)

    def init_conv(kw_key, kb_key, ci, co):
        # PyTorch-like uniform fan-in init (deterministic, synthetic).
        fan_in = ci * 9
        bound = 1.0 / (fan_in ** 0.5)
        w = jax.random.uniform(kw_key, (co, ci, 3, 3),
                               minval=-bound, maxval=bound, dtype=jnp.float32)
        b = jax.random.uniform(kb_key, (co,),
                               minval=-bound, maxval=bound, dtype=jnp.float32)
        return w, b

    params = {}
    layer_specs = [("b1_c1", in_channel, out_channel),
                   ("b1_c2", out_channel, out_channel),
                   ("b1_ds", in_channel, out_channel),
                   ("b2_c1", out_channel, out_channel),
                   ("b2_c2", out_channel, out_channel)]
    for i, (name, ci, co) in enumerate(layer_specs):
        w, b = init_conv(keys[2 + 2 * i], keys[3 + 2 * i], ci, co)
        params[name + "_w"] = w
        params[name + "_b"] = b

    out = feature_fusion_forward(value_key, key_f16, params)
    out = jax.block_until_ready(out)

    # ---- reference: pure XLA, mirrors the PyTorch module exactly ----
    def conv_ref(x, w, b):
        return lax.conv_general_dilated(
            x, w, window_strides=(1, 1), padding=((1, 1), (1, 1)),
            dimension_numbers=("NCHW", "OIHW", "NCHW"),
            precision=lax.Precision.HIGHEST,
        ) + b[None, :, None, None]

    def resblock_ref(x, p, prefix, downsample):
        r = conv_ref(jax.nn.relu(x), p[prefix + "_c1_w"], p[prefix + "_c1_b"])
        r = conv_ref(jax.nn.relu(r), p[prefix + "_c2_w"], p[prefix + "_c2_b"])
        if downsample:
            x = conv_ref(x, p[prefix + "_ds_w"], p[prefix + "_ds_b"])
        return x + r

    xr = jnp.concatenate([value_key, key_f16], axis=1)
    xr = resblock_ref(xr, params, "b1", in_channel != out_channel)
    ref = resblock_ref(xr, params, "b2", False)

    assert out.shape == (N, out_channel, H, W)
    assert jnp.allclose(out, ref, atol=1e-3, rtol=1e-3), "mismatch vs reference"

    print("KERNEL_OK")
</pallas_src>

<mosaic_0001>
module attributes {stable_mosaic.version = 11 : i64} {
  func.func @kernel(%arg0: i32, %arg1: memref<1x324x8xf32, #tpu.memory_space<vmem>>, %arg2: memref<72x1xf32, #tpu.memory_space<vmem>>, %arg3: memref<3x3x8x16xf32, #tpu.memory_space<vmem>>, %arg4: memref<1x16xf32, #tpu.memory_space<vmem>>, %arg5: memref<3x3x16x16xf32, #tpu.memory_space<vmem>>, %arg6: memref<1x16xf32, #tpu.memory_space<vmem>>, %arg7: memref<3x3x8x16xf32, #tpu.memory_space<vmem>>, %arg8: memref<1x16xf32, #tpu.memory_space<vmem>>, %arg9: memref<3x3x16x16xf32, #tpu.memory_space<vmem>>, %arg10: memref<1x16xf32, #tpu.memory_space<vmem>>, %arg11: memref<3x3x16x16xf32, #tpu.memory_space<vmem>>, %arg12: memref<1x16xf32, #tpu.memory_space<vmem>>, %arg13: memref<1x324x16xf32, #tpu.memory_space<vmem>>, %arg14: memref<340x16xf32, #tpu.memory_space<vmem>>, %arg15: memref<340x16xf32, #tpu.memory_space<vmem>>, %arg16: memref<340x16xf32, #tpu.memory_space<vmem>>) attributes {dimension_semantics = [#tpu.dimension_semantics<parallel>], iteration_bounds = array<i64: 2>, scalar_prefetch = 0 : i64, scratch_operands = 3 : i64, tpu.core_type = #tpu.core_type<tc>, window_params = [{transform_indices = @transform_0, window_bounds = array<i64: 1, 324, 8>}, {pipeline_mode = #tpu.pipeline_mode<synchronous>, transform_indices = @transform_1, window_bounds = array<i64: 72, 1>}, {pipeline_mode = #tpu.pipeline_mode<synchronous>, transform_indices = @transform_2, window_bounds = array<i64: 3, 3, 8, 16>}, {pipeline_mode = #tpu.pipeline_mode<synchronous>, transform_indices = @transform_3, window_bounds = array<i64: 1, 16>}, {pipeline_mode = #tpu.pipeline_mode<synchronous>, transform_indices = @transform_4, window_bounds = array<i64: 3, 3, 16, 16>}, {pipeline_mode = #tpu.pipeline_mode<synchronous>, transform_indices = @transform_5, window_bounds = array<i64: 1, 16>}, {pipeline_mode = #tpu.pipeline_mode<synchronous>, transform_indices = @transform_6, window_bounds = array<i64: 3, 3, 8, 16>}, {pipeline_mode = #tpu.pipeline_mode<synchronous>, transform_indices = @transform_7, window_bounds = array<i64: 1, 16>}, {pipeline_mode = #tpu.pipeline_mode<synchronous>, transform_indices = @transform_8, window_bounds = array<i64: 3, 3, 16, 16>}, {pipeline_mode = #tpu.pipeline_mode<synchronous>, transform_indices = @transform_9, window_bounds = array<i64: 1, 16>}, {pipeline_mode = #tpu.pipeline_mode<synchronous>, transform_indices = @transform_10, window_bounds = array<i64: 3, 3, 16, 16>}, {pipeline_mode = #tpu.pipeline_mode<synchronous>, transform_indices = @transform_11, window_bounds = array<i64: 1, 16>}, {transform_indices = @transform_12, window_bounds = array<i64: 1, 324, 16>}]} {
    %cst = arith.constant 0.000000e+00 : f32
    %0 = vector.broadcast %cst : f32 to vector<26x16xf32>
    %cst_0 = arith.constant 0.000000e+00 : f32
    %1 = vector.broadcast %cst_0 : f32 to vector<26x16xf32>
    %c0 = arith.constant 0 : index
    %c0_1 = arith.constant 0 : index
    %2 = vector.load %arg14[%c0, %c0_1] : memref<340x16xf32, #tpu.memory_space<vmem>>, vector<26x16xf32>
    tpu.vector_store %arg14[%c0, %c0_1], %0 {strides = array<i32>} : memref<340x16xf32, #tpu.memory_space<vmem>>, vector<26x16xf32>,
    %c314 = arith.constant 314 : index
    %c0_2 = arith.constant 0 : index
    %3 = vector.load %arg14[%c314, %c0_2] : memref<340x16xf32, #tpu.memory_space<vmem>>, vector<26x16xf32>
    tpu.vector_store %arg14[%c314, %c0_2], %1 {strides = array<i32>} : memref<340x16xf32, #tpu.memory_space<vmem>>, vector<26x16xf32>,
    %c0_3 = arith.constant 0 : index
    %c0_4 = arith.constant 0 : index
    %4 = vector.load %arg15[%c0_3, %c0_4] : memref<340x16xf32, #tpu.memory_space<vmem>>, vector<26x16xf32>
    tpu.vector_store %arg15[%c0_3, %c0_4], %0 {strides = array<i32>} : memref<340x16xf32, #tpu.memory_space<vmem>>, vector<26x16xf32>,
    %c314_5 = arith.constant 314 : index
    %c0_6 = arith.constant 0 : index
    %5 = vector.load %arg15[%c314_5, %c0_6] : memref<340x16xf32, #tpu.memory_space<vmem>>, vector<26x16xf32>
    tpu.vector_store %arg15[%c314_5, %c0_6], %1 {strides = array<i32>} : memref<340x16xf32, #tpu.memory_space<vmem>>, vector<26x16xf32>,
    %c0_7 = arith.constant 0 : index
    %c0_8 = arith.constant 0 : index
    %6 = vector.load %arg16[%c0_7, %c0_8] : memref<340x16xf32, #tpu.memory_space<vmem>>, vector<26x16xf32>
    tpu.vector_store %arg16[%c0_7, %c0_8], %0 {strides = array<i32>} : memref<340x16xf32, #tpu.memory_space<vmem>>, vector<26x16xf32>,
    %c314_9 = arith.constant 314 : index
    %c0_10 = arith.constant 0 : index
    %7 = vector.load %arg16[%c314_9, %c0_10] : memref<340x16xf32, #tpu.memory_space<vmem>>, vector<26x16xf32>
    tpu.vector_store %arg16[%c314_9, %c0_10], %1 {strides = array<i32>} : memref<340x16xf32, #tpu.memory_space<vmem>>, vector<26x16xf32>,
    %c0_11 = arith.constant 0 : index
    %c0_12 = arith.constant 0 : index
    %c0_13 = arith.constant 0 : index
    %8 = vector.load %arg1[%c0_11, %c0_12, %c0_13] : memref<1x324x8xf32, #tpu.memory_space<vmem>>, vector<1x324x8xf32>
    %9 = vector.shape_cast %8 : vector<1x324x8xf32> to vector<324x8xf32>
    %c8 = arith.constant 8 : index
    %c0_14 = arith.constant 0 : index
    %10 = vector.load %arg14[%c8, %c0_14] : memref<340x16xf32, #tpu.memory_space<vmem>>, vector<324x8xf32>
    tpu.vector_store %arg14[%c8, %c0_14], %9 {strides = array<i32>} : memref<340x16xf32, #tpu.memory_space<vmem>>, vector<324x8xf32>,
    %c0_15 = arith.constant 0 : index
    %c0_16 = arith.constant 0 : index
    %11 = vector.load %arg2[%c0_15, %c0_16] : memref<72x1xf32, #tpu.memory_space<vmem>>, vector<72x1xf32>
    %c0_i32 = arith.constant 0 : i32
    %c4_i32 = arith.constant 4 : i32
    %12 = arith.addi %c0_i32, %c4_i32 : i32
    %c1_i32 = arith.constant 1 : i32
    scf.for %arg17 = %c0_i32 to %12 step %c1_i32  : i32 {
      %c4_i32_30 = arith.constant 4 : i32
      %16 = arith.muli %arg17, %c4_i32_30 : i32
      %c1_i32_31 = arith.constant 1 : i32
      %17 = arith.addi %16, %c1_i32_31 : i32
      %c18_i32 = arith.constant 18 : i32
      %18 = arith.muli %17, %c18_i32 : i32
      %c8_i32 = arith.constant 8 : i32
      %19 = arith.addi %c8_i32, %18 : i32
      %c-18_i32 = arith.constant -18 : i32
      %20 = arith.addi %19, %c-18_i32 : i32
      %c-1_i32 = arith.constant -1 : i32
      %21 = arith.addi %20, %c-1_i32 : i32
      %22 = arith.index_cast %21 : i32 to index
      %c0_32 = arith.constant 0 : index
      %23 = vector.load %arg14[%22, %c0_32] : memref<340x16xf32, #tpu.memory_space<vmem>>, vector<72x8xf32>
      %cst_33 = arith.constant 0.000000e+00 : f32
      %24 = vector.broadcast %cst_33 : f32 to vector<72x8xf32>
      %25 = arith.maximumf %23, %24 : vector<72x8xf32>
      %c0_34 = arith.constant 0 : index
      %c0_35 = arith.constant 0 : index
      %c0_36 = arith.constant 0 : index
      %c0_37 = arith.constant 0 : index
      %26 = vector.load %arg3[%c0_34, %c0_35, %c0_36, %c0_37] : memref<3x3x8x16xf32, #tpu.memory_space<vmem>>, vector<1x1x8x16xf32>
      %27 = vector.shape_cast %26 : vector<1x1x8x16xf32> to vector<8x16xf32>
      %cst_38 = arith.constant dense<0.000000e+00> : vector<72x16xf32>
      %28 = tpu.matmul %25, %27, %cst_38 {dimension_numbers = #tpu.dot_dimension_numbers<[1], [0], [0], [1], [0, 0, 1, 1], [], []>} : vector<72x8xf32>, vector<8x16xf32>, vector<72x16xf32> -> vector<72x16xf32>
      %c-18_i32_39 = arith.constant -18 : i32
      %29 = arith.addi %19, %c-18_i32_39 : i32
      %c0_i32_40 = arith.constant 0 : i32
      %30 = arith.addi %29, %c0_i32_40 : i32
      %31 = arith.index_cast %30 : i32 to index
      %c0_41 = arith.constant 0 : index
      %32 = vector.load %arg14[%31, %c0_41] : memref<340x16xf32, #tpu.memory_space<vmem>>, vector<72x8xf32>
      %cst_42 = arith.constant 0.000000e+00 : f32
      %33 = vector.broadcast %cst_42 : f32 to vector<72x8xf32>
      %34 = arith.maximumf %32, %33 : vector<72x8xf32>
      %c0_43 = arith.constant 0 : index
      %c1 = arith.constant 1 : index
      %c0_44 = arith.constant 0 : index
      %c0_45 = arith.constant 0 : index
      %35 = vector.load %arg3[%c0_43, %c1, %c0_44, %c0_45] : memref<3x3x8x16xf32, #tpu.memory_space<vmem>>, vector<1x1x8x16xf32>
      %36 = vector.shape_cast %35 : vector<1x1x8x16xf32> to vector<8x16xf32>
      %cst_46 = arith.constant dense<0.000000e+00> : vector<72x16xf32>
      %37 = tpu.matmul %34, %36, %cst_46 {dimension_numbers = #tpu.dot_dimension_numbers<[1], [0], [0], [1], [0, 0, 1, 1], [], []>} : vector<72x8xf32>, vector<8x16xf32>, vector<72x16xf32> -> vector<72x16xf32>
      %38 = arith.addf %28, %37 : vector<72x16xf32>
      %c-18_i32_47 = arith.constant -18 : i32
      %39 = arith.addi %19, %c-18_i32_47 : i32
      %c1_i32_48 = arith.constant 1 : i32
      %40 = arith.addi %39, %c1_i32_48 : i32
      %41 = arith.index_cast %40 : i32 to index
      %c0_49 = arith.constant 0 : index
      %42 = vector.load %arg14[%41, %c0_49] : memref<340x16xf32, #tpu.memory_space<vmem>>, vector<72x8xf32>
      %cst_50 = arith.constant 0.000000e+00 : f32
      %43 = vector.broadcast %cst_50 : f32 to vector<72x8xf32>
      %44 = arith.maximumf %42, %43 : vector<72x8xf32>
      %c0_51 = arith.constant 0 : index
      %c2 = arith.constant 2 : index
      %c0_52 = arith.constant 0 : index
      %c0_53 = arith.constant 0 : index
      %45 = vector.load %arg3[%c0_51, %c2, %c0_52, %c0_53] : memref<3x3x8x16xf32, #tpu.memory_space<vmem>>, vector<1x1x8x16xf32>
      %46 = vector.shape_cast %45 : vector<1x1x8x16xf32> to vector<8x16xf32>
      %cst_54 = arith.constant dense<0.000000e+00> : vector<72x16xf32>
      %47 = tpu.matmul %44, %46, %cst_54 {dimension_numbers = #tpu.dot_dimension_numbers<[1], [0], [0], [1], [0, 0, 1, 1], [], []>} : vector<72x8xf32>, vector<8x16xf32>, vector<72x16xf32> -> vector<72x16xf32>
      %48 = arith.addf %38, %47 : vector<72x16xf32>
      %c0_i32_55 = arith.constant 0 : i32
      %49 = arith.addi %19, %c0_i32_55 : i32
      %c-1_i32_56 = arith.constant -1 : i32
      %50 = arith.addi %49, %c-1_i32_56 : i32
      %51 = arith.index_cast %50 : i32 to index
      %c0_57 = arith.constant 0 : index
      %52 = vector.load %arg14[%51, %c0_57] : memref<340x16xf32, #tpu.memory_space<vmem>>, vector<72x8xf32>
      %cst_58 = arith.constant 0.000000e+00 : f32
      %53 = vector.broadcast %cst_58 : f32 to vector<72x8xf32>
      %54 = arith.maximumf %52, %53 : vector<72x8xf32>
      %c1_59 = arith.constant 1 : index
      %c0_60 = arith.constant 0 : index
      %c0_61 = arith.constant 0 : index
      %c0_62 = arith.constant 0 : index
      %55 = vector.load %arg3[%c1_59, %c0_60, %c0_61, %c0_62] : memref<3x3x8x16xf32, #tpu.memory_space<vmem>>, vector<1x1x8x16xf32>
      %56 = vector.shape_cast %55 : vector<1x1x8x16xf32> to vector<8x16xf32>
      %cst_63 = arith.constant dense<0.000000e+00> : vector<72x16xf32>
      %57 = tpu.matmul %54, %56, %cst_63 {dimension_numbers = #tpu.dot_dimension_numbers<[1], [0], [0], [1], [0, 0, 1, 1], [], []>} : vector<72x8xf32>, vector<8x16xf32>, vector<72x16xf32> -> vector<72x16xf32>
      %58 = arith.addf %48, %57 : vector<72x16xf32>
      %c0_i32_64 = arith.constant 0 : i32
      %59 = arith.addi %19, %c0_i32_64 : i32
      %c0_i32_65 = arith.constant 0 : i32
      %60 = arith.addi %59, %c0_i32_65 : i32
      %61 = arith.index_cast %60 : i32 to index
      %c0_66 = arith.constant 0 : index
      %62 = vector.load %arg14[%61, %c0_66] : memref<340x16xf32, #tpu.memory_space<vmem>>, vector<72x8xf32>
      %cst_67 = arith.constant 0.000000e+00 : f32
      %63 = vector.broadcast %cst_67 : f32 to vector<72x8xf32>
      %64 = arith.maximumf %62, %63 : vector<72x8xf32>
      %c1_68 = arith.constant 1 : index
      %c1_69 = arith.constant 1 : index
      %c0_70 = arith.constant 0 : index
      %c0_71 = arith.constant 0 : index
      %65 = vector.load %arg3[%c1_68, %c1_69, %c0_70, %c0_71] : memref<3x3x8x16xf32, #tpu.memory_space<vmem>>, vector<1x1x8x16xf32>
      %66 = vector.shape_cast %65 : vector<1x1x8x16xf32> to vector<8x16xf32>
      %cst_72 = arith.constant dense<0.000000e+00> : vector<72x16xf32>
      %67 = tpu.matmul %64, %66, %cst_72 {dimension_numbers = #tpu.dot_dimension_numbers<[1], [0], [0], [1], [0, 0, 1, 1], [], []>} : vector<72x8xf32>, vector<8x16xf32>, vector<72x16xf32> -> vector<72x16xf32>
      %68 = arith.addf %58, %67 : vector<72x16xf32>
      %c0_i32_73 = arith.constant 0 : i32
      %69 = arith.addi %19, %c0_i32_73 : i32
      %c1_i32_74 = arith.constant 1 : i32
      %70 = arith.addi %69, %c1_i32_74 : i32
      %71 = arith.index_cast %70 : i32 to index
      %c0_75 = arith.constant 0 : index
      %72 = vector.load %arg14[%71, %c0_75] : memref<340x16xf32, #tpu.memory_space<vmem>>, vector<72x8xf32>
      %cst_76 = arith.constant 0.000000e+00 : f32
      %73 = vector.broadcast %cst_76 : f32 to vector<72x8xf32>
      %74 = arith.maximumf %72, %73 : vector<72x8xf32>
      %c1_77 = arith.constant 1 : index
      %c2_78 = arith.constant 2 : index
      %c0_79 = arith.constant 0 : index
      %c0_80 = arith.constant 0 : index
      %75 = vector.load %arg3[%c1_77, %c2_78, %c0_79, %c0_80] : memref<3x3x8x16xf32, #tpu.memory_space<vmem>>, vector<1x1x8x16xf32>
      %76 = vector.shape_cast %75 : vector<1x1x8x16xf32> to vector<8x16xf32>
      %cst_81 = arith.constant dense<0.000000e+00> : vector<72x16xf32>
      %77 = tpu.matmul %74, %76, %cst_81 {dimension_numbers = #tpu.dot_dimension_numbers<[1], [0], [0], [1], [0, 0, 1, 1], [], []>} : vector<72x8xf32>, vector<8x16xf32>, vector<72x16xf32> -> vector<72x16xf32>
      %78 = arith.addf %68, %77 : vector<72x16xf32>
      %c18_i32_82 = arith.constant 18 : i32
      %79 = arith.addi %19, %c18_i32_82 : i32
      %c-1_i32_83 = arith.constant -1 : i32
      %80 = arith.addi %79, %c-1_i32_83 : i32
      %81 = arith.index_cast %80 : i32 to index
      %c0_84 = arith.constant 0 : index
      %82 = vector.load %arg14[%81, %c0_84] : memref<340x16xf32, #tpu.memory_space<vmem>>, vector<72x8xf32>
      %cst_85 = arith.constant 0.000000e+00 : f32
      %83 = vector.broadcast %cst_85 : f32 to vector<72x8xf32>
      %84 = arith.maximumf %82, %83 : vector<72x8xf32>
      %c2_86 = arith.constant 2 : index
      %c0_87 = arith.constant 0 : index
      %c0_88 = arith.constant 0 : index
      %c0_89 = arith.constant 0 : index
      %85 = vector.load %arg3[%c2_86, %c0_87, %c0_88, %c0_89] : memref<3x3x8x16xf32, #tpu.memory_space<vmem>>, vector<1x1x8x16xf32>
      %86 = vector.shape_cast %85 : vector<1x1x8x16xf32> to vector<8x16xf32>
      %cst_90 = arith.constant dense<0.000000e+00> : vector<72x16xf32>
      %87 = tpu.matmul %84, %86, %cst_90 {dimension_numbers = #tpu.dot_dimension_numbers<[1], [0], [0], [1], [0, 0, 1, 1], [], []>} : vector<72x8xf32>, vector<8x16xf32>, vector<72x16xf32> -> vector<72x16xf32>
      %88 = arith.addf %78, %87 : vector<72x16xf32>
      %c18_i32_91 = arith.constant 18 : i32
      %89 = arith.addi %19, %c18_i32_91 : i32
      %c0_i32_92 = arith.constant 0 : i32
      %90 = arith.addi %89, %c0_i32_92 : i32
      %91 = arith.index_cast %90 : i32 to index
      %c0_93 = arith.constant 0 : index
      %92 = vector.load %arg14[%91, %c0_93] : memref<340x16xf32, #tpu.memory_space<vmem>>, vector<72x8xf32>
      %cst_94 = arith.constant 0.000000e+00 : f32
      %93 = vector.broadcast %cst_94 : f32 to vector<72x8xf32>
      %94 = arith.maximumf %92, %93 : vector<72x8xf32>
      %c2_95 = arith.constant 2 : index
      %c1_96 = arith.constant 1 : index
      %c0_97 = arith.constant 0 : index
      %c0_98 = arith.constant 0 : index
      %95 = vector.load %arg3[%c2_95, %c1_96, %c0_97, %c0_98] : memref<3x3x8x16xf32, #tpu.memory_space<vmem>>, vector<1x1x8x16xf32>
      %96 = vector.shape_cast %95 : vector<1x1x8x16xf32> to vector<8x16xf32>
      %cst_99 = arith.constant dense<0.000000e+00> : vector<72x16xf32>
      %97 = tpu.matmul %94, %96, %cst_99 {dimension_numbers = #tpu.dot_dimension_numbers<[1], [0], [0], [1], [0, 0, 1, 1], [], []>} : vector<72x8xf32>, vector<8x16xf32>, vector<72x16xf32> -> vector<72x16xf32>
      %98 = arith.addf %88, %97 : vector<72x16xf32>
      %c18_i32_100 = arith.constant 18 : i32
      %99 = arith.addi %19, %c18_i32_100 : i32
      %c1_i32_101 = arith.constant 1 : i32
      %100 = arith.addi %99, %c1_i32_101 : i32
      %101 = arith.index_cast %100 : i32 to index
      %c0_102 = arith.constant 0 : index
      %102 = vector.load %arg14[%101, %c0_102] : memref<340x16xf32, #tpu.memory_space<vmem>>, vector<72x8xf32>
      %cst_103 = arith.constant 0.000000e+00 : f32
      %103 = vector.broadcast %cst_103 : f32 to vector<72x8xf32>
      %104 = arith.maximumf %102, %103 : vector<72x8xf32>
      %c2_104 = arith.constant 2 : index
      %c2_105 = arith.constant 2 : index
      %c0_106 = arith.constant 0 : index
      %c0_107 = arith.constant 0 : index
      %105 = vector.load %arg3[%c2_104, %c2_105, %c0_106, %c0_107] : memref<3x3x8x16xf32, #tpu.memory_space<vmem>>, vector<1x1x8x16xf32>
      %106 = vector.shape_cast %105 : vector<1x1x8x16xf32> to vector<8x16xf32>
      %cst_108 = arith.constant dense<0.000000e+00> : vector<72x16xf32>
      %107 = tpu.matmul %104, %106, %cst_108 {dimension_numbers = #tpu.dot_dimension_numbers<[1], [0], [0], [1], [0, 0, 1, 1], [], []>} : vector<72x8xf32>, vector<8x16xf32>, vector<72x16xf32> -> vector<72x16xf32>
      %108 = arith.addf %98, %107 : vector<72x16xf32>
      %c0_109 = arith.constant 0 : index
      %c0_110 = arith.constant 0 : index
      %109 = vector.load %arg4[%c0_109, %c0_110] : memref<1x16xf32, #tpu.memory_space<vmem>>, vector<1x16xf32>
      %110 = vector.broadcast %109 : vector<1x16xf32> to vector<72x16xf32>
      %111 = arith.addf %108, %110 : vector<72x16xf32>
      %cst_111 = arith.constant 0.000000e+00 : f32
      %112 = vector.broadcast %cst_111 : f32 to vector<72x16xf32>
      %113 = arith.maximumf %111, %112 : vector<72x16xf32>
      %114 = vector.broadcast %11 : vector<72x1xf32> to vector<72x16xf32>
      %115 = arith.mulf %113, %114 : vector<72x16xf32>
      %116 = arith.index_cast %19 : i32 to index
      %c0_112 = arith.constant 0 : index
      %117 = vector.load %arg15[%116, %c0_112] : memref<340x16xf32, #tpu.memory_space<vmem>>, vector<72x16xf32>
      tpu.vector_store %arg15[%116, %c0_112], %115 {strides = array<i32>} : memref<340x16xf32, #tpu.memory_space<vmem>>, vector<72x16xf32>,
    }
    %c4_i32_17 = arith.constant 4 : i32
    %c0_i32_18 = arith.constant 0 : i32
    %c4_i32_19 = arith.constant 4 : i32
    %13 = arith.addi %c0_i32_18, %c4_i32_19 : i32
    %c1_i32_20 = arith.constant 1 : i32
    scf.for %arg17 = %c0_i32_18 to %13 step %c1_i32_20  : i32 {
      %c4_i32_30 = arith.constant 4 : i32
      %16 = arith.muli %arg17, %c4_i32_30 : i32
      %c1_i32_31 = arith.constant 1 : i32
      %17 = arith.addi %16, %c1_i32_31 : i32
      %c18_i32 = arith.constant 18 : i32
      %18 = arith.muli %17, %c18_i32 : i32
      %c8_i32 = arith.constant 8 : i32
      %19 = arith.addi %c8_i32, %18 : i32
      %c-18_i32 = arith.constant -18 : i32
      %20 = arith.addi %19, %c-18_i32 : i32
      %c-1_i32 = arith.constant -1 : i32
      %21 = arith.addi %20, %c-1_i32 : i32
      %22 = arith.index_cast %21 : i32 to index
      %c0_32 = arith.constant 0 : index
      %23 = vector.load %arg15[%22, %c0_32] : memref<340x16xf32, #tpu.memory_space<vmem>>, vector<72x16xf32>
      %c0_33 = arith.constant 0 : index
      %c0_34 = arith.constant 0 : index
      %c0_35 = arith.constant 0 : index
      %c0_36 = arith.constant 0 : index
      %24 = vector.load %arg5[%c0_33, %c0_34, %c0_35, %c0_36] : memref<3x3x16x16xf32, #tpu.memory_space<vmem>>, vector<1x1x16x16xf32>
      %25 = vector.shape_cast %24 : vector<1x1x16x16xf32> to vector<16x16xf32>
      %cst_37 = arith.constant dense<0.000000e+00> : vector<72x16xf32>
      %26 = tpu.matmul %23, %25, %cst_37 {dimension_numbers = #tpu.dot_dimension_numbers<[1], [0], [0], [1], [0, 0, 1, 1], [], []>} : vector<72x16xf32>, vector<16x16xf32>, vector<72x16xf32> -> vector<72x16xf32>
      %c-18_i32_38 = arith.constant -18 : i32
      %27 = arith.addi %19, %c-18_i32_38 : i32
      %c0_i32_39 = arith.constant 0 : i32
      %28 = arith.addi %27, %c0_i32_39 : i32
      %29 = arith.index_cast %28 : i32 to index
      %c0_40 = arith.constant 0 : index
      %30 = vector.load %arg15[%29, %c0_40] : memref<340x16xf32, #tpu.memory_space<vmem>>, vector<72x16xf32>
      %c0_41 = arith.constant 0 : index
      %c1 = arith.constant 1 : index
      %c0_42 = arith.constant 0 : index
      %c0_43 = arith.constant 0 : index
      %31 = vector.load %arg5[%c0_41, %c1, %c0_42, %c0_43] : memref<3x3x16x16xf32, #tpu.memory_space<vmem>>, vector<1x1x16x16xf32>
      %32 = vector.shape_cast %31 : vector<1x1x16x16xf32> to vector<16x16xf32>
      %cst_44 = arith.constant dense<0.000000e+00> : vector<72x16xf32>
      %33 = tpu.matmul %30, %32, %cst_44 {dimension_numbers = #tpu.dot_dimension_numbers<[1], [0], [0], [1], [0, 0, 1, 1], [], []>} : vector<72x16xf32>, vector<16x16xf32>, vector<72x16xf32> -> vector<72x16xf32>
      %34 = arith.addf %26, %33 : vector<72x16xf32>
      %c-18_i32_45 = arith.constant -18 : i32
      %35 = arith.addi %19, %c-18_i32_45 : i32
      %c1_i32_46 = arith.constant 1 : i32
      %36 = arith.addi %35, %c1_i32_46 : i32
      %37 = arith.index_cast %36 : i32 to index
      %c0_47 = arith.constant 0 : index
      %38 = vector.load %arg15[%37, %c0_47] : memref<340x16xf32, #tpu.memory_space<vmem>>, vector<72x16xf32>
      %c0_48 = arith.constant 0 : index
      %c2 = arith.constant 2 : index
      %c0_49 = arith.constant 0 : index
      %c0_50 = arith.constant 0 : index
      %39 = vector.load %arg5[%c0_48, %c2, %c0_49, %c0_50] : memref<3x3x16x16xf32, #tpu.memory_space<vmem>>, vector<1x1x16x16xf32>
      %40 = vector.shape_cast %39 : vector<1x1x16x16xf32> to vector<16x16xf32>
      %cst_51 = arith.constant dense<0.000000e+00> : vector<72x16xf32>
      %41 = tpu.matmul %38, %40, %cst_51 {dimension_numbers = #tpu.dot_dimension_numbers<[1], [0], [0], [1], [0, 0, 1, 1], [], []>} : vector<72x16xf32>, vector<16x16xf32>, vector<72x16xf32> -> vector<72x16xf32>
      %42 = arith.addf %34, %41 : vector<72x16xf32>
      %c0_i32_52 = arith.constant 0 : i32
      %43 = arith.addi %19, %c0_i32_52 : i32
      %c-1_i32_53 = arith.constant -1 : i32
      %44 = arith.addi %43, %c-1_i32_53 : i32
      %45 = arith.index_cast %44 : i32 to index
      %c0_54 = arith.constant 0 : index
      %46 = vector.load %arg15[%45, %c0_54] : memref<340x16xf32, #tpu.memory_space<vmem>>, vector<72x16xf32>
      %c1_55 = arith.constant 1 : index
      %c0_56 = arith.constant 0 : index
      %c0_57 = arith.constant 0 : index
      %c0_58 = arith.constant 0 : index
      %47 = vector.load %arg5[%c1_55, %c0_56, %c0_57, %c0_58] : memref<3x3x16x16xf32, #tpu.memory_space<vmem>>, vector<1x1x16x16xf32>
      %48 = vector.shape_cast %47 : vector<1x1x16x16xf32> to vector<16x16xf32>
      %cst_59 = arith.constant dense<0.000000e+00> : vector<72x16xf32>
      %49 = tpu.matmul %46, %48, %cst_59 {dimension_numbers = #tpu.dot_dimension_numbers<[1], [0], [0], [1], [0, 0, 1, 1], [], []>} : vector<72x16xf32>, vector<16x16xf32>, vector<72x16xf32> -> vector<72x16xf32>
      %50 = arith.addf %42, %49 : vector<72x16xf32>
      %c0_i32_60 = arith.constant 0 : i32
      %51 = arith.addi %19, %c0_i32_60 : i32
      %c0_i32_61 = arith.constant 0 : i32
      %52 = arith.addi %51, %c0_i32_61 : i32
      %53 = arith.index_cast %52 : i32 to index
      %c0_62 = arith.constant 0 : index
      %54 = vector.load %arg15[%53, %c0_62] : memref<340x16xf32, #tpu.memory_space<vmem>>, vector<72x16xf32>
      %c1_63 = arith.constant 1 : index
      %c1_64 = arith.constant 1 : index
      %c0_65 = arith.constant 0 : index
      %c0_66 = arith.constant 0 : index
      %55 = vector.load %arg5[%c1_63, %c1_64, %c0_65, %c0_66] : memref<3x3x16x16xf32, #tpu.memory_space<vmem>>, vector<1x1x16x16xf32>
      %56 = vector.shape_cast %55 : vector<1x1x16x16xf32> to vector<16x16xf32>
      %cst_67 = arith.constant dense<0.000000e+00> : vector<72x16xf32>
      %57 = tpu.matmul %54, %56, %cst_67 {dimension_numbers = #tpu.dot_dimension_numbers<[1], [0], [0], [1], [0, 0, 1, 1], [], []>} : vector<72x16xf32>, vector<16x16xf32>, vector<72x16xf32> -> vector<72x16xf32>
      %58 = arith.addf %50, %57 : vector<72x16xf32>
      %c0_i32_68 = arith.constant 0 : i32
      %59 = arith.addi %19, %c0_i32_68 : i32
      %c1_i32_69 = arith.constant 1 : i32
      %60 = arith.addi %59, %c1_i32_69 : i32
      %61 = arith.index_cast %60 : i32 to index
      %c0_70 = arith.constant 0 : index
      %62 = vector.load %arg15[%61, %c0_70] : memref<340x16xf32, #tpu.memory_space<vmem>>, vector<72x16xf32>
      %c1_71 = arith.constant 1 : index
      %c2_72 = arith.constant 2 : index
      %c0_73 = arith.constant 0 : index
      %c0_74 = arith.constant 0 : index
      %63 = vector.load %arg5[%c1_71, %c2_72, %c0_73, %c0_74] : memref<3x3x16x16xf32, #tpu.memory_space<vmem>>, vector<1x1x16x16xf32>
      %64 = vector.shape_cast %63 : vector<1x1x16x16xf32> to vector<16x16xf32>
      %cst_75 = arith.constant dense<0.000000e+00> : vector<72x16xf32>
      %65 = tpu.matmul %62, %64, %cst_75 {dimension_numbers = #tpu.dot_dimension_numbers<[1], [0], [0], [1], [0, 0, 1, 1], [], []>} : vector<72x16xf32>, vector<16x16xf32>, vector<72x16xf32> -> vector<72x16xf32>
      %66 = arith.addf %58, %65 : vector<72x16xf32>
      %c18_i32_76 = arith.constant 18 : i32
      %67 = arith.addi %19, %c18_i32_76 : i32
      %c-1_i32_77 = arith.constant -1 : i32
      %68 = arith.addi %67, %c-1_i32_77 : i32
      %69 = arith.index_cast %68 : i32 to index
      %c0_78 = arith.constant 0 : index
      %70 = vector.load %arg15[%69, %c0_78] : memref<340x16xf32, #tpu.memory_space<vmem>>, vector<72x16xf32>
      %c2_79 = arith.constant 2 : index
      %c0_80 = arith.constant 0 : index
      %c0_81 = arith.constant 0 : index
      %c0_82 = arith.constant 0 : index
      %71 = vector.load %arg5[%c2_79, %c0_80, %c0_81, %c0_82] : memref<3x3x16x16xf32, #tpu.memory_space<vmem>>, vector<1x1x16x16xf32>
      %72 = vector.shape_cast %71 : vector<1x1x16x16xf32> to vector<16x16xf32>
      %cst_83 = arith.constant dense<0.000000e+00> : vector<72x16xf32>
      %73 = tpu.matmul %70, %72, %cst_83 {dimension_numbers = #tpu.dot_dimension_numbers<[1], [0], [0], [1], [0, 0, 1, 1], [], []>} : vector<72x16xf32>, vector<16x16xf32>, vector<72x16xf32> -> vector<72x16xf32>
      %74 = arith.addf %66, %73 : vector<72x16xf32>
      %c18_i32_84 = arith.constant 18 : i32
      %75 = arith.addi %19, %c18_i32_84 : i32
      %c0_i32_85 = arith.constant 0 : i32
      %76 = arith.addi %75, %c0_i32_85 : i32
      %77 = arith.index_cast %76 : i32 to index
      %c0_86 = arith.constant 0 : index
      %78 = vector.load %arg15[%77, %c0_86] : memref<340x16xf32, #tpu.memory_space<vmem>>, vector<72x16xf32>
      %c2_87 = arith.constant 2 : index
      %c1_88 = arith.constant 1 : index
      %c0_89 = arith.constant 0 : index
      %c0_90 = arith.constant 0 : index
      %79 = vector.load %arg5[%c2_87, %c1_88, %c0_89, %c0_90] : memref<3x3x16x16xf32, #tpu.memory_space<vmem>>, vector<1x1x16x16xf32>
      %80 = vector.shape_cast %79 : vector<1x1x16x16xf32> to vector<16x16xf32>
      %cst_91 = arith.constant dense<0.000000e+00> : vector<72x16xf32>
      %81 = tpu.matmul %78, %80, %cst_91 {dimension_numbers = #tpu.dot_dimension_numbers<[1], [0], [0], [1], [0, 0, 1, 1], [], []>} : vector<72x16xf32>, vector<16x16xf32>, vector<72x16xf32> -> vector<72x16xf32>
      %82 = arith.addf %74, %81 : vector<72x16xf32>
      %c18_i32_92 = arith.constant 18 : i32
      %83 = arith.addi %19, %c18_i32_92 : i32
      %c1_i32_93 = arith.constant 1 : i32
      %84 = arith.addi %83, %c1_i32_93 : i32
      %85 = arith.index_cast %84 : i32 to index
      %c0_94 = arith.constant 0 : index
      %86 = vector.load %arg15[%85, %c0_94] : memref<340x16xf32, #tpu.memory_space<vmem>>, vector<72x16xf32>
      %c2_95 = arith.constant 2 : index
      %c2_96 = arith.constant 2 : index
      %c0_97 = arith.constant 0 : index
      %c0_98 = arith.constant 0 : index
      %87 = vector.load %arg5[%c2_95, %c2_96, %c0_97, %c0_98] : memref<3x3x16x16xf32, #tpu.memory_space<vmem>>, vector<1x1x16x16xf32>
      %88 = vector.shape_cast %87 : vector<1x1x16x16xf32> to vector<16x16xf32>
      %cst_99 = arith.constant dense<0.000000e+00> : vector<72x16xf32>
      %89 = tpu.matmul %86, %88, %cst_99 {dimension_numbers = #tpu.dot_dimension_numbers<[1], [0], [0], [1], [0, 0, 1, 1], [], []>} : vector<72x16xf32>, vector<16x16xf32>, vector<72x16xf32> -> vector<72x16xf32>
      %90 = arith.addf %82, %89 : vector<72x16xf32>
      %c0_100 = arith.constant 0 : index
      %c0_101 = arith.constant 0 : index
      %91 = vector.load %arg6[%c0_100, %c0_101] : memref<1x16xf32, #tpu.memory_space<vmem>>, vector<1x16xf32>
      %92 = vector.broadcast %91 : vector<1x16xf32> to vector<72x16xf32>
      %93 = arith.addf %90, %92 : vector<72x16xf32>
      %c-18_i32_102 = arith.constant -18 : i32
      %94 = arith.addi %19, %c-18_i32_102 : i32
      %c-1_i32_103 = arith.constant -1 : i32
      %95 = arith.addi %94, %c-1_i32_103 : i32
      %96 = arith.index_cast %95 : i32 to index
      %c0_104 = arith.constant 0 : index
      %97 = vector.load %arg14[%96, %c0_104] : memref<340x16xf32, #tpu.memory_space<vmem>>, vector<72x8xf32>
      %c0_105 = arith.constant 0 : index
      %c0_106 = arith.constant 0 : index
      %c0_107 = arith.constant 0 : index
      %c0_108 = arith.constant 0 : index
      %98 = vector.load %arg7[%c0_105, %c0_106, %c0_107, %c0_108] : memref<3x3x8x16xf32, #tpu.memory_space<vmem>>, vector<1x1x8x16xf32>
      %99 = vector.shape_cast %98 : vector<1x1x8x16xf32> to vector<8x16xf32>
      %cst_109 = arith.constant dense<0.000000e+00> : vector<72x16xf32>
      %100 = tpu.matmul %97, %99, %cst_109 {dimension_numbers = #tpu.dot_dimension_numbers<[1], [0], [0], [1], [0, 0, 1, 1], [], []>} : vector<72x8xf32>, vector<8x16xf32>, vector<72x16xf32> -> vector<72x16xf32>
      %c-18_i32_110 = arith.constant -18 : i32
      %101 = arith.addi %19, %c-18_i32_110 : i32
      %c0_i32_111 = arith.constant 0 : i32
      %102 = arith.addi %101, %c0_i32_111 : i32
      %103 = arith.index_cast %102 : i32 to index
      %c0_112 = arith.constant 0 : index
      %104 = vector.load %arg14[%103, %c0_112] : memref<340x16xf32, #tpu.memory_space<vmem>>, vector<72x8xf32>
      %c0_113 = arith.constant 0 : index
      %c1_114 = arith.constant 1 : index
      %c0_115 = arith.constant 0 : index
      %c0_116 = arith.constant 0 : index
      %105 = vector.load %arg7[%c0_113, %c1_114, %c0_115, %c0_116] : memref<3x3x8x16xf32, #tpu.memory_space<vmem>>, vector<1x1x8x16xf32>
      %106 = vector.shape_cast %105 : vector<1x1x8x16xf32> to vector<8x16xf32>
      %cst_117 = arith.constant dense<0.000000e+00> : vector<72x16xf32>
      %107 = tpu.matmul %104, %106, %cst_117 {dimension_numbers = #tpu.dot_dimension_numbers<[1], [0], [0], [1], [0, 0, 1, 1], [], []>} : vector<72x8xf32>, vector<8x16xf32>, vector<72x16xf32> -> vector<72x16xf32>
      %108 = arith.addf %100, %107 : vector<72x16xf32>
      %c-18_i32_118 = arith.constant -18 : i32
      %109 = arith.addi %19, %c-18_i32_118 : i32
      %c1_i32_119 = arith.constant 1 : i32
      %110 = arith.addi %109, %c1_i32_119 : i32
      %111 = arith.index_cast %110 : i32 to index
      %c0_120 = arith.constant 0 : index
      %112 = vector.load %arg14[%111, %c0_120] : memref<340x16xf32, #tpu.memory_space<vmem>>, vector<72x8xf32>
      %c0_121 = arith.constant 0 : index
      %c2_122 = arith.constant 2 : index
      %c0_123 = arith.constant 0 : index
      %c0_124 = arith.constant 0 : index
      %113 = vector.load %arg7[%c0_121, %c2_122, %c0_123, %c0_124] : memref<3x3x8x16xf32, #tpu.memory_space<vmem>>, vector<1x1x8x16xf32>
      %114 = vector.shape_cast %113 : vector<1x1x8x16xf32> to vector<8x16xf32>
      %cst_125 = arith.constant dense<0.000000e+00> : vector<72x16xf32>
      %115 = tpu.matmul %112, %114, %cst_125 {dimension_numbers = #tpu.dot_dimension_numbers<[1], [0], [0], [1], [0, 0, 1, 1], [], []>} : vector<72x8xf32>, vector<8x16xf32>, vector<72x16xf32> -> vector<72x16xf32>
      %116 = arith.addf %108, %115 : vector<72x16xf32>
      %c0_i32_126 = arith.constant 0 : i32
      %117 = arith.addi %19, %c0_i32_126 : i32
      %c-1_i32_127 = arith.constant -1 : i32
      %118 = arith.addi %117, %c-1_i32_127 : i32
      %119 = arith.index_cast %118 : i32 to index
      %c0_128 = arith.constant 0 : index
      %120 = vector.load %arg14[%119, %c0_128] : memref<340x16xf32, #tpu.memory_space<vmem>>, vector<72x8xf32>
      %c1_129 = arith.constant 1 : index
      %c0_130 = arith.constant 0 : index
      %c0_131 = arith.constant 0 : index
      %c0_132 = arith.constant 0 : index
      %121 = vector.load %arg7[%c1_129, %c0_130, %c0_131, %c0_132] : memref<3x3x8x16xf32, #tpu.memory_space<vmem>>, vector<1x1x8x16xf32>
      %122 = vector.shape_cast %121 : vector<1x1x8x16xf32> to vector<8x16xf32>
      %cst_133 = arith.constant dense<0.000000e+00> : vector<72x16xf32>
      %123 = tpu.matmul %120, %122, %cst_133 {dimension_numbers = #tpu.dot_dimension_numbers<[1], [0], [0], [1], [0, 0, 1, 1], [], []>} : vector<72x8xf32>, vector<8x16xf32>, vector<72x16xf32> -> vector<72x16xf32>
      %124 = arith.addf %116, %123 : vector<72x16xf32>
      %c0_i32_134 = arith.constant 0 : i32
      %125 = arith.addi %19, %c0_i32_134 : i32
      %c0_i32_135 = arith.constant 0 : i32
      %126 = arith.addi %125, %c0_i32_135 : i32
      %127 = arith.index_cast %126 : i32 to index
      %c0_136 = arith.constant 0 : index
      %128 = vector.load %arg14[%127, %c0_136] : memref<340x16xf32, #tpu.memory_space<vmem>>, vector<72x8xf32>
      %c1_137 = arith.constant 1 : index
      %c1_138 = arith.constant 1 : index
      %c0_139 = arith.constant 0 : index
      %c0_140 = arith.constant 0 : index
      %129 = vector.load %arg7[%c1_137, %c1_138, %c0_139, %c0_140] : memref<3x3x8x16xf32, #tpu.memory_space<vmem>>, vector<1x1x8x16xf32>
      %130 = vector.shape_cast %129 : vector<1x1x8x16xf32> to vector<8x16xf32>
      %cst_141 = arith.constant dense<0.000000e+00> : vector<72x16xf32>
      %131 = tpu.matmul %128, %130, %cst_141 {dimension_numbers = #tpu.dot_dimension_numbers<[1], [0], [0], [1], [0, 0, 1, 1], [], []>} : vector<72x8xf32>, vector<8x16xf32>, vector<72x16xf32> -> vector<72x16xf32>
      %132 = arith.addf %124, %131 : vector<72x16xf32>
      %c0_i32_142 = arith.constant 0 : i32
      %133 = arith.addi %19, %c0_i32_142 : i32
      %c1_i32_143 = arith.constant 1 : i32
      %134 = arith.addi %133, %c1_i32_143 : i32
      %135 = arith.index_cast %134 : i32 to index
      %c0_144 = arith.constant 0 : index
      %136 = vector.load %arg14[%135, %c0_144] : memref<340x16xf32, #tpu.memory_space<vmem>>, vector<72x8xf32>
      %c1_145 = arith.constant 1 : index
      %c2_146 = arith.constant 2 : index
      %c0_147 = arith.constant 0 : index
      %c0_148 = arith.constant 0 : index
      %137 = vector.load %arg7[%c1_145, %c2_146, %c0_147, %c0_148] : memref<3x3x8x16xf32, #tpu.memory_space<vmem>>, vector<1x1x8x16xf32>
      %138 = vector.shape_cast %137 : vector<1x1x8x16xf32> to vector<8x16xf32>
      %cst_149 = arith.constant dense<0.000000e+00> : vector<72x16xf32>
      %139 = tpu.matmul %136, %138, %cst_149 {dimension_numbers = #tpu.dot_dimension_numbers<[1], [0], [0], [1], [0, 0, 1, 1], [], []>} : vector<72x8xf32>, vector<8x16xf32>, vector<72x16xf32> -> vector<72x16xf32>
      %140 = arith.addf %132, %139 : vector<72x16xf32>
      %c18_i32_150 = arith.constant 18 : i32
      %141 = arith.addi %19, %c18_i32_150 : i32
      %c-1_i32_151 = arith.constant -1 : i32
      %142 = arith.addi %141, %c-1_i32_151 : i32
      %143 = arith.index_cast %142 : i32 to index
      %c0_152 = arith.constant 0 : index
      %144 = vector.load %arg14[%143, %c0_152] : memref<340x16xf32, #tpu.memory_space<vmem>>, vector<72x8xf32>
      %c2_153 = arith.constant 2 : index
      %c0_154 = arith.constant 0 : index
      %c0_155 = arith.constant 0 : index
      %c0_156 = arith.constant 0 : index
      %145 = vector.load %arg7[%c2_153, %c0_154, %c0_155, %c0_156] : memref<3x3x8x16xf32, #tpu.memory_space<vmem>>, vector<1x1x8x16xf32>
      %146 = vector.shape_cast %145 : vector<1x1x8x16xf32> to vector<8x16xf32>
      %cst_157 = arith.constant dense<0.000000e+00> : vector<72x16xf32>
      %147 = tpu.matmul %144, %146, %cst_157 {dimension_numbers = #tpu.dot_dimension_numbers<[1], [0], [0], [1], [0, 0, 1, 1], [], []>} : vector<72x8xf32>, vector<8x16xf32>, vector<72x16xf32> -> vector<72x16xf32>
      %148 = arith.addf %140, %147 : vector<72x16xf32>
      %c18_i32_158 = arith.constant 18 : i32
      %149 = arith.addi %19, %c18_i32_158 : i32
      %c0_i32_159 = arith.constant 0 : i32
      %150 = arith.addi %149, %c0_i32_159 : i32
      %151 = arith.index_cast %150 : i32 to index
      %c0_160 = arith.constant 0 : index
      %152 = vector.load %arg14[%151, %c0_160] : memref<340x16xf32, #tpu.memory_space<vmem>>, vector<72x8xf32>
      %c2_161 = arith.constant 2 : index
      %c1_162 = arith.constant 1 : index
      %c0_163 = arith.constant 0 : index
      %c0_164 = arith.constant 0 : index
      %153 = vector.load %arg7[%c2_161, %c1_162, %c0_163, %c0_164] : memref<3x3x8x16xf32, #tpu.memory_space<vmem>>, vector<1x1x8x16xf32>
      %154 = vector.shape_cast %153 : vector<1x1x8x16xf32> to vector<8x16xf32>
      %cst_165 = arith.constant dense<0.000000e+00> : vector<72x16xf32>
      %155 = tpu.matmul %152, %154, %cst_165 {dimension_numbers = #tpu.dot_dimension_numbers<[1], [0], [0], [1], [0, 0, 1, 1], [], []>} : vector<72x8xf32>, vector<8x16xf32>, vector<72x16xf32> -> vector<72x16xf32>
      %156 = arith.addf %148, %155 : vector<72x16xf32>
      %c18_i32_166 = arith.constant 18 : i32
      %157 = arith.addi %19, %c18_i32_166 : i32
      %c1_i32_167 = arith.constant 1 : i32
      %158 = arith.addi %157, %c1_i32_167 : i32
      %159 = arith.index_cast %158 : i32 to index
      %c0_168 = arith.constant 0 : index
      %160 = vector.load %arg14[%159, %c0_168] : memref<340x16xf32, #tpu.memory_space<vmem>>, vector<72x8xf32>
      %c2_169 = arith.constant 2 : index
      %c2_170 = arith.constant 2 : index
      %c0_171 = arith.constant 0 : index
      %c0_172 = arith.constant 0 : index
      %161 = vector.load %arg7[%c2_169, %c2_170, %c0_171, %c0_172] : memref<3x3x8x16xf32, #tpu.memory_space<vmem>>, vector<1x1x8x16xf32>
      %162 = vector.shape_cast %161 : vector<1x1x8x16xf32> to vector<8x16xf32>
      %cst_173 = arith.constant dense<0.000000e+00> : vector<72x16xf32>
      %163 = tpu.matmul %160, %162, %cst_173 {dimension_numbers = #tpu.dot_dimension_numbers<[1], [0], [0], [1], [0, 0, 1, 1], [], []>} : vector<72x8xf32>, vector<8x16xf32>, vector<72x16xf32> -> vector<72x16xf32>
      %164 = arith.addf %156, %163 : vector<72x16xf32>
      %c0_174 = arith.constant 0 : index
      %c0_175 = arith.constant 0 : index
      %165 = vector.load %arg8[%c0_174, %c0_175] : memref<1x16xf32, #tpu.memory_space<vmem>>, vector<1x16xf32>
      %166 = vector.broadcast %165 : vector<1x16xf32> to vector<72x16xf32>
      %167 = arith.addf %164, %166 : vector<72x16xf32>
      %168 = arith.addf %167, %93 : vector<72x16xf32>
      %169 = vector.broadcast %11 : vector<72x1xf32> to vector<72x16xf32>
      %170 = arith.mulf %168, %169 : vector<72x16xf32>
      %171 = arith.index_cast %19 : i32 to index
      %c0_176 = arith.constant 0 : index
      %172 = vector.load %arg16[%171, %c0_176] : memref<340x16xf32, #tpu.memory_space<vmem>>, vector<72x16xf32>
      tpu.vector_store %arg16[%171, %c0_176], %170 {strides = array<i32>} : memref<340x16xf32, #tpu.memory_space<vmem>>, vector<72x16xf32>,
    }
    %c4_i32_21 = arith.constant 4 : i32
    %c0_i32_22 = arith.constant 0 : i32
    %c4_i32_23 = arith.constant 4 : i32
    %14 = arith.addi %c0_i32_22, %c4_i32_23 : i32
    %c1_i32_24 = arith.constant 1 : i32
    scf.for %arg17 = %c0_i32_22 to %14 step %c1_i32_24  : i32 {
      %c4_i32_30 = arith.constant 4 : i32
      %16 = arith.muli %arg17, %c4_i32_30 : i32
      %c1_i32_31 = arith.constant 1 : i32
      %17 = arith.addi %16, %c1_i32_31 : i32
      %c18_i32 = arith.constant 18 : i32
      %18 = arith.muli %17, %c18_i32 : i32
      %c8_i32 = arith.constant 8 : i32
      %19 = arith.addi %c8_i32, %18 : i32
      %c-18_i32 = arith.constant -18 : i32
      %20 = arith.addi %19, %c-18_i32 : i32
      %c-1_i32 = arith.constant -1 : i32
      %21 = arith.addi %20, %c-1_i32 : i32
      %22 = arith.index_cast %21 : i32 to index
      %c0_32 = arith.constant 0 : index
      %23 = vector.load %arg16[%22, %c0_32] : memref<340x16xf32, #tpu.memory_space<vmem>>, vector<72x16xf32>
      %cst_33 = arith.constant 0.000000e+00 : f32
      %24 = vector.broadcast %cst_33 : f32 to vector<72x16xf32>
      %25 = arith.maximumf %23, %24 : vector<72x16xf32>
      %c0_34 = arith.constant 0 : index
      %c0_35 = arith.constant 0 : index
      %c0_36 = arith.constant 0 : index
      %c0_37 = arith.constant 0 : index
      %26 = vector.load %arg9[%c0_34, %c0_35, %c0_36, %c0_37] : memref<3x3x16x16xf32, #tpu.memory_space<vmem>>, vector<1x1x16x16xf32>
      %27 = vector.shape_cast %26 : vector<1x1x16x16xf32> to vector<16x16xf32>
      %cst_38 = arith.constant dense<0.000000e+00> : vector<72x16xf32>
      %28 = tpu.matmul %25, %27, %cst_38 {dimension_numbers = #tpu.dot_dimension_numbers<[1], [0], [0], [1], [0, 0, 1, 1], [], []>} : vector<72x16xf32>, vector<16x16xf32>, vector<72x16xf32> -> vector<72x16xf32>
      %c-18_i32_39 = arith.constant -18 : i32
      %29 = arith.addi %19, %c-18_i32_39 : i32
      %c0_i32_40 = arith.constant 0 : i32
      %30 = arith.addi %29, %c0_i32_40 : i32
      %31 = arith.index_cast %30 : i32 to index
      %c0_41 = arith.constant 0 : index
      %32 = vector.load %arg16[%31, %c0_41] : memref<340x16xf32, #tpu.memory_space<vmem>>, vector<72x16xf32>
      %cst_42 = arith.constant 0.000000e+00 : f32
      %33 = vector.broadcast %cst_42 : f32 to vector<72x16xf32>
      %34 = arith.maximumf %32, %33 : vector<72x16xf32>
      %c0_43 = arith.constant 0 : index
      %c1 = arith.constant 1 : index
      %c0_44 = arith.constant 0 : index
      %c0_45 = arith.constant 0 : index
      %35 = vector.load %arg9[%c0_43, %c1, %c0_44, %c0_45] : memref<3x3x16x16xf32, #tpu.memory_space<vmem>>, vector<1x1x16x16xf32>
      %36 = vector.shape_cast %35 : vector<1x1x16x16xf32> to vector<16x16xf32>
      %cst_46 = arith.constant dense<0.000000e+00> : vector<72x16xf32>
      %37 = tpu.matmul %34, %36, %cst_46 {dimension_numbers = #tpu.dot_dimension_numbers<[1], [0], [0], [1], [0, 0, 1, 1], [], []>} : vector<72x16xf32>, vector<16x16xf32>, vector<72x16xf32> -> vector<72x16xf32>
      %38 = arith.addf %28, %37 : vector<72x16xf32>
      %c-18_i32_47 = arith.constant -18 : i32
      %39 = arith.addi %19, %c-18_i32_47 : i32
      %c1_i32_48 = arith.constant 1 : i32
      %40 = arith.addi %39, %c1_i32_48 : i32
      %41 = arith.index_cast %40 : i32 to index
      %c0_49 = arith.constant 0 : index
      %42 = vector.load %arg16[%41, %c0_49] : memref<340x16xf32, #tpu.memory_space<vmem>>, vector<72x16xf32>
      %cst_50 = arith.constant 0.000000e+00 : f32
      %43 = vector.broadcast %cst_50 : f32 to vector<72x16xf32>
      %44 = arith.maximumf %42, %43 : vector<72x16xf32>
      %c0_51 = arith.constant 0 : index
      %c2 = arith.constant 2 : index
      %c0_52 = arith.constant 0 : index
      %c0_53 = arith.constant 0 : index
      %45 = vector.load %arg9[%c0_51, %c2, %c0_52, %c0_53] : memref<3x3x16x16xf32, #tpu.memory_space<vmem>>, vector<1x1x16x16xf32>
      %46 = vector.shape_cast %45 : vector<1x1x16x16xf32> to vector<16x16xf32>
      %cst_54 = arith.constant dense<0.000000e+00> : vector<72x16xf32>
      %47 = tpu.matmul %44, %46, %cst_54 {dimension_numbers = #tpu.dot_dimension_numbers<[1], [0], [0], [1], [0, 0, 1, 1], [], []>} : vector<72x16xf32>, vector<16x16xf32>, vector<72x16xf32> -> vector<72x16xf32>
      %48 = arith.addf %38, %47 : vector<72x16xf32>
      %c0_i32_55 = arith.constant 0 : i32
      %49 = arith.addi %19, %c0_i32_55 : i32
      %c-1_i32_56 = arith.constant -1 : i32
      %50 = arith.addi %49, %c-1_i32_56 : i32
      %51 = arith.index_cast %50 : i32 to index
      %c0_57 = arith.constant 0 : index
      %52 = vector.load %arg16[%51, %c0_57] : memref<340x16xf32, #tpu.memory_space<vmem>>, vector<72x16xf32>
      %cst_58 = arith.constant 0.000000e+00 : f32
      %53 = vector.broadcast %cst_58 : f32 to vector<72x16xf32>
      %54 = arith.maximumf %52, %53 : vector<72x16xf32>
      %c1_59 = arith.constant 1 : index
      %c0_60 = arith.constant 0 : index
      %c0_61 = arith.constant 0 : index
      %c0_62 = arith.constant 0 : index
      %55 = vector.load %arg9[%c1_59, %c0_60, %c0_61, %c0_62] : memref<3x3x16x16xf32, #tpu.memory_space<vmem>>, vector<1x1x16x16xf32>
      %56 = vector.shape_cast %55 : vector<1x1x16x16xf32> to vector<16x16xf32>
      %cst_63 = arith.constant dense<0.000000e+00> : vector<72x16xf32>
      %57 = tpu.matmul %54, %56, %cst_63 {dimension_numbers = #tpu.dot_dimension_numbers<[1], [0], [0], [1], [0, 0, 1, 1], [], []>} : vector<72x16xf32>, vector<16x16xf32>, vector<72x16xf32> -> vector<72x16xf32>
      %58 = arith.addf %48, %57 : vector<72x16xf32>
      %c0_i32_64 = arith.constant 0 : i32
      %59 = arith.addi %19, %c0_i32_64 : i32
      %c0_i32_65 = arith.constant 0 : i32
      %60 = arith.addi %59, %c0_i32_65 : i32
      %61 = arith.index_cast %60 : i32 to index
      %c0_66 = arith.constant 0 : index
      %62 = vector.load %arg16[%61, %c0_66] : memref<340x16xf32, #tpu.memory_space<vmem>>, vector<72x16xf32>
      %cst_67 = arith.constant 0.000000e+00 : f32
      %63 = vector.broadcast %cst_67 : f32 to vector<72x16xf32>
      %64 = arith.maximumf %62, %63 : vector<72x16xf32>
      %c1_68 = arith.constant 1 : index
      %c1_69 = arith.constant 1 : index
      %c0_70 = arith.constant 0 : index
      %c0_71 = arith.constant 0 : index
      %65 = vector.load %arg9[%c1_68, %c1_69, %c0_70, %c0_71] : memref<3x3x16x16xf32, #tpu.memory_space<vmem>>, vector<1x1x16x16xf32>
      %66 = vector.shape_cast %65 : vector<1x1x16x16xf32> to vector<16x16xf32>
      %cst_72 = arith.constant dense<0.000000e+00> : vector<72x16xf32>
      %67 = tpu.matmul %64, %66, %cst_72 {dimension_numbers = #tpu.dot_dimension_numbers<[1], [0], [0], [1], [0, 0, 1, 1], [], []>} : vector<72x16xf32>, vector<16x16xf32>, vector<72x16xf32> -> vector<72x16xf32>
      %68 = arith.addf %58, %67 : vector<72x16xf32>
      %c0_i32_73 = arith.constant 0 : i32
      %69 = arith.addi %19, %c0_i32_73 : i32
      %c1_i32_74 = arith.constant 1 : i32
      %70 = arith.addi %69, %c1_i32_74 : i32
      %71 = arith.index_cast %70 : i32 to index
      %c0_75 = arith.constant 0 : index
      %72 = vector.load %arg16[%71, %c0_75] : memref<340x16xf32, #tpu.memory_space<vmem>>, vector<72x16xf32>
      %cst_76 = arith.constant 0.000000e+00 : f32
      %73 = vector.broadcast %cst_76 : f32 to vector<72x16xf32>
      %74 = arith.maximumf %72, %73 : vector<72x16xf32>
      %c1_77 = arith.constant 1 : index
      %c2_78 = arith.constant 2 : index
      %c0_79 = arith.constant 0 : index
      %c0_80 = arith.constant 0 : index
      %75 = vector.load %arg9[%c1_77, %c2_78, %c0_79, %c0_80] : memref<3x3x16x16xf32, #tpu.memory_space<vmem>>, vector<1x1x16x16xf32>
      %76 = vector.shape_cast %75 : vector<1x1x16x16xf32> to vector<16x16xf32>
      %cst_81 = arith.constant dense<0.000000e+00> : vector<72x16xf32>
      %77 = tpu.matmul %74, %76, %cst_81 {dimension_numbers = #tpu.dot_dimension_numbers<[1], [0], [0], [1], [0, 0, 1, 1], [], []>} : vector<72x16xf32>, vector<16x16xf32>, vector<72x16xf32> -> vector<72x16xf32>
      %78 = arith.addf %68, %77 : vector<72x16xf32>
      %c18_i32_82 = arith.constant 18 : i32
      %79 = arith.addi %19, %c18_i32_82 : i32
      %c-1_i32_83 = arith.constant -1 : i32
      %80 = arith.addi %79, %c-1_i32_83 : i32
      %81 = arith.index_cast %80 : i32 to index
      %c0_84 = arith.constant 0 : index
      %82 = vector.load %arg16[%81, %c0_84] : memref<340x16xf32, #tpu.memory_space<vmem>>, vector<72x16xf32>
      %cst_85 = arith.constant 0.000000e+00 : f32
      %83 = vector.broadcast %cst_85 : f32 to vector<72x16xf32>
      %84 = arith.maximumf %82, %83 : vector<72x16xf32>
      %c2_86 = arith.constant 2 : index
      %c0_87 = arith.constant 0 : index
      %c0_88 = arith.constant 0 : index
      %c0_89 = arith.constant 0 : index
      %85 = vector.load %arg9[%c2_86, %c0_87, %c0_88, %c0_89] : memref<3x3x16x16xf32, #tpu.memory_space<vmem>>, vector<1x1x16x16xf32>
      %86 = vector.shape_cast %85 : vector<1x1x16x16xf32> to vector<16x16xf32>
      %cst_90 = arith.constant dense<0.000000e+00> : vector<72x16xf32>
      %87 = tpu.matmul %84, %86, %cst_90 {dimension_numbers = #tpu.dot_dimension_numbers<[1], [0], [0], [1], [0, 0, 1, 1], [], []>} : vector<72x16xf32>, vector<16x16xf32>, vector<72x16xf32> -> vector<72x16xf32>
      %88 = arith.addf %78, %87 : vector<72x16xf32>
      %c18_i32_91 = arith.constant 18 : i32
      %89 = arith.addi %19, %c18_i32_91 : i32
      %c0_i32_92 = arith.constant 0 : i32
      %90 = arith.addi %89, %c0_i32_92 : i32
      %91 = arith.index_cast %90 : i32 to index
      %c0_93 = arith.constant 0 : index
      %92 = vector.load %arg16[%91, %c0_93] : memref<340x16xf32, #tpu.memory_space<vmem>>, vector<72x16xf32>
      %cst_94 = arith.constant 0.000000e+00 : f32
      %93 = vector.broadcast %cst_94 : f32 to vector<72x16xf32>
      %94 = arith.maximumf %92, %93 : vector<72x16xf32>
      %c2_95 = arith.constant 2 : index
      %c1_96 = arith.constant 1 : index
      %c0_97 = arith.constant 0 : index
      %c0_98 = arith.constant 0 : index
      %95 = vector.load %arg9[%c2_95, %c1_96, %c0_97, %c0_98] : memref<3x3x16x16xf32, #tpu.memory_space<vmem>>, vector<1x1x16x16xf32>
      %96 = vector.shape_cast %95 : vector<1x1x16x16xf32> to vector<16x16xf32>
      %cst_99 = arith.constant dense<0.000000e+00> : vector<72x16xf32>
      %97 = tpu.matmul %94, %96, %cst_99 {dimension_numbers = #tpu.dot_dimension_numbers<[1], [0], [0], [1], [0, 0, 1, 1], [], []>} : vector<72x16xf32>, vector<16x16xf32>, vector<72x16xf32> -> vector<72x16xf32>
      %98 = arith.addf %88, %97 : vector<72x16xf32>
      %c18_i32_100 = arith.constant 18 : i32
      %99 = arith.addi %19, %c18_i32_100 : i32
      %c1_i32_101 = arith.constant 1 : i32
      %100 = arith.addi %99, %c1_i32_101 : i32
      %101 = arith.index_cast %100 : i32 to index
      %c0_102 = arith.constant 0 : index
      %102 = vector.load %arg16[%101, %c0_102] : memref<340x16xf32, #tpu.memory_space<vmem>>, vector<72x16xf32>
      %cst_103 = arith.constant 0.000000e+00 : f32
      %103 = vector.broadcast %cst_103 : f32 to vector<72x16xf32>
      %104 = arith.maximumf %102, %103 : vector<72x16xf32>
      %c2_104 = arith.constant 2 : index
      %c2_105 = arith.constant 2 : index
      %c0_106 = arith.constant 0 : index
      %c0_107 = arith.constant 0 : index
      %105 = vector.load %arg9[%c2_104, %c2_105, %c0_106, %c0_107] : memref<3x3x16x16xf32, #tpu.memory_space<vmem>>, vector<1x1x16x16xf32>
      %106 = vector.shape_cast %105 : vector<1x1x16x16xf32> to vector<16x16xf32>
      %cst_108 = arith.constant dense<0.000000e+00> : vector<72x16xf32>
      %107 = tpu.matmul %104, %106, %cst_108 {dimension_numbers = #tpu.dot_dimension_numbers<[1], [0], [0], [1], [0, 0, 1, 1], [], []>} : vector<72x16xf32>, vector<16x16xf32>, vector<72x16xf32> -> vector<72x16xf32>
      %108 = arith.addf %98, %107 : vector<72x16xf32>
      %c0_109 = arith.constant 0 : index
      %c0_110 = arith.constant 0 : index
      %109 = vector.load %arg10[%c0_109, %c0_110] : memref<1x16xf32, #tpu.memory_space<vmem>>, vector<1x16xf32>
      %110 = vector.broadcast %109 : vector<1x16xf32> to vector<72x16xf32>
      %111 = arith.addf %108, %110 : vector<72x16xf32>
      %cst_111 = arith.constant 0.000000e+00 : f32
      %112 = vector.broadcast %cst_111 : f32 to vector<72x16xf32>
      %113 = arith.maximumf %111, %112 : vector<72x16xf32>
      %114 = vector.broadcast %11 : vector<72x1xf32> to vector<72x16xf32>
      %115 = arith.mulf %113, %114 : vector<72x16xf32>
      %116 = arith.index_cast %19 : i32 to index
      %c0_112 = arith.constant 0 : index
      %117 = vector.load %arg14[%116, %c0_112] : memref<340x16xf32, #tpu.memory_space<vmem>>, vector<72x16xf32>
      tpu.vector_store %arg14[%116, %c0_112], %115 {strides = array<i32>} : memref<340x16xf32, #tpu.memory_space<vmem>>, vector<72x16xf32>,
    }
    %c4_i32_25 = arith.constant 4 : i32
    %c0_i32_26 = arith.constant 0 : i32
    %c4_i32_27 = arith.constant 4 : i32
    %15 = arith.addi %c0_i32_26, %c4_i32_27 : i32
    %c1_i32_28 = arith.constant 1 : i32
    scf.for %arg17 = %c0_i32_26 to %15 step %c1_i32_28  : i32 {
      %c4_i32_30 = arith.constant 4 : i32
      %16 = arith.muli %arg17, %c4_i32_30 : i32
      %c1_i32_31 = arith.constant 1 : i32
      %17 = arith.addi %16, %c1_i32_31 : i32
      %c18_i32 = arith.constant 18 : i32
      %18 = arith.muli %17, %c18_i32 : i32
      %c8_i32 = arith.constant 8 : i32
      %19 = arith.addi %c8_i32, %18 : i32
      %c-18_i32 = arith.constant -18 : i32
      %20 = arith.addi %19, %c-18_i32 : i32
      %c-1_i32 = arith.constant -1 : i32
      %21 = arith.addi %20, %c-1_i32 : i32
      %22 = arith.index_cast %21 : i32 to index
      %c0_32 = arith.constant 0 : index
      %23 = vector.load %arg14[%22, %c0_32] : memref<340x16xf32, #tpu.memory_space<vmem>>, vector<72x16xf32>
      %c0_33 = arith.constant 0 : index
      %c0_34 = arith.constant 0 : index
      %c0_35 = arith.constant 0 : index
      %c0_36 = arith.constant 0 : index
      %24 = vector.load %arg11[%c0_33, %c0_34, %c0_35, %c0_36] : memref<3x3x16x16xf32, #tpu.memory_space<vmem>>, vector<1x1x16x16xf32>
      %25 = vector.shape_cast %24 : vector<1x1x16x16xf32> to vector<16x16xf32>
      %cst_37 = arith.constant dense<0.000000e+00> : vector<72x16xf32>
      %26 = tpu.matmul %23, %25, %cst_37 {dimension_numbers = #tpu.dot_dimension_numbers<[1], [0], [0], [1], [0, 0, 1, 1], [], []>} : vector<72x16xf32>, vector<16x16xf32>, vector<72x16xf32> -> vector<72x16xf32>
      %c-18_i32_38 = arith.constant -18 : i32
      %27 = arith.addi %19, %c-18_i32_38 : i32
      %c0_i32_39 = arith.constant 0 : i32
      %28 = arith.addi %27, %c0_i32_39 : i32
      %29 = arith.index_cast %28 : i32 to index
      %c0_40 = arith.constant 0 : index
      %30 = vector.load %arg14[%29, %c0_40] : memref<340x16xf32, #tpu.memory_space<vmem>>, vector<72x16xf32>
      %c0_41 = arith.constant 0 : index
      %c1 = arith.constant 1 : index
      %c0_42 = arith.constant 0 : index
      %c0_43 = arith.constant 0 : index
      %31 = vector.load %arg11[%c0_41, %c1, %c0_42, %c0_43] : memref<3x3x16x16xf32, #tpu.memory_space<vmem>>, vector<1x1x16x16xf32>
      %32 = vector.shape_cast %31 : vector<1x1x16x16xf32> to vector<16x16xf32>
      %cst_44 = arith.constant dense<0.000000e+00> : vector<72x16xf32>
      %33 = tpu.matmul %30, %32, %cst_44 {dimension_numbers = #tpu.dot_dimension_numbers<[1], [0], [0], [1], [0, 0, 1, 1], [], []>} : vector<72x16xf32>, vector<16x16xf32>, vector<72x16xf32> -> vector<72x16xf32>
      %34 = arith.addf %26, %33 : vector<72x16xf32>
      %c-18_i32_45 = arith.constant -18 : i32
      %35 = arith.addi %19, %c-18_i32_45 : i32
      %c1_i32_46 = arith.constant 1 : i32
      %36 = arith.addi %35, %c1_i32_46 : i32
      %37 = arith.index_cast %36 : i32 to index
      %c0_47 = arith.constant 0 : index
      %38 = vector.load %arg14[%37, %c0_47] : memref<340x16xf32, #tpu.memory_space<vmem>>, vector<72x16xf32>
      %c0_48 = arith.constant 0 : index
      %c2 = arith.constant 2 : index
      %c0_49 = arith.constant 0 : index
      %c0_50 = arith.constant 0 : index
      %39 = vector.load %arg11[%c0_48, %c2, %c0_49, %c0_50] : memref<3x3x16x16xf32, #tpu.memory_space<vmem>>, vector<1x1x16x16xf32>
      %40 = vector.shape_cast %39 : vector<1x1x16x16xf32> to vector<16x16xf32>
      %cst_51 = arith.constant dense<0.000000e+00> : vector<72x16xf32>
      %41 = tpu.matmul %38, %40, %cst_51 {dimension_numbers = #tpu.dot_dimension_numbers<[1], [0], [0], [1], [0, 0, 1, 1], [], []>} : vector<72x16xf32>, vector<16x16xf32>, vector<72x16xf32> -> vector<72x16xf32>
      %42 = arith.addf %34, %41 : vector<72x16xf32>
      %c0_i32_52 = arith.constant 0 : i32
      %43 = arith.addi %19, %c0_i32_52 : i32
      %c-1_i32_53 = arith.constant -1 : i32
      %44 = arith.addi %43, %c-1_i32_53 : i32
      %45 = arith.index_cast %44 : i32 to index
      %c0_54 = arith.constant 0 : index
      %46 = vector.load %arg14[%45, %c0_54] : memref<340x16xf32, #tpu.memory_space<vmem>>, vector<72x16xf32>
      %c1_55 = arith.constant 1 : index
      %c0_56 = arith.constant 0 : index
      %c0_57 = arith.constant 0 : index
      %c0_58 = arith.constant 0 : index
      %47 = vector.load %arg11[%c1_55, %c0_56, %c0_57, %c0_58] : memref<3x3x16x16xf32, #tpu.memory_space<vmem>>, vector<1x1x16x16xf32>
      %48 = vector.shape_cast %47 : vector<1x1x16x16xf32> to vector<16x16xf32>
      %cst_59 = arith.constant dense<0.000000e+00> : vector<72x16xf32>
      %49 = tpu.matmul %46, %48, %cst_59 {dimension_numbers = #tpu.dot_dimension_numbers<[1], [0], [0], [1], [0, 0, 1, 1], [], []>} : vector<72x16xf32>, vector<16x16xf32>, vector<72x16xf32> -> vector<72x16xf32>
      %50 = arith.addf %42, %49 : vector<72x16xf32>
      %c0_i32_60 = arith.constant 0 : i32
      %51 = arith.addi %19, %c0_i32_60 : i32
      %c0_i32_61 = arith.constant 0 : i32
      %52 = arith.addi %51, %c0_i32_61 : i32
      %53 = arith.index_cast %52 : i32 to index
      %c0_62 = arith.constant 0 : index
      %54 = vector.load %arg14[%53, %c0_62] : memref<340x16xf32, #tpu.memory_space<vmem>>, vector<72x16xf32>
      %c1_63 = arith.constant 1 : index
      %c1_64 = arith.constant 1 : index
      %c0_65 = arith.constant 0 : index
      %c0_66 = arith.constant 0 : index
      %55 = vector.load %arg11[%c1_63, %c1_64, %c0_65, %c0_66] : memref<3x3x16x16xf32, #tpu.memory_space<vmem>>, vector<1x1x16x16xf32>
      %56 = vector.shape_cast %55 : vector<1x1x16x16xf32> to vector<16x16xf32>
      %cst_67 = arith.constant dense<0.000000e+00> : vector<72x16xf32>
      %57 = tpu.matmul %54, %56, %cst_67 {dimension_numbers = #tpu.dot_dimension_numbers<[1], [0], [0], [1], [0, 0, 1, 1], [], []>} : vector<72x16xf32>, vector<16x16xf32>, vector<72x16xf32> -> vector<72x16xf32>
      %58 = arith.addf %50, %57 : vector<72x16xf32>
      %c0_i32_68 = arith.constant 0 : i32
      %59 = arith.addi %19, %c0_i32_68 : i32
      %c1_i32_69 = arith.constant 1 : i32
      %60 = arith.addi %59, %c1_i32_69 : i32
      %61 = arith.index_cast %60 : i32 to index
      %c0_70 = arith.constant 0 : index
      %62 = vector.load %arg14[%61, %c0_70] : memref<340x16xf32, #tpu.memory_space<vmem>>, vector<72x16xf32>
      %c1_71 = arith.constant 1 : index
      %c2_72 = arith.constant 2 : index
      %c0_73 = arith.constant 0 : index
      %c0_74 = arith.constant 0 : index
      %63 = vector.load %arg11[%c1_71, %c2_72, %c0_73, %c0_74] : memref<3x3x16x16xf32, #tpu.memory_space<vmem>>, vector<1x1x16x16xf32>
      %64 = vector.shape_cast %63 : vector<1x1x16x16xf32> to vector<16x16xf32>
      %cst_75 = arith.constant dense<0.000000e+00> : vector<72x16xf32>
      %65 = tpu.matmul %62, %64, %cst_75 {dimension_numbers = #tpu.dot_dimension_numbers<[1], [0], [0], [1], [0, 0, 1, 1], [], []>} : vector<72x16xf32>, vector<16x16xf32>, vector<72x16xf32> -> vector<72x16xf32>
      %66 = arith.addf %58, %65 : vector<72x16xf32>
      %c18_i32_76 = arith.constant 18 : i32
      %67 = arith.addi %19, %c18_i32_76 : i32
      %c-1_i32_77 = arith.constant -1 : i32
      %68 = arith.addi %67, %c-1_i32_77 : i32
      %69 = arith.index_cast %68 : i32 to index
      %c0_78 = arith.constant 0 : index
      %70 = vector.load %arg14[%69, %c0_78] : memref<340x16xf32, #tpu.memory_space<vmem>>, vector<72x16xf32>
      %c2_79 = arith.constant 2 : index
      %c0_80 = arith.constant 0 : index
      %c0_81 = arith.constant 0 : index
      %c0_82 = arith.constant 0 : index
      %71 = vector.load %arg11[%c2_79, %c0_80, %c0_81, %c0_82] : memref<3x3x16x16xf32, #tpu.memory_space<vmem>>, vector<1x1x16x16xf32>
      %72 = vector.shape_cast %71 : vector<1x1x16x16xf32> to vector<16x16xf32>
      %cst_83 = arith.constant dense<0.000000e+00> : vector<72x16xf32>
      %73 = tpu.matmul %70, %72, %cst_83 {dimension_numbers = #tpu.dot_dimension_numbers<[1], [0], [0], [1], [0, 0, 1, 1], [], []>} : vector<72x16xf32>, vector<16x16xf32>, vector<72x16xf32> -> vector<72x16xf32>
      %74 = arith.addf %66, %73 : vector<72x16xf32>
      %c18_i32_84 = arith.constant 18 : i32
      %75 = arith.addi %19, %c18_i32_84 : i32
      %c0_i32_85 = arith.constant 0 : i32
      %76 = arith.addi %75, %c0_i32_85 : i32
      %77 = arith.index_cast %76 : i32 to index
      %c0_86 = arith.constant 0 : index
      %78 = vector.load %arg14[%77, %c0_86] : memref<340x16xf32, #tpu.memory_space<vmem>>, vector<72x16xf32>
      %c2_87 = arith.constant 2 : index
      %c1_88 = arith.constant 1 : index
      %c0_89 = arith.constant 0 : index
      %c0_90 = arith.constant 0 : index
      %79 = vector.load %arg11[%c2_87, %c1_88, %c0_89, %c0_90] : memref<3x3x16x16xf32, #tpu.memory_space<vmem>>, vector<1x1x16x16xf32>
      %80 = vector.shape_cast %79 : vector<1x1x16x16xf32> to vector<16x16xf32>
      %cst_91 = arith.constant dense<0.000000e+00> : vector<72x16xf32>
      %81 = tpu.matmul %78, %80, %cst_91 {dimension_numbers = #tpu.dot_dimension_numbers<[1], [0], [0], [1], [0, 0, 1, 1], [], []>} : vector<72x16xf32>, vector<16x16xf32>, vector<72x16xf32> -> vector<72x16xf32>
      %82 = arith.addf %74, %81 : vector<72x16xf32>
      %c18_i32_92 = arith.constant 18 : i32
      %83 = arith.addi %19, %c18_i32_92 : i32
      %c1_i32_93 = arith.constant 1 : i32
      %84 = arith.addi %83, %c1_i32_93 : i32
      %85 = arith.index_cast %84 : i32 to index
      %c0_94 = arith.constant 0 : index
      %86 = vector.load %arg14[%85, %c0_94] : memref<340x16xf32, #tpu.memory_space<vmem>>, vector<72x16xf32>
      %c2_95 = arith.constant 2 : index
      %c2_96 = arith.constant 2 : index
      %c0_97 = arith.constant 0 : index
      %c0_98 = arith.constant 0 : index
      %87 = vector.load %arg11[%c2_95, %c2_96, %c0_97, %c0_98] : memref<3x3x16x16xf32, #tpu.memory_space<vmem>>, vector<1x1x16x16xf32>
      %88 = vector.shape_cast %87 : vector<1x1x16x16xf32> to vector<16x16xf32>
      %cst_99 = arith.constant dense<0.000000e+00> : vector<72x16xf32>
      %89 = tpu.matmul %86, %88, %cst_99 {dimension_numbers = #tpu.dot_dimension_numbers<[1], [0], [0], [1], [0, 0, 1, 1], [], []>} : vector<72x16xf32>, vector<16x16xf32>, vector<72x16xf32> -> vector<72x16xf32>
      %90 = arith.addf %82, %89 : vector<72x16xf32>
      %c0_100 = arith.constant 0 : index
      %c0_101 = arith.constant 0 : index
      %91 = vector.load %arg12[%c0_100, %c0_101] : memref<1x16xf32, #tpu.memory_space<vmem>>, vector<1x16xf32>
      %92 = vector.broadcast %91 : vector<1x16xf32> to vector<72x16xf32>
      %93 = arith.addf %90, %92 : vector<72x16xf32>
      %94 = arith.index_cast %19 : i32 to index
      %c0_102 = arith.constant 0 : index
      %95 = vector.load %arg16[%94, %c0_102] : memref<340x16xf32, #tpu.memory_space<vmem>>, vector<72x16xf32>
      %96 = arith.addf %95, %93 : vector<72x16xf32>
      %c8_i32_103 = arith.constant 8 : i32
      %97 = arith.subi %19, %c8_i32_103 : i32
      %c0_104 = arith.constant 0 : index
      %98 = arith.index_cast %97 : i32 to index
      %c0_105 = arith.constant 0 : index
      %99 = vector.load %arg13[%c0_104, %98, %c0_105] : memref<1x324x16xf32, #tpu.memory_space<vmem>>, vector<1x72x16xf32>
      %100 = vector.shape_cast %99 : vector<1x72x16xf32> to vector<72x16xf32>
      %101 = vector.shape_cast %96 : vector<72x16xf32> to vector<1x72x16xf32>
      tpu.vector_store %arg13[%c0_104, %98, %c0_105], %101 {strides = array<i32>} : memref<1x324x16xf32, #tpu.memory_space<vmem>>, vector<1x72x16xf32>,
    }
    %c4_i32_29 = arith.constant 4 : i32
    return
  }
  func.func @transform_0(%arg0: i32) -> (i32, i32, i32) {
    %c0_i32 = arith.constant 0 : i32
    %c0_i32_0 = arith.constant 0 : i32
    %c0_i32_1 = arith.constant 0 : i32
    return %arg0, %c0_i32, %c0_i32_0 : i32, i32, i32
  }
  func.func @transform_1(%arg0: i32) -> (i32, i32) {
    %c0_i32 = arith.constant 0 : i32
    %c0_i32_0 = arith.constant 0 : i32
    %c0_i32_1 = arith.constant 0 : i32
    return %c0_i32, %c0_i32_0 : i32, i32
  }
  func.func @transform_2(%arg0: i32) -> (i32, i32, i32, i32) {
    %c0_i32 = arith.constant 0 : i32
    %c0_i32_0 = arith.constant 0 : i32
    %c0_i32_1 = arith.constant 0 : i32
    %c0_i32_2 = arith.constant 0 : i32
    %c0_i32_3 = arith.constant 0 : i32
    return %c0_i32, %c0_i32_0, %c0_i32_1, %c0_i32_2 : i32, i32, i32, i32
  }
  func.func @transform_3(%arg0: i32) -> (i32, i32) {
    %c0_i32 = arith.constant 0 : i32
    %c0_i32_0 = arith.constant 0 : i32
    %c0_i32_1 = arith.constant 0 : i32
    return %c0_i32, %c0_i32_0 : i32, i32
  }
  func.func @transform_4(%arg0: i32) -> (i32, i32, i32, i32) {
    %c0_i32 = arith.constant 0 : i32
    %c0_i32_0 = arith.constant 0 : i32
    %c0_i32_1 = arith.constant 0 : i32
    %c0_i32_2 = arith.constant 0 : i32
    %c0_i32_3 = arith.constant 0 : i32
    return %c0_i32, %c0_i32_0, %c0_i32_1, %c0_i32_2 : i32, i32, i32, i32
  }
  func.func @transform_5(%arg0: i32) -> (i32, i32) {
    %c0_i32 = arith.constant 0 : i32
    %c0_i32_0 = arith.constant 0 : i32
    %c0_i32_1 = arith.constant 0 : i32
    return %c0_i32, %c0_i32_0 : i32, i32
  }
  func.func @transform_6(%arg0: i32) -> (i32, i32, i32, i32) {
    %c0_i32 = arith.constant 0 : i32
    %c0_i32_0 = arith.constant 0 : i32
    %c0_i32_1 = arith.constant 0 : i32
    %c0_i32_2 = arith.constant 0 : i32
    %c0_i32_3 = arith.constant 0 : i32
    return %c0_i32, %c0_i32_0, %c0_i32_1, %c0_i32_2 : i32, i32, i32, i32
  }
  func.func @transform_7(%arg0: i32) -> (i32, i32) {
    %c0_i32 = arith.constant 0 : i32
    %c0_i32_0 = arith.constant 0 : i32
    %c0_i32_1 = arith.constant 0 : i32
    return %c0_i32, %c0_i32_0 : i32, i32
  }
  func.func @transform_8(%arg0: i32) -> (i32, i32, i32, i32) {
    %c0_i32 = arith.constant 0 : i32
    %c0_i32_0 = arith.constant 0 : i32
    %c0_i32_1 = arith.constant 0 : i32
    %c0_i32_2 = arith.constant 0 : i32
    %c0_i32_3 = arith.constant 0 : i32
    return %c0_i32, %c0_i32_0, %c0_i32_1, %c0_i32_2 : i32, i32, i32, i32
  }
  func.func @transform_9(%arg0: i32) -> (i32, i32) {
    %c0_i32 = arith.constant 0 : i32
    %c0_i32_0 = arith.constant 0 : i32
    %c0_i32_1 = arith.constant 0 : i32
    return %c0_i32, %c0_i32_0 : i32, i32
  }
  func.func @transform_10(%arg0: i32) -> (i32, i32, i32, i32) {
    %c0_i32 = arith.constant 0 : i32
    %c0_i32_0 = arith.constant 0 : i32
    %c0_i32_1 = arith.constant 0 : i32
    %c0_i32_2 = arith.constant 0 : i32
    %c0_i32_3 = arith.constant 0 : i32
    return %c0_i32, %c0_i32_0, %c0_i32_1, %c0_i32_2 : i32, i32, i32, i32
  }
  func.func @transform_11(%arg0: i32) -> (i32, i32) {
    %c0_i32 = arith.constant 0 : i32
    %c0_i32_0 = arith.constant 0 : i32
    %c0_i32_1 = arith.constant 0 : i32
    return %c0_i32, %c0_i32_0 : i32, i32
  }
  func.func @transform_12(%arg0: i32) -> (i32, i32, i32) {
    %c0_i32 = arith.constant 0 : i32
    %c0_i32_0 = arith.constant 0 : i32
    %c0_i32_1 = arith.constant 0 : i32
    return %arg0, %c0_i32, %c0_i32_0 : i32, i32, i32
  }
}

</mosaic_0001>

<llo_original>
// kernel: tpu_custom_call.1
$region0: #{tpu_custom_call.1}
  #allocation0 [shape = 'u32[]', space=smem, size = 0x4, offset = 0x4, fixed_abs, tag = 'smem constant byte address 0x4 - core index']
  #allocation1 [shape = 'u32[144,128]{1,0:T(1,128)}', space=vmem, size = 0x12000, scoped, tag = 'internal scratch']
  #allocation2 [shape = 'f32[340,16]{1,0:T(8,128)}', space=vmem, size = 0x2b000, scoped, tag = 'scratch operand']
  #allocation3 [shape = 'f32[340,16]{1,0:T(8,128)}', space=vmem, size = 0x2b000, scoped, tag = 'scratch operand']
  #allocation4 [shape = 'f32[340,16]{1,0:T(8,128)}', space=vmem, size = 0x2b000, scoped, tag = 'scratch operand']
  %s0 = inlined_call_operand.vmem [shape: f32[2,324,8], index: 0, kind: input, shape index: {}]
  %s1 = inlined_call_operand.vmem [shape: f32[72,1], index: 1, kind: input, shape index: {}]
  %s2 = inlined_call_operand.vmem [shape: f32[3,3,8,16], index: 2, kind: input, shape index: {}]
  %s3 = inlined_call_operand.vmem [shape: f32[1,16], index: 3, kind: input, shape index: {}]
  %s4 = inlined_call_operand.vmem [shape: f32[3,3,16,16], index: 4, kind: input, shape index: {}]
  %s5 = inlined_call_operand.vmem [shape: f32[1,16], index: 5, kind: input, shape index: {}]
  %s6 = inlined_call_operand.vmem [shape: f32[3,3,8,16], index: 6, kind: input, shape index: {}]
  %s7 = inlined_call_operand.vmem [shape: f32[1,16], index: 7, kind: input, shape index: {}]
  %s8 = inlined_call_operand.vmem [shape: f32[3,3,16,16], index: 8, kind: input, shape index: {}]
  %s9 = inlined_call_operand.vmem [shape: f32[1,16], index: 9, kind: input, shape index: {}]
  %s10 = inlined_call_operand.vmem [shape: f32[3,3,16,16], index: 10, kind: input, shape index: {}]
  %s11 = inlined_call_operand.vmem [shape: f32[1,16], index: 11, kind: input, shape index: {}]
  %s12 = inlined_call_operand.vmem [shape: f32[2,324,16], index: 12, kind: output, shape index: {}]
  %s13 = sld [smem:[#allocation0]]
  $region109: #{tpu_custom_call.1} parent=0
    _
  %s15 = ssub.s32 1, %s13
  %s16 = scalar_select 0, %s15, %s13
  loop: start=0, step=1, limit=4
  $region2: #{tpu_custom_call.1} parent=0 // loop_pre_header
    _
  $region3: #{tpu_custom_call.1} parent=0 // loop_header
    %s18 = sphi 0, %s22
    %p19 = scmp.ge.s32.totalorder %s18, 4
    %s28 = sphi 0, %s30
    %s31 = sphi 0, %s28
    %s32 = sphi 0, %s31
    %s48 = sphi 0, %s32
    %s52 = sphi 0, %s52
    %s54 = sphi 0, %s52
    %s55 = sphi 0, %s54
    %s69 = sphi 0, %s55
    %s73 = sphi 0, %s73
    %s75 = sphi 0, %s73
    %s76 = sphi 0, %s75
    %s90 = sphi 0, %s76
    %s94 = sphi 0, %s94
    %s96 = sphi 0, %s94
    %s97 = sphi 0, %s96
    %s111 = sphi 0, %s97
    %s115 = sphi 0, %s115
    %s117 = sphi 0, %s115
    %s118 = sphi 0, %s117
    %s132 = sphi 0, %s118
    %s136 = sphi 0, %s136
    %s138 = sphi 0, %s136
    %s139 = sphi 0, %s138
    %s153 = sphi 0, %s139
    %s157 = sphi 0, %s157
    %s159 = sphi 0, %s157
    %s160 = sphi 0, %s159
    %s174 = sphi 0, %s160
    %s178 = sphi 0, %s178
    %s180 = sphi 0, %s178
    %s181 = sphi 0, %s180
    %s195 = sphi 0, %s181
    %s199 = sphi 0, %s199
    %s201 = sphi 0, %s199
    %s202 = sphi 0, %s201
    %s216 = sphi 0, %s202
    %s220 = sphi 0, %s220
    %s222 = sphi 0, %s220
    %s223 = sphi 0, %s222
    %s237 = sphi 0, %s223
    %s241 = sphi 0, %s241
    %s243 = sphi 0, %s241
    %s244 = sphi 0, %s243
    %s258 = sphi 0, %s244
    %s262 = sphi 0, %s262
    %s264 = sphi 0, %s262
    %s265 = sphi 0, %s264
    %s279 = sphi 0, %s265
    %s285 = sphi 0, %s287
    %s288 = sphi 0, %s285
    %s289 = sphi 0, %s288
    %s305 = sphi 0, %s289
  $region4: #{tpu_custom_call.1} parent=0 // loop_header_branch
    %21 = sbr.rel (%p19) target = $region8
  $region5: #{tpu_custom_call.1} parent=0 // loop_body
    %s23 = ssub.s32 %s18, 1
    %s24 = ssub.s32 %s18, 2
    %s25 = sadd.s32 %s18, 1
    %s26 = ssub.s32 %s18, %s25
    %p27 = scmp.eq.s32.totalorder %s26, 0
    %s29 = sadd.s32 %s28, 1
    %s30 = scalar_select %p27, %s28, %s29
    %p33 = pneg %p27
    %p34 = scmp.eq.s32.totalorder %s18, 1
    %p35 = por %p33, %p34
    %p36 = scmp.ne.s32.totalorder %s28, %s31
    %p37 = scmp.eq.s32.totalorder %s18, 0
    %p38 = por %p36, %p37
    %p39 = scmp.ne.s32.totalorder %s28, %s31
    %p40 = scmp.eq.s32.totalorder %s23, 1
    %p41 = por %p39, %p40
    %p42 = scmp.ne.s32.totalorder %s31, %s32
    %p43 = scmp.eq.s32.totalorder %s23, 0
    %p44 = por %p42, %p43
    %p45 = scmp.ne.s32.totalorder %s31, %s32
    %p46 = scmp.eq.s32.totalorder %s24, 1
    %p47 = por %p45, %p46
    %p49 = scmp.ne.s32.totalorder %s32, %s48
    %p50 = scmp.eq.s32.totalorder %s24, 0
    %p51 = por %p49, %p50
    %s53 = sadd.s32 %s52, 1
    %p56 = scmp.eq.s32.totalorder %s18, 1
    %p57 = scmp.ne.s32.totalorder %s52, %s54
    %p58 = scmp.eq.s32.totalorder %s18, 0
    %p59 = por %p57, %p58
    %p60 = scmp.ne.s32.totalorder %s52, %s54
    %p61 = scmp.eq.s32.totalorder %s23, 1
    %p62 = por %p60, %p61
    %p63 = scmp.ne.s32.totalorder %s54, %s55
    %p64 = scmp.eq.s32.totalorder %s23, 0
    %p65 = por %p63, %p64
    %p66 = scmp.ne.s32.totalorder %s54, %s55
    %p67 = scmp.eq.s32.totalorder %s24, 1
    %p68 = por %p66, %p67
    %p70 = scmp.ne.s32.totalorder %s55, %s69
    %p71 = scmp.eq.s32.totalorder %s24, 0
    %p72 = por %p70, %p71
    %s74 = sadd.s32 %s73, 1
    %p77 = scmp.eq.s32.totalorder %s18, 1
    %p78 = scmp.ne.s32.totalorder %s73, %s75
    %p79 = scmp.eq.s32.totalorder %s18, 0
    %p80 = por %p78, %p79
    %p81 = scmp.ne.s32.totalorder %s73, %s75
    %p82 = scmp.eq.s32.totalorder %s23, 1
    %p83 = por %p81, %p82
    %p84 = scmp.ne.s32.totalorder %s75, %s76
    %p85 = scmp.eq.s32.totalorder %s23, 0
    %p86 = por %p84, %p85
    %p87 = scmp.ne.s32.totalorder %s75, %s76
    %p88 = scmp.eq.s32.totalorder %s24, 1
    %p89 = por %p87, %p88
    %p91 = scmp.ne.s32.totalorder %s76, %s90
    %p92 = scmp.eq.s32.totalorder %s24, 0
    %p93 = por %p91, %p92
    %s95 = sadd.s32 %s94, 1
    %p98 = scmp.eq.s32.totalorder %s18, 1
    %p99 = scmp.ne.s32.totalorder %s94, %s96
    %p100 = scmp.eq.s32.totalorder %s18, 0
    %p101 = por %p99, %p100
    %p102 = scmp.ne.s32.totalorder %s94, %s96
    %p103 = scmp.eq.s32.totalorder %s23, 1
    %p104 = por %p102, %p103
    %p105 = scmp.ne.s32.totalorder %s96, %s97
    %p106 = scmp.eq.s32.totalorder %s23, 0
    %p107 = por %p105, %p106
    %p108 = scmp.ne.s32.totalorder %s96, %s97
    %p109 = scmp.eq.s32.totalorder %s24, 1
    %p110 = por %p108, %p109
    %p112 = scmp.ne.s32.totalorder %s97, %s111
    %p113 = scmp.eq.s32.totalorder %s24, 0
    %p114 = por %p112, %p113
    %s116 = sadd.s32 %s115, 1
    %p119 = scmp.eq.s32.totalorder %s18, 1
    %p120 = scmp.ne.s32.totalorder %s115, %s117
    %p121 = scmp.eq.s32.totalorder %s18, 0
    %p122 = por %p120, %p121
    %p123 = scmp.ne.s32.totalorder %s115, %s117
    %p124 = scmp.eq.s32.totalorder %s23, 1
    %p125 = por %p123, %p124
    %p126 = scmp.ne.s32.totalorder %s117, %s118
    %p127 = scmp.eq.s32.totalorder %s23, 0
    %p128 = por %p126, %p127
    %p129 = scmp.ne.s32.totalorder %s117, %s118
    %p130 = scmp.eq.s32.totalorder %s24, 1
    %p131 = por %p129, %p130
    %p133 = scmp.ne.s32.totalorder %s118, %s132
    %p134 = scmp.eq.s32.totalorder %s24, 0
    %p135 = por %p133, %p134
    %s137 = sadd.s32 %s136, 1
    %p140 = scmp.eq.s32.totalorder %s18, 1
    %p141 = scmp.ne.s32.totalorder %s136, %s138
    %p142 = scmp.eq.s32.totalorder %s18, 0
    %p143 = por %p141, %p142
    %p144 = scmp.ne.s32.totalorder %s136, %s138
    %p145 = scmp.eq.s32.totalorder %s23, 1
    %p146 = por %p144, %p145
    %p147 = scmp.ne.s32.totalorder %s138, %s139
    %p148 = scmp.eq.s32.totalorder %s23, 0
    %p149 = por %p147, %p148
    %p150 = scmp.ne.s32.totalorder %s138, %s139
    %p151 = scmp.eq.s32.totalorder %s24, 1
    %p152 = por %p150, %p151
    %p154 = scmp.ne.s32.totalorder %s139, %s153
    %p155 = scmp.eq.s32.totalorder %s24, 0
    %p156 = por %p154, %p155
    %s158 = sadd.s32 %s157, 1
    %p161 = scmp.eq.s32.totalorder %s18, 1
    %p162 = scmp.ne.s32.totalorder %s157, %s159
    %p163 = scmp.eq.s32.totalorder %s18, 0
    %p164 = por %p162, %p163
    %p165 = scmp.ne.s32.totalorder %s157, %s159
    %p166 = scmp.eq.s32.totalorder %s23, 1
    %p167 = por %p165, %p166
    %p168 = scmp.ne.s32.totalorder %s159, %s160
    %p169 = scmp.eq.s32.totalorder %s23, 0
    %p170 = por %p168, %p169
    %p171 = scmp.ne.s32.totalorder %s159, %s160
    %p172 = scmp.eq.s32.totalorder %s24, 1
    %p173 = por %p171, %p172
    %p175 = scmp.ne.s32.totalorder %s160, %s174
    %p176 = scmp.eq.s32.totalorder %s24, 0
    %p177 = por %p175, %p176
    %s179 = sadd.s32 %s178, 1
    %p182 = scmp.eq.s32.totalorder %s18, 1
    %p183 = scmp.ne.s32.totalorder %s178, %s180
    %p184 = scmp.eq.s32.totalorder %s18, 0
    %p185 = por %p183, %p184
    %p186 = scmp.ne.s32.totalorder %s178, %s180
    %p187 = scmp.eq.s32.totalorder %s23, 1
    %p188 = por %p186, %p187
    %p189 = scmp.ne.s32.totalorder %s180, %s181
    %p190 = scmp.eq.s32.totalorder %s23, 0
    %p191 = por %p189, %p190
    %p192 = scmp.ne.s32.totalorder %s180, %s181
    %p193 = scmp.eq.s32.totalorder %s24, 1
    %p194 = por %p192, %p193
    %p196 = scmp.ne.s32.totalorder %s181, %s195
    %p197 = scmp.eq.s32.totalorder %s24, 0
    %p198 = por %p196, %p197
    %s200 = sadd.s32 %s199, 1
    %p203 = scmp.eq.s32.totalorder %s18, 1
    %p204 = scmp.ne.s32.totalorder %s199, %s201
    %p205 = scmp.eq.s32.totalorder %s18, 0
    %p206 = por %p204, %p205
    %p207 = scmp.ne.s32.totalorder %s199, %s201
    %p208 = scmp.eq.s32.totalorder %s23, 1
    %p209 = por %p207, %p208
    %p210 = scmp.ne.s32.totalorder %s201, %s202
    %p211 = scmp.eq.s32.totalorder %s23, 0
    %p212 = por %p210, %p211
    %p213 = scmp.ne.s32.totalorder %s201, %s202
    %p214 = scmp.eq.s32.totalorder %s24, 1
    %p215 = por %p213, %p214
    %p217 = scmp.ne.s32.totalorder %s202, %s216
    %p218 = scmp.eq.s32.totalorder %s24, 0
    %p219 = por %p217, %p218
    %s221 = sadd.s32 %s220, 1
    %p224 = scmp.eq.s32.totalorder %s18, 1
    %p225 = scmp.ne.s32.totalorder %s220, %s222
    %p226 = scmp.eq.s32.totalorder %s18, 0
    %p227 = por %p225, %p226
    %p228 = scmp.ne.s32.totalorder %s220, %s222
    %p229 = scmp.eq.s32.totalorder %s23, 1
    %p230 = por %p228, %p229
    %p231 = scmp.ne.s32.totalorder %s222, %s223
    %p232 = scmp.eq.s32.totalorder %s23, 0
    %p233 = por %p231, %p232
    %p234 = scmp.ne.s32.totalorder %s222, %s223
    %p235 = scmp.eq.s32.totalorder %s24, 1
    %p236 = por %p234, %p235
    %p238 = scmp.ne.s32.totalorder %s223, %s237
    %p239 = scmp.eq.s32.totalorder %s24, 0
    %p240 = por %p238, %p239
    %s242 = sadd.s32 %s241, 1
    %p245 = scmp.eq.s32.totalorder %s18, 1
    %p246 = scmp.ne.s32.totalorder %s241, %s243
    %p247 = scmp.eq.s32.totalorder %s18, 0
    %p248 = por %p246, %p247
    %p249 = scmp.ne.s32.totalorder %s241, %s243
    %p250 = scmp.eq.s32.totalorder %s23, 1
    %p251 = por %p249, %p250
    %p252 = scmp.ne.s32.totalorder %s243, %s244
    %p253 = scmp.eq.s32.totalorder %s23, 0
    %p254 = por %p252, %p253
    %p255 = scmp.ne.s32.totalorder %s243, %s244
    %p256 = scmp.eq.s32.totalorder %s24, 1
    %p257 = por %p255, %p256
    %p259 = scmp.ne.s32.totalorder %s244, %s258
    %p260 = scmp.eq.s32.totalorder %s24, 0
    %p261 = por %p259, %p260
    %s263 = sadd.s32 %s262, 1
    %p266 = scmp.eq.s32.totalorder %s18, 1
    %p267 = scmp.ne.s32.totalorder %s262, %s264
    %p268 = scmp.eq.s32.totalorder %s18, 0
    %p269 = por %p267, %p268
    %p270 = scmp.ne.s32.totalorder %s262, %s264
    %p271 = scmp.eq.s32.totalorder %s23, 1
    %p272 = por %p270, %p271
    %p273 = scmp.ne.s32.totalorder %s264, %s265
    %p274 = scmp.eq.s32.totalorder %s23, 0
    %p275 = por %p273, %p274
    %p276 = scmp.ne.s32.totalorder %s264, %s265
    %p277 = scmp.eq.s32.totalorder %s24, 1
    %p278 = por %p276, %p277
    %p280 = scmp.ne.s32.totalorder %s265, %s279
    %p281 = scmp.eq.s32.totalorder %s24, 0
    %p282 = por %p280, %p281
    %s283 = ssub.s32 %s18, %s25
    %p284 = scmp.eq.s32.totalorder %s283, 0
    %s286 = sadd.s32 %s285, 1
    %s287 = scalar_select %p284, %s285, %s286
    %p290 = pneg %p284
    %p291 = scmp.eq.s32.totalorder %s18, 1
    %p292 = por %p290, %p291
    %p293 = scmp.ne.s32.totalorder %s285, %s288
    %p294 = scmp.eq.s32.totalorder %s18, 0
    %p295 = por %p293, %p294
    %p296 = scmp.ne.s32.totalorder %s285, %s288
    %p297 = scmp.eq.s32.totalorder %s23, 1
    %p298 = por %p296, %p297
    %p299 = scmp.ne.s32.totalorder %s288, %s289
    %p300 = scmp.eq.s32.totalorder %s23, 0
    %p301 = por %p299, %p300
    %p302 = scmp.ne.s32.totalorder %s288, %s289
    %p303 = scmp.eq.s32.totalorder %s24, 1
    %p304 = por %p302, %p303
    %p306 = scmp.ne.s32.totalorder %s289, %s305
    %p307 = scmp.eq.s32.totalorder %s24, 0
    %p308 = por %p306, %p307
    %p309 = scmp.le.s32.totalorder 1, %s18
    %p310 = scmp.lt.s32.totalorder %s18, 3
    %p311 = pnand %p309, %p310
    %p312 = pneg %p311
    // Predicated region
    $region9: #{tpu_custom_call.1} parent=5 // pred_check
      _
    $region10: #{tpu_custom_call.1} parent=5 // pred_check_branch
      %314 = sbr.rel (%p311) target = $region12
    $region11: #{tpu_custom_call.1} parent=5 // pred_region
      %s315 = ssub.s32 %s18, 1
      // Predicated region
      $region13: #{tpu_custom_call.1} parent=11 // pred_check
        %p316 = pneg %p65
      $region14: #{tpu_custom_call.1} parent=11 // pred_check_branch
        %318 = sbr.rel (%p316) target = $region16
      $region15: #{tpu_custom_call.1} parent=11 // pred_region
        _
      $region16: #{tpu_custom_call.1} parent=11 // pred_fallthru
        _
      // Predicated region
      $region17: #{tpu_custom_call.1} parent=11 // pred_check
        %p319 = pneg %p86
      $region18: #{tpu_custom_call.1} parent=11 // pred_check_branch
        %321 = sbr.rel (%p319) target = $region20
      $region19: #{tpu_custom_call.1} parent=11 // pred_region
        _
      $region20: #{tpu_custom_call.1} parent=11 // pred_fallthru
        _
      // Predicated region
      $region21: #{tpu_custom_call.1} parent=11 // pred_check
        %p322 = pneg %p107
      $region22: #{tpu_custom_call.1} parent=11 // pred_check_branch
        %324 = sbr.rel (%p322) target = $region24
      $region23: #{tpu_custom_call.1} parent=11 // pred_region
        _
      $region24: #{tpu_custom_call.1} parent=11 // pred_fallthru
        _
      // Predicated region
      $region25: #{tpu_custom_call.1} parent=11 // pred_check
        %p325 = pneg %p128
      $region26: #{tpu_custom_call.1} parent=11 // pred_check_branch
        %327 = sbr.rel (%p325) target = $region28
      $region27: #{tpu_custom_call.1} parent=11 // pred_region
        _
      $region28: #{tpu_custom_call.1} parent=11 // pred_fallthru
        _
      // Predicated region
      $region29: #{tpu_custom_call.1} parent=11 // pred_check
        %p328 = pneg %p149
      $region30: #{tpu_custom_call.1} parent=11 // pred_check_branch
        %330 = sbr.rel (%p328) target = $region32
      $region31: #{tpu_custom_call.1} parent=11 // pred_region
        _
      $region32: #{tpu_custom_call.1} parent=11 // pred_fallthru
        _
      // Predicated region
      $region33: #{tpu_custom_call.1} parent=11 // pred_check
        %p331 = pneg %p170
      $region34: #{tpu_custom_call.1} parent=11 // pred_check_branch
        %333 = sbr.rel (%p331) target = $region36
      $region35: #{tpu_custom_call.1} parent=11 // pred_region
        _
      $region36: #{tpu_custom_call.1} parent=11 // pred_fallthru
        _
      // Predicated region
      $region37: #{tpu_custom_call.1} parent=11 // pred_check
        %p334 = pneg %p191
      $region38: #{tpu_custom_call.1} parent=11 // pred_check_branch
        %336 = sbr.rel (%p334) target = $region40
      $region39: #{tpu_custom_call.1} parent=11 // pred_region
        _
      $region40: #{tpu_custom_call.1} parent=11 // pred_fallthru
        _
      // Predicated region
      $region41: #{tpu_custom_call.1} parent=11 // pred_check
        %p337 = pneg %p212
      $region42: #{tpu_custom_call.1} parent=11 // pred_check_branch
        %339 = sbr.rel (%p337) target = $region44
      $region43: #{tpu_custom_call.1} parent=11 // pred_region
        _
      $region44: #{tpu_custom_call.1} parent=11 // pred_fallthru
        _
      // Predicated region
      $region45: #{tpu_custom_call.1} parent=11 // pred_check
        %p340 = pneg %p233
      $region46: #{tpu_custom_call.1} parent=11 // pred_check_branch
        %342 = sbr.rel (%p340) target = $region48
      $region47: #{tpu_custom_call.1} parent=11 // pred_region
        _
      $region48: #{tpu_custom_call.1} parent=11 // pred_fallthru
        _
      // Predicated region
      $region49: #{tpu_custom_call.1} parent=11 // pred_check
        %p343 = pneg %p254
      $region50: #{tpu_custom_call.1} parent=11 // pred_check_branch
        %345 = sbr.rel (%p343) target = $region52
      $region51: #{tpu_custom_call.1} parent=11 // pred_region
        _
      $region52: #{tpu_custom_call.1} parent=11 // pred_fallthru
        _
      // Predicated region
      $region53: #{tpu_custom_call.1} parent=11 // pred_check
        %p346 = pneg %p275
      $region54: #{tpu_custom_call.1} parent=11 // pred_check_branch
        %348 = sbr.rel (%p346) target = $region56
      $region55: #{tpu_custom_call.1} parent=11 // pred_region
        _
      $region56: #{tpu_custom_call.1} parent=11 // pred_fallthru
        _
    $region12: #{tpu_custom_call.1} parent=5 // pred_fallthru
      _
    %p349 = scmp.lt.s32.totalorder %s18, 2
    // Predicated region
    $region57: #{tpu_custom_call.1} parent=5 // pred_check
      %p350 = pneg %p349
    $region58: #{tpu_custom_call.1} parent=5 // pred_check_branch
      %352 = sbr.rel (%p350) target = $region60
    $region59: #{tpu_custom_call.1} parent=5 // pred_region
      // Predicated region
      $region61: #{tpu_custom_call.1} parent=59 // pred_check
        %p353 = pneg %p38
      $region62: #{tpu_custom_call.1} parent=59 // pred_check_branch
        %355 = sbr.rel (%p353) target = $region64
      $region63: #{tpu_custom_call.1} parent=59 // pred_region
        %p356 = scmp.lt.s32.totalorder %s18, 1
        %s357 = scalar_select %p356, %s18, 1
        %s358 = smul.addr %s357, 41
        %s359 = smul.addr %s358, 8
        %s360 = scalar_lea.vmem %s0, %s359
      $region64: #{tpu_custom_call.1} parent=59 // pred_fallthru
        _
    $region60: #{tpu_custom_call.1} parent=5 // pred_fallthru
      _
    %p361 = scmp.le.s32.totalorder 1, %s18
    %p362 = scmp.lt.s32.totalorder %s18, 3
    %p363 = pnand %p361, %p362
    %p364 = pneg %p363
    // Predicated region
    $region65: #{tpu_custom_call.1} parent=5 // pred_check
      _
    $region66: #{tpu_custom_call.1} parent=5 // pred_check_branch
      %366 = sbr.rel (%p363) target = $region68
    $region67: #{tpu_custom_call.1} parent=5 // pred_region
      %s367 = ssub.s32 %s18, 1
      %p368 = scmp.lt.s32.totalorder %s23, 1
      %s369 = scalar_select %p368, %s23, 1
      %s370 = smul.addr %s369, 41
      %s371 = smul.addr %s370, 8
      %s372 = scalar_lea.vmem %s0, %s371
      %p373 = pneg %p44
      %p374 = pneg %p41
      %p375 = pneg %p65
      %p376 = pneg %p62
      %p377 = pneg %p86
      %p378 = pneg %p83
      %p379 = pneg %p107
      %p380 = pneg %p104
      %p381 = pneg %p128
      %p382 = pneg %p125
      %p383 = pneg %p149
      %p384 = pneg %p146
      %p385 = pneg %p170
      %p386 = pneg %p167
      %p387 = pneg %p191
      %p388 = pneg %p188
      %p389 = pneg %p212
      %p390 = pneg %p209
      %p391 = pneg %p233
      %p392 = pneg %p230
      %p393 = pneg %p254
      %p394 = pneg %p251
      %p395 = pneg %p275
      %p396 = pneg %p272
      %p397 = pneg %p301
      %p398 = pneg %p298
      %p399 = scmp.lt.s32.totalorder %s23, 1
      %s400 = scalar_select %p399, %s23, 1
      %s401 = smul.addr %s400, 41
      %s402 = smul.addr %s401, 8
      %s403 = scalar_lea.vmem %s12, %s402
      %p404 = scmp.lt.s32.totalorder %s23, 1
      %s405 = scalar_select %p404, %s23, 1
      %s406 = smul.addr %s405, 41
      %s407 = smul.addr %s406, 8
      %s408 = scalar_lea.vmem %s0, %s407
      %p409 = scmp.lt.s32.totalorder %s23, 1
      %s410 = scalar_select %p409, %s23, 1
      %s411 = smul.addr %s410, 41
      %s412 = smul.addr %s411, 8
      %s413 = scalar_lea.vmem %s12, %s412
      %vm414 = vcmask 130048
      %415 = vst.msk [vmem:[#allocation2] sm:$0xff] %vm414, 0.0
      %416 = vst.msk [vmem:[#allocation2 + $0x8] sm:$0xff] %vm414, 0.0
      %417 = vst.msk [vmem:[#allocation2 + $0x10] sm:$0xff] %vm414, 0.0
      %vm418 = vcmask 123904
      %419 = vst.msk [vmem:[#allocation2 + $0x18] sm:$0x3] %vm418, 0.0
      %420 = vst.msk [vmem:[#allocation2 + $0x13a] sm:$0xff] %vm414, 0.0
      %421 = vst.msk [vmem:[#allocation2 + $0x142] sm:$0xff] %vm414, 0.0
      %422 = vst.msk [vmem:[#allocation2 + $0x14a] sm:$0xff] %vm414, 0.0
      %423 = vst.msk [vmem:[#allocation2 + $0x152] sm:$0x3] %vm418, 0.0
      %424 = vst.msk [vmem:[#allocation3] sm:$0xff] %vm414, 0.0
      %425 = vst.msk [vmem:[#allocation3 + $0x8] sm:$0xff] %vm414, 0.0
      %426 = vst.msk [vmem:[#allocation3 + $0x10] sm:$0xff] %vm414, 0.0
      %427 = vst.msk [vmem:[#allocation3 + $0x18] sm:$0x3] %vm418, 0.0
      %428 = vst.msk [vmem:[#allocation3 + $0x13a] sm:$0xff] %vm414, 0.0
      %429 = vst.msk [vmem:[#allocation3 + $0x142] sm:$0xff] %vm414, 0.0
      %430 = vst.msk [vmem:[#allocation3 + $0x14a] sm:$0xff] %vm414, 0.0
      %431 = vst.msk [vmem:[#allocation3 + $0x152] sm:$0x3] %vm418, 0.0
      %432 = vst.msk [vmem:[#allocation4] sm:$0xff] %vm414, 0.0
      %433 = vst.msk [vmem:[#allocation4 + $0x8] sm:$0xff] %vm414, 0.0
      %434 = vst.msk [vmem:[#allocation4 + $0x10] sm:$0xff] %vm414, 0.0
      %435 = vst.msk [vmem:[#allocation4 + $0x18] sm:$0x3] %vm418, 0.0
      %436 = vst.msk [vmem:[#allocation4 + $0x13a] sm:$0xff] %vm414, 0.0
      %437 = vst.msk [vmem:[#allocation4 + $0x142] sm:$0xff] %vm414, 0.0
      %438 = vst.msk [vmem:[#allocation4 + $0x14a] sm:$0xff] %vm414, 0.0
      %439 = vst.msk [vmem:[#allocation4 + $0x152] sm:$0x3] %vm418, 0.0
      %v440 = vld [vmem:[%s408] sm:$0xff]
      %v441 = vld [vmem:[%s408 + $0x8] sm:$0xff]
      %v442 = vld [vmem:[%s408 + $0x10] sm:$0xff]
      %v443 = vld [vmem:[%s408 + $0x18] sm:$0xff]
      %v444 = vld [vmem:[%s408 + $0x20] sm:$0xff]
      %v445 = vld [vmem:[%s408 + $0x28] sm:$0xff]
      %v446 = vld [vmem:[%s408 + $0x30] sm:$0xff]
      %v447 = vld [vmem:[%s408 + $0x38] sm:$0xff]
      %v448 = vld [vmem:[%s408 + $0x40] sm:$0xff]
      %v449 = vld [vmem:[%s408 + $0x48] sm:$0xff]
      %v450 = vld [vmem:[%s408 + $0x50] sm:$0xff]
      %v451 = vld [vmem:[%s408 + $0x58] sm:$0xff]
      %v452 = vld [vmem:[%s408 + $0x60] sm:$0xff]
      %v453 = vld [vmem:[%s408 + $0x68] sm:$0xff]
      %v454 = vld [vmem:[%s408 + $0x70] sm:$0xff]
      %v455 = vld [vmem:[%s408 + $0x78] sm:$0xff]
      %v456 = vld [vmem:[%s408 + $0x80] sm:$0xff]
      %v457 = vld [vmem:[%s408 + $0x88] sm:$0xff]
      %v458 = vld [vmem:[%s408 + $0x90] sm:$0xff]
      %v459 = vld [vmem:[%s408 + $0x98] sm:$0xff]
      %v460 = vld [vmem:[%s408 + $0xa0] sm:$0xff]
      %v461 = vld [vmem:[%s408 + $0xa8] sm:$0xff]
      %v462 = vld [vmem:[%s408 + $0xb0] sm:$0xff]
      %v463 = vld [vmem:[%s408 + $0xb8] sm:$0xff]
      %v464 = vld [vmem:[%s408 + $0xc0] sm:$0xff]
      %v465 = vld [vmem:[%s408 + $0xc8] sm:$0xff]
      %v466 = vld [vmem:[%s408 + $0xd0] sm:$0xff]
      %v467 = vld [vmem:[%s408 + $0xd8] sm:$0xff]
      %v468 = vld [vmem:[%s408 + $0xe0] sm:$0xff]
      %v469 = vld [vmem:[%s408 + $0xe8] sm:$0xff]
      %v470 = vld [vmem:[%s408 + $0xf0] sm:$0xff]
      %v471 = vld [vmem:[%s408 + $0xf8] sm:$0xff]
      %v472 = vld [vmem:[%s408 + $0x100] sm:$0xff]
      %v473 = vld [vmem:[%s408 + $0x108] sm:$0xff]
      %v474 = vld [vmem:[%s408 + $0x110] sm:$0xff]
      %v475 = vld [vmem:[%s408 + $0x118] sm:$0xff]
      %v476 = vld [vmem:[%s408 + $0x120] sm:$0xff]
      %v477 = vld [vmem:[%s408 + $0x128] sm:$0xff]
      %v478 = vld [vmem:[%s408 + $0x130] sm:$0xff]
      %v479 = vld [vmem:[%s408 + $0x138] sm:$0xff]
      %v480 = vld [vmem:[%s408 + $0x140] sm:$0xf]
      %vm481 = vcmask 64512
      %482 = vst.msk [vmem:[#allocation2 + $0x8] sm:$0xff] %vm481, %v440
      %483 = vst.msk [vmem:[#allocation2 + $0x10] sm:$0xff] %vm481, %v441
      %484 = vst.msk [vmem:[#allocation2 + $0x18] sm:$0xff] %vm481, %v442
      %485 = vst.msk [vmem:[#allocation2 + $0x20] sm:$0xff] %vm481, %v443
      %486 = vst.msk [vmem:[#allocation2 + $0x28] sm:$0xff] %vm481, %v444
      %487 = vst.msk [vmem:[#allocation2 + $0x30] sm:$0xff] %vm481, %v445
      %488 = vst.msk [vmem:[#allocation2 + $0x38] sm:$0xff] %vm481, %v446
      %489 = vst.msk [vmem:[#allocation2 + $0x40] sm:$0xff] %vm481, %v447
      %490 = vst.msk [vmem:[#allocation2 + $0x48] sm:$0xff] %vm481, %v448
      %491 = vst.msk [vmem:[#allocation2 + $0x50] sm:$0xff] %vm481, %v449
      %492 = vst.msk [vmem:[#allocation2 + $0x58] sm:$0xff] %vm481, %v450
      %493 = vst.msk [vmem:[#allocation2 + $0x60] sm:$0xff] %vm481, %v451
      %494 = vst.msk [vmem:[#allocation2 + $0x68] sm:$0xff] %vm481, %v452
      %495 = vst.msk [vmem:[#allocation2 + $0x70] sm:$0xff] %vm481, %v453
      %496 = vst.msk [vmem:[#allocation2 + $0x78] sm:$0xff] %vm481, %v454
      %497 = vst.msk [vmem:[#allocation2 + $0x80] sm:$0xff] %vm481, %v455
      %498 = vst.msk [vmem:[#allocation2 + $0x88] sm:$0xff] %vm481, %v456
      %499 = vst.msk [vmem:[#allocation2 + $0x90] sm:$0xff] %vm481, %v457
      %500 = vst.msk [vmem:[#allocation2 + $0x98] sm:$0xff] %vm481, %v458
      %501 = vst.msk [vmem:[#allocation2 + $0xa0] sm:$0xff] %vm481, %v459
      %502 = vst.msk [vmem:[#allocation2 + $0xa8] sm:$0xff] %vm481, %v460
      %503 = vst.msk [vmem:[#allocation2 + $0xb0] sm:$0xff] %vm481, %v461
      %504 = vst.msk [vmem:[#allocation2 + $0xb8] sm:$0xff] %vm481, %v462
      %505 = vst.msk [vmem:[#allocation2 + $0xc0] sm:$0xff] %vm481, %v463
      %506 = vst.msk [vmem:[#allocation2 + $0xc8] sm:$0xff] %vm481, %v464
      %507 = vst.msk [vmem:[#allocation2 + $0xd0] sm:$0xff] %vm481, %v465
      %508 = vst.msk [vmem:[#allocation2 + $0xd8] sm:$0xff] %vm481, %v466
      %509 = vst.msk [vmem:[#allocation2 + $0xe0] sm:$0xff] %vm481, %v467
      %510 = vst.msk [vmem:[#allocation2 + $0xe8] sm:$0xff] %vm481, %v468
      %511 = vst.msk [vmem:[#allocation2 + $0xf0] sm:$0xff] %vm481, %v469
      %512 = vst.msk [vmem:[#allocation2 + $0xf8] sm:$0xff] %vm481, %v470
      %513 = vst.msk [vmem:[#allocation2 + $0x100] sm:$0xff] %vm481, %v471
      %514 = vst.msk [vmem:[#allocation2 + $0x108] sm:$0xff] %vm481, %v472
      %515 = vst.msk [vmem:[#allocation2 + $0x110] sm:$0xff] %vm481, %v473
      %516 = vst.msk [vmem:[#allocation2 + $0x118] sm:$0xff] %vm481, %v474
      %517 = vst.msk [vmem:[#allocation2 + $0x120] sm:$0xff] %vm481, %v475
      %518 = vst.msk [vmem:[#allocation2 + $0x128] sm:$0xff] %vm481, %v476
      %519 = vst.msk [vmem:[#allocation2 + $0x130] sm:$0xff] %vm481, %v477
      %520 = vst.msk [vmem:[#allocation2 + $0x138] sm:$0xff] %vm481, %v478
      %521 = vst.msk [vmem:[#allocation2 + $0x140] sm:$0xff] %vm481, %v479
      %vm522 = vcmask 60416
      %523 = vst.msk [vmem:[#allocation2 + $0x148] sm:$0xf] %vm522, %v480
      %v524 = vld [vmem:[%s1] sm:$0xff]
      %v525 = vld [vmem:[%s1 + $0x8] sm:$0xff]
      %v526 = vld [vmem:[%s1 + $0x10] sm:$0xff]
      %v527 = vld [vmem:[%s1 + $0x18] sm:$0xff]
      %v528 = vld [vmem:[%s1 + $0x20] sm:$0xff]
      %v529 = vld [vmem:[%s1 + $0x28] sm:$0xff]
      %v530 = vld [vmem:[%s1 + $0x30] sm:$0xff]
      %v531 = vld [vmem:[%s1 + $0x38] sm:$0xff]
      %v532 = vld [vmem:[%s1 + $0x40] sm:$0xff]
      loop: start=0, step=1, limit=4
      $region69: #{tpu_custom_call.1} parent=67 // loop_pre_header
        _
      $region70: #{tpu_custom_call.1} parent=67 // loop_header
        %s534 = sphi 0, %s538
        %p535 = scmp.ge.s32.totalorder %s534, 4
      $region71: #{tpu_custom_call.1} parent=67 // loop_header_branch
        %537 = sbr.rel (%p535) target = $region75
      $region72: #{tpu_custom_call.1} parent=67 // loop_body
        %s539 = smul.u32 %s534, 4
        %s540 = sadd.s32 %s539, 1
        %s541 = smul.u32 %s540, 18
        %s542 = sadd.s32 %s541, 8
        %s543 = sadd.s32 %s541, 4294967285
        %s544 = scalar_lea.vmem [#allocation2], %s543
        %v545 = vld [vmem:[%s544] sm:$0xff]
        %v546 = vld [vmem:[%s544 + $0x8] sm:$0xff]
        %v547 = vld [vmem:[%s544 + $0x10] sm:$0xff]
        %v548 = vld [vmem:[%s544 + $0x18] sm:$0xff]
        %v549 = vld [vmem:[%s544 + $0x20] sm:$0xff]
        %v550 = vld [vmem:[%s544 + $0x28] sm:$0xff]
        %v551 = vld [vmem:[%s544 + $0x30] sm:$0xff]
        %v552 = vld [vmem:[%s544 + $0x38] sm:$0xff]
        %v553 = vld [vmem:[%s544 + $0x40] sm:$0xff]
        %v554 = vmax.f32 %v545, 0.0
        %v555 = vmax.f32 %v546, 0.0
        %v556 = vmax.f32 %v547, 0.0
        %v557 = vmax.f32 %v548, 0.0
        %v558 = vmax.f32 %v549, 0.0
        %v559 = vmax.f32 %v550, 0.0
        %v560 = vmax.f32 %v551, 0.0
        %v561 = vmax.f32 %v552, 0.0
        %v562 = vmax.f32 %v553, 0.0
        %v563 = vld [vmem:[%s2] sm:$0xff]
        %s564 = sadd.s32 %s541, 4294967286
        %s565 = scalar_lea.vmem [#allocation2], %s564
        %v566 = vld [vmem:[%s565] sm:$0xff]
        %v567 = vld [vmem:[%s565 + $0x8] sm:$0xff]
        %v568 = vld [vmem:[%s565 + $0x10] sm:$0xff]
        %v569 = vld [vmem:[%s565 + $0x18] sm:$0xff]
        %v570 = vld [vmem:[%s565 + $0x20] sm:$0xff]
        %v571 = vld [vmem:[%s565 + $0x28] sm:$0xff]
        %v572 = vld [vmem:[%s565 + $0x30] sm:$0xff]
        %v573 = vld [vmem:[%s565 + $0x38] sm:$0xff]
        %v574 = vld [vmem:[%s565 + $0x40] sm:$0xff]
        %v575 = vmax.f32 %v566, 0.0
        %v576 = vmax.f32 %v567, 0.0
        %v577 = vmax.f32 %v568, 0.0
        %v578 = vmax.f32 %v569, 0.0
        %v579 = vmax.f32 %v570, 0.0
        %v580 = vmax.f32 %v571, 0.0
        %v581 = vmax.f32 %v572, 0.0
        %v582 = vmax.f32 %v573, 0.0
        %v583 = vmax.f32 %v574, 0.0
        %s584 = scalar_lea.vmem %s2, 8
        %v585 = vld [vmem:[%s584] sm:$0xff]
        %v587 = vsel %vm481, %v575, 0
        %v590 = vsel %vm481, %v576, 0
        %v593 = vsel %vm481, %v577, 0
        %v596 = vsel %vm481, %v578, 0
        %v599 = vsel %vm481, %v579, 0
        %v602 = vsel %vm481, %v580, 0
        %v605 = vsel %vm481, %v581, 0
        %v608 = vsel %vm481, %v582, 0
        %v611 = vsel %vm481, %v583, 0
        %613 = vmatprep.subr.mxu0 0.0
        %614 = vmatpush1.msra.mxu0 %v585
        %615 = vmatprep.subr.mxu0 0.0
        %616 = vmatpush1.msra.mxu0 0.0
        %617 = vmatprep.subr.mxu0 0.0
        %618 = vmatpush1.msra.mxu0 0.0
        %619 = vmatprep.subr.mxu0 0.0
        %620 = vmatpush1.msra.mxu0 0.0
        %621 = vmatprep.subr.mxu0 0.0
        %622 = vmatpush1.msra.mxu0 0.0
        %623 = vmatprep.subr.mxu0 0.0
        %624 = vmatpush1.msra.mxu0 0.0
        %625 = vmatprep.subr.mxu0 0.0
        %626 = vmatpush1.msra.mxu0 0.0
        %627 = vmatprep.subr.mxu0 0.0
        %628 = vmatpush1.msra.mxu0 0.0
        %629 = vmatprep.subr.mxu0 0.0
        %630 = vmatpush1.msra.mxu0 0.0
        %631 = vmatprep.subr.mxu0 0.0
        %632 = vmatpush1.msra.mxu0 0.0
        %633 = vmatprep.subr.mxu0 0.0
        %634 = vmatpush1.msra.mxu0 0.0
        %635 = vmatprep.subr.mxu0 0.0
        %636 = vmatpush1.msra.mxu0 0.0
        %637 = vmatprep.subr.mxu0 0.0
        %638 = vmatpush1.msra.mxu0 0.0
        %639 = vmatprep.subr.mxu0 0.0
        %640 = vmatpush1.msra.mxu0 0.0
        %641 = vmatprep.subr.mxu0 0.0
        %642 = vmatpush1.msra.mxu0 0.0
        %643 = vmatprep.subr.mxu0 0.0
        %644 = vmatpush1.msra.mxu0 0.0
        %645 = vmatprep.subr.mxu0 0.0
        %646 = vmatpush1.msra.mxu0 0.0
        %647 = vmatprep.subr.mxu0 0.0
        %648 = vmatpush1.msra.mxu0 0.0
        %649 = vmatprep.subr.mxu0 0.0
        %650 = vmatpush1.msra.mxu0 0.0
        %651 = vmatprep.subr.mxu0 0.0
        %652 = vmatpush1.msra.mxu0 0.0
        %653 = vmatprep.subr.mxu0 0.0
        %654 = vmatpush1.msra.mxu0 0.0
        %655 = vmatprep.subr.mxu0 0.0
        %656 = vmatpush1.msra.mxu0 0.0
        %657 = vmatprep.subr.mxu0 0.0
        %658 = vmatpush1.msra.mxu0 0.0
        %659 = vmatprep.subr.mxu0 0.0
        %660 = vmatpush1.msra.mxu0 0.0
        %661 = vmatprep.subr.mxu0 0.0
        %662 = vmatpush1.msra.mxu0 0.0
        %663 = vmatprep.subr.mxu0 0.0
        %664 = vmatpush1.msra.mxu0 0.0
        %665 = vmatprep.subr.mxu0 0.0
        %666 = vmatpush1.msra.mxu0 0.0
        %667 = vmatprep.subr.mxu0 0.0
        %668 = vmatpush1.msra.mxu0 0.0
        %669 = vmatprep.subr.mxu0 0.0
        %670 = vmatpush1.msra.mxu0 0.0
        %671 = vmatprep.subr.mxu0 0.0
        %672 = vmatpush1.msra.mxu0 0.0
        %673 = vmatprep.subr.mxu0 0.0
        %674 = vmatpush1.msra.mxu0 0.0
        %675 = vmatprep.subr.mxu0 0.0
        %676 = vmatpush1.msra.mxu0 0.0
        %677 = vmatprep.mubr.f32.mxu0 0.0
        %678 = vmatmul.mubr.f32.gmra.mrb[0].mxu0 %v587
        %v679 = vpop.f32.mrb[0].mxu0
        %v680 = vadd.f32 0.0, %v679
        %v681 = vpop.f32.mrb[0].mxu0
        %682 = vmatprep.mubr.f32.mxu0 0.0
        %683 = vmatmul.mubr.f32.gmra.mrb[0].mxu0 %v590
        %v684 = vpop.f32.mrb[0].mxu0
        %v685 = vadd.f32 0.0, %v684
        %v686 = vpop.f32.mrb[0].mxu0
        %687 = vmatprep.mubr.f32.mxu0 0.0
        %688 = vmatmul.mubr.f32.gmra.mrb[0].mxu0 %v593
        %v689 = vpop.f32.mrb[0].mxu0
        %v690 = vadd.f32 0.0, %v689
        %v691 = vpop.f32.mrb[0].mxu0
        %692 = vmatprep.mubr.f32.mxu0 0.0
        %693 = vmatmul.mubr.f32.gmra.mrb[0].mxu0 %v596
        %v694 = vpop.f32.mrb[0].mxu0
        %v695 = vadd.f32 0.0, %v694
        %v696 = vpop.f32.mrb[0].mxu0
        %697 = vmatprep.mubr.f32.mxu0 0.0
        %698 = vmatmul.mubr.f32.gmra.mrb[0].mxu0 %v599
        %v699 = vpop.f32.mrb[0].mxu0
        %v700 = vadd.f32 0.0, %v699
        %v701 = vpop.f32.mrb[0].mxu0
        %702 = vmatprep.mubr.f32.mxu0 0.0
        %703 = vmatmul.mubr.f32.gmra.mrb[0].mxu0 %v602
        %v704 = vpop.f32.mrb[0].mxu0
        %v705 = vadd.f32 0.0, %v704
        %v706 = vpop.f32.mrb[0].mxu0
        %707 = vmatprep.mubr.f32.mxu0 0.0
        %708 = vmatmul.mubr.f32.gmra.mrb[0].mxu0 %v605
        %v709 = vpop.f32.mrb[0].mxu0
        %v710 = vadd.f32 0.0, %v709
        %v711 = vpop.f32.mrb[0].mxu0
        %712 = vmatprep.mubr.f32.mxu0 0.0
        %713 = vmatmul.mubr.f32.gmra.mrb[0].mxu0 %v608
        %v714 = vpop.f32.mrb[0].mxu0
        %v715 = vadd.f32 0.0, %v714
        %v716 = vpop.f32.mrb[0].mxu0
        %717 = vmatprep.mubr.f32.mxu0 0.0
        %718 = vmatmul.mubr.f32.gmra.mrb[0].mxu0 %v611
        %v719 = vpop.f32.mrb[0].mxu0
        %v720 = vadd.f32 0.0, %v719
        %v721 = vpop.f32.mrb[0].mxu0
        %722 = vdwg.mxu0
        %v724 = vsel %vm481, %v554, 0
        %v727 = vsel %vm481, %v555, 0
        %v730 = vsel %vm481, %v556, 0
        %v733 = vsel %vm481, %v557, 0
        %v736 = vsel %vm481, %v558, 0
        %v739 = vsel %vm481, %v559, 0
        %v742 = vsel %vm481, %v560, 0
        %v745 = vsel %vm481, %v561, 0
        %v748 = vsel %vm481, %v562, 0
        %750 = vmatprep.subr.mxu0 0.0
        %751 = vmatpush1.msra.mxu0 %v563
        %752 = vmatprep.subr.mxu0 0.0
        %753 = vmatpush1.msra.mxu0 0.0
        %754 = vmatprep.subr.mxu0 0.0
        %755 = vmatpush1.msra.mxu0 0.0
        %756 = vmatprep.subr.mxu0 0.0
        %757 = vmatpush1.msra.mxu0 0.0
        %758 = vmatprep.subr.mxu0 0.0
        %759 = vmatpush1.msra.mxu0 0.0
        %760 = vmatprep.subr.mxu0 0.0
        %761 = vmatpush1.msra.mxu0 0.0
        %762 = vmatprep.subr.mxu0 0.0
        %763 = vmatpush1.msra.mxu0 0.0
        %764 = vmatprep.subr.mxu0 0.0
        %765 = vmatpush1.msra.mxu0 0.0
        %766 = vmatprep.subr.mxu0 0.0
        %767 = vmatpush1.msra.mxu0 0.0
        %768 = vmatprep.subr.mxu0 0.0
        %769 = vmatpush1.msra.mxu0 0.0
        %770 = vmatprep.subr.mxu0 0.0
        %771 = vmatpush1.msra.mxu0 0.0
        %772 = vmatprep.subr.mxu0 0.0
        %773 = vmatpush1.msra.mxu0 0.0
        %774 = vmatprep.subr.mxu0 0.0
        %775 = vmatpush1.msra.mxu0 0.0
        %776 = vmatprep.subr.mxu0 0.0
        %777 = vmatpush1.msra.mxu0 0.0
        %778 = vmatprep.subr.mxu0 0.0
        %779 = vmatpush1.msra.mxu0 0.0
        %780 = vmatprep.subr.mxu0 0.0
        %781 = vmatpush1.msra.mxu0 0.0
        %782 = vmatprep.subr.mxu0 0.0
        %783 = vmatpush1.msra.mxu0 0.0
        %784 = vmatprep.subr.mxu0 0.0
        %785 = vmatpush1.msra.mxu0 0.0
        %786 = vmatprep.subr.mxu0 0.0
        %787 = vmatpush1.msra.mxu0 0.0
        %788 = vmatprep.subr.mxu0 0.0
        %789 = vmatpush1.msra.mxu0 0.0
        %790 = vmatprep.subr.mxu0 0.0
        %791 = vmatpush1.msra.mxu0 0.0
        %792 = vmatprep.subr.mxu0 0.0
        %793 = vmatpush1.msra.mxu0 0.0
        %794 = vmatprep.subr.mxu0 0.0
        %795 = vmatpush1.msra.mxu0 0.0
        %796 = vmatprep.subr.mxu0 0.0
        %797 = vmatpush1.msra.mxu0 0.0
        %798 = vmatprep.subr.mxu0 0.0
        %799 = vmatpush1.msra.mxu0 0.0
        %800 = vmatprep.subr.mxu0 0.0
        %801 = vmatpush1.msra.mxu0 0.0
        %802 = vmatprep.subr.mxu0 0.0
        %803 = vmatpush1.msra.mxu0 0.0
        %804 = vmatprep.subr.mxu0 0.0
        %805 = vmatpush1.msra.mxu0 0.0
        %806 = vmatprep.subr.mxu0 0.0
        %807 = vmatpush1.msra.mxu0 0.0
        %808 = vmatprep.subr.mxu0 0.0
        %809 = vmatpush1.msra.mxu0 0.0
        %810 = vmatprep.subr.mxu0 0.0
        %811 = vmatpush1.msra.mxu0 0.0
        %812 = vmatprep.subr.mxu0 0.0
        %813 = vmatpush1.msra.mxu0 0.0
        %814 = vmatprep.mubr.f32.mxu0 0.0
        %815 = vmatmul.mubr.f32.gmra.mrb[0].mxu0 %v724
        %v816 = vpop.f32.mrb[0].mxu0
        %v817 = vadd.f32 %v680, %v816
        %v818 = vpop.f32.mrb[0].mxu0
        %819 = vmatprep.mubr.f32.mxu0 0.0
        %820 = vmatmul.mubr.f32.gmra.mrb[0].mxu0 %v727
        %v821 = vpop.f32.mrb[0].mxu0
        %v822 = vadd.f32 %v685, %v821
        %v823 = vpop.f32.mrb[0].mxu0
        %824 = vmatprep.mubr.f32.mxu0 0.0
        %825 = vmatmul.mubr.f32.gmra.mrb[0].mxu0 %v730
        %v826 = vpop.f32.mrb[0].mxu0
        %v827 = vadd.f32 %v690, %v826
        %v828 = vpop.f32.mrb[0].mxu0
        %829 = vmatprep.mubr.f32.mxu0 0.0
        %830 = vmatmul.mubr.f32.gmra.mrb[0].mxu0 %v733
        %v831 = vpop.f32.mrb[0].mxu0
        %v832 = vadd.f32 %v695, %v831
        %v833 = vpop.f32.mrb[0].mxu0
        %834 = vmatprep.mubr.f32.mxu0 0.0
        %835 = vmatmul.mubr.f32.gmra.mrb[0].mxu0 %v736
        %v836 = vpop.f32.mrb[0].mxu0
        %v837 = vadd.f32 %v700, %v836
        %v838 = vpop.f32.mrb[0].mxu0
        %839 = vmatprep.mubr.f32.mxu0 0.0
        %840 = vmatmul.mubr.f32.gmra.mrb[0].mxu0 %v739
        %v841 = vpop.f32.mrb[0].mxu0
        %v842 = vadd.f32 %v705, %v841
        %v843 = vpop.f32.mrb[0].mxu0
        %844 = vmatprep.mubr.f32.mxu0 0.0
        %845 = vmatmul.mubr.f32.gmra.mrb[0].mxu0 %v742
        %v846 = vpop.f32.mrb[0].mxu0
        %v847 = vadd.f32 %v710, %v846
        %v848 = vpop.f32.mrb[0].mxu0
        %849 = vmatprep.mubr.f32.mxu0 0.0
        %850 = vmatmul.mubr.f32.gmra.mrb[0].mxu0 %v745
        %v851 = vpop.f32.mrb[0].mxu0
        %v852 = vadd.f32 %v715, %v851
        %v853 = vpop.f32.mrb[0].mxu0
        %854 = vmatprep.mubr.f32.mxu0 0.0
        %855 = vmatmul.mubr.f32.gmra.mrb[0].mxu0 %v748
        %v856 = vpop.f32.mrb[0].mxu0
        %v857 = vadd.f32 %v720, %v856
        %v858 = vpop.f32.mrb[0].mxu0
        %859 = vdwg.mxu0
        %s860 = sadd.s32 %s541, 4294967287
        %s861 = scalar_lea.vmem [#allocation2], %s860
        %v862 = vld [vmem:[%s861] sm:$0xff]
        %v863 = vld [vmem:[%s861 + $0x8] sm:$0xff]
        %v864 = vld [vmem:[%s861 + $0x10] sm:$0xff]
        %v865 = vld [vmem:[%s861 + $0x18] sm:$0xff]
        %v866 = vld [vmem:[%s861 + $0x20] sm:$0xff]
        %v867 = vld [vmem:[%s861 + $0x28] sm:$0xff]
        %v868 = vld [vmem:[%s861 + $0x30] sm:$0xff]
        %v869 = vld [vmem:[%s861 + $0x38] sm:$0xff]
        %v870 = vld [vmem:[%s861 + $0x40] sm:$0xff]
        %v871 = vmax.f32 %v862, 0.0
        %v872 = vmax.f32 %v863, 0.0
        %v873 = vmax.f32 %v864, 0.0
        %v874 = vmax.f32 %v865, 0.0
        %v875 = vmax.f32 %v866, 0.0
        %v876 = vmax.f32 %v867, 0.0
        %v877 = vmax.f32 %v868, 0.0
        %v878 = vmax.f32 %v869, 0.0
        %v879 = vmax.f32 %v870, 0.0
        %s880 = scalar_lea.vmem %s2, 16
        %v881 = vld [vmem:[%s880] sm:$0xff]
        %v883 = vsel %vm481, %v871, 0
        %v886 = vsel %vm481, %v872, 0
        %v889 = vsel %vm481, %v873, 0
        %v892 = vsel %vm481, %v874, 0
        %v895 = vsel %vm481, %v875, 0
        %v898 = vsel %vm481, %v876, 0
        %v901 = vsel %vm481, %v877, 0
        %v904 = vsel %vm481, %v878, 0
        %v907 = vsel %vm481, %v879, 0
        %909 = vmatprep.subr.mxu0 0.0
        %910 = vmatpush1.msra.mxu0 %v881
        %911 = vmatprep.subr.mxu0 0.0
        %912 = vmatpush1.msra.mxu0 0.0
        %913 = vmatprep.subr.mxu0 0.0
        %914 = vmatpush1.msra.mxu0 0.0
        %915 = vmatprep.subr.mxu0 0.0
        %916 = vmatpush1.msra.mxu0 0.0
        %917 = vmatprep.subr.mxu0 0.0
        %918 = vmatpush1.msra.mxu0 0.0
        %919 = vmatprep.subr.mxu0 0.0
        %920 = vmatpush1.msra.mxu0 0.0
        %921 = vmatprep.subr.mxu0 0.0
        %922 = vmatpush1.msra.mxu0 0.0
        %923 = vmatprep.subr.mxu0 0.0
        %924 = vmatpush1.msra.mxu0 0.0
        %925 = vmatprep.subr.mxu0 0.0
        %926 = vmatpush1.msra.mxu0 0.0
        %927 = vmatprep.subr.mxu0 0.0
        %928 = vmatpush1.msra.mxu0 0.0
        %929 = vmatprep.subr.mxu0 0.0
        %930 = vmatpush1.msra.mxu0 0.0
        %931 = vmatprep.subr.mxu0 0.0
        %932 = vmatpush1.msra.mxu0 0.0
        %933 = vmatprep.subr.mxu0 0.0
        %934 = vmatpush1.msra.mxu0 0.0
        %935 = vmatprep.subr.mxu0 0.0
        %936 = vmatpush1.msra.mxu0 0.0
        %937 = vmatprep.subr.mxu0 0.0
        %938 = vmatpush1.msra.mxu0 0.0
        %939 = vmatprep.subr.mxu0 0.0
        %940 = vmatpush1.msra.mxu0 0.0
        %941 = vmatprep.subr.mxu0 0.0
        %942 = vmatpush1.msra.mxu0 0.0
        %943 = vmatprep.subr.mxu0 0.0
        %944 = vmatpush1.msra.mxu0 0.0
        %945 = vmatprep.subr.mxu0 0.0
        %946 = vmatpush1.msra.mxu0 0.0
        %947 = vmatprep.subr.mxu0 0.0
        %948 = vmatpush1.msra.mxu0 0.0
        %949 = vmatprep.subr.mxu0 0.0
        %950 = vmatpush1.msra.mxu0 0.0
        %951 = vmatprep.subr.mxu0 0.0
        %952 = vmatpush1.msra.mxu0 0.0
        %953 = vmatprep.subr.mxu0 0.0
        %954 = vmatpush1.msra.mxu0 0.0
        %955 = vmatprep.subr.mxu0 0.0
        %956 = vmatpush1.msra.mxu0 0.0
        %957 = vmatprep.subr.mxu0 0.0
        %958 = vmatpush1.msra.mxu0 0.0
        %959 = vmatprep.subr.mxu0 0.0
        %960 = vmatpush1.msra.mxu0 0.0
        %961 = vmatprep.subr.mxu0 0.0
        %962 = vmatpush1.msra.mxu0 0.0
        %963 = vmatprep.subr.mxu0 0.0
        %964 = vmatpush1.msra.mxu0 0.0
        %965 = vmatprep.subr.mxu0 0.0
        %966 = vmatpush1.msra.mxu0 0.0
        %967 = vmatprep.subr.mxu0 0.0
        %968 = vmatpush1.msra.mxu0 0.0
        %969 = vmatprep.subr.mxu0 0.0
        %970 = vmatpush1.msra.mxu0 0.0
        %971 = vmatprep.subr.mxu0 0.0
        %972 = vmatpush1.msra.mxu0 0.0
        %973 = vmatprep.mubr.f32.mxu0 0.0
        %974 = vmatmul.mubr.f32.gmra.mrb[0].mxu0 %v883
        %v975 = vpop.f32.mrb[0].mxu0
        %v976 = vadd.f32 0.0, %v975
        %v977 = vpop.f32.mrb[0].mxu0
        %978 = vmatprep.mubr.f32.mxu0 0.0
        %979 = vmatmul.mubr.f32.gmra.mrb[0].mxu0 %v886
        %v980 = vpop.f32.mrb[0].mxu0
        %v981 = vadd.f32 0.0, %v980
        %v982 = vpop.f32.mrb[0].mxu0
        %983 = vmatprep.mubr.f32.mxu0 0.0
        %984 = vmatmul.mubr.f32.gmra.mrb[0].mxu0 %v889
        %v985 = vpop.f32.mrb[0].mxu0
        %v986 = vadd.f32 0.0, %v985
        %v987 = vpop.f32.mrb[0].mxu0
        %988 = vmatprep.mubr.f32.mxu0 0.0
        %989 = vmatmul.mubr.f32.gmra.mrb[0].mxu0 %v892
        %v990 = vpop.f32.mrb[0].mxu0
        %v991 = vadd.f32 0.0, %v990
        %v992 = vpop.f32.mrb[0].mxu0
        %993 = vmatprep.mubr.f32.mxu0 0.0
        %994 = vmatmul.mubr.f32.gmra.mrb[0].mxu0 %v895
        %v995 = vpop.f32.mrb[0].mxu0
        %v996 = vadd.f32 0.0, %v995
        %v997 = vpop.f32.mrb[0].mxu0
        %998 = vmatprep.mubr.f32.mxu0 0.0
        %999 = vmatmul.mubr.f32.gmra.mrb[0].mxu0 %v898
        %v1000 = vpop.f32.mrb[0].mxu0
        %v1001 = vadd.f32 0.0, %v1000
        %v1002 = vpop.f32.mrb[0].mxu0
        %1003 = vmatprep.mubr.f32.mxu0 0.0
        %1004 = vmatmul.mubr.f32.gmra.mrb[0].mxu0 %v901
        %v1005 = vpop.f32.mrb[0].mxu0
        %v1006 = vadd.f32 0.0, %v1005
        %v1007 = vpop.f32.mrb[0].mxu0
        %1008 = vmatprep.mubr.f32.mxu0 0.0
        %1009 = vmatmul.mubr.f32.gmra.mrb[0].mxu0 %v904
        %v1010 = vpop.f32.mrb[0].mxu0
        %v1011 = vadd.f32 0.0, %v1010
        %v1012 = vpop.f32.mrb[0].mxu0
        %1013 = vmatprep.mubr.f32.mxu0 0.0
        %1014 = vmatmul.mubr.f32.gmra.mrb[0].mxu0 %v907
        %v1015 = vpop.f32.mrb[0].mxu0
        %v1016 = vadd.f32 0.0, %v1015
        %v1017 = vpop.f32.mrb[0].mxu0
        %1018 = vdwg.mxu0
        %v1019 = vadd.f32 %v817, %v976
        %v1020 = vadd.f32 %v822, %v981
        %v1021 = vadd.f32 %v827, %v986
        %v1022 = vadd.f32 %v832, %v991
        %v1023 = vadd.f32 %v837, %v996
        %v1024 = vadd.f32 %v842, %v1001
        %v1025 = vadd.f32 %v847, %v1006
        %v1026 = vadd.f32 %v852, %v1011
        %v1027 = vadd.f32 %v857, %v1016
        %s1028 = sadd.s32 %s541, 7
        %s1029 = scalar_lea.vmem [#allocation2], %s1028
        %v1030 = vld [vmem:[%s1029] sm:$0xff]
        %v1031 = vld [vmem:[%s1029 + $0x8] sm:$0xff]
        %v1032 = vld [vmem:[%s1029 + $0x10] sm:$0xff]
        %v1033 = vld [vmem:[%s1029 + $0x18] sm:$0xff]
        %v1034 = vld [vmem:[%s1029 + $0x20] sm:$0xff]
        %v1035 = vld [vmem:[%s1029 + $0x28] sm:$0xff]
        %v1036 = vld [vmem:[%s1029 + $0x30] sm:$0xff]
        %v1037 = vld [vmem:[%s1029 + $0x38] sm:$0xff]
        %v1038 = vld [vmem:[%s1029 + $0x40] sm:$0xff]
        %v1039 = vmax.f32 %v1030, 0.0
        %v1040 = vmax.f32 %v1031, 0.0
        %v1041 = vmax.f32 %v1032, 0.0
        %v1042 = vmax.f32 %v1033, 0.0
        %v1043 = vmax.f32 %v1034, 0.0
        %v1044 = vmax.f32 %v1035, 0.0
        %v1045 = vmax.f32 %v1036, 0.0
        %v1046 = vmax.f32 %v1037, 0.0
        %v1047 = vmax.f32 %v1038, 0.0
        %s1048 = scalar_lea.vmem %s2, 24
        %v1049 = vld [vmem:[%s1048] sm:$0xff]
        %v1051 = vsel %vm481, %v1039, 0
        %v1054 = vsel %vm481, %v1040, 0
        %v1057 = vsel %vm481, %v1041, 0
        %v1060 = vsel %vm481, %v1042, 0
        %v1063 = vsel %vm481, %v1043, 0
        %v1066 = vsel %vm481, %v1044, 0
        %v1069 = vsel %vm481, %v1045, 0
        %v1072 = vsel %vm481, %v1046, 0
        %v1075 = vsel %vm481, %v1047, 0
        %1077 = vmatprep.subr.mxu0 0.0
        %1078 = vmatpush1.msra.mxu0 %v1049
        %1079 = vmatprep.subr.mxu0 0.0
        %1080 = vmatpush1.msra.mxu0 0.0
        %1081 = vmatprep.subr.mxu0 0.0
        %1082 = vmatpush1.msra.mxu0 0.0
        %1083 = vmatprep.subr.mxu0 0.0
        %1084 = vmatpush1.msra.mxu0 0.0
        %1085 = vmatprep.subr.mxu0 0.0
        %1086 = vmatpush1.msra.mxu0 0.0
        %1087 = vmatprep.subr.mxu0 0.0
        %1088 = vmatpush1.msra.mxu0 0.0
        %1089 = vmatprep.subr.mxu0 0.0
        %1090 = vmatpush1.msra.mxu0 0.0
        %1091 = vmatprep.subr.mxu0 0.0
        %1092 = vmatpush1.msra.mxu0 0.0
        %1093 = vmatprep.subr.mxu0 0.0
        %1094 = vmatpush1.msra.mxu0 0.0
        %1095 = vmatprep.subr.mxu0 0.0
        %1096 = vmatpush1.msra.mxu0 0.0
        %1097 = vmatprep.subr.mxu0 0.0
        %1098 = vmatpush1.msra.mxu0 0.0
        %1099 = vmatprep.subr.mxu0 0.0
        %1100 = vmatpush1.msra.mxu0 0.0
        %1101 = vmatprep.subr.mxu0 0.0
        %1102 = vmatpush1.msra.mxu0 0.0
        %1103 = vmatprep.subr.mxu0 0.0
        %1104 = vmatpush1.msra.mxu0 0.0
        %1105 = vmatprep.subr.mxu0 0.0
        %1106 = vmatpush1.msra.mxu0 0.0
        %1107 = vmatprep.subr.mxu0 0.0
        %1108 = vmatpush1.msra.mxu0 0.0
        %1109 = vmatprep.subr.mxu0 0.0
        %1110 = vmatpush1.msra.mxu0 0.0
        %1111 = vmatprep.subr.mxu0 0.0
        %1112 = vmatpush1.msra.mxu0 0.0
        %1113 = vmatprep.subr.mxu0 0.0
        %1114 = vmatpush1.msra.mxu0 0.0
        %1115 = vmatprep.subr.mxu0 0.0
        %1116 = vmatpush1.msra.mxu0 0.0
        %1117 = vmatprep.subr.mxu0 0.0
        %1118 = vmatpush1.msra.mxu0 0.0
        %1119 = vmatprep.subr.mxu0 0.0
        %1120 = vmatpush1.msra.mxu0 0.0
        %1121 = vmatprep.subr.mxu0 0.0
        %1122 = vmatpush1.msra.mxu0 0.0
        %1123 = vmatprep.subr.mxu0 0.0
        %1124 = vmatpush1.msra.mxu0 0.0
        %1125 = vmatprep.subr.mxu0 0.0
        %1126 = vmatpush1.msra.mxu0 0.0
        %1127 = vmatprep.subr.mxu0 0.0
        %1128 = vmatpush1.msra.mxu0 0.0
        %1129 = vmatprep.subr.mxu0 0.0
        %1130 = vmatpush1.msra.mxu0 0.0
        %1131 = vmatprep.subr.mxu0 0.0
        %1132 = vmatpush1.msra.mxu0 0.0
        %1133 = vmatprep.subr.mxu0 0.0
        %1134 = vmatpush1.msra.mxu0 0.0
        %1135 = vmatprep.subr.mxu0 0.0
        %1136 = vmatpush1.msra.mxu0 0.0
        %1137 = vmatprep.subr.mxu0 0.0
        %1138 = vmatpush1.msra.mxu0 0.0
        %1139 = vmatprep.subr.mxu0 0.0
        %1140 = vmatpush1.msra.mxu0 0.0
        %1141 = vmatprep.mubr.f32.mxu0 0.0
        %1142 = vmatmul.mubr.f32.gmra.mrb[0].mxu0 %v1051
        %v1143 = vpop.f32.mrb[0].mxu0
        %v1144 = vadd.f32 0.0, %v1143
        %v1145 = vpop.f32.mrb[0].mxu0
        %1146 = vmatprep.mubr.f32.mxu0 0.0
        %1147 = vmatmul.mubr.f32.gmra.mrb[0].mxu0 %v1054
        %v1148 = vpop.f32.mrb[0].mxu0
        %v1149 = vadd.f32 0.0, %v1148
        %v1150 = vpop.f32.mrb[0].mxu0
        %1151 = vmatprep.mubr.f32.mxu0 0.0
        %1152 = vmatmul.mubr.f32.gmra.mrb[0].mxu0 %v1057
        %v1153 = vpop.f32.mrb[0].mxu0
        %v1154 = vadd.f32 0.0, %v1153
        %v1155 = vpop.f32.mrb[0].mxu0
        %1156 = vmatprep.mubr.f32.mxu0 0.0
        %1157 = vmatmul.mubr.f32.gmra.mrb[0].mxu0 %v1060
        %v1158 = vpop.f32.mrb[0].mxu0
        %v1159 = vadd.f32 0.0, %v1158
        %v1160 = vpop.f32.mrb[0].mxu0
        %1161 = vmatprep.mubr.f32.mxu0 0.0
        %1162 = vmatmul.mubr.f32.gmra.mrb[0].mxu0 %v1063
        %v1163 = vpop.f32.mrb[0].mxu0
        %v1164 = vadd.f32 0.0, %v1163
        %v1165 = vpop.f32.mrb[0].mxu0
        %1166 = vmatprep.mubr.f32.mxu0 0.0
        %1167 = vmatmul.mubr.f32.gmra.mrb[0].mxu0 %v1066
        %v1168 = vpop.f32.mrb[0].mxu0
        %v1169 = vadd.f32 0.0, %v1168
        %v1170 = vpop.f32.mrb[0].mxu0
        %1171 = vmatprep.mubr.f32.mxu0 0.0
        %1172 = vmatmul.mubr.f32.gmra.mrb[0].mxu0 %v1069
        %v1173 = vpop.f32.mrb[0].mxu0
        %v1174 = vadd.f32 0.0, %v1173
        %v1175 = vpop.f32.mrb[0].mxu0
        %1176 = vmatprep.mubr.f32.mxu0 0.0
        %1177 = vmatmul.mubr.f32.gmra.mrb[0].mxu0 %v1072
        %v1178 = vpop.f32.mrb[0].mxu0
        %v1179 = vadd.f32 0.0, %v1178
        %v1180 = vpop.f32.mrb[0].mxu0
        %1181 = vmatprep.mubr.f32.mxu0 0.0
        %1182 = vmatmul.mubr.f32.gmra.mrb[0].mxu0 %v1075
        %v1183 = vpop.f32.mrb[0].mxu0
        %v1184 = vadd.f32 0.0, %v1183
        %v1185 = vpop.f32.mrb[0].mxu0
        %1186 = vdwg.mxu0
        %v1187 = vadd.f32 %v1019, %v1144
        %v1188 = vadd.f32 %v1020, %v1149
        %v1189 = vadd.f32 %v1021, %v1154
        %v1190 = vadd.f32 %v1022, %v1159
        %v1191 = vadd.f32 %v1023, %v1164
        %v1192 = vadd.f32 %v1024, %v1169
        %v1193 = vadd.f32 %v1025, %v1174
        %v1194 = vadd.f32 %v1026, %v1179
        %v1195 = vadd.f32 %v1027, %v1184
        %s1196 = scalar_lea.vmem [#allocation2], %s542
        %v1197 = vld [vmem:[%s1196] sm:$0xff]
        %v1198 = vld [vmem:[%s1196 + $0x8] sm:$0xff]
        %v1199 = vld [vmem:[%s1196 + $0x10] sm:$0xff]
        %v1200 = vld [vmem:[%s1196 + $0x18] sm:$0xff]
        %v1201 = vld [vmem:[%s1196 + $0x20] sm:$0xff]
        %v1202 = vld [vmem:[%s1196 + $0x28] sm:$0xff]
        %v1203 = vld [vmem:[%s1196 + $0x30] sm:$0xff]
        %v1204 = vld [vmem:[%s1196 + $0x38] sm:$0xff]
        %v1205 = vld [vmem:[%s1196 + $0x40] sm:$0xff]
        %v1206 = vmax.f32 %v1197, 0.0
        %v1207 = vmax.f32 %v1198, 0.0
        %v1208 = vmax.f32 %v1199, 0.0
        %v1209 = vmax.f32 %v1200, 0.0
        %v1210 = vmax.f32 %v1201, 0.0
        %v1211 = vmax.f32 %v1202, 0.0
        %v1212 = vmax.f32 %v1203, 0.0
        %v1213 = vmax.f32 %v1204, 0.0
        %v1214 = vmax.f32 %v1205, 0.0
        %s1215 = scalar_lea.vmem %s2, 32
        %v1216 = vld [vmem:[%s1215] sm:$0xff]
        %v1218 = vsel %vm481, %v1206, 0
        %v1221 = vsel %vm481, %v1207, 0
        %v1224 = vsel %vm481, %v1208, 0
        %v1227 = vsel %vm481, %v1209, 0
        %v1230 = vsel %vm481, %v1210, 0
        %v1233 = vsel %vm481, %v1211, 0
        %v1236 = vsel %vm481, %v1212, 0
        %v1239 = vsel %vm481, %v1213, 0
        %v1242 = vsel %vm481, %v1214, 0
        %1244 = vmatprep.subr.mxu0 0.0
        %1245 = vmatpush1.msra.mxu0 %v1216
        %1246 = vmatprep.subr.mxu0 0.0
        %1247 = vmatpush1.msra.mxu0 0.0
        %1248 = vmatprep.subr.mxu0 0.0
        %1249 = vmatpush1.msra.mxu0 0.0
        %1250 = vmatprep.subr.mxu0 0.0
        %1251 = vmatpush1.msra.mxu0 0.0
        %1252 = vmatprep.subr.mxu0 0.0
        %1253 = vmatpush1.msra.mxu0 0.0
        %1254 = vmatprep.subr.mxu0 0.0
        %1255 = vmatpush1.msra.mxu0 0.0
        %1256 = vmatprep.subr.mxu0 0.0
        %1257 = vmatpush1.msra.mxu0 0.0
        %1258 = vmatprep.subr.mxu0 0.0
        %1259 = vmatpush1.msra.mxu0 0.0
        %1260 = vmatprep.subr.mxu0 0.0
        %1261 = vmatpush1.msra.mxu0 0.0
        %1262 = vmatprep.subr.mxu0 0.0
        %1263 = vmatpush1.msra.mxu0 0.0
        %1264 = vmatprep.subr.mxu0 0.0
        %1265 = vmatpush1.msra.mxu0 0.0
        %1266 = vmatprep.subr.mxu0 0.0
        %1267 = vmatpush1.msra.mxu0 0.0
        %1268 = vmatprep.subr.mxu0 0.0
        %1269 = vmatpush1.msra.mxu0 0.0
        %1270 = vmatprep.subr.mxu0 0.0
        %1271 = vmatpush1.msra.mxu0 0.0
        %1272 = vmatprep.subr.mxu0 0.0
        %1273 = vmatpush1.msra.mxu0 0.0
        %1274 = vmatprep.subr.mxu0 0.0
        %1275 = vmatpush1.msra.mxu0 0.0
        %1276 = vmatprep.subr.mxu0 0.0
        %1277 = vmatpush1.msra.mxu0 0.0
        %1278 = vmatprep.subr.mxu0 0.0
        %1279 = vmatpush1.msra.mxu0 0.0
        %1280 = vmatprep.subr.mxu0 0.0
        %1281 = vmatpush1.msra.mxu0 0.0
        %1282 = vmatprep.subr.mxu0 0.0
        %1283 = vmatpush1.msra.mxu0 0.0
        %1284 = vmatprep.subr.mxu0 0.0
        %1285 = vmatpush1.msra.mxu0 0.0
        %1286 = vmatprep.subr.mxu0 0.0
        %1287 = vmatpush1.msra.mxu0 0.0
        %1288 = vmatprep.subr.mxu0 0.0
        %1289 = vmatpush1.msra.mxu0 0.0
        %1290 = vmatprep.subr.mxu0 0.0
        %1291 = vmatpush1.msra.mxu0 0.0
        %1292 = vmatprep.subr.mxu0 0.0
        %1293 = vmatpush1.msra.mxu0 0.0
        %1294 = vmatprep.subr.mxu0 0.0
        %1295 = vmatpush1.msra.mxu0 0.0
        %1296 = vmatprep.subr.mxu0 0.0
        %1297 = vmatpush1.msra.mxu0 0.0
        %1298 = vmatprep.subr.mxu0 0.0
        %1299 = vmatpush1.msra.mxu0 0.0
        %1300 = vmatprep.subr.mxu0 0.0
        %1301 = vmatpush1.msra.mxu0 0.0
        %1302 = vmatprep.subr.mxu0 0.0
        %1303 = vmatpush1.msra.mxu0 0.0
        %1304 = vmatprep.subr.mxu0 0.0
        %1305 = vmatpush1.msra.mxu0 0.0
        %1306 = vmatprep.subr.mxu0 0.0
        %1307 = vmatpush1.msra.mxu0 0.0
        %1308 = vmatprep.mubr.f32.mxu0 0.0
        %1309 = vmatmul.mubr.f32.gmra.mrb[0].mxu0 %v1218
        %v1310 = vpop.f32.mrb[0].mxu0
        %v1311 = vadd.f32 0.0, %v1310
        %v1312 = vpop.f32.mrb[0].mxu0
        %1313 = vmatprep.mubr.f32.mxu0 0.0
        %1314 = vmatmul.mubr.f32.gmra.mrb[0].mxu0 %v1221
        %v1315 = vpop.f32.mrb[0].mxu0
        %v1316 = vadd.f32 0.0, %v1315
        %v1317 = vpop.f32.mrb[0].mxu0
        %1318 = vmatprep.mubr.f32.mxu0 0.0
        %1319 = vmatmul.mubr.f32.gmra.mrb[0].mxu0 %v1224
        %v1320 = vpop.f32.mrb[0].mxu0
        %v1321 = vadd.f32 0.0, %v1320
        %v1322 = vpop.f32.mrb[0].mxu0
        %1323 = vmatprep.mubr.f32.mxu0 0.0
        %1324 = vmatmul.mubr.f32.gmra.mrb[0].mxu0 %v1227
        %v1325 = vpop.f32.mrb[0].mxu0
        %v1326 = vadd.f32 0.0, %v1325
        %v1327 = vpop.f32.mrb[0].mxu0
        %1328 = vmatprep.mubr.f32.mxu0 0.0
        %1329 = vmatmul.mubr.f32.gmra.mrb[0].mxu0 %v1230
        %v1330 = vpop.f32.mrb[0].mxu0
        %v1331 = vadd.f32 0.0, %v1330
        %v1332 = vpop.f32.mrb[0].mxu0
        %1333 = vmatprep.mubr.f32.mxu0 0.0
        %1334 = vmatmul.mubr.f32.gmra.mrb[0].mxu0 %v1233
        %v1335 = vpop.f32.mrb[0].mxu0
        %v1336 = vadd.f32 0.0, %v1335
        %v1337 = vpop.f32.mrb[0].mxu0
        %1338 = vmatprep.mubr.f32.mxu0 0.0
        %1339 = vmatmul.mubr.f32.gmra.mrb[0].mxu0 %v1236
        %v1340 = vpop.f32.mrb[0].mxu0
        %v1341 = vadd.f32 0.0, %v1340
        %v1342 = vpop.f32.mrb[0].mxu0
        %1343 = vmatprep.mubr.f32.mxu0 0.0
        %1344 = vmatmul.mubr.f32.gmra.mrb[0].mxu0 %v1239
        %v1345 = vpop.f32.mrb[0].mxu0
        %v1346 = vadd.f32 0.0, %v1345
        %v1347 = vpop.f32.mrb[0].mxu0
        %1348 = vmatprep.mubr.f32.mxu0 0.0
        %1349 = vmatmul.mubr.f32.gmra.mrb[0].mxu0 %v1242
        %v1350 = vpop.f32.mrb[0].mxu0
        %v1351 = vadd.f32 0.0, %v1350
        %v1352 = vpop.f32.mrb[0].mxu0
        %1353 = vdwg.mxu0
        %v1354 = vadd.f32 %v1187, %v1311
        %v1355 = vadd.f32 %v1188, %v1316
        %v1356 = vadd.f32 %v1189, %v1321
        %v1357 = vadd.f32 %v1190, %v1326
        %v1358 = vadd.f32 %v1191, %v1331
        %v1359 = vadd.f32 %v1192, %v1336
        %v1360 = vadd.f32 %v1193, %v1341
        %v1361 = vadd.f32 %v1194, %v1346
        %v1362 = vadd.f32 %v1195, %v1351
        %s1363 = sadd.s32 %s541, 9
        %s1364 = scalar_lea.vmem [#allocation2], %s1363
        %v1365 = vld [vmem:[%s1364] sm:$0xff]
        %v1366 = vld [vmem:[%s1364 + $0x8] sm:$0xff]
        %v1367 = vld [vmem:[%s1364 + $0x10] sm:$0xff]
        %v1368 = vld [vmem:[%s1364 + $0x18] sm:$0xff]
        %v1369 = vld [vmem:[%s1364 + $0x20] sm:$0xff]
        %v1370 = vld [vmem:[%s1364 + $0x28] sm:$0xff]
        %v1371 = vld [vmem:[%s1364 + $0x30] sm:$0xff]
        %v1372 = vld [vmem:[%s1364 + $0x38] sm:$0xff]
        %v1373 = vld [vmem:[%s1364 + $0x40] sm:$0xff]
        %v1374 = vmax.f32 %v1365, 0.0
        %v1375 = vmax.f32 %v1366, 0.0
        %v1376 = vmax.f32 %v1367, 0.0
        %v1377 = vmax.f32 %v1368, 0.0
        %v1378 = vmax.f32 %v1369, 0.0
        %v1379 = vmax.f32 %v1370, 0.0
        %v1380 = vmax.f32 %v1371, 0.0
        %v1381 = vmax.f32 %v1372, 0.0
        %v1382 = vmax.f32 %v1373, 0.0
        %s1383 = scalar_lea.vmem %s2, 40
        %v1384 = vld [vmem:[%s1383] sm:$0xff]
        %v1386 = vsel %vm481, %v1374, 0
        %v1389 = vsel %vm481, %v1375, 0
        %v1392 = vsel %vm481, %v1376, 0
        %v1395 = vsel %vm481, %v1377, 0
        %v1398 = vsel %vm481, %v1378, 0
        %v1401 = vsel %vm481, %v1379, 0
        %v1404 = vsel %vm481, %v1380, 0
        %v1407 = vsel %vm481, %v1381, 0
        %v1410 = vsel %vm481, %v1382, 0
        %1412 = vmatprep.subr.mxu0 0.0
        %1413 = vmatpush1.msra.mxu0 %v1384
        %1414 = vmatprep.subr.mxu0 0.0
        %1415 = vmatpush1.msra.mxu0 0.0
        %1416 = vmatprep.subr.mxu0 0.0
        %1417 = vmatpush1.msra.mxu0 0.0
        %1418 = vmatprep.subr.mxu0 0.0
        %1419 = vmatpush1.msra.mxu0 0.0
        %1420 = vmatprep.subr.mxu0 0.0
        %1421 = vmatpush1.msra.mxu0 0.0
        %1422 = vmatprep.subr.mxu0 0.0
        %1423 = vmatpush1.msra.mxu0 0.0
        %1424 = vmatprep.subr.mxu0 0.0
        %1425 = vmatpush1.msra.mxu0 0.0
        %1426 = vmatprep.subr.mxu0 0.0
        %1427 = vmatpush1.msra.mxu0 0.0
        %1428 = vmatprep.subr.mxu0 0.0
        %1429 = vmatpush1.msra.mxu0 0.0
        %1430 = vmatprep.subr.mxu0 0.0
        %1431 = vmatpush1.msra.mxu0 0.0
        %1432 = vmatprep.subr.mxu0 0.0
        %1433 = vmatpush1.msra.mxu0 0.0
        %1434 = vmatprep.subr.mxu0 0.0
        %1435 = vmatpush1.msra.mxu0 0.0
        %1436 = vmatprep.subr.mxu0 0.0
        %1437 = vmatpush1.msra.mxu0 0.0
        %1438 = vmatprep.subr.mxu0 0.0
        %1439 = vmatpush1.msra.mxu0 0.0
        %1440 = vmatprep.subr.mxu0 0.0
        %1441 = vmatpush1.msra.mxu0 0.0
        %1442 = vmatprep.subr.mxu0 0.0
        %1443 = vmatpush1.msra.mxu0 0.0
        %1444 = vmatprep.subr.mxu0 0.0
        %1445 = vmatpush1.msra.mxu0 0.0
        %1446 = vmatprep.subr.mxu0 0.0
        %1447 = vmatpush1.msra.mxu0 0.0
        %1448 = vmatprep.subr.mxu0 0.0
        %1449 = vmatpush1.msra.mxu0 0.0
        %1450 = vmatprep.subr.mxu0 0.0
        %1451 = vmatpush1.msra.mxu0 0.0
        %1452 = vmatprep.subr.mxu0 0.0
        %1453 = vmatpush1.msra.mxu0 0.0
        %1454 = vmatprep.subr.mxu0 0.0
        %1455 = vmatpush1.msra.mxu0 0.0
        %1456 = vmatprep.subr.mxu0 0.0
        %1457 = vmatpush1.msra.mxu0 0.0
        %1458 = vmatprep.subr.mxu0 0.0
        %1459 = vmatpush1.msra.mxu0 0.0
        %1460 = vmatprep.subr.mxu0 0.0
        %1461 = vmatpush1.msra.mxu0 0.0
        %1462 = vmatprep.subr.mxu0 0.0
        %1463 = vmatpush1.msra.mxu0 0.0
        %1464 = vmatprep.subr.mxu0 0.0
        %1465 = vmatpush1.msra.mxu0 0.0
        %1466 = vmatprep.subr.mxu0 0.0
        %1467 = vmatpush1.msra.mxu0 0.0
        %1468 = vmatprep.subr.mxu0 0.0
        %1469 = vmatpush1.msra.mxu0 0.0
        %1470 = vmatprep.subr.mxu0 0.0
        %1471 = vmatpush1.msra.mxu0 0.0
        %1472 = vmatprep.subr.mxu0 0.0
        %1473 = vmatpush1.msra.mxu0 0.0
        %1474 = vmatprep.subr.mxu0 0.0
        %1475 = vmatpush1.msra.mxu0 0.0
        %1476 = vmatprep.mubr.f32.mxu0 0.0
        %1477 = vmatmul.mubr.f32.gmra.mrb[0].mxu0 %v1386
        %v1478 = vpop.f32.mrb[0].mxu0
        %v1479 = vadd.f32 0.0, %v1478
        %v1480 = vpop.f32.mrb[0].mxu0
        %1481 = vmatprep.mubr.f32.mxu0 0.0
        %1482 = vmatmul.mubr.f32.gmra.mrb[0].mxu0 %v1389
        %v1483 = vpop.f32.mrb[0].mxu0
        %v1484 = vadd.f32 0.0, %v1483
        %v1485 = vpop.f32.mrb[0].mxu0
        %1486 = vmatprep.mubr.f32.mxu0 0.0
        %1487 = vmatmul.mubr.f32.gmra.mrb[0].mxu0 %v1392
        %v1488 = vpop.f32.mrb[0].mxu0
        %v1489 = vadd.f32 0.0, %v1488
        %v1490 = vpop.f32.mrb[0].mxu0
        %1491 = vmatprep.mubr.f32.mxu0 0.0
        %1492 = vmatmul.mubr.f32.gmra.mrb[0].mxu0 %v1395
        %v1493 = vpop.f32.mrb[0].mxu0
        %v1494 = vadd.f32 0.0, %v1493
        %v1495 = vpop.f32.mrb[0].mxu0
        %1496 = vmatprep.mubr.f32.mxu0 0.0
        %1497 = vmatmul.mubr.f32.gmra.mrb[0].mxu0 %v1398
        %v1498 = vpop.f32.mrb[0].mxu0
        %v1499 = vadd.f32 0.0, %v1498
        %v1500 = vpop.f32.mrb[0].mxu0
        %1501 = vmatprep.mubr.f32.mxu0 0.0
        %1502 = vmatmul.mubr.f32.gmra.mrb[0].mxu0 %v1401
        %v1503 = vpop.f32.mrb[0].mxu0
        %v1504 = vadd.f32 0.0, %v1503
        %v1505 = vpop.f32.mrb[0].mxu0
        %1506 = vmatprep.mubr.f32.mxu0 0.0
        %1507 = vmatmul.mubr.f32.gmra.mrb[0].mxu0 %v1404
        %v1508 = vpop.f32.mrb[0].mxu0
        %v1509 = vadd.f32 0.0, %v1508
        %v1510 = vpop.f32.mrb[0].mxu0
        %1511 = vmatprep.mubr.f32.mxu0 0.0
        %1512 = vmatmul.mubr.f32.gmra.mrb[0].mxu0 %v1407
        %v1513 = vpop.f32.mrb[0].mxu0
        %v1514 = vadd.f32 0.0, %v1513
        %v1515 = vpop.f32.mrb[0].mxu0
        %1516 = vmatprep.mubr.f32.mxu0 0.0
        %1517 = vmatmul.mubr.f32.gmra.mrb[0].mxu0 %v1410
        %v1518 = vpop.f32.mrb[0].mxu0
        %v1519 = vadd.f32 0.0, %v1518
        %v1520 = vpop.f32.mrb[0].mxu0
        %1521 = vdwg.mxu0
        %v1522 = vadd.f32 %v1354, %v1479
        %v1523 = vadd.f32 %v1355, %v1484
        %v1524 = vadd.f32 %v1356, %v1489
        %v1525 = vadd.f32 %v1357, %v1494
        %v1526 = vadd.f32 %v1358, %v1499
        %v1527 = vadd.f32 %v1359, %v1504
        %v1528 = vadd.f32 %v1360, %v1509
        %v1529 = vadd.f32 %v1361, %v1514
        %v1530 = vadd.f32 %v1362, %v1519
        %s1531 = sadd.s32 %s541, 25
        %s1532 = scalar_lea.vmem [#allocation2], %s1531
        %v1533 = vld [vmem:[%s1532] sm:$0xff]
        %v1534 = vld [vmem:[%s1532 + $0x8] sm:$0xff]
        %v1535 = vld [vmem:[%s1532 + $0x10] sm:$0xff]
        %v1536 = vld [vmem:[%s1532 + $0x18] sm:$0xff]
        %v1537 = vld [vmem:[%s1532 + $0x20] sm:$0xff]
        %v1538 = vld [vmem:[%s1532 + $0x28] sm:$0xff]
        %v1539 = vld [vmem:[%s1532 + $0x30] sm:$0xff]
        %v1540 = vld [vmem:[%s1532 + $0x38] sm:$0xff]
        %v1541 = vld [vmem:[%s1532 + $0x40] sm:$0xff]
        %v1542 = vmax.f32 %v1533, 0.0
        %v1543 = vmax.f32 %v1534, 0.0
        %v1544 = vmax.f32 %v1535, 0.0
        %v1545 = vmax.f32 %v1536, 0.0
        %v1546 = vmax.f32 %v1537, 0.0
        %v1547 = vmax.f32 %v1538, 0.0
        %v1548 = vmax.f32 %v1539, 0.0
        %v1549 = vmax.f32 %v1540, 0.0
        %v1550 = vmax.f32 %v1541, 0.0
        %s1551 = scalar_lea.vmem %s2, 48
        %v1552 = vld [vmem:[%s1551] sm:$0xff]
        %v1554 = vsel %vm481, %v1542, 0
        %v1557 = vsel %vm481, %v1543, 0
        %v1560 = vsel %vm481, %v1544, 0
        %v1563 = vsel %vm481, %v1545, 0
        %v1566 = vsel %vm481, %v1546, 0
        %v1569 = vsel %vm481, %v1547, 0
        %v1572 = vsel %vm481, %v1548, 0
        %v1575 = vsel %vm481, %v1549, 0
        %v1578 = vsel %vm481, %v1550, 0
        %1580 = vmatprep.subr.mxu0 0.0
        %1581 = vmatpush1.msra.mxu0 %v1552
        %1582 = vmatprep.subr.mxu0 0.0
        %1583 = vmatpush1.msra.mxu0 0.0
        %1584 = vmatprep.subr.mxu0 0.0
        %1585 = vmatpush1.msra.mxu0 0.0
        %1586 = vmatprep.subr.mxu0 0.0
        %1587 = vmatpush1.msra.mxu0 0.0
        %1588 = vmatprep.subr.mxu0 0.0
        %1589 = vmatpush1.msra.mxu0 0.0
        %1590 = vmatprep.subr.mxu0 0.0
        %1591 = vmatpush1.msra.mxu0 0.0
        %1592 = vmatprep.subr.mxu0 0.0
        %1593 = vmatpush1.msra.mxu0 0.0
        %1594 = vmatprep.subr.mxu0 0.0
        %1595 = vmatpush1.msra.mxu0 0.0
        %1596 = vmatprep.subr.mxu0 0.0
        %1597 = vmatpush1.msra.mxu0 0.0
        %1598 = vmatprep.subr.mxu0 0.0
        %1599 = vmatpush1.msra.mxu0 0.0
        %1600 = vmatprep.subr.mxu0 0.0
        %1601 = vmatpush1.msra.mxu0 0.0
        %1602 = vmatprep.subr.mxu0 0.0
        %1603 = vmatpush1.msra.mxu0 0.0
        %1604 = vmatprep.subr.mxu0 0.0
        %1605 = vmatpush1.msra.mxu0 0.0
        %1606 = vmatprep.subr.mxu0 0.0
        %1607 = vmatpush1.msra.mxu0 0.0
        %1608 = vmatprep.subr.mxu0 0.0
        %1609 = vmatpush1.msra.mxu0 0.0
        %1610 = vmatprep.subr.mxu0 0.0
        %1611 = vmatpush1.msra.mxu0 0.0
        %1612 = vmatprep.subr.mxu0 0.0
        %1613 = vmatpush1.msra.mxu0 0.0
        %1614 = vmatprep.subr.mxu0 0.0
        %1615 = vmatpush1.msra.mxu0 0.0
        %1616 = vmatprep.subr.mxu0 0.0
        %1617 = vmatpush1.msra.mxu0 0.0
        %1618 = vmatprep.subr.mxu0 0.0
        %1619 = vmatpush1.msra.mxu0 0.0
        %1620 = vmatprep.subr.mxu0 0.0
        %1621 = vmatpush1.msra.mxu0 0.0
        %1622 = vmatprep.subr.mxu0 0.0
        %1623 = vmatpush1.msra.mxu0 0.0
        %1624 = vmatprep.subr.mxu0 0.0
        %1625 = vmatpush1.msra.mxu0 0.0
        %1626 = vmatprep.subr.mxu0 0.0
        %1627 = vmatpush1.msra.mxu0 0.0
        %1628 = vmatprep.subr.mxu0 0.0
        %1629 = vmatpush1.msra.mxu0 0.0
        %1630 = vmatprep.subr.mxu0 0.0
        %1631 = vmatpush1.msra.mxu0 0.0
        %1632 = vmatprep.subr.mxu0 0.0
        %1633 = vmatpush1.msra.mxu0 0.0
        %1634 = vmatprep.subr.mxu0 0.0
        %1635 = vmatpush1.msra.mxu0 0.0
        %1636 = vmatprep.subr.mxu0 0.0
        %1637 = vmatpush1.msra.mxu0 0.0
        %1638 = vmatprep.subr.mxu0 0.0
        %1639 = vmatpush1.msra.mxu0 0.0
        %1640 = vmatprep.subr.mxu0 0.0
        %1641 = vmatpush1.msra.mxu0 0.0
        %1642 = vmatprep.subr.mxu0 0.0
        %1643 = vmatpush1.msra.mxu0 0.0
        %1644 = vmatprep.mubr.f32.mxu0 0.0
        %1645 = vmatmul.mubr.f32.gmra.mrb[0].mxu0 %v1554
        %v1646 = vpop.f32.mrb[0].mxu0
        %v1647 = vadd.f32 0.0, %v1646
        %v1648 = vpop.f32.mrb[0].mxu0
        %1649 = vmatprep.mubr.f32.mxu0 0.0
        %1650 = vmatmul.mubr.f32.gmra.mrb[0].mxu0 %v1557
        %v1651 = vpop.f32.mrb[0].mxu0
        %v1652 = vadd.f32 0.0, %v1651
        %v1653 = vpop.f32.mrb[0].mxu0
        %1654 = vmatprep.mubr.f32.mxu0 0.0
        %1655 = vmatmul.mubr.f32.gmra.mrb[0].mxu0 %v1560
        %v1656 = vpop.f32.mrb[0].mxu0
        %v1657 = vadd.f32 0.0, %v1656
        %v1658 = vpop.f32.mrb[0].mxu0
        %1659 = vmatprep.mubr.f32.mxu0 0.0
        %1660 = vmatmul.mubr.f32.gmra.mrb[0].mxu0 %v1563
        %v1661 = vpop.f32.mrb[0].mxu0
        %v1662 = vadd.f32 0.0, %v1661
        %v1663 = vpop.f32.mrb[0].mxu0
        %1664 = vmatprep.mubr.f32.mxu0 0.0
        %1665 = vmatmul.mubr.f32.gmra.mrb[0].mxu0 %v1566
        %v1666 = vpop.f32.mrb[0].mxu0
        %v1667 = vadd.f32 0.0, %v1666
        %v1668 = vpop.f32.mrb[0].mxu0
        %1669 = vmatprep.mubr.f32.mxu0 0.0
        %1670 = vmatmul.mubr.f32.gmra.mrb[0].mxu0 %v1569
        %v1671 = vpop.f32.mrb[0].mxu0
        %v1672 = vadd.f32 0.0, %v1671
        %v1673 = vpop.f32.mrb[0].mxu0
        %1674 = vmatprep.mubr.f32.mxu0 0.0
        %1675 = vmatmul.mubr.f32.gmra.mrb[0].mxu0 %v1572
        %v1676 = vpop.f32.mrb[0].mxu0
        %v1677 = vadd.f32 0.0, %v1676
        %v1678 = vpop.f32.mrb[0].mxu0
        %1679 = vmatprep.mubr.f32.mxu0 0.0
        %1680 = vmatmul.mubr.f32.gmra.mrb[0].mxu0 %v1575
        %v1681 = vpop.f32.mrb[0].mxu0
        %v1682 = vadd.f32 0.0, %v1681
        %v1683 = vpop.f32.mrb[0].mxu0
        %1684 = vmatprep.mubr.f32.mxu0 0.0
        %1685 = vmatmul.mubr.f32.gmra.mrb[0].mxu0 %v1578
        %v1686 = vpop.f32.mrb[0].mxu0
        %v1687 = vadd.f32 0.0, %v1686
        %v1688 = vpop.f32.mrb[0].mxu0
        %1689 = vdwg.mxu0
        %v1690 = vadd.f32 %v1522, %v1647
        %v1691 = vadd.f32 %v1523, %v1652
        %v1692 = vadd.f32 %v1524, %v1657
        %v1693 = vadd.f32 %v1525, %v1662
        %v1694 = vadd.f32 %v1526, %v1667
        %v1695 = vadd.f32 %v1527, %v1672
        %v1696 = vadd.f32 %v1528, %v1677
        %v1697 = vadd.f32 %v1529, %v1682
        %v1698 = vadd.f32 %v1530, %v1687
        %s1699 = sadd.s32 %s541, 26
        %s1700 = scalar_lea.vmem [#allocation2], %s1699
        %v1701 = vld [vmem:[%s1700] sm:$0xff]
        %v1702 = vld [vmem:[%s1700 + $0x8] sm:$0xff]
        %v1703 = vld [vmem:[%s1700 + $0x10] sm:$0xff]
        %v1704 = vld [vmem:[%s1700 + $0x18] sm:$0xff]
        %v1705 = vld [vmem:[%s1700 + $0x20] sm:$0xff]
        %v1706 = vld [vmem:[%s1700 + $0x28] sm:$0xff]
        %v1707 = vld [vmem:[%s1700 + $0x30] sm:$0xff]
        %v1708 = vld [vmem:[%s1700 + $0x38] sm:$0xff]
        %v1709 = vld [vmem:[%s1700 + $0x40] sm:$0xff]
        %v1710 = vmax.f32 %v1701, 0.0
        %v1711 = vmax.f32 %v1702, 0.0
        %v1712 = vmax.f32 %v1703, 0.0
        %v1713 = vmax.f32 %v1704, 0.0
        %v1714 = vmax.f32 %v1705, 0.0
        %v1715 = vmax.f32 %v1706, 0.0
        %v1716 = vmax.f32 %v1707, 0.0
        %v1717 = vmax.f32 %v1708, 0.0
        %v1718 = vmax.f32 %v1709, 0.0
        %s1719 = scalar_lea.vmem %s2, 56
        %v1720 = vld [vmem:[%s1719] sm:$0xff]
        %v1722 = vsel %vm481, %v1710, 0
        %v1725 = vsel %vm481, %v1711, 0
        %v1728 = vsel %vm481, %v1712, 0
        %v1731 = vsel %vm481, %v1713, 0
        %v1734 = vsel %vm481, %v1714, 0
        %v1737 = vsel %vm481, %v1715, 0
        %v1740 = vsel %vm481, %v1716, 0
        %v1743 = vsel %vm481, %v1717, 0
        %v1746 = vsel %vm481, %v1718, 0
        %1748 = vmatprep.subr.mxu0 0.0
        %1749 = vmatpush1.msra.mxu0 %v1720
        %1750 = vmatprep.subr.mxu0 0.0
        %1751 = vmatpush1.msra.mxu0 0.0
        %1752 = vmatprep.subr.mxu0 0.0
        %1753 = vmatpush1.msra.mxu0 0.0
        %1754 = vmatprep.subr.mxu0 0.0
        %1755 = vmatpush1.msra.mxu0 0.0
        %1756 = vmatprep.subr.mxu0 0.0
        %1757 = vmatpush1.msra.mxu0 0.0
        %1758 = vmatprep.subr.mxu0 0.0
        %1759 = vmatpush1.msra.mxu0 0.0
        %1760 = vmatprep.subr.mxu0 0.0
        %1761 = vmatpush1.msra.mxu0 0.0
        %1762 = vmatprep.subr.mxu0 0.0
        %1763 = vmatpush1.msra.mxu0 0.0
        %1764 = vmatprep.subr.mxu0 0.0
        %1765 = vmatpush1.msra.mxu0 0.0
        %1766 = vmatprep.subr.mxu0 0.0
        %1767 = vmatpush1.msra.mxu0 0.0
        %1768 = vmatprep.subr.mxu0 0.0
        %1769 = vmatpush1.msra.mxu0 0.0
        %1770 = vmatprep.subr.mxu0 0.0
        %1771 = vmatpush1.msra.mxu0 0.0
        %1772 = vmatprep.subr.mxu0 0.0
        %1773 = vmatpush1.msra.mxu0 0.0
        %1774 = vmatprep.subr.mxu0 0.0
        %1775 = vmatpush1.msra.mxu0 0.0
        %1776 = vmatprep.subr.mxu0 0.0
        %1777 = vmatpush1.msra.mxu0 0.0
        %1778 = vmatprep.subr.mxu0 0.0
        %1779 = vmatpush1.msra.mxu0 0.0
        %1780 = vmatprep.subr.mxu0 0.0
        %1781 = vmatpush1.msra.mxu0 0.0
        %1782 = vmatprep.subr.mxu0 0.0
        %1783 = vmatpush1.msra.mxu0 0.0
        %1784 = vmatprep.subr.mxu0 0.0
        %1785 = vmatpush1.msra.mxu0 0.0
        %1786 = vmatprep.subr.mxu0 0.0
        %1787 = vmatpush1.msra.mxu0 0.0
        %1788 = vmatprep.subr.mxu0 0.0
        %1789 = vmatpush1.msra.mxu0 0.0
        %1790 = vmatprep.subr.mxu0 0.0
        %1791 = vmatpush1.msra.mxu0 0.0
        %1792 = vmatprep.subr.mxu0 0.0
        %1793 = vmatpush1.msra.mxu0 0.0
        %1794 = vmatprep.subr.mxu0 0.0
        %1795 = vmatpush1.msra.mxu0 0.0
        %1796 = vmatprep.subr.mxu0 0.0
        %1797 = vmatpush1.msra.mxu0 0.0
        %1798 = vmatprep.subr.mxu0 0.0
        %1799 = vmatpush1.msra.mxu0 0.0
        %1800 = vmatprep.subr.mxu0 0.0
        %1801 = vmatpush1.msra.mxu0 0.0
        %1802 = vmatprep.subr.mxu0 0.0
        %1803 = vmatpush1.msra.mxu0 0.0
        %1804 = vmatprep.subr.mxu0 0.0
        %1805 = vmatpush1.msra.mxu0 0.0
        %1806 = vmatprep.subr.mxu0 0.0
        %1807 = vmatpush1.msra.mxu0 0.0
        %1808 = vmatprep.subr.mxu0 0.0
        %1809 = vmatpush1.msra.mxu0 0.0
        %1810 = vmatprep.subr.mxu0 0.0
        %1811 = vmatpush1.msra.mxu0 0.0
        %1812 = vmatprep.mubr.f32.mxu0 0.0
        %1813 = vmatmul.mubr.f32.gmra.mrb[0].mxu0 %v1722
        %v1814 = vpop.f32.mrb[0].mxu0
        %v1815 = vadd.f32 0.0, %v1814
        %v1816 = vpop.f32.mrb[0].mxu0
        %1817 = vmatprep.mubr.f32.mxu0 0.0
        %1818 = vmatmul.mubr.f32.gmra.mrb[0].mxu0 %v1725
        %v1819 = vpop.f32.mrb[0].mxu0
        %v1820 = vadd.f32 0.0, %v1819
        %v1821 = vpop.f32.mrb[0].mxu0
        %1822 = vmatprep.mubr.f32.mxu0 0.0
        %1823 = vmatmul.mubr.f32.gmra.mrb[0].mxu0 %v1728
        %v1824 = vpop.f32.mrb[0].mxu0
        %v1825 = vadd.f32 0.0, %v1824
        %v1826 = vpop.f32.mrb[0].mxu0
        %1827 = vmatprep.mubr.f32.mxu0 0.0
        %1828 = vmatmul.mubr.f32.gmra.mrb[0].mxu0 %v1731
        %v1829 = vpop.f32.mrb[0].mxu0
        %v1830 = vadd.f32 0.0, %v1829
        %v1831 = vpop.f32.mrb[0].mxu0
        %1832 = vmatprep.mubr.f32.mxu0 0.0
        %1833 = vmatmul.mubr.f32.gmra.mrb[0].mxu0 %v1734
        %v1834 = vpop.f32.mrb[0].mxu0
        %v1835 = vadd.f32 0.0, %v1834
        %v1836 = vpop.f32.mrb[0].mxu0
        %1837 = vmatprep.mubr.f32.mxu0 0.0
        %1838 = vmatmul.mubr.f32.gmra.mrb[0].mxu0 %v1737
        %v1839 = vpop.f32.mrb[0].mxu0
        %v1840 = vadd.f32 0.0, %v1839
        %v1841 = vpop.f32.mrb[0].mxu0
        %1842 = vmatprep.mubr.f32.mxu0 0.0
        %1843 = vmatmul.mubr.f32.gmra.mrb[0].mxu0 %v1740
        %v1844 = vpop.f32.mrb[0].mxu0
        %v1845 = vadd.f32 0.0, %v1844
        %v1846 = vpop.f32.mrb[0].mxu0
        %1847 = vmatprep.mubr.f32.mxu0 0.0
        %1848 = vmatmul.mubr.f32.gmra.mrb[0].mxu0 %v1743
        %v1849 = vpop.f32.mrb[0].mxu0
        %v1850 = vadd.f32 0.0, %v1849
        %v1851 = vpop.f32.mrb[0].mxu0
        %1852 = vmatprep.mubr.f32.mxu0 0.0
        %1853 = vmatmul.mubr.f32.gmra.mrb[0].mxu0 %v1746
        %v1854 = vpop.f32.mrb[0].mxu0
        %v1855 = vadd.f32 0.0, %v1854
        %v1856 = vpop.f32.mrb[0].mxu0
        %1857 = vdwg.mxu0
        %v1858 = vadd.f32 %v1690, %v1815
        %v1859 = vadd.f32 %v1691, %v1820
        %v1860 = vadd.f32 %v1692, %v1825
        %v1861 = vadd.f32 %v1693, %v1830
        %v1862 = vadd.f32 %v1694, %v1835
        %v1863 = vadd.f32 %v1695, %v1840
        %v1864 = vadd.f32 %v1696, %v1845
        %v1865 = vadd.f32 %v1697, %v1850
        %v1866 = vadd.f32 %v1698, %v1855
        %s1867 = sadd.s32 %s541, 27
        %s1868 = scalar_lea.vmem [#allocation2], %s1867
        %v1869 = vld [vmem:[%s1868] sm:$0xff]
        %v1870 = vld [vmem:[%s1868 + $0x8] sm:$0xff]
        %v1871 = vld [vmem:[%s1868 + $0x10] sm:$0xff]
        %v1872 = vld [vmem:[%s1868 + $0x18] sm:$0xff]
        %v1873 = vld [vmem:[%s1868 + $0x20] sm:$0xff]
        %v1874 = vld [vmem:[%s1868 + $0x28] sm:$0xff]
        %v1875 = vld [vmem:[%s1868 + $0x30] sm:$0xff]
        %v1876 = vld [vmem:[%s1868 + $0x38] sm:$0xff]
        %v1877 = vld [vmem:[%s1868 + $0x40] sm:$0xff]
        %v1878 = vmax.f32 %v1869, 0.0
        %v1879 = vmax.f32 %v1870, 0.0
        %v1880 = vmax.f32 %v1871, 0.0
        %v1881 = vmax.f32 %v1872, 0.0
        %v1882 = vmax.f32 %v1873, 0.0
        %v1883 = vmax.f32 %v1874, 0.0
        %v1884 = vmax.f32 %v1875, 0.0
        %v1885 = vmax.f32 %v1876, 0.0
        %v1886 = vmax.f32 %v1877, 0.0
        %s1887 = scalar_lea.vmem %s2, 64
        %v1888 = vld [vmem:[%s1887] sm:$0xff]
        %v1890 = vsel %vm481, %v1878, 0
        %v1893 = vsel %vm481, %v1879, 0
        %v1896 = vsel %vm481, %v1880, 0
        %v1899 = vsel %vm481, %v1881, 0
        %v1902 = vsel %vm481, %v1882, 0
        %v1905 = vsel %vm481, %v1883, 0
        %v1908 = vsel %vm481, %v1884, 0
        %v1911 = vsel %vm481, %v1885, 0
        %v1914 = vsel %vm481, %v1886, 0
        %1916 = vmatprep.subr.mxu0 0.0
        %1917 = vmatpush1.msra.mxu0 %v1888
        %1918 = vmatprep.subr.mxu0 0.0
        %1919 = vmatpush1.msra.mxu0 0.0
        %1920 = vmatprep.subr.mxu0 0.0
        %1921 = vmatpush1.msra.mxu0 0.0
        %1922 = vmatprep.subr.mxu0 0.0
        %1923 = vmatpush1.msra.mxu0 0.0
        %1924 = vmatprep.subr.mxu0 0.0
        %1925 = vmatpush1.msra.mxu0 0.0
        %1926 = vmatprep.subr.mxu0 0.0
        %1927 = vmatpush1.msra.mxu0 0.0
        %1928 = vmatprep.subr.mxu0 0.0
        %1929 = vmatpush1.msra.mxu0 0.0
        %1930 = vmatprep.subr.mxu0 0.0
        %1931 = vmatpush1.msra.mxu0 0.0
        %1932 = vmatprep.subr.mxu0 0.0
        %1933 = vmatpush1.msra.mxu0 0.0
        %1934 = vmatprep.subr.mxu0 0.0
        %1935 = vmatpush1.msra.mxu0 0.0
        %1936 = vmatprep.subr.mxu0 0.0
        %1937 = vmatpush1.msra.mxu0 0.0
        %1938 = vmatprep.subr.mxu0 0.0
        %1939 = vmatpush1.msra.mxu0 0.0
        %1940 = vmatprep.subr.mxu0 0.0
        %1941 = vmatpush1.msra.mxu0 0.0
        %1942 = vmatprep.subr.mxu0 0.0
        %1943 = vmatpush1.msra.mxu0 0.0
        %1944 = vmatprep.subr.mxu0 0.0
        %1945 = vmatpush1.msra.mxu0 0.0
        %1946 = vmatprep.subr.mxu0 0.0
        %1947 = vmatpush1.msra.mxu0 0.0
        %1948 = vmatprep.subr.mxu0 0.0
        %1949 = vmatpush1.msra.mxu0 0.0
        %1950 = vmatprep.subr.mxu0 0.0
        %1951 = vmatpush1.msra.mxu0 0.0
        %1952 = vmatprep.subr.mxu0 0.0
        %1953 = vmatpush1.msra.mxu0 0.0
        %1954 = vmatprep.subr.mxu0 0.0
        %1955 = vmatpush1.msra.mxu0 0.0
        %1956 = vmatprep.subr.mxu0 0.0
        %1957 = vmatpush1.msra.mxu0 0.0
        %1958 = vmatprep.subr.mxu0 0.0
        %1959 = vmatpush1.msra.mxu0 0.0
        %1960 = vmatprep.subr.mxu0 0.0
        %1961 = vmatpush1.msra.mxu0 0.0
        %1962 = vmatprep.subr.mxu0 0.0
        %1963 = vmatpush1.msra.mxu0 0.0
        %1964 = vmatprep.subr.mxu0 0.0
        %1965 = vmatpush1.msra.mxu0 0.0
        %1966 = vmatprep.subr.mxu0 0.0
        %1967 = vmatpush1.msra.mxu0 0.0
        %1968 = vmatprep.subr.mxu0 0.0
        %1969 = vmatpush1.msra.mxu0 0.0
        %1970 = vmatprep.subr.mxu0 0.0
        %1971 = vmatpush1.msra.mxu0 0.0
        %1972 = vmatprep.subr.mxu0 0.0
        %1973 = vmatpush1.msra.mxu0 0.0
        %1974 = vmatprep.subr.mxu0 0.0
        %1975 = vmatpush1.msra.mxu0 0.0
        %1976 = vmatprep.subr.mxu0 0.0
        %1977 = vmatpush1.msra.mxu0 0.0
        %1978 = vmatprep.subr.mxu0 0.0
        %1979 = vmatpush1.msra.mxu0 0.0
        %1980 = vmatprep.mubr.f32.mxu0 0.0
        %1981 = vmatmul.mubr.f32.gmra.mrb[0].mxu0 %v1890
        %v1982 = vpop.f32.mrb[0].mxu0
        %v1983 = vadd.f32 0.0, %v1982
        %v1984 = vpop.f32.mrb[0].mxu0
        %1985 = vmatprep.mubr.f32.mxu0 0.0
        %1986 = vmatmul.mubr.f32.gmra.mrb[0].mxu0 %v1893
        %v1987 = vpop.f32.mrb[0].mxu0
        %v1988 = vadd.f32 0.0, %v1987
        %v1989 = vpop.f32.mrb[0].mxu0
        %1990 = vmatprep.mubr.f32.mxu0 0.0
        %1991 = vmatmul.mubr.f32.gmra.mrb[0].mxu0 %v1896
        %v1992 = vpop.f32.mrb[0].mxu0
        %v1993 = vadd.f32 0.0, %v1992
        %v1994 = vpop.f32.mrb[0].mxu0
        %1995 = vmatprep.mubr.f32.mxu0 0.0
        %1996 = vmatmul.mubr.f32.gmra.mrb[0].mxu0 %v1899
        %v1997 = vpop.f32.mrb[0].mxu0
        %v1998 = vadd.f32 0.0, %v1997
        %v1999 = vpop.f32.mrb[0].mxu0
        %2000 = vmatprep.mubr.f32.mxu0 0.0
        %2001 = vmatmul.mubr.f32.gmra.mrb[0].mxu0 %v1902
        %v2002 = vpop.f32.mrb[0].mxu0
        %v2003 = vadd.f32 0.0, %v2002
        %v2004 = vpop.f32.mrb[0].mxu0
        %2005 = vmatprep.mubr.f32.mxu0 0.0
        %2006 = vmatmul.mubr.f32.gmra.mrb[0].mxu0 %v1905
        %v2007 = vpop.f32.mrb[0].mxu0
        %v2008 = vadd.f32 0.0, %v2007
        %v2009 = vpop.f32.mrb[0].mxu0
        %2010 = vmatprep.mubr.f32.mxu0 0.0
        %2011 = vmatmul.mubr.f32.gmra.mrb[0].mxu0 %v1908
        %v2012 = vpop.f32.mrb[0].mxu0
        %v2013 = vadd.f32 0.0, %v2012
        %v2014 = vpop.f32.mrb[0].mxu0
        %2015 = vmatprep.mubr.f32.mxu0 0.0
        %2016 = vmatmul.mubr.f32.gmra.mrb[0].mxu0 %v1911
        %v2017 = vpop.f32.mrb[0].mxu0
        %v2018 = vadd.f32 0.0, %v2017
        %v2019 = vpop.f32.mrb[0].mxu0
        %2020 = vmatprep.mubr.f32.mxu0 0.0
        %2021 = vmatmul.mubr.f32.gmra.mrb[0].mxu0 %v1914
        %v2022 = vpop.f32.mrb[0].mxu0
        %v2023 = vadd.f32 0.0, %v2022
        %v2024 = vpop.f32.mrb[0].mxu0
        %2025 = vdwg.mxu0
        %v2026 = vadd.f32 %v1858, %v1983
        %v2027 = vadd.f32 %v1859, %v1988
        %v2028 = vadd.f32 %v1860, %v1993
        %v2029 = vadd.f32 %v1861, %v1998
        %v2030 = vadd.f32 %v1862, %v2003
        %v2031 = vadd.f32 %v1863, %v2008
        %v2032 = vadd.f32 %v1864, %v2013
        %v2033 = vadd.f32 %v1865, %v2018
        %v2034 = vadd.f32 %v1866, %v2023
        %v2035 = vld [vmem:[%s3] sm:$0x1]
        %v2037 = vlaneseq
        %v2038 = vshrl.u32 %v2037, 7
        %v2039 = vsub.s32 0, %v2038
        %v2040 = vrot.slane %v2035, %v2039
        %v2042 = vadd.f32 %v2026, %v2040
        %v2043 = vadd.f32 %v2027, %v2040
        %v2044 = vadd.f32 %v2028, %v2040
        %v2045 = vadd.f32 %v2029, %v2040
        %v2046 = vadd.f32 %v2030, %v2040
        %v2047 = vadd.f32 %v2031, %v2040
        %v2048 = vadd.f32 %v2032, %v2040
        %v2049 = vadd.f32 %v2033, %v2040
        %v2050 = vadd.f32 %v2034, %v2040
        %v2051 = vmax.f32 %v2042, 0.0
        %v2052 = vmax.f32 %v2043, 0.0
        %v2053 = vmax.f32 %v2044, 0.0
        %v2054 = vmax.f32 %v2045, 0.0
        %v2055 = vmax.f32 %v2046, 0.0
        %v2056 = vmax.f32 %v2047, 0.0
        %v2057 = vmax.f32 %v2048, 0.0
        %v2058 = vmax.f32 %v2049, 0.0
        %v2059 = vmax.f32 %v2050, 0.0
        %2061 = vset.pattern.permute.xlu0 0
        %2062 = vperm.xlu0 %2061, %v524
        %v2063 = vpop.permute.xlu0 %2062
        %2066 = vset.pattern.permute.xlu0 0
        %2067 = vperm.xlu0 %2066, %v525
        %v2068 = vpop.permute.xlu0 %2067
        %2071 = vset.pattern.permute.xlu0 0
        %2072 = vperm.xlu0 %2071, %v526
        %v2073 = vpop.permute.xlu0 %2072
        %2076 = vset.pattern.permute.xlu0 0
        %2077 = vperm.xlu0 %2076, %v527
        %v2078 = vpop.permute.xlu0 %2077
        %2081 = vset.pattern.permute.xlu0 0
        %2082 = vperm.xlu0 %2081, %v528
        %v2083 = vpop.permute.xlu0 %2082
        %2086 = vset.pattern.permute.xlu0 0
        %2087 = vperm.xlu0 %2086, %v529
        %v2088 = vpop.permute.xlu0 %2087
        %2091 = vset.pattern.permute.xlu0 0
        %2092 = vperm.xlu0 %2091, %v530
        %v2093 = vpop.permute.xlu0 %2092
        %2096 = vset.pattern.permute.xlu0 0
        %2097 = vperm.xlu0 %2096, %v531
        %v2098 = vpop.permute.xlu0 %2097
        %2101 = vset.pattern.permute.xlu0 0
        %2102 = vperm.xlu0 %2101, %v532
        %v2103 = vpop.permute.xlu0 %2102
        %v2105 = vmul.f32 %v2051, %v2063
        %v2106 = vmul.f32 %v2052, %v2068
        %v2107 = vmul.f32 %v2053, %v2073
        %v2108 = vmul.f32 %v2054, %v2078
        %v2109 = vmul.f32 %v2055, %v2083
        %v2110 = vmul.f32 %v2056, %v2088
        %v2111 = vmul.f32 %v2057, %v2093
        %v2112 = vmul.f32 %v2058, %v2098
        %v2113 = vmul.f32 %v2059, %v2103
        %s2114 = scalar_lea.vmem [#allocation3], %s542
        %2115 = vst.msk [vmem:[%s2114] sm:$0xff] %vm414, %v2105
        %2116 = vst.msk [vmem:[%s2114 + $0x8] sm:$0xff] %vm414, %v2106
        %2117 = vst.msk [vmem:[%s2114 + $0x10] sm:$0xff] %vm414, %v2107
        %2118 = vst.msk [vmem:[%s2114 + $0x18] sm:$0xff] %vm414, %v2108
        %2119 = vst.msk [vmem:[%s2114 + $0x20] sm:$0xff] %vm414, %v2109
        %2120 = vst.msk [vmem:[%s2114 + $0x28] sm:$0xff] %vm414, %v2110
        %2121 = vst.msk [vmem:[%s2114 + $0x30] sm:$0xff] %vm414, %v2111
        %2122 = vst.msk [vmem:[%s2114 + $0x38] sm:$0xff] %vm414, %v2112
        %2123 = vst.msk [vmem:[%s2114 + $0x40] sm:$0xff] %vm414, %v2113
      $region73: #{tpu_custom_call.1} parent=67 // loop_footer
        %s538 = sadd.s32 1, %s534
      $region74: #{tpu_custom_call.1} parent=67 // loop_footer_branch
        %533 = sbr.rel target = $region70
      $region75: #{tpu_custom_call.1} parent=67 // loop_exit
        _
      loop: start=0, step=1, limit=4
      $region76: #{tpu_custom_call.1} parent=67 // loop_pre_header
        _
      $region77: #{tpu_custom_call.1} parent=67 // loop_header
        %s2125 = sphi 0, %s2129
        %p2126 = scmp.ge.s32.totalorder %s2125, 4
      $region78: #{tpu_custom_call.1} parent=67 // loop_header_branch
        %2128 = sbr.rel (%p2126) target = $region82
      $region79: #{tpu_custom_call.1} parent=67 // loop_body
        %s2130 = smul.u32 %s2125, 4
        %s2131 = sadd.s32 %s2130, 1
        %s2132 = smul.u32 %s2131, 18
        %s2133 = sadd.s32 %s2132, 8
        %s2134 = sadd.s32 %s2132, 4294967285
        %s2135 = scalar_lea.vmem [#allocation3], %s2134
        %v2136 = vld [vmem:[%s2135] sm:$0xff]
        %v2137 = vld [vmem:[%s2135 + $0x8] sm:$0xff]
        %v2138 = vld [vmem:[%s2135 + $0x10] sm:$0xff]
        %v2139 = vld [vmem:[%s2135 + $0x18] sm:$0xff]
        %v2140 = vld [vmem:[%s2135 + $0x20] sm:$0xff]
        %v2141 = vld [vmem:[%s2135 + $0x28] sm:$0xff]
        %v2142 = vld [vmem:[%s2135 + $0x30] sm:$0xff]
        %v2143 = vld [vmem:[%s2135 + $0x38] sm:$0xff]
        %v2144 = vld [vmem:[%s2135 + $0x40] sm:$0xff]
        %v2145 = vld [vmem:[%s4] sm:$0xff]
        %v2146 = vld [vmem:[%s4 + $0x8] sm:$0xff]
        %s2147 = sadd.s32 %s2132, 4294967286
        %s2148 = scalar_lea.vmem [#allocation3], %s2147
        %v2149 = vld [vmem:[%s2148] sm:$0xff]
        %v2150 = vld [vmem:[%s2148 + $0x8] sm:$0xff]
        %v2151 = vld [vmem:[%s2148 + $0x10] sm:$0xff]
        %v2152 = vld [vmem:[%s2148 + $0x18] sm:$0xff]
        %v2153 = vld [vmem:[%s2148 + $0x20] sm:$0xff]
        %v2154 = vld [vmem:[%s2148 + $0x28] sm:$0xff]
        %v2155 = vld [vmem:[%s2148 + $0x30] sm:$0xff]
        %v2156 = vld [vmem:[%s2148 + $0x38] sm:$0xff]
        %v2157 = vld [vmem:[%s2148 + $0x40] sm:$0xff]
        %s2158 = scalar_lea.vmem %s4, 16
        %v2159 = vld [vmem:[%s2158] sm:$0xff]
        %v2160 = vld [vmem:[%s2158 + $0x8] sm:$0xff]
        %v2162 = vsel %vm414, %v2149, 0
        %v2165 = vsel %vm414, %v2150, 0
        %v2168 = vsel %vm414, %v2151, 0
        %v2171 = vsel %vm414, %v2152, 0
        %v2174 = vsel %vm414, %v2153, 0
        %v2177 = vsel %vm414, %v2154, 0
        %v2180 = vsel %vm414, %v2155, 0
        %v2183 = vsel %vm414, %v2156, 0
        %v2186 = vsel %vm414, %v2157, 0
        %2188 = vmatprep.subr.mxu0 0.0
        %2189 = vmatpush1.msra.mxu0 %v2159
        %2190 = vmatprep.subr.mxu0 0.0
        %2191 = vmatpush1.msra.mxu0 %v2160
        %2192 = vmatprep.subr.mxu0 0.0
        %2193 = vmatpush1.msra.mxu0 0.0
        %2194 = vmatprep.subr.mxu0 0.0
        %2195 = vmatpush1.msra.mxu0 0.0
        %2196 = vmatprep.subr.mxu0 0.0
        %2197 = vmatpush1.msra.mxu0 0.0
        %2198 = vmatprep.subr.mxu0 0.0
        %2199 = vmatpush1.msra.mxu0 0.0
        %2200 = vmatprep.subr.mxu0 0.0
        %2201 = vmatpush1.msra.mxu0 0.0
        %2202 = vmatprep.subr.mxu0 0.0
        %2203 = vmatpush1.msra.mxu0 0.0
        %2204 = vmatprep.subr.mxu0 0.0
        %2205 = vmatpush1.msra.mxu0 0.0
        %2206 = vmatprep.subr.mxu0 0.0
        %2207 = vmatpush1.msra.mxu0 0.0
        %2208 = vmatprep.subr.mxu0 0.0
        %2209 = vmatpush1.msra.mxu0 0.0
        %2210 = vmatprep.subr.mxu0 0.0
        %2211 = vmatpush1.msra.mxu0 0.0
        %2212 = vmatprep.subr.mxu0 0.0
        %2213 = vmatpush1.msra.mxu0 0.0
        %2214 = vmatprep.subr.mxu0 0.0
        %2215 = vmatpush1.msra.mxu0 0.0
        %2216 = vmatprep.subr.mxu0 0.0
        %2217 = vmatpush1.msra.mxu0 0.0
        %2218 = vmatprep.subr.mxu0 0.0
        %2219 = vmatpush1.msra.mxu0 0.0
        %2220 = vmatprep.subr.mxu0 0.0
        %2221 = vmatpush1.msra.mxu0 0.0
        %2222 = vmatprep.subr.mxu0 0.0
        %2223 = vmatpush1.msra.mxu0 0.0
        %2224 = vmatprep.subr.mxu0 0.0
        %2225 = vmatpush1.msra.mxu0 0.0
        %2226 = vmatprep.subr.mxu0 0.0
        %2227 = vmatpush1.msra.mxu0 0.0
        %2228 = vmatprep.subr.mxu0 0.0
        %2229 = vmatpush1.msra.mxu0 0.0
        %2230 = vmatprep.subr.mxu0 0.0
        %2231 = vmatpush1.msra.mxu0 0.0
        %2232 = vmatprep.subr.mxu0 0.0
        %2233 = vmatpush1.msra.mxu0 0.0
        %2234 = vmatprep.subr.mxu0 0.0
        %2235 = vmatpush1.msra.mxu0 0.0
        %2236 = vmatprep.subr.mxu0 0.0
        %2237 = vmatpush1.msra.mxu0 0.0
        %2238 = vmatprep.subr.mxu0 0.0
        %2239 = vmatpush1.msra.mxu0 0.0
        %2240 = vmatprep.subr.mxu0 0.0
        %2241 = vmatpush1.msra.mxu0 0.0
        %2242 = vmatprep.subr.mxu0 0.0
        %2243 = vmatpush1.msra.mxu0 0.0
        %2244 = vmatprep.subr.mxu0 0.0
        %2245 = vmatpush1.msra.mxu0 0.0
        %2246 = vmatprep.subr.mxu0 0.0
        %2247 = vmatpush1.msra.mxu0 0.0
        %2248 = vmatprep.subr.mxu0 0.0
        %2249 = vmatpush1.msra.mxu0 0.0
        %2250 = vmatprep.subr.mxu0 0.0
        %2251 = vmatpush1.msra.mxu0 0.0
        %2252 = vmatprep.mubr.f32.mxu0 0.0
        %2253 = vmatmul.mubr.f32.gmra.mrb[0].mxu0 %v2162
        %v2254 = vpop.f32.mrb[0].mxu0
        %v2255 = vadd.f32 0.0, %v2254
        %v2256 = vpop.f32.mrb[0].mxu0
        %2257 = vmatprep.mubr.f32.mxu0 0.0
        %2258 = vmatmul.mubr.f32.gmra.mrb[0].mxu0 %v2165
        %v2259 = vpop.f32.mrb[0].mxu0
        %v2260 = vadd.f32 0.0, %v2259
        %v2261 = vpop.f32.mrb[0].mxu0
        %2262 = vmatprep.mubr.f32.mxu0 0.0
        %2263 = vmatmul.mubr.f32.gmra.mrb[0].mxu0 %v2168
        %v2264 = vpop.f32.mrb[0].mxu0
        %v2265 = vadd.f32 0.0, %v2264
        %v2266 = vpop.f32.mrb[0].mxu0
        %2267 = vmatprep.mubr.f32.mxu0 0.0
        %2268 = vmatmul.mubr.f32.gmra.mrb[0].mxu0 %v2171
        %v2269 = vpop.f32.mrb[0].mxu0
        %v2270 = vadd.f32 0.0, %v2269
        %v2271 = vpop.f32.mrb[0].mxu0
        %2272 = vmatprep.mubr.f32.mxu0 0.0
        %2273 = vmatmul.mubr.f32.gmra.mrb[0].mxu0 %v2174
        %v2274 = vpop.f32.mrb[0].mxu0
        %v2275 = vadd.f32 0.0, %v2274
        %v2276 = vpop.f32.mrb[0].mxu0
        %2277 = vmatprep.mubr.f32.mxu0 0.0
        %2278 = vmatmul.mubr.f32.gmra.mrb[0].mxu0 %v2177
        %v2279 = vpop.f32.mrb[0].mxu0
        %v2280 = vadd.f32 0.0, %v2279
        %v2281 = vpop.f32.mrb[0].mxu0
        %2282 = vmatprep.mubr.f32.mxu0 0.0
        %2283 = vmatmul.mubr.f32.gmra.mrb[0].mxu0 %v2180
        %v2284 = vpop.f32.mrb[0].mxu0
        %v2285 = vadd.f32 0.0, %v2284
        %v2286 = vpop.f32.mrb[0].mxu0
        %2287 = vmatprep.mubr.f32.mxu0 0.0
        %2288 = vmatmul.mubr.f32.gmra.mrb[0].mxu0 %v2183
        %v2289 = vpop.f32.mrb[0].mxu0
        %v2290 = vadd.f32 0.0, %v2289
        %v2291 = vpop.f32.mrb[0].mxu0
        %2292 = vmatprep.mubr.f32.mxu0 0.0
        %2293 = vmatmul.mubr.f32.gmra.mrb[0].mxu0 %v2186
        %v2294 = vpop.f32.mrb[0].mxu0
        %v2295 = vadd.f32 0.0, %v2294
        %v2296 = vpop.f32.mrb[0].mxu0
        %2297 = vdwg.mxu0
        %v2299 = vsel %vm414, %v2136, 0
        %v2302 = vsel %vm414, %v2137, 0
        %v2305 = vsel %vm414, %v2138, 0
        %v2308 = vsel %vm414, %v2139, 0
        %v2311 = vsel %vm414, %v2140, 0
        %v2314 = vsel %vm414, %v2141, 0
        %v2317 = vsel %vm414, %v2142, 0
        %v2320 = vsel %vm414, %v2143, 0
        %v2323 = vsel %vm414, %v2144, 0
        %2325 = vmatprep.subr.mxu0 0.0
        %2326 = vmatpush1.msra.mxu0 %v2145
        %2327 = vmatprep.subr.mxu0 0.0
        %2328 = vmatpush1.msra.mxu0 %v2146
        %2329 = vmatprep.subr.mxu0 0.0
        %2330 = vmatpush1.msra.mxu0 0.0
        %2331 = vmatprep.subr.mxu0 0.0
        %2332 = vmatpush1.msra.mxu0 0.0
        %2333 = vmatprep.subr.mxu0 0.0
        %2334 = vmatpush1.msra.mxu0 0.0
        %2335 = vmatprep.subr.mxu0 0.0
        %2336 = vmatpush1.msra.mxu0 0.0
        %2337 = vmatprep.subr.mxu0 0.0
        %2338 = vmatpush1.msra.mxu0 0.0
        %2339 = vmatprep.subr.mxu0 0.0
        %2340 = vmatpush1.msra.mxu0 0.0
        %2341 = vmatprep.subr.mxu0 0.0
        %2342 = vmatpush1.msra.mxu0 0.0
        %2343 = vmatprep.subr.mxu0 0.0
        %2344 = vmatpush1.msra.mxu0 0.0
        %2345 = vmatprep.subr.mxu0 0.0
        %2346 = vmatpush1.msra.mxu0 0.0
        %2347 = vmatprep.subr.mxu0 0.0
        %2348 = vmatpush1.msra.mxu0 0.0
        %2349 = vmatprep.subr.mxu0 0.0
        %2350 = vmatpush1.msra.mxu0 0.0
        %2351 = vmatprep.subr.mxu0 0.0
        %2352 = vmatpush1.msra.mxu0 0.0
        %2353 = vmatprep.subr.mxu0 0.0
        %2354 = vmatpush1.msra.mxu0 0.0
        %2355 = vmatprep.subr.mxu0 0.0
        %2356 = vmatpush1.msra.mxu0 0.0
        %2357 = vmatprep.subr.mxu0 0.0
        %2358 = vmatpush1.msra.mxu0 0.0
        %2359 = vmatprep.subr.mxu0 0.0
        %2360 = vmatpush1.msra.mxu0 0.0
        %2361 = vmatprep.subr.mxu0 0.0
        %2362 = vmatpush1.msra.mxu0 0.0
        %2363 = vmatprep.subr.mxu0 0.0
        %2364 = vmatpush1.msra.mxu0 0.0
        %2365 = vmatprep.subr.mxu0 0.0
        %2366 = vmatpush1.msra.mxu0 0.0
        %2367 = vmatprep.subr.mxu0 0.0
        %2368 = vmatpush1.msra.mxu0 0.0
        %2369 = vmatprep.subr.mxu0 0.0
        %2370 = vmatpush1.msra.mxu0 0.0
        %2371 = vmatprep.subr.mxu0 0.0
        %2372 = vmatpush1.msra.mxu0 0.0
        %2373 = vmatprep.subr.mxu0 0.0
        %2374 = vmatpush1.msra.mxu0 0.0
        %2375 = vmatprep.subr.mxu0 0.0
        %2376 = vmatpush1.msra.mxu0 0.0
        %2377 = vmatprep.subr.mxu0 0.0
        %2378 = vmatpush1.msra.mxu0 0.0
        %2379 = vmatprep.subr.mxu0 0.0
        %2380 = vmatpush1.msra.mxu0 0.0
        %2381 = vmatprep.subr.mxu0 0.0
        %2382 = vmatpush1.msra.mxu0 0.0
        %2383 = vmatprep.subr.mxu0 0.0
        %2384 = vmatpush1.msra.mxu0 0.0
        %2385 = vmatprep.subr.mxu0 0.0
        %2386 = vmatpush1.msra.mxu0 0.0
        %2387 = vmatprep.subr.mxu0 0.0
        %2388 = vmatpush1.msra.mxu0 0.0
        %2389 = vmatprep.mubr.f32.mxu0 0.0
        %2390 = vmatmul.mubr.f32.gmra.mrb[0].mxu0 %v2299
        %v2391 = vpop.f32.mrb[0].mxu0
        %v2392 = vadd.f32 %v2255, %v2391
        %v2393 = vpop.f32.mrb[0].mxu0
        %2394 = vmatprep.mubr.f32.mxu0 0.0
        %2395 = vmatmul.mubr.f32.gmra.mrb[0].mxu0 %v2302
        %v2396 = vpop.f32.mrb[0].mxu0
        %v2397 = vadd.f32 %v2260, %v2396
        %v2398 = vpop.f32.mrb[0].mxu0
        %2399 = vmatprep.mubr.f32.mxu0 0.0
        %2400 = vmatmul.mubr.f32.gmra.mrb[0].mxu0 %v2305
        %v2401 = vpop.f32.mrb[0].mxu0
        %v2402 = vadd.f32 %v2265, %v2401
        %v2403 = vpop.f32.mrb[0].mxu0
        %2404 = vmatprep.mubr.f32.mxu0 0.0
        %2405 = vmatmul.mubr.f32.gmra.mrb[0].mxu0 %v2308
        %v2406 = vpop.f32.mrb[0].mxu0
        %v2407 = vadd.f32 %v2270, %v2406
        %v2408 = vpop.f32.mrb[0].mxu0
        %2409 = vmatprep.mubr.f32.mxu0 0.0
        %2410 = vmatmul.mubr.f32.gmra.mrb[0].mxu0 %v2311
        %v2411 = vpop.f32.mrb[0].mxu0
        %v2412 = vadd.f32 %v2275, %v2411
        %v2413 = vpop.f32.mrb[0].mxu0
        %2414 = vmatprep.mubr.f32.mxu0 0.0
        %2415 = vmatmul.mubr.f32.gmra.mrb[0].mxu0 %v2314
        %v2416 = vpop.f32.mrb[0].mxu0
        %v2417 = vadd.f32 %v2280, %v2416
        %v2418 = vpop.f32.mrb[0].mxu0
        %2419 = vmatprep.mubr.f32.mxu0 0.0
        %2420 = vmatmul.mubr.f32.gmra.mrb[0].mxu0 %v2317
        %v2421 = vpop.f32.mrb[0].mxu0
        %v2422 = vadd.f32 %v2285, %v2421
        %v2423 = vpop.f32.mrb[0].mxu0
        %2424 = vmatprep.mubr.f32.mxu0 0.0
        %2425 = vmatmul.mubr.f32.gmra.mrb[0].mxu0 %v2320
        %v2426 = vpop.f32.mrb[0].mxu0
        %v2427 = vadd.f32 %v2290, %v2426
        %v2428 = vpop.f32.mrb[0].mxu0
        %2429 = vmatprep.mubr.f32.mxu0 0.0
        %2430 = vmatmul.mubr.f32.gmra.mrb[0].mxu0 %v2323
        %v2431 = vpop.f32.mrb[0].mxu0
        %v2432 = vadd.f32 %v2295, %v2431
        %v2433 = vpop.f32.mrb[0].mxu0
        %2434 = vdwg.mxu0
        %s2435 = sadd.s32 %s2132, 4294967287
        %s2436 = scalar_lea.vmem [#allocation3], %s2435
        %v2437 = vld [vmem:[%s2436] sm:$0xff]
        %v2438 = vld [vmem:[%s2436 + $0x8] sm:$0xff]
        %v2439 = vld [vmem:[%s2436 + $0x10] sm:$0xff]
        %v2440 = vld [vmem:[%s2436 + $0x18] sm:$0xff]
        %v2441 = vld [vmem:[%s2436 + $0x20] sm:$0xff]
        %v2442 = vld [vmem:[%s2436 + $0x28] sm:$0xff]
        %v2443 = vld [vmem:[%s2436 + $0x30] sm:$0xff]
        %v2444 = vld [vmem:[%s2436 + $0x38] sm:$0xff]
        %v2445 = vld [vmem:[%s2436 + $0x40] sm:$0xff]
        %s2446 = scalar_lea.vmem %s4, 32
        %v2447 = vld [vmem:[%s2446] sm:$0xff]
        %v2448 = vld [vmem:[%s2446 + $0x8] sm:$0xff]
        %v2450 = vsel %vm414, %v2437, 0
        %v2453 = vsel %vm414, %v2438, 0
        %v2456 = vsel %vm414, %v2439, 0
        %v2459 = vsel %vm414, %v2440, 0
        %v2462 = vsel %vm414, %v2441, 0
        %v2465 = vsel %vm414, %v2442, 0
        %v2468 = vsel %vm414, %v2443, 0
        %v2471 = vsel %vm414, %v2444, 0
        %v2474 = vsel %vm414, %v2445, 0
        %2476 = vmatprep.subr.mxu0 0.0
        %2477 = vmatpush1.msra.mxu0 %v2447
        %2478 = vmatprep.subr.mxu0 0.0
        %2479 = vmatpush1.msra.mxu0 %v2448
        %2480 = vmatprep.subr.mxu0 0.0
        %2481 = vmatpush1.msra.mxu0 0.0
        %2482 = vmatprep.subr.mxu0 0.0
        %2483 = vmatpush1.msra.mxu0 0.0
        %2484 = vmatprep.subr.mxu0 0.0
        %2485 = vmatpush1.msra.mxu0 0.0
        %2486 = vmatprep.subr.mxu0 0.0
        %2487 = vmatpush1.msra.mxu0 0.0
        %2488 = vmatprep.subr.mxu0 0.0
        %2489 = vmatpush1.msra.mxu0 0.0
        %2490 = vmatprep.subr.mxu0 0.0
        %2491 = vmatpush1.msra.mxu0 0.0
        %2492 = vmatprep.subr.mxu0 0.0
        %2493 = vmatpush1.msra.mxu0 0.0
        %2494 = vmatprep.subr.mxu0 0.0
        %2495 = vmatpush1.msra.mxu0 0.0
        %2496 = vmatprep.subr.mxu0 0.0
        %2497 = vmatpush1.msra.mxu0 0.0
        %2498 = vmatprep.subr.mxu0 0.0
        %2499 = vmatpush1.msra.mxu0 0.0
        %2500 = vmatprep.subr.mxu0 0.0
        %2501 = vmatpush1.msra.mxu0 0.0
        %2502 = vmatprep.subr.mxu0 0.0
        %2503 = vmatpush1.msra.mxu0 0.0
        %2504 = vmatprep.subr.mxu0 0.0
        %2505 = vmatpush1.msra.mxu0 0.0
        %2506 = vmatprep.subr.mxu0 0.0
        %2507 = vmatpush1.msra.mxu0 0.0
        %2508 = vmatprep.subr.mxu0 0.0
        %2509 = vmatpush1.msra.mxu0 0.0
        %2510 = vmatprep.subr.mxu0 0.0
        %2511 = vmatpush1.msra.mxu0 0.0
        %2512 = vmatprep.subr.mxu0 0.0
        %2513 = vmatpush1.msra.mxu0 0.0
        %2514 = vmatprep.subr.mxu0 0.0
        %2515 = vmatpush1.msra.mxu0 0.0
        %2516 = vmatprep.subr.mxu0 0.0
        %2517 = vmatpush1.msra.mxu0 0.0
        %2518 = vmatprep.subr.mxu0 0.0
        %2519 = vmatpush1.msra.mxu0 0.0
        %2520 = vmatprep.subr.mxu0 0.0
        %2521 = vmatpush1.msra.mxu0 0.0
        %2522 = vmatprep.subr.mxu0 0.0
        %2523 = vmatpush1.msra.mxu0 0.0
        %2524 = vmatprep.subr.mxu0 0.0
        %2525 = vmatpush1.msra.mxu0 0.0
        %2526 = vmatprep.subr.mxu0 0.0
        %2527 = vmatpush1.msra.mxu0 0.0
        %2528 = vmatprep.subr.mxu0 0.0
        %2529 = vmatpush1.msra.mxu0 0.0
        %2530 = vmatprep.subr.mxu0 0.0
        %2531 = vmatpush1.msra.mxu0 0.0
        %2532 = vmatprep.subr.mxu0 0.0
        %2533 = vmatpush1.msra.mxu0 0.0
        %2534 = vmatprep.subr.mxu0 0.0
        %2535 = vmatpush1.msra.mxu0 0.0
        %2536 = vmatprep.subr.mxu0 0.0
        %2537 = vmatpush1.msra.mxu0 0.0
        %2538 = vmatprep.subr.mxu0 0.0
        %2539 = vmatpush1.msra.mxu0 0.0
        %2540 = vmatprep.mubr.f32.mxu0 0.0
        %2541 = vmatmul.mubr.f32.gmra.mrb[0].mxu0 %v2450
        %v2542 = vpop.f32.mrb[0].mxu0
        %v2543 = vadd.f32 0.0, %v2542
        %v2544 = vpop.f32.mrb[0].mxu0
        %2545 = vmatprep.mubr.f32.mxu0 0.0
        %2546 = vmatmul.mubr.f32.gmra.mrb[0].mxu0 %v2453
        %v2547 = vpop.f32.mrb[0].mxu0
        %v2548 = vadd.f32 0.0, %v2547
        %v2549 = vpop.f32.mrb[0].mxu0
        %2550 = vmatprep.mubr.f32.mxu0 0.0
        %2551 = vmatmul.mubr.f32.gmra.mrb[0].mxu0 %v2456
        %v2552 = vpop.f32.mrb[0].mxu0
        %v2553 = vadd.f32 0.0, %v2552
        %v2554 = vpop.f32.mrb[0].mxu0
        %2555 = vmatprep.mubr.f32.mxu0 0.0
        %2556 = vmatmul.mubr.f32.gmra.mrb[0].mxu0 %v2459
        %v2557 = vpop.f32.mrb[0].mxu0
        %v2558 = vadd.f32 0.0, %v2557
        %v2559 = vpop.f32.mrb[0].mxu0
        %2560 = vmatprep.mubr.f32.mxu0 0.0
        %2561 = vmatmul.mubr.f32.gmra.mrb[0].mxu0 %v2462
        %v2562 = vpop.f32.mrb[0].mxu0
        %v2563 = vadd.f32 0.0, %v2562
        %v2564 = vpop.f32.mrb[0].mxu0
        %2565 = vmatprep.mubr.f32.mxu0 0.0
        %2566 = vmatmul.mubr.f32.gmra.mrb[0].mxu0 %v2465
        %v2567 = vpop.f32.mrb[0].mxu0
        %v2568 = vadd.f32 0.0, %v2567
        %v2569 = vpop.f32.mrb[0].mxu0
        %2570 = vmatprep.mubr.f32.mxu0 0.0
        %2571 = vmatmul.mubr.f32.gmra.mrb[0].mxu0 %v2468
        %v2572 = vpop.f32.mrb[0].mxu0
        %v2573 = vadd.f32 0.0, %v2572
        %v2574 = vpop.f32.mrb[0].mxu0
        %2575 = vmatprep.mubr.f32.mxu0 0.0
        %2576 = vmatmul.mubr.f32.gmra.mrb[0].mxu0 %v2471
        %v2577 = vpop.f32.mrb[0].mxu0
        %v2578 = vadd.f32 0.0, %v2577
        %v2579 = vpop.f32.mrb[0].mxu0
        %2580 = vmatprep.mubr.f32.mxu0 0.0
        %2581 = vmatmul.mubr.f32.gmra.mrb[0].mxu0 %v2474
        %v2582 = vpop.f32.mrb[0].mxu0
        %v2583 = vadd.f32 0.0, %v2582
        %v2584 = vpop.f32.mrb[0].mxu0
        %2585 = vdwg.mxu0
        %v2586 = vadd.f32 %v2392, %v2543
        %v2587 = vadd.f32 %v2397, %v2548
        %v2588 = vadd.f32 %v2402, %v2553
        %v2589 = vadd.f32 %v2407, %v2558
        %v2590 = vadd.f32 %v2412, %v2563
        %v2591 = vadd.f32 %v2417, %v2568
        %v2592 = vadd.f32 %v2422, %v2573
        %v2593 = vadd.f32 %v2427, %v2578
        %v2594 = vadd.f32 %v2432, %v2583
        %s2595 = sadd.s32 %s2132, 7
        %s2596 = scalar_lea.vmem [#allocation3], %s2595
        %v2597 = vld [vmem:[%s2596] sm:$0xff]
        %v2598 = vld [vmem:[%s2596 + $0x8] sm:$0xff]
        %v2599 = vld [vmem:[%s2596 + $0x10] sm:$0xff]
        %v2600 = vld [vmem:[%s2596 + $0x18] sm:$0xff]
        %v2601 = vld [vmem:[%s2596 + $0x20] sm:$0xff]
        %v2602 = vld [vmem:[%s2596 + $0x28] sm:$0xff]
        %v2603 = vld [vmem:[%s2596 + $0x30] sm:$0xff]
        %v2604 = vld [vmem:[%s2596 + $0x38] sm:$0xff]
        %v2605 = vld [vmem:[%s2596 + $0x40] sm:$0xff]
        %s2606 = scalar_lea.vmem %s4, 48
        %v2607 = vld [vmem:[%s2606] sm:$0xff]
        %v2608 = vld [vmem:[%s2606 + $0x8] sm:$0xff]
        %v2610 = vsel %vm414, %v2597, 0
        %v2613 = vsel %vm414, %v2598, 0
        %v2616 = vsel %vm414, %v2599, 0
        %v2619 = vsel %vm414, %v2600, 0
        %v2622 = vsel %vm414, %v2601, 0
        %v2625 = vsel %vm414, %v2602, 0
        %v2628 = vsel %vm414, %v2603, 0
        %v2631 = vsel %vm414, %v2604, 0
        %v2634 = vsel %vm414, %v2605, 0
        %2636 = vmatprep.subr.mxu0 0.0
        %2637 = vmatpush1.msra.mxu0 %v2607
        %2638 = vmatprep.subr.mxu0 0.0
        %2639 = vmatpush1.msra.mxu0 %v2608
        %2640 = vmatprep.subr.mxu0 0.0
        %2641 = vmatpush1.msra.mxu0 0.0
        %2642 = vmatprep.subr.mxu0 0.0
        %2643 = vmatpush1.msra.mxu0 0.0
        %2644 = vmatprep.subr.mxu0 0.0
        %2645 = vmatpush1.msra.mxu0 0.0
        %2646 = vmatprep.subr.mxu0 0.0
        %2647 = vmatpush1.msra.mxu0 0.0
        %2648 = vmatprep.subr.mxu0 0.0
        %2649 = vmatpush1.msra.mxu0 0.0
        %2650 = vmatprep.subr.mxu0 0.0
        %2651 = vmatpush1.msra.mxu0 0.0
        %2652 = vmatprep.subr.mxu0 0.0
        %2653 = vmatpush1.msra.mxu0 0.0
        %2654 = vmatprep.subr.mxu0 0.0
        %2655 = vmatpush1.msra.mxu0 0.0
        %2656 = vmatprep.subr.mxu0 0.0
        %2657 = vmatpush1.msra.mxu0 0.0
        %2658 = vmatprep.subr.mxu0 0.0
        %2659 = vmatpush1.msra.mxu0 0.0
        %2660 = vmatprep.subr.mxu0 0.0
        %2661 = vmatpush1.msra.mxu0 0.0
        %2662 = vmatprep.subr.mxu0 0.0
        %2663 = vmatpush1.msra.mxu0 0.0
        %2664 = vmatprep.subr.mxu0 0.0
        %2665 = vmatpush1.msra.mxu0 0.0
        %2666 = vmatprep.subr.mxu0 0.0
        %2667 = vmatpush1.msra.mxu0 0.0
        %2668 = vmatprep.subr.mxu0 0.0
        %2669 = vmatpush1.msra.mxu0 0.0
        %2670 = vmatprep.subr.mxu0 0.0
        %2671 = vmatpush1.msra.mxu0 0.0
        %2672 = vmatprep.subr.mxu0 0.0
        %2673 = vmatpush1.msra.mxu0 0.0
        %2674 = vmatprep.subr.mxu0 0.0
        %2675 = vmatpush1.msra.mxu0 0.0
        %2676 = vmatprep.subr.mxu0 0.0
        %2677 = vmatpush1.msra.mxu0 0.0
        %2678 = vmatprep.subr.mxu0 0.0
        %2679 = vmatpush1.msra.mxu0 0.0
        %2680 = vmatprep.subr.mxu0 0.0
        %2681 = vmatpush1.msra.mxu0 0.0
        %2682 = vmatprep.subr.mxu0 0.0
        %2683 = vmatpush1.msra.mxu0 0.0
        %2684 = vmatprep.subr.mxu0 0.0
        %2685 = vmatpush1.msra.mxu0 0.0
        %2686 = vmatprep.subr.mxu0 0.0
        %2687 = vmatpush1.msra.mxu0 0.0
        %2688 = vmatprep.subr.mxu0 0.0
        %2689 = vmatpush1.msra.mxu0 0.0
        %2690 = vmatprep.subr.mxu0 0.0
        %2691 = vmatpush1.msra.mxu0 0.0
        %2692 = vmatprep.subr.mxu0 0.0
        %2693 = vmatpush1.msra.mxu0 0.0
        %2694 = vmatprep.subr.mxu0 0.0
        %2695 = vmatpush1.msra.mxu0 0.0
        %2696 = vmatprep.subr.mxu0 0.0
        %2697 = vmatpush1.msra.mxu0 0.0
        %2698 = vmatprep.subr.mxu0 0.0
        %2699 = vmatpush1.msra.mxu0 0.0
        %2700 = vmatprep.mubr.f32.mxu0 0.0
        %2701 = vmatmul.mubr.f32.gmra.mrb[0].mxu0 %v2610
        %v2702 = vpop.f32.mrb[0].mxu0
        %v2703 = vadd.f32 0.0, %v2702
        %v2704 = vpop.f32.mrb[0].mxu0
        %2705 = vmatprep.mubr.f32.mxu0 0.0
        %2706 = vmatmul.mubr.f32.gmra.mrb[0].mxu0 %v2613
        %v2707 = vpop.f32.mrb[0].mxu0
        %v2708 = vadd.f32 0.0, %v2707
        %v2709 = vpop.f32.mrb[0].mxu0
        %2710 = vmatprep.mubr.f32.mxu0 0.0
        %2711 = vmatmul.mubr.f32.gmra.mrb[0].mxu0 %v2616
        %v2712 = vpop.f32.mrb[0].mxu0
        %v2713 = vadd.f32 0.0, %v2712
        %v2714 = vpop.f32.mrb[0].mxu0
        %2715 = vmatprep.mubr.f32.mxu0 0.0
        %2716 = vmatmul.mubr.f32.gmra.mrb[0].mxu0 %v2619
        %v2717 = vpop.f32.mrb[0].mxu0
        %v2718 = vadd.f32 0.0, %v2717
        %v2719 = vpop.f32.mrb[0].mxu0
        %2720 = vmatprep.mubr.f32.mxu0 0.0
        %2721 = vmatmul.mubr.f32.gmra.mrb[0].mxu0 %v2622
        %v2722 = vpop.f32.mrb[0].mxu0
        %v2723 = vadd.f32 0.0, %v2722
        %v2724 = vpop.f32.mrb[0].mxu0
        %2725 = vmatprep.mubr.f32.mxu0 0.0
        %2726 = vmatmul.mubr.f32.gmra.mrb[0].mxu0 %v2625
        %v2727 = vpop.f32.mrb[0].mxu0
        %v2728 = vadd.f32 0.0, %v2727
        %v2729 = vpop.f32.mrb[0].mxu0
        %2730 = vmatprep.mubr.f32.mxu0 0.0
        %2731 = vmatmul.mubr.f32.gmra.mrb[0].mxu0 %v2628
        %v2732 = vpop.f32.mrb[0].mxu0
        %v2733 = vadd.f32 0.0, %v2732
        %v2734 = vpop.f32.mrb[0].mxu0
        %2735 = vmatprep.mubr.f32.mxu0 0.0
        %2736 = vmatmul.mubr.f32.gmra.mrb[0].mxu0 %v2631
        %v2737 = vpop.f32.mrb[0].mxu0
        %v2738 = vadd.f32 0.0, %v2737
        %v2739 = vpop.f32.mrb[0].mxu0
        %2740 = vmatprep.mubr.f32.mxu0 0.0
        %2741 = vmatmul.mubr.f32.gmra.mrb[0].mxu0 %v2634
        %v2742 = vpop.f32.mrb[0].mxu0
        %v2743 = vadd.f32 0.0, %v2742
        %v2744 = vpop.f32.mrb[0].mxu0
        %2745 = vdwg.mxu0
        %v2746 = vadd.f32 %v2586, %v2703
        %v2747 = vadd.f32 %v2587, %v2708
        %v2748 = vadd.f32 %v2588, %v2713
        %v2749 = vadd.f32 %v2589, %v2718
        %v2750 = vadd.f32 %v2590, %v2723
        %v2751 = vadd.f32 %v2591, %v2728
        %v2752 = vadd.f32 %v2592, %v2733
        %v2753 = vadd.f32 %v2593, %v2738
        %v2754 = vadd.f32 %v2594, %v2743
        %s2755 = scalar_lea.vmem [#allocation3], %s2133
        %v2756 = vld [vmem:[%s2755] sm:$0xff]
        %v2757 = vld [vmem:[%s2755 + $0x8] sm:$0xff]
        %v2758 = vld [vmem:[%s2755 + $0x10] sm:$0xff]
        %v2759 = vld [vmem:[%s2755 + $0x18] sm:$0xff]
        %v2760 = vld [vmem:[%s2755 + $0x20] sm:$0xff]
        %v2761 = vld [vmem:[%s2755 + $0x28] sm:$0xff]
        %v2762 = vld [vmem:[%s2755 + $0x30] sm:$0xff]
        %v2763 = vld [vmem:[%s2755 + $0x38] sm:$0xff]
        %v2764 = vld [vmem:[%s2755 + $0x40] sm:$0xff]
        %s2765 = scalar_lea.vmem %s4, 64
        %v2766 = vld [vmem:[%s2765] sm:$0xff]
        %v2767 = vld [vmem:[%s2765 + $0x8] sm:$0xff]
        %v2769 = vsel %vm414, %v2756, 0
        %v2772 = vsel %vm414, %v2757, 0
        %v2775 = vsel %vm414, %v2758, 0
        %v2778 = vsel %vm414, %v2759, 0
        %v2781 = vsel %vm414, %v2760, 0
        %v2784 = vsel %vm414, %v2761, 0
        %v2787 = vsel %vm414, %v2762, 0
        %v2790 = vsel %vm414, %v2763, 0
        %v2793 = vsel %vm414, %v2764, 0
        %2795 = vmatprep.subr.mxu0 0.0
        %2796 = vmatpush1.msra.mxu0 %v2766
        %2797 = vmatprep.subr.mxu0 0.0
        %2798 = vmatpush1.msra.mxu0 %v2767
        %2799 = vmatprep.subr.mxu0 0.0
        %2800 = vmatpush1.msra.mxu0 0.0
        %2801 = vmatprep.subr.mxu0 0.0
        %2802 = vmatpush1.msra.mxu0 0.0
        %2803 = vmatprep.subr.mxu0 0.0
        %2804 = vmatpush1.msra.mxu0 0.0
        %2805 = vmatprep.subr.mxu0 0.0
        %2806 = vmatpush1.msra.mxu0 0.0
        %2807 = vmatprep.subr.mxu0 0.0
        %2808 = vmatpush1.msra.mxu0 0.0
        %2809 = vmatprep.subr.mxu0 0.0
        %2810 = vmatpush1.msra.mxu0 0.0
        %2811 = vmatprep.subr.mxu0 0.0
        %2812 = vmatpush1.msra.mxu0 0.0
        %2813 = vmatprep.subr.mxu0 0.0
        %2814 = vmatpush1.msra.mxu0 0.0
        %2815 = vmatprep.subr.mxu0 0.0
        %2816 = vmatpush1.msra.mxu0 0.0
        %2817 = vmatprep.subr.mxu0 0.0
        %2818 = vmatpush1.msra.mxu0 0.0
        %2819 = vmatprep.subr.mxu0 0.0
        %2820 = vmatpush1.msra.mxu0 0.0
        %2821 = vmatprep.subr.mxu0 0.0
        %2822 = vmatpush1.msra.mxu0 0.0
        %2823 = vmatprep.subr.mxu0 0.0
        %2824 = vmatpush1.msra.mxu0 0.0
        %2825 = vmatprep.subr.mxu0 0.0
        %2826 = vmatpush1.msra.mxu0 0.0
        %2827 = vmatprep.subr.mxu0 0.0
        %2828 = vmatpush1.msra.mxu0 0.0
        %2829 = vmatprep.subr.mxu0 0.0
        %2830 = vmatpush1.msra.mxu0 0.0
        %2831 = vmatprep.subr.mxu0 0.0
        %2832 = vmatpush1.msra.mxu0 0.0
        %2833 = vmatprep.subr.mxu0 0.0
        %2834 = vmatpush1.msra.mxu0 0.0
        %2835 = vmatprep.subr.mxu0 0.0
        %2836 = vmatpush1.msra.mxu0 0.0
        %2837 = vmatprep.subr.mxu0 0.0
        %2838 = vmatpush1.msra.mxu0 0.0
        %2839 = vmatprep.subr.mxu0 0.0
        %2840 = vmatpush1.msra.mxu0 0.0
        %2841 = vmatprep.subr.mxu0 0.0
        %2842 = vmatpush1.msra.mxu0 0.0
        %2843 = vmatprep.subr.mxu0 0.0
        %2844 = vmatpush1.msra.mxu0 0.0
        %2845 = vmatprep.subr.mxu0 0.0
        %2846 = vmatpush1.msra.mxu0 0.0
        %2847 = vmatprep.subr.mxu0 0.0
        %2848 = vmatpush1.msra.mxu0 0.0
        %2849 = vmatprep.subr.mxu0 0.0
        %2850 = vmatpush1.msra.mxu0 0.0
        %2851 = vmatprep.subr.mxu0 0.0
        %2852 = vmatpush1.msra.mxu0 0.0
        %2853 = vmatprep.subr.mxu0 0.0
        %2854 = vmatpush1.msra.mxu0 0.0
        %2855 = vmatprep.subr.mxu0 0.0
        %2856 = vmatpush1.msra.mxu0 0.0
        %2857 = vmatprep.subr.mxu0 0.0
        %2858 = vmatpush1.msra.mxu0 0.0
        %2859 = vmatprep.mubr.f32.mxu0 0.0
        %2860 = vmatmul.mubr.f32.gmra.mrb[0].mxu0 %v2769
        %v2861 = vpop.f32.mrb[0].mxu0
        %v2862 = vadd.f32 0.0, %v2861
        %v2863 = vpop.f32.mrb[0].mxu0
        %2864 = vmatprep.mubr.f32.mxu0 0.0
        %2865 = vmatmul.mubr.f32.gmra.mrb[0].mxu0 %v2772
        %v2866 = vpop.f32.mrb[0].mxu0
        %v2867 = vadd.f32 0.0, %v2866
        %v2868 = vpop.f32.mrb[0].mxu0
        %2869 = vmatprep.mubr.f32.mxu0 0.0
        %2870 = vmatmul.mubr.f32.gmra.mrb[0].mxu0 %v2775
        %v2871 = vpop.f32.mrb[0].mxu0
        %v2872 = vadd.f32 0.0, %v2871
        %v2873 = vpop.f32.mrb[0].mxu0
        %2874 = vmatprep.mubr.f32.mxu0 0.0
        %2875 = vmatmul.mubr.f32.gmra.mrb[0].mxu0 %v2778
        %v2876 = vpop.f32.mrb[0].mxu0
        %v2877 = vadd.f32 0.0, %v2876
        %v2878 = vpop.f32.mrb[0].mxu0
        %2879 = vmatprep.mubr.f32.mxu0 0.0
        %2880 = vmatmul.mubr.f32.gmra.mrb[0].mxu0 %v2781
        %v2881 = vpop.f32.mrb[0].mxu0
        %v2882 = vadd.f32 0.0, %v2881
        %v2883 = vpop.f32.mrb[0].mxu0
        %2884 = vmatprep.mubr.f32.mxu0 0.0
        %2885 = vmatmul.mubr.f32.gmra.mrb[0].mxu0 %v2784
        %v2886 = vpop.f32.mrb[0].mxu0
        %v2887 = vadd.f32 0.0, %v2886
        %v2888 = vpop.f32.mrb[0].mxu0
        %2889 = vmatprep.mubr.f32.mxu0 0.0
        %2890 = vmatmul.mubr.f32.gmra.mrb[0].mxu0 %v2787
        %v2891 = vpop.f32.mrb[0].mxu0
        %v2892 = vadd.f32 0.0, %v2891
        %v2893 = vpop.f32.mrb[0].mxu0
        %2894 = vmatprep.mubr.f32.mxu0 0.0
        %2895 = vmatmul.mubr.f32.gmra.mrb[0].mxu0 %v2790
        %v2896 = vpop.f32.mrb[0].mxu0
        %v2897 = vadd.f32 0.0, %v2896
        %v2898 = vpop.f32.mrb[0].mxu0
        %2899 = vmatprep.mubr.f32.mxu0 0.0
        %2900 = vmatmul.mubr.f32.gmra.mrb[0].mxu0 %v2793
        %v2901 = vpop.f32.mrb[0].mxu0
        %v2902 = vadd.f32 0.0, %v2901
        %v2903 = vpop.f32.mrb[0].mxu0
        %2904 = vdwg.mxu0
        %v2905 = vadd.f32 %v2746, %v2862
        %v2906 = vadd.f32 %v2747, %v2867
        %v2907 = vadd.f32 %v2748, %v2872
        %v2908 = vadd.f32 %v2749, %v2877
        %v2909 = vadd.f32 %v2750, %v2882
        %v2910 = vadd.f32 %v2751, %v2887
        %v2911 = vadd.f32 %v2752, %v2892
        %v2912 = vadd.f32 %v2753, %v2897
        %v2913 = vadd.f32 %v2754, %v2902
        %s2914 = sadd.s32 %s2132, 9
        %s2915 = scalar_lea.vmem [#allocation3], %s2914
        %v2916 = vld [vmem:[%s2915] sm:$0xff]
        %v2917 = vld [vmem:[%s2915 + $0x8] sm:$0xff]
        %v2918 = vld [vmem:[%s2915 + $0x10] sm:$0xff]
        %v2919 = vld [vmem:[%s2915 + $0x18] sm:$0xff]
        %v2920 = vld [vmem:[%s2915 + $0x20] sm:$0xff]
        %v2921 = vld [vmem:[%s2915 + $0x28] sm:$0xff]
        %v2922 = vld [vmem:[%s2915 + $0x30] sm:$0xff]
        %v2923 = vld [vmem:[%s2915 + $0x38] sm:$0xff]
        %v2924 = vld [vmem:[%s2915 + $0x40] sm:$0xff]
        %s2925 = scalar_lea.vmem %s4, 80
        %v2926 = vld [vmem:[%s2925] sm:$0xff]
        %v2927 = vld [vmem:[%s2925 + $0x8] sm:$0xff]
        %v2929 = vsel %vm414, %v2916, 0
        %v2932 = vsel %vm414, %v2917, 0
        %v2935 = vsel %vm414, %v2918, 0
        %v2938 = vsel %vm414, %v2919, 0
        %v2941 = vsel %vm414, %v2920, 0
        %v2944 = vsel %vm414, %v2921, 0
        %v2947 = vsel %vm414, %v2922, 0
        %v2950 = vsel %vm414, %v2923, 0
        %v2953 = vsel %vm414, %v2924, 0
        %2955 = vmatprep.subr.mxu0 0.0
        %2956 = vmatpush1.msra.mxu0 %v2926
        %2957 = vmatprep.subr.mxu0 0.0
        %2958 = vmatpush1.msra.mxu0 %v2927
        %2959 = vmatprep.subr.mxu0 0.0
        %2960 = vmatpush1.msra.mxu0 0.0
        %2961 = vmatprep.subr.mxu0 0.0
        %2962 = vmatpush1.msra.mxu0 0.0
        %2963 = vmatprep.subr.mxu0 0.0
        %2964 = vmatpush1.msra.mxu0 0.0
        %2965 = vmatprep.subr.mxu0 0.0
        %2966 = vmatpush1.msra.mxu0 0.0
        %2967 = vmatprep.subr.mxu0 0.0
        %2968 = vmatpush1.msra.mxu0 0.0
        %2969 = vmatprep.subr.mxu0 0.0
        %2970 = vmatpush1.msra.mxu0 0.0
        %2971 = vmatprep.subr.mxu0 0.0
        %2972 = vmatpush1.msra.mxu0 0.0
        %2973 = vmatprep.subr.mxu0 0.0
        %2974 = vmatpush1.msra.mxu0 0.0
        %2975 = vmatprep.subr.mxu0 0.0
        %2976 = vmatpush1.msra.mxu0 0.0
        %2977 = vmatprep.subr.mxu0 0.0
        %2978 = vmatpush1.msra.mxu0 0.0
        %2979 = vmatprep.subr.mxu0 0.0
        %2980 = vmatpush1.msra.mxu0 0.0
        %2981 = vmatprep.subr.mxu0 0.0
        %2982 = vmatpush1.msra.mxu0 0.0
        %2983 = vmatprep.subr.mxu0 0.0
        %2984 = vmatpush1.msra.mxu0 0.0
        %2985 = vmatprep.subr.mxu0 0.0
        %2986 = vmatpush1.msra.mxu0 0.0
        %2987 = vmatprep.subr.mxu0 0.0
        %2988 = vmatpush1.msra.mxu0 0.0
        %2989 = vmatprep.subr.mxu0 0.0
        %2990 = vmatpush1.msra.mxu0 0.0
        %2991 = vmatprep.subr.mxu0 0.0
        %2992 = vmatpush1.msra.mxu0 0.0
        %2993 = vmatprep.subr.mxu0 0.0
        %2994 = vmatpush1.msra.mxu0 0.0
        %2995 = vmatprep.subr.mxu0 0.0
        %2996 = vmatpush1.msra.mxu0 0.0
        %2997 = vmatprep.subr.mxu0 0.0
        %2998 = vmatpush1.msra.mxu0 0.0
        %2999 = vmatprep.subr.mxu0 0.0
        %3000 = vmatpush1.msra.mxu0 0.0
        %3001 = vmatprep.subr.mxu0 0.0
        %3002 = vmatpush1.msra.mxu0 0.0
        %3003 = vmatprep.subr.mxu0 0.0
        %3004 = vmatpush1.msra.mxu0 0.0
        %3005 = vmatprep.subr.mxu0 0.0
        %3006 = vmatpush1.msra.mxu0 0.0
        %3007 = vmatprep.subr.mxu0 0.0
        %3008 = vmatpush1.msra.mxu0 0.0
        %3009 = vmatprep.subr.mxu0 0.0
        %3010 = vmatpush1.msra.mxu0 0.0
        %3011 = vmatprep.subr.mxu0 0.0
        %3012 = vmatpush1.msra.mxu0 0.0
        %3013 = vmatprep.subr.mxu0 0.0
        %3014 = vmatpush1.msra.mxu0 0.0
        %3015 = vmatprep.subr.mxu0 0.0
        %3016 = vmatpush1.msra.mxu0 0.0
        %3017 = vmatprep.subr.mxu0 0.0
        %3018 = vmatpush1.msra.mxu0 0.0
        %3019 = vmatprep.mubr.f32.mxu0 0.0
        %3020 = vmatmul.mubr.f32.gmra.mrb[0].mxu0 %v2929
        %v3021 = vpop.f32.mrb[0].mxu0
        %v3022 = vadd.f32 0.0, %v3021
        %v3023 = vpop.f32.mrb[0].mxu0
        %3024 = vmatprep.mubr.f32.mxu0 0.0
        %3025 = vmatmul.mubr.f32.gmra.mrb[0].mxu0 %v2932
        %v3026 = vpop.f32.mrb[0].mxu0
        %v3027 = vadd.f32 0.0, %v3026
        %v3028 = vpop.f32.mrb[0].mxu0
        %3029 = vmatprep.mubr.f32.mxu0 0.0
        %3030 = vmatmul.mubr.f32.gmra.mrb[0].mxu0 %v2935
        %v3031 = vpop.f32.mrb[0].mxu0
        %v3032 = vadd.f32 0.0, %v3031
        %v3033 = vpop.f32.mrb[0].mxu0
        %3034 = vmatprep.mubr.f32.mxu0 0.0
        %3035 = vmatmul.mubr.f32.gmra.mrb[0].mxu0 %v2938
        %v3036 = vpop.f32.mrb[0].mxu0
        %v3037 = vadd.f32 0.0, %v3036
        %v3038 = vpop.f32.mrb[0].mxu0
        %3039 = vmatprep.mubr.f32.mxu0 0.0
        %3040 = vmatmul.mubr.f32.gmra.mrb[0].mxu0 %v2941
        %v3041 = vpop.f32.mrb[0].mxu0
        %v3042 = vadd.f32 0.0, %v3041
        %v3043 = vpop.f32.mrb[0].mxu0
        %3044 = vmatprep.mubr.f32.mxu0 0.0
        %3045 = vmatmul.mubr.f32.gmra.mrb[0].mxu0 %v2944
        %v3046 = vpop.f32.mrb[0].mxu0
        %v3047 = vadd.f32 0.0, %v3046
        %v3048 = vpop.f32.mrb[0].mxu0
        %3049 = vmatprep.mubr.f32.mxu0 0.0
        %3050 = vmatmul.mubr.f32.gmra.mrb[0].mxu0 %v2947
        %v3051 = vpop.f32.mrb[0].mxu0
        %v3052 = vadd.f32 0.0, %v3051
        %v3053 = vpop.f32.mrb[0].mxu0
        %3054 = vmatprep.mubr.f32.mxu0 0.0
        %3055 = vmatmul.mubr.f32.gmra.mrb[0].mxu0 %v2950
        %v3056 = vpop.f32.mrb[0].mxu0
        %v3057 = vadd.f32 0.0, %v3056
        %v3058 = vpop.f32.mrb[0].mxu0
        %3059 = vmatprep.mubr.f32.mxu0 0.0
        %3060 = vmatmul.mubr.f32.gmra.mrb[0].mxu0 %v2953
        %v3061 = vpop.f32.mrb[0].mxu0
        %v3062 = vadd.f32 0.0, %v3061
        %v3063 = vpop.f32.mrb[0].mxu0
        %3064 = vdwg.mxu0
        %v3065 = vadd.f32 %v2905, %v3022
        %v3066 = vadd.f32 %v2906, %v3027
        %v3067 = vadd.f32 %v2907, %v3032
        %v3068 = vadd.f32 %v2908, %v3037
        %v3069 = vadd.f32 %v2909, %v3042
        %v3070 = vadd.f32 %v2910, %v3047
        %v3071 = vadd.f32 %v2911, %v3052
        %v3072 = vadd.f32 %v2912, %v3057
        %v3073 = vadd.f32 %v2913, %v3062
        %s3074 = sadd.s32 %s2132, 25
        %s3075 = scalar_lea.vmem [#allocation3], %s3074
        %v3076 = vld [vmem:[%s3075] sm:$0xff]
        %v3077 = vld [vmem:[%s3075 + $0x8] sm:$0xff]
        %v3078 = vld [vmem:[%s3075 + $0x10] sm:$0xff]
        %v3079 = vld [vmem:[%s3075 + $0x18] sm:$0xff]
        %v3080 = vld [vmem:[%s3075 + $0x20] sm:$0xff]
        %v3081 = vld [vmem:[%s3075 + $0x28] sm:$0xff]
        %v3082 = vld [vmem:[%s3075 + $0x30] sm:$0xff]
        %v3083 = vld [vmem:[%s3075 + $0x38] sm:$0xff]
        %v3084 = vld [vmem:[%s3075 + $0x40] sm:$0xff]
        %s3085 = scalar_lea.vmem %s4, 96
        %v3086 = vld [vmem:[%s3085] sm:$0xff]
        %v3087 = vld [vmem:[%s3085 + $0x8] sm:$0xff]
        %v3089 = vsel %vm414, %v3076, 0
        %v3092 = vsel %vm414, %v3077, 0
        %v3095 = vsel %vm414, %v3078, 0
        %v3098 = vsel %vm414, %v3079, 0
        %v3101 = vsel %vm414, %v3080, 0
        %v3104 = vsel %vm414, %v3081, 0
        %v3107 = vsel %vm414, %v3082, 0
        %v3110 = vsel %vm414, %v3083, 0
        %v3113 = vsel %vm414, %v3084, 0
        %3115 = vmatprep.subr.mxu0 0.0
        %3116 = vmatpush1.msra.mxu0 %v3086
        %3117 = vmatprep.subr.mxu0 0.0
        %3118 = vmatpush1.msra.mxu0 %v3087
        %3119 = vmatprep.subr.mxu0 0.0
        %3120 = vmatpush1.msra.mxu0 0.0
        %3121 = vmatprep.subr.mxu0 0.0
        %3122 = vmatpush1.msra.mxu0 0.0
        %3123 = vmatprep.subr.mxu0 0.0
        %3124 = vmatpush1.msra.mxu0 0.0
        %3125 = vmatprep.subr.mxu0 0.0
        %3126 = vmatpush1.msra.mxu0 0.0
        %3127 = vmatprep.subr.mxu0 0.0
        %3128 = vmatpush1.msra.mxu0 0.0
        %3129 = vmatprep.subr.mxu0 0.0
        %3130 = vmatpush1.msra.mxu0 0.0
        %3131 = vmatprep.subr.mxu0 0.0
        %3132 = vmatpush1.msra.mxu0 0.0
        %3133 = vmatprep.subr.mxu0 0.0
        %3134 = vmatpush1.msra.mxu0 0.0
        %3135 = vmatprep.subr.mxu0 0.0
        %3136 = vmatpush1.msra.mxu0 0.0
        %3137 = vmatprep.subr.mxu0 0.0
        %3138 = vmatpush1.msra.mxu0 0.0
        %3139 = vmatprep.subr.mxu0 0.0
        %3140 = vmatpush1.msra.mxu0 0.0
        %3141 = vmatprep.subr.mxu0 0.0
        %3142 = vmatpush1.msra.mxu0 0.0
        %3143 = vmatprep.subr.mxu0 0.0
        %3144 = vmatpush1.msra.mxu0 0.0
        %3145 = vmatprep.subr.mxu0 0.0
        %3146 = vmatpush1.msra.mxu0 0.0
        %3147 = vmatprep.subr.mxu0 0.0
        %3148 = vmatpush1.msra.mxu0 0.0
        %3149 = vmatprep.subr.mxu0 0.0
        %3150 = vmatpush1.msra.mxu0 0.0
        %3151 = vmatprep.subr.mxu0 0.0
        %3152 = vmatpush1.msra.mxu0 0.0
        %3153 = vmatprep.subr.mxu0 0.0
        %3154 = vmatpush1.msra.mxu0 0.0
        %3155 = vmatprep.subr.mxu0 0.0
        %3156 = vmatpush1.msra.mxu0 0.0
        %3157 = vmatprep.subr.mxu0 0.0
        %3158 = vmatpush1.msra.mxu0 0.0
        %3159 = vmatprep.subr.mxu0 0.0
        %3160 = vmatpush1.msra.mxu0 0.0
        %3161 = vmatprep.subr.mxu0 0.0
        %3162 = vmatpush1.msra.mxu0 0.0
        %3163 = vmatprep.subr.mxu0 0.0
        %3164 = vmatpush1.msra.mxu0 0.0
        %3165 = vmatprep.subr.mxu0 0.0
        %3166 = vmatpush1.msra.mxu0 0.0
        %3167 = vmatprep.subr.mxu0 0.0
        %3168 = vmatpush1.msra.mxu0 0.0
        %3169 = vmatprep.subr.mxu0 0.0
        %3170 = vmatpush1.msra.mxu0 0.0
        %3171 = vmatprep.subr.mxu0 0.0
        %3172 = vmatpush1.msra.mxu0 0.0
        %3173 = vmatprep.subr.mxu0 0.0
        %3174 = vmatpush1.msra.mxu0 0.0
        %3175 = vmatprep.subr.mxu0 0.0
        %3176 = vmatpush1.msra.mxu0 0.0
        %3177 = vmatprep.subr.mxu0 0.0
        %3178 = vmatpush1.msra.mxu0 0.0
        %3179 = vmatprep.mubr.f32.mxu0 0.0
        %3180 = vmatmul.mubr.f32.gmra.mrb[0].mxu0 %v3089
        %v3181 = vpop.f32.mrb[0].mxu0
        %v3182 = vadd.f32 0.0, %v3181
        %v3183 = vpop.f32.mrb[0].mxu0
        %3184 = vmatprep.mubr.f32.mxu0 0.0
        %3185 = vmatmul.mubr.f32.gmra.mrb[0].mxu0 %v3092
        %v3186 = vpop.f32.mrb[0].mxu0
        %v3187 = vadd.f32 0.0, %v3186
        %v3188 = vpop.f32.mrb[0].mxu0
        %3189 = vmatprep.mubr.f32.mxu0 0.0
        %3190 = vmatmul.mubr.f32.gmra.mrb[0].mxu0 %v3095
        %v3191 = vpop.f32.mrb[0].mxu0
        %v3192 = vadd.f32 0.0, %v3191
        %v3193 = vpop.f32.mrb[0].mxu0
        %3194 = vmatprep.mubr.f32.mxu0 0.0
        %3195 = vmatmul.mubr.f32.gmra.mrb[0].mxu0 %v3098
        %v3196 = vpop.f32.mrb[0].mxu0
        %v3197 = vadd.f32 0.0, %v3196
        %v3198 = vpop.f32.mrb[0].mxu0
        %3199 = vmatprep.mubr.f32.mxu0 0.0
        %3200 = vmatmul.mubr.f32.gmra.mrb[0].mxu0 %v3101
        %v3201 = vpop.f32.mrb[0].mxu0
        %v3202 = vadd.f32 0.0, %v3201
        %v3203 = vpop.f32.mrb[0].mxu0
        %3204 = vmatprep.mubr.f32.mxu0 0.0
        %3205 = vmatmul.mubr.f32.gmra.mrb[0].mxu0 %v3104
        %v3206 = vpop.f32.mrb[0].mxu0
        %v3207 = vadd.f32 0.0, %v3206
        %v3208 = vpop.f32.mrb[0].mxu0
        %3209 = vmatprep.mubr.f32.mxu0 0.0
        %3210 = vmatmul.mubr.f32.gmra.mrb[0].mxu0 %v3107
        %v3211 = vpop.f32.mrb[0].mxu0
        %v3212 = vadd.f32 0.0, %v3211
        %v3213 = vpop.f32.mrb[0].mxu0
        %3214 = vmatprep.mubr.f32.mxu0 0.0
        %3215 = vmatmul.mubr.f32.gmra.mrb[0].mxu0 %v3110
        %v3216 = vpop.f32.mrb[0].mxu0
        %v3217 = vadd.f32 0.0, %v3216
        %v3218 = vpop.f32.mrb[0].mxu0
        %3219 = vmatprep.mubr.f32.mxu0 0.0
        %3220 = vmatmul.mubr.f32.gmra.mrb[0].mxu0 %v3113
        %v3221 = vpop.f32.mrb[0].mxu0
        %v3222 = vadd.f32 0.0, %v3221
        %v3223 = vpop.f32.mrb[0].mxu0
        %3224 = vdwg.mxu0
        %v3225 = vadd.f32 %v3065, %v3182
        %v3226 = vadd.f32 %v3066, %v3187
        %v3227 = vadd.f32 %v3067, %v3192
        %v3228 = vadd.f32 %v3068, %v3197
        %v3229 = vadd.f32 %v3069, %v3202
        %v3230 = vadd.f32 %v3070, %v3207
        %v3231 = vadd.f32 %v3071, %v3212
        %v3232 = vadd.f32 %v3072, %v3217
        %v3233 = vadd.f32 %v3073, %v3222
        %s3234 = sadd.s32 %s2132, 26
        %s3235 = scalar_lea.vmem [#allocation3], %s3234
        %v3236 = vld [vmem:[%s3235] sm:$0xff]
        %v3237 = vld [vmem:[%s3235 + $0x8] sm:$0xff]
        %v3238 = vld [vmem:[%s3235 + $0x10] sm:$0xff]
        %v3239 = vld [vmem:[%s3235 + $0x18] sm:$0xff]
        %v3240 = vld [vmem:[%s3235 + $0x20] sm:$0xff]
        %v3241 = vld [vmem:[%s3235 + $0x28] sm:$0xff]
        %v3242 = vld [vmem:[%s3235 + $0x30] sm:$0xff]
        %v3243 = vld [vmem:[%s3235 + $0x38] sm:$0xff]
        %v3244 = vld [vmem:[%s3235 + $0x40] sm:$0xff]
        %s3245 = scalar_lea.vmem %s4, 112
        %v3246 = vld [vmem:[%s3245] sm:$0xff]
        %v3247 = vld [vmem:[%s3245 + $0x8] sm:$0xff]
        %v3249 = vsel %vm414, %v3236, 0
        %v3252 = vsel %vm414, %v3237, 0
        %v3255 = vsel %vm414, %v3238, 0
        %v3258 = vsel %vm414, %v3239, 0
        %v3261 = vsel %vm414, %v3240, 0
        %v3264 = vsel %vm414, %v3241, 0
        %v3267 = vsel %vm414, %v3242, 0
        %v3270 = vsel %vm414, %v3243, 0
        %v3273 = vsel %vm414, %v3244, 0
        %3275 = vmatprep.subr.mxu0 0.0
        %3276 = vmatpush1.msra.mxu0 %v3246
        %3277 = vmatprep.subr.mxu0 0.0
        %3278 = vmatpush1.msra.mxu0 %v3247
        %3279 = vmatprep.subr.mxu0 0.0
        %3280 = vmatpush1.msra.mxu0 0.0
        %3281 = vmatprep.subr.mxu0 0.0
        %3282 = vmatpush1.msra.mxu0 0.0
        %3283 = vmatprep.subr.mxu0 0.0
        %3284 = vmatpush1.msra.mxu0 0.0
        %3285 = vmatprep.subr.mxu0 0.0
        %3286 = vmatpush1.msra.mxu0 0.0
        %3287 = vmatprep.subr.mxu0 0.0
        %3288 = vmatpush1.msra.mxu0 0.0
        %3289 = vmatprep.subr.mxu0 0.0
        %3290 = vmatpush1.msra.mxu0 0.0
        %3291 = vmatprep.subr.mxu0 0.0
        %3292 = vmatpush1.msra.mxu0 0.0
        %3293 = vmatprep.subr.mxu0 0.0
        %3294 = vmatpush1.msra.mxu0 0.0
        %3295 = vmatprep.subr.mxu0 0.0
        %3296 = vmatpush1.msra.mxu0 0.0
        %3297 = vmatprep.subr.mxu0 0.0
        %3298 = vmatpush1.msra.mxu0 0.0
        %3299 = vmatprep.subr.mxu0 0.0
        %3300 = vmatpush1.msra.mxu0 0.0
        %3301 = vmatprep.subr.mxu0 0.0
        %3302 = vmatpush1.msra.mxu0 0.0
        %3303 = vmatprep.subr.mxu0 0.0
        %3304 = vmatpush1.msra.mxu0 0.0
        %3305 = vmatprep.subr.mxu0 0.0
        %3306 = vmatpush1.msra.mxu0 0.0
        %3307 = vmatprep.subr.mxu0 0.0
        %3308 = vmatpush1.msra.mxu0 0.0
        %3309 = vmatprep.subr.mxu0 0.0
        %3310 = vmatpush1.msra.mxu0 0.0
        %3311 = vmatprep.subr.mxu0 0.0
        %3312 = vmatpush1.msra.mxu0 0.0
        %3313 = vmatprep.subr.mxu0 0.0
        %3314 = vmatpush1.msra.mxu0 0.0
        %3315 = vmatprep.subr.mxu0 0.0
        %3316 = vmatpush1.msra.mxu0 0.0
        %3317 = vmatprep.subr.mxu0 0.0
        %3318 = vmatpush1.msra.mxu0 0.0
        %3319 = vmatprep.subr.mxu0 0.0
        %3320 = vmatpush1.msra.mxu0 0.0
        %3321 = vmatprep.subr.mxu0 0.0
        %3322 = vmatpush1.msra.mxu0 0.0
        %3323 = vmatprep.subr.mxu0 0.0
        %3324 = vmatpush1.msra.mxu0 0.0
        %3325 = vmatprep.subr.mxu0 0.0
        %3326 = vmatpush1.msra.mxu0 0.0
        %3327 = vmatprep.subr.mxu0 0.0
        %3328 = vmatpush1.msra.mxu0 0.0
        %3329 = vmatprep.subr.mxu0 0.0
        %3330 = vmatpush1.msra.mxu0 0.0
        %3331 = vmatprep.subr.mxu0 0.0
        %3332 = vmatpush1.msra.mxu0 0.0
        %3333 = vmatprep.subr.mxu0 0.0
        %3334 = vmatpush1.msra.mxu0 0.0
        %3335 = vmatprep.subr.mxu0 0.0
        %3336 = vmatpush1.msra.mxu0 0.0
        %3337 = vmatprep.subr.mxu0 0.0
        %3338 = vmatpush1.msra.mxu0 0.0
        %3339 = vmatprep.mubr.f32.mxu0 0.0
        %3340 = vmatmul.mubr.f32.gmra.mrb[0].mxu0 %v3249
        %v3341 = vpop.f32.mrb[0].mxu0
        %v3342 = vadd.f32 0.0, %v3341
        %v3343 = vpop.f32.mrb[0].mxu0
        %3344 = vmatprep.mubr.f32.mxu0 0.0
        %3345 = vmatmul.mubr.f32.gmra.mrb[0].mxu0 %v3252
        %v3346 = vpop.f32.mrb[0].mxu0
        %v3347 = vadd.f32 0.0, %v3346
        %v3348 = vpop.f32.mrb[0].mxu0
        %3349 = vmatprep.mubr.f32.mxu0 0.0
        %3350 = vmatmul.mubr.f32.gmra.mrb[0].mxu0 %v3255
        %v3351 = vpop.f32.mrb[0].mxu0
        %v3352 = vadd.f32 0.0, %v3351
        %v3353 = vpop.f32.mrb[0].mxu0
        %3354 = vmatprep.mubr.f32.mxu0 0.0
        %3355 = vmatmul.mubr.f32.gmra.mrb[0].mxu0 %v3258
        %v3356 = vpop.f32.mrb[0].mxu0
        %v3357 = vadd.f32 0.0, %v3356
        %v3358 = vpop.f32.mrb[0].mxu0
        %3359 = vmatprep.mubr.f32.mxu0 0.0
        %3360 = vmatmul.mubr.f32.gmra.mrb[0].mxu0 %v3261
        %v3361 = vpop.f32.mrb[0].mxu0
        %v3362 = vadd.f32 0.0, %v3361
        %v3363 = vpop.f32.mrb[0].mxu0
        %3364 = vmatprep.mubr.f32.mxu0 0.0
        %3365 = vmatmul.mubr.f32.gmra.mrb[0].mxu0 %v3264
        %v3366 = vpop.f32.mrb[0].mxu0
        %v3367 = vadd.f32 0.0, %v3366
        %v3368 = vpop.f32.mrb[0].mxu0
        %3369 = vmatprep.mubr.f32.mxu0 0.0
        %3370 = vmatmul.mubr.f32.gmra.mrb[0].mxu0 %v3267
        %v3371 = vpop.f32.mrb[0].mxu0
        %v3372 = vadd.f32 0.0, %v3371
        %v3373 = vpop.f32.mrb[0].mxu0
        %3374 = vmatprep.mubr.f32.mxu0 0.0
        %3375 = vmatmul.mubr.f32.gmra.mrb[0].mxu0 %v3270
        %v3376 = vpop.f32.mrb[0].mxu0
        %v3377 = vadd.f32 0.0, %v3376
        %v3378 = vpop.f32.mrb[0].mxu0
        %3379 = vmatprep.mubr.f32.mxu0 0.0
        %3380 = vmatmul.mubr.f32.gmra.mrb[0].mxu0 %v3273
        %v3381 = vpop.f32.mrb[0].mxu0
        %v3382 = vadd.f32 0.0, %v3381
        %v3383 = vpop.f32.mrb[0].mxu0
        %3384 = vdwg.mxu0
        %v3385 = vadd.f32 %v3225, %v3342
        %v3386 = vadd.f32 %v3226, %v3347
        %v3387 = vadd.f32 %v3227, %v3352
        %v3388 = vadd.f32 %v3228, %v3357
        %v3389 = vadd.f32 %v3229, %v3362
        %v3390 = vadd.f32 %v3230, %v3367
        %v3391 = vadd.f32 %v3231, %v3372
        %v3392 = vadd.f32 %v3232, %v3377
        %v3393 = vadd.f32 %v3233, %v3382
        %s3394 = sadd.s32 %s2132, 27
        %s3395 = scalar_lea.vmem [#allocation3], %s3394
        %v3396 = vld [vmem:[%s3395] sm:$0xff]
        %v3397 = vld [vmem:[%s3395 + $0x8] sm:$0xff]
        %v3398 = vld [vmem:[%s3395 + $0x10] sm:$0xff]
        %v3399 = vld [vmem:[%s3395 + $0x18] sm:$0xff]
        %v3400 = vld [vmem:[%s3395 + $0x20] sm:$0xff]
        %v3401 = vld [vmem:[%s3395 + $0x28] sm:$0xff]
        %v3402 = vld [vmem:[%s3395 + $0x30] sm:$0xff]
        %v3403 = vld [vmem:[%s3395 + $0x38] sm:$0xff]
        %v3404 = vld [vmem:[%s3395 + $0x40] sm:$0xff]
        %s3405 = scalar_lea.vmem %s4, 128
        %v3406 = vld [vmem:[%s3405] sm:$0xff]
        %v3407 = vld [vmem:[%s3405 + $0x8] sm:$0xff]
        %v3409 = vsel %vm414, %v3396, 0
        %v3412 = vsel %vm414, %v3397, 0
        %v3415 = vsel %vm414, %v3398, 0
        %v3418 = vsel %vm414, %v3399, 0
        %v3421 = vsel %vm414, %v3400, 0
        %v3424 = vsel %vm414, %v3401, 0
        %v3427 = vsel %vm414, %v3402, 0
        %v3430 = vsel %vm414, %v3403, 0
        %v3433 = vsel %vm414, %v3404, 0
        %3435 = vmatprep.subr.mxu0 0.0
        %3436 = vmatpush1.msra.mxu0 %v3406
        %3437 = vmatprep.subr.mxu0 0.0
        %3438 = vmatpush1.msra.mxu0 %v3407
        %3439 = vmatprep.subr.mxu0 0.0
        %3440 = vmatpush1.msra.mxu0 0.0
        %3441 = vmatprep.subr.mxu0 0.0
        %3442 = vmatpush1.msra.mxu0 0.0
        %3443 = vmatprep.subr.mxu0 0.0
        %3444 = vmatpush1.msra.mxu0 0.0
        %3445 = vmatprep.subr.mxu0 0.0
        %3446 = vmatpush1.msra.mxu0 0.0
        %3447 = vmatprep.subr.mxu0 0.0
        %3448 = vmatpush1.msra.mxu0 0.0
        %3449 = vmatprep.subr.mxu0 0.0
        %3450 = vmatpush1.msra.mxu0 0.0
        %3451 = vmatprep.subr.mxu0 0.0
        %3452 = vmatpush1.msra.mxu0 0.0
        %3453 = vmatprep.subr.mxu0 0.0
        %3454 = vmatpush1.msra.mxu0 0.0
        %3455 = vmatprep.subr.mxu0 0.0
        %3456 = vmatpush1.msra.mxu0 0.0
        %3457 = vmatprep.subr.mxu0 0.0
        %3458 = vmatpush1.msra.mxu0 0.0
        %3459 = vmatprep.subr.mxu0 0.0
        %3460 = vmatpush1.msra.mxu0 0.0
        %3461 = vmatprep.subr.mxu0 0.0
        %3462 = vmatpush1.msra.mxu0 0.0
        %3463 = vmatprep.subr.mxu0 0.0
        %3464 = vmatpush1.msra.mxu0 0.0
        %3465 = vmatprep.subr.mxu0 0.0
        %3466 = vmatpush1.msra.mxu0 0.0
        %3467 = vmatprep.subr.mxu0 0.0
        %3468 = vmatpush1.msra.mxu0 0.0
        %3469 = vmatprep.subr.mxu0 0.0
        %3470 = vmatpush1.msra.mxu0 0.0
        %3471 = vmatprep.subr.mxu0 0.0
        %3472 = vmatpush1.msra.mxu0 0.0
        %3473 = vmatprep.subr.mxu0 0.0
        %3474 = vmatpush1.msra.mxu0 0.0
        %3475 = vmatprep.subr.mxu0 0.0
        %3476 = vmatpush1.msra.mxu0 0.0
        %3477 = vmatprep.subr.mxu0 0.0
        %3478 = vmatpush1.msra.mxu0 0.0
        %3479 = vmatprep.subr.mxu0 0.0
        %3480 = vmatpush1.msra.mxu0 0.0
        %3481 = vmatprep.subr.mxu0 0.0
        %3482 = vmatpush1.msra.mxu0 0.0
        %3483 = vmatprep.subr.mxu0 0.0
        %3484 = vmatpush1.msra.mxu0 0.0
        %3485 = vmatprep.subr.mxu0 0.0
        %3486 = vmatpush1.msra.mxu0 0.0
        %3487 = vmatprep.subr.mxu0 0.0
        %3488 = vmatpush1.msra.mxu0 0.0
        %3489 = vmatprep.subr.mxu0 0.0
        %3490 = vmatpush1.msra.mxu0 0.0
        %3491 = vmatprep.subr.mxu0 0.0
        %3492 = vmatpush1.msra.mxu0 0.0
        %3493 = vmatprep.subr.mxu0 0.0
        %3494 = vmatpush1.msra.mxu0 0.0
        %3495 = vmatprep.subr.mxu0 0.0
        %3496 = vmatpush1.msra.mxu0 0.0
        %3497 = vmatprep.subr.mxu0 0.0
        %3498 = vmatpush1.msra.mxu0 0.0
        %3499 = vmatprep.mubr.f32.mxu0 0.0
        %3500 = vmatmul.mubr.f32.gmra.mrb[0].mxu0 %v3409
        %v3501 = vpop.f32.mrb[0].mxu0
        %v3502 = vadd.f32 0.0, %v3501
        %v3503 = vpop.f32.mrb[0].mxu0
        %3504 = vmatprep.mubr.f32.mxu0 0.0
        %3505 = vmatmul.mubr.f32.gmra.mrb[0].mxu0 %v3412
        %v3506 = vpop.f32.mrb[0].mxu0
        %v3507 = vadd.f32 0.0, %v3506
        %v3508 = vpop.f32.mrb[0].mxu0
        %3509 = vmatprep.mubr.f32.mxu0 0.0
        %3510 = vmatmul.mubr.f32.gmra.mrb[0].mxu0 %v3415
        %v3511 = vpop.f32.mrb[0].mxu0
        %v3512 = vadd.f32 0.0, %v3511
        %v3513 = vpop.f32.mrb[0].mxu0
        %3514 = vmatprep.mubr.f32.mxu0 0.0
        %3515 = vmatmul.mubr.f32.gmra.mrb[0].mxu0 %v3418
        %v3516 = vpop.f32.mrb[0].mxu0
        %v3517 = vadd.f32 0.0, %v3516
        %v3518 = vpop.f32.mrb[0].mxu0
        %3519 = vmatprep.mubr.f32.mxu0 0.0
        %3520 = vmatmul.mubr.f32.gmra.mrb[0].mxu0 %v3421
        %v3521 = vpop.f32.mrb[0].mxu0
        %v3522 = vadd.f32 0.0, %v3521
        %v3523 = vpop.f32.mrb[0].mxu0
        %3524 = vmatprep.mubr.f32.mxu0 0.0
        %3525 = vmatmul.mubr.f32.gmra.mrb[0].mxu0 %v3424
        %v3526 = vpop.f32.mrb[0].mxu0
        %v3527 = vadd.f32 0.0, %v3526
        %v3528 = vpop.f32.mrb[0].mxu0
        %3529 = vmatprep.mubr.f32.mxu0 0.0
        %3530 = vmatmul.mubr.f32.gmra.mrb[0].mxu0 %v3427
        %v3531 = vpop.f32.mrb[0].mxu0
        %v3532 = vadd.f32 0.0, %v3531
        %v3533 = vpop.f32.mrb[0].mxu0
        %3534 = vmatprep.mubr.f32.mxu0 0.0
        %3535 = vmatmul.mubr.f32.gmra.mrb[0].mxu0 %v3430
        %v3536 = vpop.f32.mrb[0].mxu0
        %v3537 = vadd.f32 0.0, %v3536
        %v3538 = vpop.f32.mrb[0].mxu0
        %3539 = vmatprep.mubr.f32.mxu0 0.0
        %3540 = vmatmul.mubr.f32.gmra.mrb[0].mxu0 %v3433
        %v3541 = vpop.f32.mrb[0].mxu0
        %v3542 = vadd.f32 0.0, %v3541
        %v3543 = vpop.f32.mrb[0].mxu0
        %3544 = vdwg.mxu0
        %v3545 = vadd.f32 %v3385, %v3502
        %v3546 = vadd.f32 %v3386, %v3507
        %v3547 = vadd.f32 %v3387, %v3512
        %v3548 = vadd.f32 %v3388, %v3517
        %v3549 = vadd.f32 %v3389, %v3522
        %v3550 = vadd.f32 %v3390, %v3527
        %v3551 = vadd.f32 %v3391, %v3532
        %v3552 = vadd.f32 %v3392, %v3537
        %v3553 = vadd.f32 %v3393, %v3542
        %v3554 = vld [vmem:[%s5] sm:$0x1]
        %v3556 = vlaneseq
        %v3557 = vshrl.u32 %v3556, 7
        %v3558 = vsub.s32 0, %v3557
        %v3559 = vrot.slane %v3554, %v3558
        %v3561 = vadd.f32 %v3545, %v3559
        %v3562 = vadd.f32 %v3546, %v3559
        %v3563 = vadd.f32 %v3547, %v3559
        %v3564 = vadd.f32 %v3548, %v3559
        %v3565 = vadd.f32 %v3549, %v3559
        %v3566 = vadd.f32 %v3550, %v3559
        %v3567 = vadd.f32 %v3551, %v3559
        %v3568 = vadd.f32 %v3552, %v3559
        %v3569 = vadd.f32 %v3553, %v3559
        %s3570 = scalar_lea.vmem [#allocation2], %s2134
        %v3571 = vld [vmem:[%s3570] sm:$0xff]
        %v3572 = vld [vmem:[%s3570 + $0x8] sm:$0xff]
        %v3573 = vld [vmem:[%s3570 + $0x10] sm:$0xff]
        %v3574 = vld [vmem:[%s3570 + $0x18] sm:$0xff]
        %v3575 = vld [vmem:[%s3570 + $0x20] sm:$0xff]
        %v3576 = vld [vmem:[%s3570 + $0x28] sm:$0xff]
        %v3577 = vld [vmem:[%s3570 + $0x30] sm:$0xff]
        %v3578 = vld [vmem:[%s3570 + $0x38] sm:$0xff]
        %v3579 = vld [vmem:[%s3570 + $0x40] sm:$0xff]
        %v3580 = vld [vmem:[%s6] sm:$0xff]
        %s3581 = scalar_lea.vmem [#allocation2], %s2147
        %v3582 = vld [vmem:[%s3581] sm:$0xff]
        %v3583 = vld [vmem:[%s3581 + $0x8] sm:$0xff]
        %v3584 = vld [vmem:[%s3581 + $0x10] sm:$0xff]
        %v3585 = vld [vmem:[%s3581 + $0x18] sm:$0xff]
        %v3586 = vld [vmem:[%s3581 + $0x20] sm:$0xff]
        %v3587 = vld [vmem:[%s3581 + $0x28] sm:$0xff]
        %v3588 = vld [vmem:[%s3581 + $0x30] sm:$0xff]
        %v3589 = vld [vmem:[%s3581 + $0x38] sm:$0xff]
        %v3590 = vld [vmem:[%s3581 + $0x40] sm:$0xff]
        %s3591 = scalar_lea.vmem %s6, 8
        %v3592 = vld [vmem:[%s3591] sm:$0xff]
        %v3594 = vsel %vm481, %v3582, 0
        %v3597 = vsel %vm481, %v3583, 0
        %v3600 = vsel %vm481, %v3584, 0
        %v3603 = vsel %vm481, %v3585, 0
        %v3606 = vsel %vm481, %v3586, 0
        %v3609 = vsel %vm481, %v3587, 0
        %v3612 = vsel %vm481, %v3588, 0
        %v3615 = vsel %vm481, %v3589, 0
        %v3618 = vsel %vm481, %v3590, 0
        %3620 = vmatprep.subr.mxu0 0.0
        %3621 = vmatpush1.msra.mxu0 %v3592
        %3622 = vmatprep.subr.mxu0 0.0
        %3623 = vmatpush1.msra.mxu0 0.0
        %3624 = vmatprep.subr.mxu0 0.0
        %3625 = vmatpush1.msra.mxu0 0.0
        %3626 = vmatprep.subr.mxu0 0.0
        %3627 = vmatpush1.msra.mxu0 0.0
        %3628 = vmatprep.subr.mxu0 0.0
        %3629 = vmatpush1.msra.mxu0 0.0
        %3630 = vmatprep.subr.mxu0 0.0
        %3631 = vmatpush1.msra.mxu0 0.0
        %3632 = vmatprep.subr.mxu0 0.0
        %3633 = vmatpush1.msra.mxu0 0.0
        %3634 = vmatprep.subr.mxu0 0.0
        %3635 = vmatpush1.msra.mxu0 0.0
        %3636 = vmatprep.subr.mxu0 0.0
        %3637 = vmatpush1.msra.mxu0 0.0
        %3638 = vmatprep.subr.mxu0 0.0
        %3639 = vmatpush1.msra.mxu0 0.0
        %3640 = vmatprep.subr.mxu0 0.0
        %3641 = vmatpush1.msra.mxu0 0.0
        %3642 = vmatprep.subr.mxu0 0.0
        %3643 = vmatpush1.msra.mxu0 0.0
        %3644 = vmatprep.subr.mxu0 0.0
        %3645 = vmatpush1.msra.mxu0 0.0
        %3646 = vmatprep.subr.mxu0 0.0
        %3647 = vmatpush1.msra.mxu0 0.0
        %3648 = vmatprep.subr.mxu0 0.0
        %3649 = vmatpush1.msra.mxu0 0.0
        %3650 = vmatprep.subr.mxu0 0.0
        %3651 = vmatpush1.msra.mxu0 0.0
        %3652 = vmatprep.subr.mxu0 0.0
        %3653 = vmatpush1.msra.mxu0 0.0
        %3654 = vmatprep.subr.mxu0 0.0
        %3655 = vmatpush1.msra.mxu0 0.0
        %3656 = vmatprep.subr.mxu0 0.0
        %3657 = vmatpush1.msra.mxu0 0.0
        %3658 = vmatprep.subr.mxu0 0.0
        %3659 = vmatpush1.msra.mxu0 0.0
        %3660 = vmatprep.subr.mxu0 0.0
        %3661 = vmatpush1.msra.mxu0 0.0
        %3662 = vmatprep.subr.mxu0 0.0
        %3663 = vmatpush1.msra.mxu0 0.0
        %3664 = vmatprep.subr.mxu0 0.0
        %3665 = vmatpush1.msra.mxu0 0.0
        %3666 = vmatprep.subr.mxu0 0.0
        %3667 = vmatpush1.msra.mxu0 0.0
        %3668 = vmatprep.subr.mxu0 0.0
        %3669 = vmatpush1.msra.mxu0 0.0
        %3670 = vmatprep.subr.mxu0 0.0
        %3671 = vmatpush1.msra.mxu0 0.0
        %3672 = vmatprep.subr.mxu0 0.0
        %3673 = vmatpush1.msra.mxu0 0.0
        %3674 = vmatprep.subr.mxu0 0.0
        %3675 = vmatpush1.msra.mxu0 0.0
        %3676 = vmatprep.subr.mxu0 0.0
        %3677 = vmatpush1.msra.mxu0 0.0
        %3678 = vmatprep.subr.mxu0 0.0
        %3679 = vmatpush1.msra.mxu0 0.0
        %3680 = vmatprep.subr.mxu0 0.0
        %3681 = vmatpush1.msra.mxu0 0.0
        %3682 = vmatprep.subr.mxu0 0.0
        %3683 = vmatpush1.msra.mxu0 0.0
        %3684 = vmatprep.mubr.f32.mxu0 0.0
        %3685 = vmatmul.mubr.f32.gmra.mrb[0].mxu0 %v3594
        %v3686 = vpop.f32.mrb[0].mxu0
        %v3687 = vadd.f32 0.0, %v3686
        %v3688 = vpop.f32.mrb[0].mxu0
        %3689 = vmatprep.mubr.f32.mxu0 0.0
        %3690 = vmatmul.mubr.f32.gmra.mrb[0].mxu0 %v3597
        %v3691 = vpop.f32.mrb[0].mxu0
        %v3692 = vadd.f32 0.0, %v3691
        %v3693 = vpop.f32.mrb[0].mxu0
        %3694 = vmatprep.mubr.f32.mxu0 0.0
        %3695 = vmatmul.mubr.f32.gmra.mrb[0].mxu0 %v3600
        %v3696 = vpop.f32.mrb[0].mxu0
        %v3697 = vadd.f32 0.0, %v3696
        %v3698 = vpop.f32.mrb[0].mxu0
        %3699 = vmatprep.mubr.f32.mxu0 0.0
        %3700 = vmatmul.mubr.f32.gmra.mrb[0].mxu0 %v3603
        %v3701 = vpop.f32.mrb[0].mxu0
        %v3702 = vadd.f32 0.0, %v3701
        %v3703 = vpop.f32.mrb[0].mxu0
        %3704 = vmatprep.mubr.f32.mxu0 0.0
        %3705 = vmatmul.mubr.f32.gmra.mrb[0].mxu0 %v3606
        %v3706 = vpop.f32.mrb[0].mxu0
        %v3707 = vadd.f32 0.0, %v3706
        %v3708 = vpop.f32.mrb[0].mxu0
        %3709 = vmatprep.mubr.f32.mxu0 0.0
        %3710 = vmatmul.mubr.f32.gmra.mrb[0].mxu0 %v3609
        %v3711 = vpop.f32.mrb[0].mxu0
        %v3712 = vadd.f32 0.0, %v3711
        %v3713 = vpop.f32.mrb[0].mxu0
        %3714 = vmatprep.mubr.f32.mxu0 0.0
        %3715 = vmatmul.mubr.f32.gmra.mrb[0].mxu0 %v3612
        %v3716 = vpop.f32.mrb[0].mxu0
        %v3717 = vadd.f32 0.0, %v3716
        %v3718 = vpop.f32.mrb[0].mxu0
        %3719 = vmatprep.mubr.f32.mxu0 0.0
        %3720 = vmatmul.mubr.f32.gmra.mrb[0].mxu0 %v3615
        %v3721 = vpop.f32.mrb[0].mxu0
        %v3722 = vadd.f32 0.0, %v3721
        %v3723 = vpop.f32.mrb[0].mxu0
        %3724 = vmatprep.mubr.f32.mxu0 0.0
        %3725 = vmatmul.mubr.f32.gmra.mrb[0].mxu0 %v3618
        %v3726 = vpop.f32.mrb[0].mxu0
        %v3727 = vadd.f32 0.0, %v3726
        %v3728 = vpop.f32.mrb[0].mxu0
        %3729 = vdwg.mxu0
        %v3731 = vsel %vm481, %v3571, 0
        %v3734 = vsel %vm481, %v3572, 0
        %v3737 = vsel %vm481, %v3573, 0
        %v3740 = vsel %vm481, %v3574, 0
        %v3743 = vsel %vm481, %v3575, 0
        %v3746 = vsel %vm481, %v3576, 0
        %v3749 = vsel %vm481, %v3577, 0
        %v3752 = vsel %vm481, %v3578, 0
        %v3755 = vsel %vm481, %v3579, 0
        %3757 = vmatprep.subr.mxu0 0.0
        %3758 = vmatpush1.msra.mxu0 %v3580
        %3759 = vmatprep.subr.mxu0 0.0
        %3760 = vmatpush1.msra.mxu0 0.0
        %3761 = vmatprep.subr.mxu0 0.0
        %3762 = vmatpush1.msra.mxu0 0.0
        %3763 = vmatprep.subr.mxu0 0.0
        %3764 = vmatpush1.msra.mxu0 0.0
        %3765 = vmatprep.subr.mxu0 0.0
        %3766 = vmatpush1.msra.mxu0 0.0
        %3767 = vmatprep.subr.mxu0 0.0
        %3768 = vmatpush1.msra.mxu0 0.0
        %3769 = vmatprep.subr.mxu0 0.0
        %3770 = vmatpush1.msra.mxu0 0.0
        %3771 = vmatprep.subr.mxu0 0.0
        %3772 = vmatpush1.msra.mxu0 0.0
        %3773 = vmatprep.subr.mxu0 0.0
        %3774 = vmatpush1.msra.mxu0 0.0
        %3775 = vmatprep.subr.mxu0 0.0
        %3776 = vmatpush1.msra.mxu0 0.0
        %3777 = vmatprep.subr.mxu0 0.0
        %3778 = vmatpush1.msra.mxu0 0.0
        %3779 = vmatprep.subr.mxu0 0.0
        %3780 = vmatpush1.msra.mxu0 0.0
        %3781 = vmatprep.subr.mxu0 0.0
        %3782 = vmatpush1.msra.mxu0 0.0
        %3783 = vmatprep.subr.mxu0 0.0
        %3784 = vmatpush1.msra.mxu0 0.0
        %3785 = vmatprep.subr.mxu0 0.0
        %3786 = vmatpush1.msra.mxu0 0.0
        %3787 = vmatprep.subr.mxu0 0.0
        %3788 = vmatpush1.msra.mxu0 0.0
        %3789 = vmatprep.subr.mxu0 0.0
        %3790 = vmatpush1.msra.mxu0 0.0
        %3791 = vmatprep.subr.mxu0 0.0
        %3792 = vmatpush1.msra.mxu0 0.0
        %3793 = vmatprep.subr.mxu0 0.0
        %3794 = vmatpush1.msra.mxu0 0.0
        %3795 = vmatprep.subr.mxu0 0.0
        %3796 = vmatpush1.msra.mxu0 0.0
        %3797 = vmatprep.subr.mxu0 0.0
        %3798 = vmatpush1.msra.mxu0 0.0
        %3799 = vmatprep.subr.mxu0 0.0
        %3800 = vmatpush1.msra.mxu0 0.0
        %3801 = vmatprep.subr.mxu0 0.0
        %3802 = vmatpush1.msra.mxu0 0.0
        %3803 = vmatprep.subr.mxu0 0.0
        %3804 = vmatpush1.msra.mxu0 0.0
        %3805 = vmatprep.subr.mxu0 0.0
        %3806 = vmatpush1.msra.mxu0 0.0
        %3807 = vmatprep.subr.mxu0 0.0
        %3808 = vmatpush1.msra.mxu0 0.0
        %3809 = vmatprep.subr.mxu0 0.0
        %3810 = vmatpush1.msra.mxu0 0.0
        %3811 = vmatprep.subr.mxu0 0.0
        %3812 = vmatpush1.msra.mxu0 0.0
        %3813 = vmatprep.subr.mxu0 0.0
        %3814 = vmatpush1.msra.mxu0 0.0
        %3815 = vmatprep.subr.mxu0 0.0
        %3816 = vmatpush1.msra.mxu0 0.0
        %3817 = vmatprep.subr.mxu0 0.0
        %3818 = vmatpush1.msra.mxu0 0.0
        %3819 = vmatprep.subr.mxu0 0.0
        %3820 = vmatpush1.msra.mxu0 0.0
        %3821 = vmatprep.mubr.f32.mxu0 0.0
        %3822 = vmatmul.mubr.f32.gmra.mrb[0].mxu0 %v3731
        %v3823 = vpop.f32.mrb[0].mxu0
        %v3824 = vadd.f32 %v3687, %v3823
        %v3825 = vpop.f32.mrb[0].mxu0
        %3826 = vmatprep.mubr.f32.mxu0 0.0
        %3827 = vmatmul.mubr.f32.gmra.mrb[0].mxu0 %v3734
        %v3828 = vpop.f32.mrb[0].mxu0
        %v3829 = vadd.f32 %v3692, %v3828
        %v3830 = vpop.f32.mrb[0].mxu0
        %3831 = vmatprep.mubr.f32.mxu0 0.0
        %3832 = vmatmul.mubr.f32.gmra.mrb[0].mxu0 %v3737
        %v3833 = vpop.f32.mrb[0].mxu0
        %v3834 = vadd.f32 %v3697, %v3833
        %v3835 = vpop.f32.mrb[0].mxu0
        %3836 = vmatprep.mubr.f32.mxu0 0.0
        %3837 = vmatmul.mubr.f32.gmra.mrb[0].mxu0 %v3740
        %v3838 = vpop.f32.mrb[0].mxu0
        %v3839 = vadd.f32 %v3702, %v3838
        %v3840 = vpop.f32.mrb[0].mxu0
        %3841 = vmatprep.mubr.f32.mxu0 0.0
        %3842 = vmatmul.mubr.f32.gmra.mrb[0].mxu0 %v3743
        %v3843 = vpop.f32.mrb[0].mxu0
        %v3844 = vadd.f32 %v3707, %v3843
        %v3845 = vpop.f32.mrb[0].mxu0
        %3846 = vmatprep.mubr.f32.mxu0 0.0
        %3847 = vmatmul.mubr.f32.gmra.mrb[0].mxu0 %v3746
        %v3848 = vpop.f32.mrb[0].mxu0
        %v3849 = vadd.f32 %v3712, %v3848
        %v3850 = vpop.f32.mrb[0].mxu0
        %3851 = vmatprep.mubr.f32.mxu0 0.0
        %3852 = vmatmul.mubr.f32.gmra.mrb[0].mxu0 %v3749
        %v3853 = vpop.f32.mrb[0].mxu0
        %v3854 = vadd.f32 %v3717, %v3853
        %v3855 = vpop.f32.mrb[0].mxu0
        %3856 = vmatprep.mubr.f32.mxu0 0.0
        %3857 = vmatmul.mubr.f32.gmra.mrb[0].mxu0 %v3752
        %v3858 = vpop.f32.mrb[0].mxu0
        %v3859 = vadd.f32 %v3722, %v3858
        %v3860 = vpop.f32.mrb[0].mxu0
        %3861 = vmatprep.mubr.f32.mxu0 0.0
        %3862 = vmatmul.mubr.f32.gmra.mrb[0].mxu0 %v3755
        %v3863 = vpop.f32.mrb[0].mxu0
        %v3864 = vadd.f32 %v3727, %v3863
        %v3865 = vpop.f32.mrb[0].mxu0
        %3866 = vdwg.mxu0
        %s3867 = scalar_lea.vmem [#allocation2], %s2435
        %v3868 = vld [vmem:[%s3867] sm:$0xff]
        %v3869 = vld [vmem:[%s3867 + $0x8] sm:$0xff]
        %v3870 = vld [vmem:[%s3867 + $0x10] sm:$0xff]
        %v3871 = vld [vmem:[%s3867 + $0x18] sm:$0xff]
        %v3872 = vld [vmem:[%s3867 + $0x20] sm:$0xff]
        %v3873 = vld [vmem:[%s3867 + $0x28] sm:$0xff]
        %v3874 = vld [vmem:[%s3867 + $0x30] sm:$0xff]
        %v3875 = vld [vmem:[%s3867 + $0x38] sm:$0xff]
        %v3876 = vld [vmem:[%s3867 + $0x40] sm:$0xff]
        %s3877 = scalar_lea.vmem %s6, 16
        %v3878 = vld [vmem:[%s3877] sm:$0xff]
        %v3880 = vsel %vm481, %v3868, 0
        %v3883 = vsel %vm481, %v3869, 0
        %v3886 = vsel %vm481, %v3870, 0
        %v3889 = vsel %vm481, %v3871, 0
        %v3892 = vsel %vm481, %v3872, 0
        %v3895 = vsel %vm481, %v3873, 0
        %v3898 = vsel %vm481, %v3874, 0
        %v3901 = vsel %vm481, %v3875, 0
        %v3904 = vsel %vm481, %v3876, 0
        %3906 = vmatprep.subr.mxu0 0.0
        %3907 = vmatpush1.msra.mxu0 %v3878
        %3908 = vmatprep.subr.mxu0 0.0
        %3909 = vmatpush1.msra.mxu0 0.0
        %3910 = vmatprep.subr.mxu0 0.0
        %3911 = vmatpush1.msra.mxu0 0.0
        %3912 = vmatprep.subr.mxu0 0.0
        %3913 = vmatpush1.msra.mxu0 0.0
        %3914 = vmatprep.subr.mxu0 0.0
        %3915 = vmatpush1.msra.mxu0 0.0
        %3916 = vmatprep.subr.mxu0 0.0
        %3917 = vmatpush1.msra.mxu0 0.0
        %3918 = vmatprep.subr.mxu0 0.0
        %3919 = vmatpush1.msra.mxu0 0.0
        %3920 = vmatprep.subr.mxu0 0.0
        %3921 = vmatpush1.msra.mxu0 0.0
        %3922 = vmatprep.subr.mxu0 0.0
        %3923 = vmatpush1.msra.mxu0 0.0
        %3924 = vmatprep.subr.mxu0 0.0
        %3925 = vmatpush1.msra.mxu0 0.0
        %3926 = vmatprep.subr.mxu0 0.0
        %3927 = vmatpush1.msra.mxu0 0.0
        %3928 = vmatprep.subr.mxu0 0.0
        %3929 = vmatpush1.msra.mxu0 0.0
        %3930 = vmatprep.subr.mxu0 0.0
        %3931 = vmatpush1.msra.mxu0 0.0
        %3932 = vmatprep.subr.mxu0 0.0
        %3933 = vmatpush1.msra.mxu0 0.0
        %3934 = vmatprep.subr.mxu0 0.0
        %3935 = vmatpush1.msra.mxu0 0.0
        %3936 = vmatprep.subr.mxu0 0.0
        %3937 = vmatpush1.msra.mxu0 0.0
        %3938 = vmatprep.subr.mxu0 0.0
        %3939 = vmatpush1.msra.mxu0 0.0
        %3940 = vmatprep.subr.mxu0 0.0
        %3941 = vmatpush1.msra.mxu0 0.0
        %3942 = vmatprep.subr.mxu0 0.0
        %3943 = vmatpush1.msra.mxu0 0.0
        %3944 = vmatprep.subr.mxu0 0.0
        %3945 = vmatpush1.msra.mxu0 0.0
        %3946 = vmatprep.subr.mxu0 0.0
        %3947 = vmatpush1.msra.mxu0 0.0
        %3948 = vmatprep.subr.mxu0 0.0
        %3949 = vmatpush1.msra.mxu0 0.0
        %3950 = vmatprep.subr.mxu0 0.0
        %3951 = vmatpush1.msra.mxu0 0.0
        %3952 = vmatprep.subr.mxu0 0.0
        %3953 = vmatpush1.msra.mxu0 0.0
        %3954 = vmatprep.subr.mxu0 0.0
        %3955 = vmatpush1.msra.mxu0 0.0
        %3956 = vmatprep.subr.mxu0 0.0
        %3957 = vmatpush1.msra.mxu0 0.0
        %3958 = vmatprep.subr.mxu0 0.0
        %3959 = vmatpush1.msra.mxu0 0.0
        %3960 = vmatprep.subr.mxu0 0.0
        %3961 = vmatpush1.msra.mxu0 0.0
        %3962 = vmatprep.subr.mxu0 0.0
        %3963 = vmatpush1.msra.mxu0 0.0
        %3964 = vmatprep.subr.mxu0 0.0
        %3965 = vmatpush1.msra.mxu0 0.0
        %3966 = vmatprep.subr.mxu0 0.0
        %3967 = vmatpush1.msra.mxu0 0.0
        %3968 = vmatprep.subr.mxu0 0.0
        %3969 = vmatpush1.msra.mxu0 0.0
        %3970 = vmatprep.mubr.f32.mxu0 0.0
        %3971 = vmatmul.mubr.f32.gmra.mrb[0].mxu0 %v3880
        %v3972 = vpop.f32.mrb[0].mxu0
        %v3973 = vadd.f32 0.0, %v3972
        %v3974 = vpop.f32.mrb[0].mxu0
        %3975 = vmatprep.mubr.f32.mxu0 0.0
        %3976 = vmatmul.mubr.f32.gmra.mrb[0].mxu0 %v3883
        %v3977 = vpop.f32.mrb[0].mxu0
        %v3978 = vadd.f32 0.0, %v3977
        %v3979 = vpop.f32.mrb[0].mxu0
        %3980 = vmatprep.mubr.f32.mxu0 0.0
        %3981 = vmatmul.mubr.f32.gmra.mrb[0].mxu0 %v3886
        %v3982 = vpop.f32.mrb[0].mxu0
        %v3983 = vadd.f32 0.0, %v3982
        %v3984 = vpop.f32.mrb[0].mxu0
        %3985 = vmatprep.mubr.f32.mxu0 0.0
        %3986 = vmatmul.mubr.f32.gmra.mrb[0].mxu0 %v3889
        %v3987 = vpop.f32.mrb[0].mxu0
        %v3988 = vadd.f32 0.0, %v3987
        %v3989 = vpop.f32.mrb[0].mxu0
        %3990 = vmatprep.mubr.f32.mxu0 0.0
        %3991 = vmatmul.mubr.f32.gmra.mrb[0].mxu0 %v3892
        %v3992 = vpop.f32.mrb[0].mxu0
        %v3993 = vadd.f32 0.0, %v3992
        %v3994 = vpop.f32.mrb[0].mxu0
        %3995 = vmatprep.mubr.f32.mxu0 0.0
        %3996 = vmatmul.mubr.f32.gmra.mrb[0].mxu0 %v3895
        %v3997 = vpop.f32.mrb[0].mxu0
        %v3998 = vadd.f32 0.0, %v3997
        %v3999 = vpop.f32.mrb[0].mxu0
        %4000 = vmatprep.mubr.f32.mxu0 0.0
        %4001 = vmatmul.mubr.f32.gmra.mrb[0].mxu0 %v3898
        %v4002 = vpop.f32.mrb[0].mxu0
        %v4003 = vadd.f32 0.0, %v4002
        %v4004 = vpop.f32.mrb[0].mxu0
        %4005 = vmatprep.mubr.f32.mxu0 0.0
        %4006 = vmatmul.mubr.f32.gmra.mrb[0].mxu0 %v3901
        %v4007 = vpop.f32.mrb[0].mxu0
        %v4008 = vadd.f32 0.0, %v4007
        %v4009 = vpop.f32.mrb[0].mxu0
        %4010 = vmatprep.mubr.f32.mxu0 0.0
        %4011 = vmatmul.mubr.f32.gmra.mrb[0].mxu0 %v3904
        %v4012 = vpop.f32.mrb[0].mxu0
        %v4013 = vadd.f32 0.0, %v4012
        %v4014 = vpop.f32.mrb[0].mxu0
        %4015 = vdwg.mxu0
        %v4016 = vadd.f32 %v3824, %v3973
        %v4017 = vadd.f32 %v3829, %v3978
        %v4018 = vadd.f32 %v3834, %v3983
        %v4019 = vadd.f32 %v3839, %v3988
        %v4020 = vadd.f32 %v3844, %v3993
        %v4021 = vadd.f32 %v3849, %v3998
        %v4022 = vadd.f32 %v3854, %v4003
        %v4023 = vadd.f32 %v3859, %v4008
        %v4024 = vadd.f32 %v3864, %v4013
        %s4025 = scalar_lea.vmem [#allocation2], %s2595
        %v4026 = vld [vmem:[%s4025] sm:$0xff]
        %v4027 = vld [vmem:[%s4025 + $0x8] sm:$0xff]
        %v4028 = vld [vmem:[%s4025 + $0x10] sm:$0xff]
        %v4029 = vld [vmem:[%s4025 + $0x18] sm:$0xff]
        %v4030 = vld [vmem:[%s4025 + $0x20] sm:$0xff]
        %v4031 = vld [vmem:[%s4025 + $0x28] sm:$0xff]
        %v4032 = vld [vmem:[%s4025 + $0x30] sm:$0xff]
        %v4033 = vld [vmem:[%s4025 + $0x38] sm:$0xff]
        %v4034 = vld [vmem:[%s4025 + $0x40] sm:$0xff]
        %s4035 = scalar_lea.vmem %s6, 24
        %v4036 = vld [vmem:[%s4035] sm:$0xff]
        %v4038 = vsel %vm481, %v4026, 0
        %v4041 = vsel %vm481, %v4027, 0
        %v4044 = vsel %vm481, %v4028, 0
        %v4047 = vsel %vm481, %v4029, 0
        %v4050 = vsel %vm481, %v4030, 0
        %v4053 = vsel %vm481, %v4031, 0
        %v4056 = vsel %vm481, %v4032, 0
        %v4059 = vsel %vm481, %v4033, 0
        %v4062 = vsel %vm481, %v4034, 0
        %4064 = vmatprep.subr.mxu0 0.0
        %4065 = vmatpush1.msra.mxu0 %v4036
        %4066 = vmatprep.subr.mxu0 0.0
        %4067 = vmatpush1.msra.mxu0 0.0
        %4068 = vmatprep.subr.mxu0 0.0
        %4069 = vmatpush1.msra.mxu0 0.0
        %4070 = vmatprep.subr.mxu0 0.0
        %4071 = vmatpush1.msra.mxu0 0.0
        %4072 = vmatprep.subr.mxu0 0.0
        %4073 = vmatpush1.msra.mxu0 0.0
        %4074 = vmatprep.subr.mxu0 0.0
        %4075 = vmatpush1.msra.mxu0 0.0
        %4076 = vmatprep.subr.mxu0 0.0
        %4077 = vmatpush1.msra.mxu0 0.0
        %4078 = vmatprep.subr.mxu0 0.0
        %4079 = vmatpush1.msra.mxu0 0.0
        %4080 = vmatprep.subr.mxu0 0.0
        %4081 = vmatpush1.msra.mxu0 0.0
        %4082 = vmatprep.subr.mxu0 0.0
        %4083 = vmatpush1.msra.mxu0 0.0
        %4084 = vmatprep.subr.mxu0 0.0
        %4085 = vmatpush1.msra.mxu0 0.0
        %4086 = vmatprep.subr.mxu0 0.0
        %4087 = vmatpush1.msra.mxu0 0.0
        %4088 = vmatprep.subr.mxu0 0.0
        %4089 = vmatpush1.msra.mxu0 0.0
        %4090 = vmatprep.subr.mxu0 0.0
        %4091 = vmatpush1.msra.mxu0 0.0
        %4092 = vmatprep.subr.mxu0 0.0
        %4093 = vmatpush1.msra.mxu0 0.0
        %4094 = vmatprep.subr.mxu0 0.0
        %4095 = vmatpush1.msra.mxu0 0.0
        %4096 = vmatprep.subr.mxu0 0.0
        %4097 = vmatpush1.msra.mxu0 0.0
        %4098 = vmatprep.subr.mxu0 0.0
        %4099 = vmatpush1.msra.mxu0 0.0
        %4100 = vmatprep.subr.mxu0 0.0
        %4101 = vmatpush1.msra.mxu0 0.0
        %4102 = vmatprep.subr.mxu0 0.0
        %4103 = vmatpush1.msra.mxu0 0.0
        %4104 = vmatprep.subr.mxu0 0.0
        %4105 = vmatpush1.msra.mxu0 0.0
        %4106 = vmatprep.subr.mxu0 0.0
        %4107 = vmatpush1.msra.mxu0 0.0
        %4108 = vmatprep.subr.mxu0 0.0
        %4109 = vmatpush1.msra.mxu0 0.0
        %4110 = vmatprep.subr.mxu0 0.0
        %4111 = vmatpush1.msra.mxu0 0.0
        %4112 = vmatprep.subr.mxu0 0.0
        %4113 = vmatpush1.msra.mxu0 0.0
        %4114 = vmatprep.subr.mxu0 0.0
        %4115 = vmatpush1.msra.mxu0 0.0
        %4116 = vmatprep.subr.mxu0 0.0
        %4117 = vmatpush1.msra.mxu0 0.0
        %4118 = vmatprep.subr.mxu0 0.0
        %4119 = vmatpush1.msra.mxu0 0.0
        %4120 = vmatprep.subr.mxu0 0.0
        %4121 = vmatpush1.msra.mxu0 0.0
        %4122 = vmatprep.subr.mxu0 0.0
        %4123 = vmatpush1.msra.mxu0 0.0
        %4124 = vmatprep.subr.mxu0 0.0
        %4125 = vmatpush1.msra.mxu0 0.0
        %4126 = vmatprep.subr.mxu0 0.0
        %4127 = vmatpush1.msra.mxu0 0.0
        %4128 = vmatprep.mubr.f32.mxu0 0.0
        %4129 = vmatmul.mubr.f32.gmra.mrb[0].mxu0 %v4038
        %v4130 = vpop.f32.mrb[0].mxu0
        %v4131 = vadd.f32 0.0, %v4130
        %v4132 = vpop.f32.mrb[0].mxu0
        %4133 = vmatprep.mubr.f32.mxu0 0.0
        %4134 = vmatmul.mubr.f32.gmra.mrb[0].mxu0 %v4041
        %v4135 = vpop.f32.mrb[0].mxu0
        %v4136 = vadd.f32 0.0, %v4135
        %v4137 = vpop.f32.mrb[0].mxu0
        %4138 = vmatprep.mubr.f32.mxu0 0.0
        %4139 = vmatmul.mubr.f32.gmra.mrb[0].mxu0 %v4044
        %v4140 = vpop.f32.mrb[0].mxu0
        %v4141 = vadd.f32 0.0, %v4140
        %v4142 = vpop.f32.mrb[0].mxu0
        %4143 = vmatprep.mubr.f32.mxu0 0.0
        %4144 = vmatmul.mubr.f32.gmra.mrb[0].mxu0 %v4047
        %v4145 = vpop.f32.mrb[0].mxu0
        %v4146 = vadd.f32 0.0, %v4145
        %v4147 = vpop.f32.mrb[0].mxu0
        %4148 = vmatprep.mubr.f32.mxu0 0.0
        %4149 = vmatmul.mubr.f32.gmra.mrb[0].mxu0 %v4050
        %v4150 = vpop.f32.mrb[0].mxu0
        %v4151 = vadd.f32 0.0, %v4150
        %v4152 = vpop.f32.mrb[0].mxu0
        %4153 = vmatprep.mubr.f32.mxu0 0.0
        %4154 = vmatmul.mubr.f32.gmra.mrb[0].mxu0 %v4053
        %v4155 = vpop.f32.mrb[0].mxu0
        %v4156 = vadd.f32 0.0, %v4155
        %v4157 = vpop.f32.mrb[0].mxu0
        %4158 = vmatprep.mubr.f32.mxu0 0.0
        %4159 = vmatmul.mubr.f32.gmra.mrb[0].mxu0 %v4056
        %v4160 = vpop.f32.mrb[0].mxu0
        %v4161 = vadd.f32 0.0, %v4160
        %v4162 = vpop.f32.mrb[0].mxu0
        %4163 = vmatprep.mubr.f32.mxu0 0.0
        %4164 = vmatmul.mubr.f32.gmra.mrb[0].mxu0 %v4059
        %v4165 = vpop.f32.mrb[0].mxu0
        %v4166 = vadd.f32 0.0, %v4165
        %v4167 = vpop.f32.mrb[0].mxu0
        %4168 = vmatprep.mubr.f32.mxu0 0.0
        %4169 = vmatmul.mubr.f32.gmra.mrb[0].mxu0 %v4062
        %v4170 = vpop.f32.mrb[0].mxu0
        %v4171 = vadd.f32 0.0, %v4170
        %v4172 = vpop.f32.mrb[0].mxu0
        %4173 = vdwg.mxu0
        %v4174 = vadd.f32 %v4016, %v4131
        %v4175 = vadd.f32 %v4017, %v4136
        %v4176 = vadd.f32 %v4018, %v4141
        %v4177 = vadd.f32 %v4019, %v4146
        %v4178 = vadd.f32 %v4020, %v4151
        %v4179 = vadd.f32 %v4021, %v4156
        %v4180 = vadd.f32 %v4022, %v4161
        %v4181 = vadd.f32 %v4023, %v4166
        %v4182 = vadd.f32 %v4024, %v4171
        %s4183 = scalar_lea.vmem [#allocation2], %s2133
        %v4184 = vld [vmem:[%s4183] sm:$0xff]
        %v4185 = vld [vmem:[%s4183 + $0x8] sm:$0xff]
        %v4186 = vld [vmem:[%s4183 + $0x10] sm:$0xff]
        %v4187 = vld [vmem:[%s4183 + $0x18] sm:$0xff]
        %v4188 = vld [vmem:[%s4183 + $0x20] sm:$0xff]
        %v4189 = vld [vmem:[%s4183 + $0x28] sm:$0xff]
        %v4190 = vld [vmem:[%s4183 + $0x30] sm:$0xff]
        %v4191 = vld [vmem:[%s4183 + $0x38] sm:$0xff]
        %v4192 = vld [vmem:[%s4183 + $0x40] sm:$0xff]
        %s4193 = scalar_lea.vmem %s6, 32
        %v4194 = vld [vmem:[%s4193] sm:$0xff]
        %v4196 = vsel %vm481, %v4184, 0
        %v4199 = vsel %vm481, %v4185, 0
        %v4202 = vsel %vm481, %v4186, 0
        %v4205 = vsel %vm481, %v4187, 0
        %v4208 = vsel %vm481, %v4188, 0
        %v4211 = vsel %vm481, %v4189, 0
        %v4214 = vsel %vm481, %v4190, 0
        %v4217 = vsel %vm481, %v4191, 0
        %v4220 = vsel %vm481, %v4192, 0
        %4222 = vmatprep.subr.mxu0 0.0
        %4223 = vmatpush1.msra.mxu0 %v4194
        %4224 = vmatprep.subr.mxu0 0.0
        %4225 = vmatpush1.msra.mxu0 0.0
        %4226 = vmatprep.subr.mxu0 0.0
        %4227 = vmatpush1.msra.mxu0 0.0
        %4228 = vmatprep.subr.mxu0 0.0
        %4229 = vmatpush1.msra.mxu0 0.0
        %4230 = vmatprep.subr.mxu0 0.0
        %4231 = vmatpush1.msra.mxu0 0.0
        %4232 = vmatprep.subr.mxu0 0.0
        %4233 = vmatpush1.msra.mxu0 0.0
        %4234 = vmatprep.subr.mxu0 0.0
        %4235 = vmatpush1.msra.mxu0 0.0
        %4236 = vmatprep.subr.mxu0 0.0
        %4237 = vmatpush1.msra.mxu0 0.0
        %4238 = vmatprep.subr.mxu0 0.0
        %4239 = vmatpush1.msra.mxu0 0.0
        %4240 = vmatprep.subr.mxu0 0.0
        %4241 = vmatpush1.msra.mxu0 0.0
        %4242 = vmatprep.subr.mxu0 0.0
        %4243 = vmatpush1.msra.mxu0 0.0
        %4244 = vmatprep.subr.mxu0 0.0
        %4245 = vmatpush1.msra.mxu0 0.0
        %4246 = vmatprep.subr.mxu0 0.0
        %4247 = vmatpush1.msra.mxu0 0.0
        %4248 = vmatprep.subr.mxu0 0.0
        %4249 = vmatpush1.msra.mxu0 0.0
        %4250 = vmatprep.subr.mxu0 0.0
        %4251 = vmatpush1.msra.mxu0 0.0
        %4252 = vmatprep.subr.mxu0 0.0
        %4253 = vmatpush1.msra.mxu0 0.0
        %4254 = vmatprep.subr.mxu0 0.0
        %4255 = vmatpush1.msra.mxu0 0.0
        %4256 = vmatprep.subr.mxu0 0.0
        %4257 = vmatpush1.msra.mxu0 0.0
        %4258 = vmatprep.subr.mxu0 0.0
        %4259 = vmatpush1.msra.mxu0 0.0
        %4260 = vmatprep.subr.mxu0 0.0
        %4261 = vmatpush1.msra.mxu0 0.0
        %4262 = vmatprep.subr.mxu0 0.0
        %4263 = vmatpush1.msra.mxu0 0.0
        %4264 = vmatprep.subr.mxu0 0.0
        %4265 = vmatpush1.msra.mxu0 0.0
        %4266 = vmatprep.subr.mxu0 0.0
        %4267 = vmatpush1.msra.mxu0 0.0
        %4268 = vmatprep.subr.mxu0 0.0
        %4269 = vmatpush1.msra.mxu0 0.0
        %4270 = vmatprep.subr.mxu0 0.0
        %4271 = vmatpush1.msra.mxu0 0.0
        %4272 = vmatprep.subr.mxu0 0.0
        %4273 = vmatpush1.msra.mxu0 0.0
        %4274 = vmatprep.subr.mxu0 0.0
        %4275 = vmatpush1.msra.mxu0 0.0
        %4276 = vmatprep.subr.mxu0 0.0
        %4277 = vmatpush1.msra.mxu0 0.0
        %4278 = vmatprep.subr.mxu0 0.0
        %4279 = vmatpush1.msra.mxu0 0.0
        %4280 = vmatprep.subr.mxu0 0.0
        %4281 = vmatpush1.msra.mxu0 0.0
        %4282 = vmatprep.subr.mxu0 0.0
        %4283 = vmatpush1.msra.mxu0 0.0
        %4284 = vmatprep.subr.mxu0 0.0
        %4285 = vmatpush1.msra.mxu0 0.0
        %4286 = vmatprep.mubr.f32.mxu0 0.0
        %4287 = vmatmul.mubr.f32.gmra.mrb[0].mxu0 %v4196
        %v4288 = vpop.f32.mrb[0].mxu0
        %v4289 = vadd.f32 0.0, %v4288
        %v4290 = vpop.f32.mrb[0].mxu0
        %4291 = vmatprep.mubr.f32.mxu0 0.0
        %4292 = vmatmul.mubr.f32.gmra.mrb[0].mxu0 %v4199
        %v4293 = vpop.f32.mrb[0].mxu0
        %v4294 = vadd.f32 0.0, %v4293
        %v4295 = vpop.f32.mrb[0].mxu0
        %4296 = vmatprep.mubr.f32.mxu0 0.0
        %4297 = vmatmul.mubr.f32.gmra.mrb[0].mxu0 %v4202
        %v4298 = vpop.f32.mrb[0].mxu0
        %v4299 = vadd.f32 0.0, %v4298
        %v4300 = vpop.f32.mrb[0].mxu0
        %4301 = vmatprep.mubr.f32.mxu0 0.0
        %4302 = vmatmul.mubr.f32.gmra.mrb[0].mxu0 %v4205
        %v4303 = vpop.f32.mrb[0].mxu0
        %v4304 = vadd.f32 0.0, %v4303
        %v4305 = vpop.f32.mrb[0].mxu0
        %4306 = vmatprep.mubr.f32.mxu0 0.0
        %4307 = vmatmul.mubr.f32.gmra.mrb[0].mxu0 %v4208
        %v4308 = vpop.f32.mrb[0].mxu0
        %v4309 = vadd.f32 0.0, %v4308
        %v4310 = vpop.f32.mrb[0].mxu0
        %4311 = vmatprep.mubr.f32.mxu0 0.0
        %4312 = vmatmul.mubr.f32.gmra.mrb[0].mxu0 %v4211
        %v4313 = vpop.f32.mrb[0].mxu0
        %v4314 = vadd.f32 0.0, %v4313
        %v4315 = vpop.f32.mrb[0].mxu0
        %4316 = vmatprep.mubr.f32.mxu0 0.0
        %4317 = vmatmul.mubr.f32.gmra.mrb[0].mxu0 %v4214
        %v4318 = vpop.f32.mrb[0].mxu0
        %v4319 = vadd.f32 0.0, %v4318
        %v4320 = vpop.f32.mrb[0].mxu0
        %4321 = vmatprep.mubr.f32.mxu0 0.0
        %4322 = vmatmul.mubr.f32.gmra.mrb[0].mxu0 %v4217
        %v4323 = vpop.f32.mrb[0].mxu0
        %v4324 = vadd.f32 0.0, %v4323
        %v4325 = vpop.f32.mrb[0].mxu0
        %4326 = vmatprep.mubr.f32.mxu0 0.0
        %4327 = vmatmul.mubr.f32.gmra.mrb[0].mxu0 %v4220
        %v4328 = vpop.f32.mrb[0].mxu0
        %v4329 = vadd.f32 0.0, %v4328
        %v4330 = vpop.f32.mrb[0].mxu0
        %4331 = vdwg.mxu0
        %v4332 = vadd.f32 %v4174, %v4289
        %v4333 = vadd.f32 %v4175, %v4294
        %v4334 = vadd.f32 %v4176, %v4299
        %v4335 = vadd.f32 %v4177, %v4304
        %v4336 = vadd.f32 %v4178, %v4309
        %v4337 = vadd.f32 %v4179, %v4314
        %v4338 = vadd.f32 %v4180, %v4319
        %v4339 = vadd.f32 %v4181, %v4324
        %v4340 = vadd.f32 %v4182, %v4329
        %s4341 = scalar_lea.vmem [#allocation2], %s2914
        %v4342 = vld [vmem:[%s4341] sm:$0xff]
        %v4343 = vld [vmem:[%s4341 + $0x8] sm:$0xff]
        %v4344 = vld [vmem:[%s4341 + $0x10] sm:$0xff]
        %v4345 = vld [vmem:[%s4341 + $0x18] sm:$0xff]
        %v4346 = vld [vmem:[%s4341 + $0x20] sm:$0xff]
        %v4347 = vld [vmem:[%s4341 + $0x28] sm:$0xff]
        %v4348 = vld [vmem:[%s4341 + $0x30] sm:$0xff]
        %v4349 = vld [vmem:[%s4341 + $0x38] sm:$0xff]
        %v4350 = vld [vmem:[%s4341 + $0x40] sm:$0xff]
        %s4351 = scalar_lea.vmem %s6, 40
        %v4352 = vld [vmem:[%s4351] sm:$0xff]
        %v4354 = vsel %vm481, %v4342, 0
        %v4357 = vsel %vm481, %v4343, 0
        %v4360 = vsel %vm481, %v4344, 0
        %v4363 = vsel %vm481, %v4345, 0
        %v4366 = vsel %vm481, %v4346, 0
        %v4369 = vsel %vm481, %v4347, 0
        %v4372 = vsel %vm481, %v4348, 0
        %v4375 = vsel %vm481, %v4349, 0
        %v4378 = vsel %vm481, %v4350, 0
        %4380 = vmatprep.subr.mxu0 0.0
        %4381 = vmatpush1.msra.mxu0 %v4352
        %4382 = vmatprep.subr.mxu0 0.0
        %4383 = vmatpush1.msra.mxu0 0.0
        %4384 = vmatprep.subr.mxu0 0.0
        %4385 = vmatpush1.msra.mxu0 0.0
        %4386 = vmatprep.subr.mxu0 0.0
        %4387 = vmatpush1.msra.mxu0 0.0
        %4388 = vmatprep.subr.mxu0 0.0
        %4389 = vmatpush1.msra.mxu0 0.0
        %4390 = vmatprep.subr.mxu0 0.0
        %4391 = vmatpush1.msra.mxu0 0.0
        %4392 = vmatprep.subr.mxu0 0.0
        %4393 = vmatpush1.msra.mxu0 0.0
        %4394 = vmatprep.subr.mxu0 0.0
        %4395 = vmatpush1.msra.mxu0 0.0
        %4396 = vmatprep.subr.mxu0 0.0
        %4397 = vmatpush1.msra.mxu0 0.0
        %4398 = vmatprep.subr.mxu0 0.0
        %4399 = vmatpush1.msra.mxu0 0.0
        %4400 = vmatprep.subr.mxu0 0.0
        %4401 = vmatpush1.msra.mxu0 0.0
        %4402 = vmatprep.subr.mxu0 0.0
        %4403 = vmatpush1.msra.mxu0 0.0
        %4404 = vmatprep.subr.mxu0 0.0
        %4405 = vmatpush1.msra.mxu0 0.0
        %4406 = vmatprep.subr.mxu0 0.0
        %4407 = vmatpush1.msra.mxu0 0.0
        %4408 = vmatprep.subr.mxu0 0.0
        %4409 = vmatpush1.msra.mxu0 0.0
        %4410 = vmatprep.subr.mxu0 0.0
        %4411 = vmatpush1.msra.mxu0 0.0
        %4412 = vmatprep.subr.mxu0 0.0
        %4413 = vmatpush1.msra.mxu0 0.0
        %4414 = vmatprep.subr.mxu0 0.0
        %4415 = vmatpush1.msra.mxu0 0.0
        %4416 = vmatprep.subr.mxu0 0.0
        %4417 = vmatpush1.msra.mxu0 0.0
        %4418 = vmatprep.subr.mxu0 0.0
        %4419 = vmatpush1.msra.mxu0 0.0
        %4420 = vmatprep.subr.mxu0 0.0
        %4421 = vmatpush1.msra.mxu0 0.0
        %4422 = vmatprep.subr.mxu0 0.0
        %4423 = vmatpush1.msra.mxu0 0.0
        %4424 = vmatprep.subr.mxu0 0.0
        %4425 = vmatpush1.msra.mxu0 0.0
        %4426 = vmatprep.subr.mxu0 0.0
        %4427 = vmatpush1.msra.mxu0 0.0
        %4428 = vmatprep.subr.mxu0 0.0
        %4429 = vmatpush1.msra.mxu0 0.0
        %4430 = vmatprep.subr.mxu0 0.0
        %4431 = vmatpush1.msra.mxu0 0.0
        %4432 = vmatprep.subr.mxu0 0.0
        %4433 = vmatpush1.msra.mxu0 0.0
        %4434 = vmatprep.subr.mxu0 0.0
        %4435 = vmatpush1.msra.mxu0 0.0
        %4436 = vmatprep.subr.mxu0 0.0
        %4437 = vmatpush1.msra.mxu0 0.0
        %4438 = vmatprep.subr.mxu0 0.0
        %4439 = vmatpush1.msra.mxu0 0.0
        %4440 = vmatprep.subr.mxu0 0.0
        %4441 = vmatpush1.msra.mxu0 0.0
        %4442 = vmatprep.subr.mxu0 0.0
        %4443 = vmatpush1.msra.mxu0 0.0
        %4444 = vmatprep.mubr.f32.mxu0 0.0
        %4445 = vmatmul.mubr.f32.gmra.mrb[0].mxu0 %v4354
        %v4446 = vpop.f32.mrb[0].mxu0
        %v4447 = vadd.f32 0.0, %v4446
        %v4448 = vpop.f32.mrb[0].mxu0
        %4449 = vmatprep.mubr.f32.mxu0 0.0
        %4450 = vmatmul.mubr.f32.gmra.mrb[0].mxu0 %v4357
        %v4451 = vpop.f32.mrb[0].mxu0
        %v4452 = vadd.f32 0.0, %v4451
        %v4453 = vpop.f32.mrb[0].mxu0
        %4454 = vmatprep.mubr.f32.mxu0 0.0
        %4455 = vmatmul.mubr.f32.gmra.mrb[0].mxu0 %v4360
        %v4456 = vpop.f32.mrb[0].mxu0
        %v4457 = vadd.f32 0.0, %v4456
        %v4458 = vpop.f32.mrb[0].mxu0
        %4459 = vmatprep.mubr.f32.mxu0 0.0
        %4460 = vmatmul.mubr.f32.gmra.mrb[0].mxu0 %v4363
        %v4461 = vpop.f32.mrb[0].mxu0
        %v4462 = vadd.f32 0.0, %v4461
        %v4463 = vpop.f32.mrb[0].mxu0
        %4464 = vmatprep.mubr.f32.mxu0 0.0
        %4465 = vmatmul.mubr.f32.gmra.mrb[0].mxu0 %v4366
        %v4466 = vpop.f32.mrb[0].mxu0
        %v4467 = vadd.f32 0.0, %v4466
        %v4468 = vpop.f32.mrb[0].mxu0
        %4469 = vmatprep.mubr.f32.mxu0 0.0
        %4470 = vmatmul.mubr.f32.gmra.mrb[0].mxu0 %v4369
        %v4471 = vpop.f32.mrb[0].mxu0
        %v4472 = vadd.f32 0.0, %v4471
        %v4473 = vpop.f32.mrb[0].mxu0
        %4474 = vmatprep.mubr.f32.mxu0 0.0
        %4475 = vmatmul.mubr.f32.gmra.mrb[0].mxu0 %v4372
        %v4476 = vpop.f32.mrb[0].mxu0
        %v4477 = vadd.f32 0.0, %v4476
        %v4478 = vpop.f32.mrb[0].mxu0
        %4479 = vmatprep.mubr.f32.mxu0 0.0
        %4480 = vmatmul.mubr.f32.gmra.mrb[0].mxu0 %v4375
        %v4481 = vpop.f32.mrb[0].mxu0
        %v4482 = vadd.f32 0.0, %v4481
        %v4483 = vpop.f32.mrb[0].mxu0
        %4484 = vmatprep.mubr.f32.mxu0 0.0
        %4485 = vmatmul.mubr.f32.gmra.mrb[0].mxu0 %v4378
        %v4486 = vpop.f32.mrb[0].mxu0
        %v4487 = vadd.f32 0.0, %v4486
        %v4488 = vpop.f32.mrb[0].mxu0
        %4489 = vdwg.mxu0
        %v4490 = vadd.f32 %v4332, %v4447
        %v4491 = vadd.f32 %v4333, %v4452
        %v4492 = vadd.f32 %v4334, %v4457
        %v4493 = vadd.f32 %v4335, %v4462
        %v4494 = vadd.f32 %v4336, %v4467
        %v4495 = vadd.f32 %v4337, %v4472
        %v4496 = vadd.f32 %v4338, %v4477
        %v4497 = vadd.f32 %v4339, %v4482
        %v4498 = vadd.f32 %v4340, %v4487
        %s4499 = scalar_lea.vmem [#allocation2], %s3074
        %v4500 = vld [vmem:[%s4499] sm:$0xff]
        %v4501 = vld [vmem:[%s4499 + $0x8] sm:$0xff]
        %v4502 = vld [vmem:[%s4499 + $0x10] sm:$0xff]
        %v4503 = vld [vmem:[%s4499 + $0x18] sm:$0xff]
        %v4504 = vld [vmem:[%s4499 + $0x20] sm:$0xff]
        %v4505 = vld [vmem:[%s4499 + $0x28] sm:$0xff]
        %v4506 = vld [vmem:[%s4499 + $0x30] sm:$0xff]
        %v4507 = vld [vmem:[%s4499 + $0x38] sm:$0xff]
        %v4508 = vld [vmem:[%s4499 + $0x40] sm:$0xff]
        %s4509 = scalar_lea.vmem %s6, 48
        %v4510 = vld [vmem:[%s4509] sm:$0xff]
        %v4512 = vsel %vm481, %v4500, 0
        %v4515 = vsel %vm481, %v4501, 0
        %v4518 = vsel %vm481, %v4502, 0
        %v4521 = vsel %vm481, %v4503, 0
        %v4524 = vsel %vm481, %v4504, 0
        %v4527 = vsel %vm481, %v4505, 0
        %v4530 = vsel %vm481, %v4506, 0
        %v4533 = vsel %vm481, %v4507, 0
        %v4536 = vsel %vm481, %v4508, 0
        %4538 = vmatprep.subr.mxu0 0.0
        %4539 = vmatpush1.msra.mxu0 %v4510
        %4540 = vmatprep.subr.mxu0 0.0
        %4541 = vmatpush1.msra.mxu0 0.0
        %4542 = vmatprep.subr.mxu0 0.0
        %4543 = vmatpush1.msra.mxu0 0.0
        %4544 = vmatprep.subr.mxu0 0.0
        %4545 = vmatpush1.msra.mxu0 0.0
        %4546 = vmatprep.subr.mxu0 0.0
        %4547 = vmatpush1.msra.mxu0 0.0
        %4548 = vmatprep.subr.mxu0 0.0
        %4549 = vmatpush1.msra.mxu0 0.0
        %4550 = vmatprep.subr.mxu0 0.0
        %4551 = vmatpush1.msra.mxu0 0.0
        %4552 = vmatprep.subr.mxu0 0.0
        %4553 = vmatpush1.msra.mxu0 0.0
        %4554 = vmatprep.subr.mxu0 0.0
        %4555 = vmatpush1.msra.mxu0 0.0
        %4556 = vmatprep.subr.mxu0 0.0
        %4557 = vmatpush1.msra.mxu0 0.0
        %4558 = vmatprep.subr.mxu0 0.0
        %4559 = vmatpush1.msra.mxu0 0.0
        %4560 = vmatprep.subr.mxu0 0.0
        %4561 = vmatpush1.msra.mxu0 0.0
        %4562 = vmatprep.subr.mxu0 0.0
        %4563 = vmatpush1.msra.mxu0 0.0
        %4564 = vmatprep.subr.mxu0 0.0
        %4565 = vmatpush1.msra.mxu0 0.0
        %4566 = vmatprep.subr.mxu0 0.0
        %4567 = vmatpush1.msra.mxu0 0.0
        %4568 = vmatprep.subr.mxu0 0.0
        %4569 = vmatpush1.msra.mxu0 0.0
        %4570 = vmatprep.subr.mxu0 0.0
        %4571 = vmatpush1.msra.mxu0 0.0
        %4572 = vmatprep.subr.mxu0 0.0
        %4573 = vmatpush1.msra.mxu0 0.0
        %4574 = vmatprep.subr.mxu0 0.0
        %4575 = vmatpush1.msra.mxu0 0.0
        %4576 = vmatprep.subr.mxu0 0.0
        %4577 = vmatpush1.msra.mxu0 0.0
        %4578 = vmatprep.subr.mxu0 0.0
        %4579 = vmatpush1.msra.mxu0 0.0
        %4580 = vmatprep.subr.mxu0 0.0
        %4581 = vmatpush1.msra.mxu0 0.0
        %4582 = vmatprep.subr.mxu0 0.0
        %4583 = vmatpush1.msra.mxu0 0.0
        %4584 = vmatprep.subr.mxu0 0.0
        %4585 = vmatpush1.msra.mxu0 0.0
        %4586 = vmatprep.subr.mxu0 0.0
        %4587 = vmatpush1.msra.mxu0 0.0
        %4588 = vmatprep.subr.mxu0 0.0
        %4589 = vmatpush1.msra.mxu0 0.0
        %4590 = vmatprep.subr.mxu0 0.0
        %4591 = vmatpush1.msra.mxu0 0.0
        %4592 = vmatprep.subr.mxu0 0.0
        %4593 = vmatpush1.msra.mxu0 0.0
        %4594 = vmatprep.subr.mxu0 0.0
        %4595 = vmatpush1.msra.mxu0 0.0
        %4596 = vmatprep.subr.mxu0 0.0
        %4597 = vmatpush1.msra.mxu0 0.0
        %4598 = vmatprep.subr.mxu0 0.0
        %4599 = vmatpush1.msra.mxu0 0.0
        %4600 = vmatprep.subr.mxu0 0.0
        %4601 = vmatpush1.msra.mxu0 0.0
        %4602 = vmatprep.mubr.f32.mxu0 0.0
        %4603 = vmatmul.mubr.f32.gmra.mrb[0].mxu0 %v4512
        %v4604 = vpop.f32.mrb[0].mxu0
        %v4605 = vadd.f32 0.0, %v4604
        %v4606 = vpop.f32.mrb[0].mxu0
        %4607 = vmatprep.mubr.f32.mxu0 0.0
        %4608 = vmatmul.mubr.f32.gmra.mrb[0].mxu0 %v4515
        %v4609 = vpop.f32.mrb[0].mxu0
        %v4610 = vadd.f32 0.0, %v4609
        %v4611 = vpop.f32.mrb[0].mxu0
        %4612 = vmatprep.mubr.f32.mxu0 0.0
        %4613 = vmatmul.mubr.f32.gmra.mrb[0].mxu0 %v4518
        %v4614 = vpop.f32.mrb[0].mxu0
        %v4615 = vadd.f32 0.0, %v4614
        %v4616 = vpop.f32.mrb[0].mxu0
        %4617 = vmatprep.mubr.f32.mxu0 0.0
        %4618 = vmatmul.mubr.f32.gmra.mrb[0].mxu0 %v4521
        %v4619 = vpop.f32.mrb[0].mxu0
        %v4620 = vadd.f32 0.0, %v4619
        %v4621 = vpop.f32.mrb[0].mxu0
        %4622 = vmatprep.mubr.f32.mxu0 0.0
        %4623 = vmatmul.mubr.f32.gmra.mrb[0].mxu0 %v4524
        %v4624 = vpop.f32.mrb[0].mxu0
        %v4625 = vadd.f32 0.0, %v4624
        %v4626 = vpop.f32.mrb[0].mxu0
        %4627 = vmatprep.mubr.f32.mxu0 0.0
        %4628 = vmatmul.mubr.f32.gmra.mrb[0].mxu0 %v4527
        %v4629 = vpop.f32.mrb[0].mxu0
        %v4630 = vadd.f32 0.0, %v4629
        %v4631 = vpop.f32.mrb[0].mxu0
        %4632 = vmatprep.mubr.f32.mxu0 0.0
        %4633 = vmatmul.mubr.f32.gmra.mrb[0].mxu0 %v4530
        %v4634 = vpop.f32.mrb[0].mxu0
        %v4635 = vadd.f32 0.0, %v4634
        %v4636 = vpop.f32.mrb[0].mxu0
        %4637 = vmatprep.mubr.f32.mxu0 0.0
        %4638 = vmatmul.mubr.f32.gmra.mrb[0].mxu0 %v4533
        %v4639 = vpop.f32.mrb[0].mxu0
        %v4640 = vadd.f32 0.0, %v4639
        %v4641 = vpop.f32.mrb[0].mxu0
        %4642 = vmatprep.mubr.f32.mxu0 0.0
        %4643 = vmatmul.mubr.f32.gmra.mrb[0].mxu0 %v4536
        %v4644 = vpop.f32.mrb[0].mxu0
        %v4645 = vadd.f32 0.0, %v4644
        %v4646 = vpop.f32.mrb[0].mxu0
        %4647 = vdwg.mxu0
        %v4648 = vadd.f32 %v4490, %v4605
        %v4649 = vadd.f32 %v4491, %v4610
        %v4650 = vadd.f32 %v4492, %v4615
        %v4651 = vadd.f32 %v4493, %v4620
        %v4652 = vadd.f32 %v4494, %v4625
        %v4653 = vadd.f32 %v4495, %v4630
        %v4654 = vadd.f32 %v4496, %v4635
        %v4655 = vadd.f32 %v4497, %v4640
        %v4656 = vadd.f32 %v4498, %v4645
        %s4657 = scalar_lea.vmem [#allocation2], %s3234
        %v4658 = vld [vmem:[%s4657] sm:$0xff]
        %v4659 = vld [vmem:[%s4657 + $0x8] sm:$0xff]
        %v4660 = vld [vmem:[%s4657 + $0x10] sm:$0xff]
        %v4661 = vld [vmem:[%s4657 + $0x18] sm:$0xff]
        %v4662 = vld [vmem:[%s4657 + $0x20] sm:$0xff]
        %v4663 = vld [vmem:[%s4657 + $0x28] sm:$0xff]
        %v4664 = vld [vmem:[%s4657 + $0x30] sm:$0xff]
        %v4665 = vld [vmem:[%s4657 + $0x38] sm:$0xff]
        %v4666 = vld [vmem:[%s4657 + $0x40] sm:$0xff]
        %s4667 = scalar_lea.vmem %s6, 56
        %v4668 = vld [vmem:[%s4667] sm:$0xff]
        %v4670 = vsel %vm481, %v4658, 0
        %v4673 = vsel %vm481, %v4659, 0
        %v4676 = vsel %vm481, %v4660, 0
        %v4679 = vsel %vm481, %v4661, 0
        %v4682 = vsel %vm481, %v4662, 0
        %v4685 = vsel %vm481, %v4663, 0
        %v4688 = vsel %vm481, %v4664, 0
        %v4691 = vsel %vm481, %v4665, 0
        %v4694 = vsel %vm481, %v4666, 0
        %4696 = vmatprep.subr.mxu0 0.0
        %4697 = vmatpush1.msra.mxu0 %v4668
        %4698 = vmatprep.subr.mxu0 0.0
        %4699 = vmatpush1.msra.mxu0 0.0
        %4700 = vmatprep.subr.mxu0 0.0
        %4701 = vmatpush1.msra.mxu0 0.0
        %4702 = vmatprep.subr.mxu0 0.0
        %4703 = vmatpush1.msra.mxu0 0.0
        %4704 = vmatprep.subr.mxu0 0.0
        %4705 = vmatpush1.msra.mxu0 0.0
        %4706 = vmatprep.subr.mxu0 0.0
        %4707 = vmatpush1.msra.mxu0 0.0
        %4708 = vmatprep.subr.mxu0 0.0
        %4709 = vmatpush1.msra.mxu0 0.0
        %4710 = vmatprep.subr.mxu0 0.0
        %4711 = vmatpush1.msra.mxu0 0.0
        %4712 = vmatprep.subr.mxu0 0.0
        %4713 = vmatpush1.msra.mxu0 0.0
        %4714 = vmatprep.subr.mxu0 0.0
        %4715 = vmatpush1.msra.mxu0 0.0
        %4716 = vmatprep.subr.mxu0 0.0
        %4717 = vmatpush1.msra.mxu0 0.0
        %4718 = vmatprep.subr.mxu0 0.0
        %4719 = vmatpush1.msra.mxu0 0.0
        %4720 = vmatprep.subr.mxu0 0.0
        %4721 = vmatpush1.msra.mxu0 0.0
        %4722 = vmatprep.subr.mxu0 0.0
        %4723 = vmatpush1.msra.mxu0 0.0
        %4724 = vmatprep.subr.mxu0 0.0
        %4725 = vmatpush1.msra.mxu0 0.0
        %4726 = vmatprep.subr.mxu0 0.0
        %4727 = vmatpush1.msra.mxu0 0.0
        %4728 = vmatprep.subr.mxu0 0.0
        %4729 = vmatpush1.msra.mxu0 0.0
        %4730 = vmatprep.subr.mxu0 0.0
        %4731 = vmatpush1.msra.mxu0 0.0
        %4732 = vmatprep.subr.mxu0 0.0
        %4733 = vmatpush1.msra.mxu0 0.0
        %4734 = vmatprep.subr.mxu0 0.0
        %4735 = vmatpush1.msra.mxu0 0.0
        %4736 = vmatprep.subr.mxu0 0.0
        %4737 = vmatpush1.msra.mxu0 0.0
        %4738 = vmatprep.subr.mxu0 0.0
        %4739 = vmatpush1.msra.mxu0 0.0
        %4740 = vmatprep.subr.mxu0 0.0
        %4741 = vmatpush1.msra.mxu0 0.0
        %4742 = vmatprep.subr.mxu0 0.0
        %4743 = vmatpush1.msra.mxu0 0.0
        %4744 = vmatprep.subr.mxu0 0.0
        %4745 = vmatpush1.msra.mxu0 0.0
        %4746 = vmatprep.subr.mxu0 0.0
        %4747 = vmatpush1.msra.mxu0 0.0
        %4748 = vmatprep.subr.mxu0 0.0
        %4749 = vmatpush1.msra.mxu0 0.0
        %4750 = vmatprep.subr.mxu0 0.0
        %4751 = vmatpush1.msra.mxu0 0.0
        %4752 = vmatprep.subr.mxu0 0.0
        %4753 = vmatpush1.msra.mxu0 0.0
        %4754 = vmatprep.subr.mxu0 0.0
        %4755 = vmatpush1.msra.mxu0 0.0
        %4756 = vmatprep.subr.mxu0 0.0
        %4757 = vmatpush1.msra.mxu0 0.0
        %4758 = vmatprep.subr.mxu0 0.0
        %4759 = vmatpush1.msra.mxu0 0.0
        %4760 = vmatprep.mubr.f32.mxu0 0.0
        %4761 = vmatmul.mubr.f32.gmra.mrb[0].mxu0 %v4670
        %v4762 = vpop.f32.mrb[0].mxu0
        %v4763 = vadd.f32 0.0, %v4762
        %v4764 = vpop.f32.mrb[0].mxu0
        %4765 = vmatprep.mubr.f32.mxu0 0.0
        %4766 = vmatmul.mubr.f32.gmra.mrb[0].mxu0 %v4673
        %v4767 = vpop.f32.mrb[0].mxu0
        %v4768 = vadd.f32 0.0, %v4767
        %v4769 = vpop.f32.mrb[0].mxu0
        %4770 = vmatprep.mubr.f32.mxu0 0.0
        %4771 = vmatmul.mubr.f32.gmra.mrb[0].mxu0 %v4676
        %v4772 = vpop.f32.mrb[0].mxu0
        %v4773 = vadd.f32 0.0, %v4772
        %v4774 = vpop.f32.mrb[0].mxu0
        %4775 = vmatprep.mubr.f32.mxu0 0.0
        %4776 = vmatmul.mubr.f32.gmra.mrb[0].mxu0 %v4679
        %v4777 = vpop.f32.mrb[0].mxu0
        %v4778 = vadd.f32 0.0, %v4777
        %v4779 = vpop.f32.mrb[0].mxu0
        %4780 = vmatprep.mubr.f32.mxu0 0.0
        %4781 = vmatmul.mubr.f32.gmra.mrb[0].mxu0 %v4682
        %v4782 = vpop.f32.mrb[0].mxu0
        %v4783 = vadd.f32 0.0, %v4782
        %v4784 = vpop.f32.mrb[0].mxu0
        %4785 = vmatprep.mubr.f32.mxu0 0.0
        %4786 = vmatmul.mubr.f32.gmra.mrb[0].mxu0 %v4685
        %v4787 = vpop.f32.mrb[0].mxu0
        %v4788 = vadd.f32 0.0, %v4787
        %v4789 = vpop.f32.mrb[0].mxu0
        %4790 = vmatprep.mubr.f32.mxu0 0.0
        %4791 = vmatmul.mubr.f32.gmra.mrb[0].mxu0 %v4688
        %v4792 = vpop.f32.mrb[0].mxu0
        %v4793 = vadd.f32 0.0, %v4792
        %v4794 = vpop.f32.mrb[0].mxu0
        %4795 = vmatprep.mubr.f32.mxu0 0.0
        %4796 = vmatmul.mubr.f32.gmra.mrb[0].mxu0 %v4691
        %v4797 = vpop.f32.mrb[0].mxu0
        %v4798 = vadd.f32 0.0, %v4797
        %v4799 = vpop.f32.mrb[0].mxu0
        %4800 = vmatprep.mubr.f32.mxu0 0.0
        %4801 = vmatmul.mubr.f32.gmra.mrb[0].mxu0 %v4694
        %v4802 = vpop.f32.mrb[0].mxu0
        %v4803 = vadd.f32 0.0, %v4802
        %v4804 = vpop.f32.mrb[0].mxu0
        %4805 = vdwg.mxu0
        %v4806 = vadd.f32 %v4648, %v4763
        %v4807 = vadd.f32 %v4649, %v4768
        %v4808 = vadd.f32 %v4650, %v4773
        %v4809 = vadd.f32 %v4651, %v4778
        %v4810 = vadd.f32 %v4652, %v4783
        %v4811 = vadd.f32 %v4653, %v4788
        %v4812 = vadd.f32 %v4654, %v4793
        %v4813 = vadd.f32 %v4655, %v4798
        %v4814 = vadd.f32 %v4656, %v4803
        %s4815 = scalar_lea.vmem [#allocation2], %s3394
        %v4816 = vld [vmem:[%s4815] sm:$0xff]
        %v4817 = vld [vmem:[%s4815 + $0x8] sm:$0xff]
        %v4818 = vld [vmem:[%s4815 + $0x10] sm:$0xff]
        %v4819 = vld [vmem:[%s4815 + $0x18] sm:$0xff]
        %v4820 = vld [vmem:[%s4815 + $0x20] sm:$0xff]
        %v4821 = vld [vmem:[%s4815 + $0x28] sm:$0xff]
        %v4822 = vld [vmem:[%s4815 + $0x30] sm:$0xff]
        %v4823 = vld [vmem:[%s4815 + $0x38] sm:$0xff]
        %v4824 = vld [vmem:[%s4815 + $0x40] sm:$0xff]
        %s4825 = scalar_lea.vmem %s6, 64
        %v4826 = vld [vmem:[%s4825] sm:$0xff]
        %v4828 = vsel %vm481, %v4816, 0
        %v4831 = vsel %vm481, %v4817, 0
        %v4834 = vsel %vm481, %v4818, 0
        %v4837 = vsel %vm481, %v4819, 0
        %v4840 = vsel %vm481, %v4820, 0
        %v4843 = vsel %vm481, %v4821, 0
        %v4846 = vsel %vm481, %v4822, 0
        %v4849 = vsel %vm481, %v4823, 0
        %v4852 = vsel %vm481, %v4824, 0
        %4854 = vmatprep.subr.mxu0 0.0
        %4855 = vmatpush1.msra.mxu0 %v4826
        %4856 = vmatprep.subr.mxu0 0.0
        %4857 = vmatpush1.msra.mxu0 0.0
        %4858 = vmatprep.subr.mxu0 0.0
        %4859 = vmatpush1.msra.mxu0 0.0
        %4860 = vmatprep.subr.mxu0 0.0
        %4861 = vmatpush1.msra.mxu0 0.0
        %4862 = vmatprep.subr.mxu0 0.0
        %4863 = vmatpush1.msra.mxu0 0.0
        %4864 = vmatprep.subr.mxu0 0.0
        %4865 = vmatpush1.msra.mxu0 0.0
        %4866 = vmatprep.subr.mxu0 0.0
        %4867 = vmatpush1.msra.mxu0 0.0
        %4868 = vmatprep.subr.mxu0 0.0
        %4869 = vmatpush1.msra.mxu0 0.0
        %4870 = vmatprep.subr.mxu0 0.0
        %4871 = vmatpush1.msra.mxu0 0.0
        %4872 = vmatprep.subr.mxu0 0.0
        %4873 = vmatpush1.msra.mxu0 0.0
        %4874 = vmatprep.subr.mxu0 0.0
        %4875 = vmatpush1.msra.mxu0 0.0
        %4876 = vmatprep.subr.mxu0 0.0
        %4877 = vmatpush1.msra.mxu0 0.0
        %4878 = vmatprep.subr.mxu0 0.0
        %4879 = vmatpush1.msra.mxu0 0.0
        %4880 = vmatprep.subr.mxu0 0.0
        %4881 = vmatpush1.msra.mxu0 0.0
        %4882 = vmatprep.subr.mxu0 0.0
        %4883 = vmatpush1.msra.mxu0 0.0
        %4884 = vmatprep.subr.mxu0 0.0
        %4885 = vmatpush1.msra.mxu0 0.0
        %4886 = vmatprep.subr.mxu0 0.0
        %4887 = vmatpush1.msra.mxu0 0.0
        %4888 = vmatprep.subr.mxu0 0.0
        %4889 = vmatpush1.msra.mxu0 0.0
        %4890 = vmatprep.subr.mxu0 0.0
        %4891 = vmatpush1.msra.mxu0 0.0
        %4892 = vmatprep.subr.mxu0 0.0
        %4893 = vmatpush1.msra.mxu0 0.0
        %4894 = vmatprep.subr.mxu0 0.0
        %4895 = vmatpush1.msra.mxu0 0.0
        %4896 = vmatprep.subr.mxu0 0.0
        %4897 = vmatpush1.msra.mxu0 0.0
        %4898 = vmatprep.subr.mxu0 0.0
        %4899 = vmatpush1.msra.mxu0 0.0
        %4900 = vmatprep.subr.mxu0 0.0
        %4901 = vmatpush1.msra.mxu0 0.0
        %4902 = vmatprep.subr.mxu0 0.0
        %4903 = vmatpush1.msra.mxu0 0.0
        %4904 = vmatprep.subr.mxu0 0.0
        %4905 = vmatpush1.msra.mxu0 0.0
        %4906 = vmatprep.subr.mxu0 0.0
        %4907 = vmatpush1.msra.mxu0 0.0
        %4908 = vmatprep.subr.mxu0 0.0
        %4909 = vmatpush1.msra.mxu0 0.0
        %4910 = vmatprep.subr.mxu0 0.0
        %4911 = vmatpush1.msra.mxu0 0.0
        %4912 = vmatprep.subr.mxu0 0.0
        %4913 = vmatpush1.msra.mxu0 0.0
        %4914 = vmatprep.subr.mxu0 0.0
        %4915 = vmatpush1.msra.mxu0 0.0
        %4916 = vmatprep.subr.mxu0 0.0
        %4917 = vmatpush1.msra.mxu0 0.0
        %4918 = vmatprep.mubr.f32.mxu0 0.0
        %4919 = vmatmul.mubr.f32.gmra.mrb[0].mxu0 %v4828
        %v4920 = vpop.f32.mrb[0].mxu0
        %v4921 = vadd.f32 0.0, %v4920
        %v4922 = vpop.f32.mrb[0].mxu0
        %4923 = vmatprep.mubr.f32.mxu0 0.0
        %4924 = vmatmul.mubr.f32.gmra.mrb[0].mxu0 %v4831
        %v4925 = vpop.f32.mrb[0].mxu0
        %v4926 = vadd.f32 0.0, %v4925
        %v4927 = vpop.f32.mrb[0].mxu0
        %4928 = vmatprep.mubr.f32.mxu0 0.0
        %4929 = vmatmul.mubr.f32.gmra.mrb[0].mxu0 %v4834
        %v4930 = vpop.f32.mrb[0].mxu0
        %v4931 = vadd.f32 0.0, %v4930
        %v4932 = vpop.f32.mrb[0].mxu0
        %4933 = vmatprep.mubr.f32.mxu0 0.0
        %4934 = vmatmul.mubr.f32.gmra.mrb[0].mxu0 %v4837
        %v4935 = vpop.f32.mrb[0].mxu0
        %v4936 = vadd.f32 0.0, %v4935
        %v4937 = vpop.f32.mrb[0].mxu0
        %4938 = vmatprep.mubr.f32.mxu0 0.0
        %4939 = vmatmul.mubr.f32.gmra.mrb[0].mxu0 %v4840
        %v4940 = vpop.f32.mrb[0].mxu0
        %v4941 = vadd.f32 0.0, %v4940
        %v4942 = vpop.f32.mrb[0].mxu0
        %4943 = vmatprep.mubr.f32.mxu0 0.0
        %4944 = vmatmul.mubr.f32.gmra.mrb[0].mxu0 %v4843
        %v4945 = vpop.f32.mrb[0].mxu0
        %v4946 = vadd.f32 0.0, %v4945
        %v4947 = vpop.f32.mrb[0].mxu0
        %4948 = vmatprep.mubr.f32.mxu0 0.0
        %4949 = vmatmul.mubr.f32.gmra.mrb[0].mxu0 %v4846
        %v4950 = vpop.f32.mrb[0].mxu0
        %v4951 = vadd.f32 0.0, %v4950
        %v4952 = vpop.f32.mrb[0].mxu0
        %4953 = vmatprep.mubr.f32.mxu0 0.0
        %4954 = vmatmul.mubr.f32.gmra.mrb[0].mxu0 %v4849
        %v4955 = vpop.f32.mrb[0].mxu0
        %v4956 = vadd.f32 0.0, %v4955
        %v4957 = vpop.f32.mrb[0].mxu0
        %4958 = vmatprep.mubr.f32.mxu0 0.0
        %4959 = vmatmul.mubr.f32.gmra.mrb[0].mxu0 %v4852
        %v4960 = vpop.f32.mrb[0].mxu0
        %v4961 = vadd.f32 0.0, %v4960
        %v4962 = vpop.f32.mrb[0].mxu0
        %4963 = vdwg.mxu0
        %v4964 = vadd.f32 %v4806, %v4921
        %v4965 = vadd.f32 %v4807, %v4926
        %v4966 = vadd.f32 %v4808, %v4931
        %v4967 = vadd.f32 %v4809, %v4936
        %v4968 = vadd.f32 %v4810, %v4941
        %v4969 = vadd.f32 %v4811, %v4946
        %v4970 = vadd.f32 %v4812, %v4951
        %v4971 = vadd.f32 %v4813, %v4956
        %v4972 = vadd.f32 %v4814, %v4961
        %v4973 = vld [vmem:[%s7] sm:$0x1]
        %v4975 = vlaneseq
        %v4976 = vshrl.u32 %v4975, 7
        %v4977 = vsub.s32 0, %v4976
        %v4978 = vrot.slane %v4973, %v4977
        %v4980 = vadd.f32 %v4964, %v4978
        %v4981 = vadd.f32 %v4965, %v4978
        %v4982 = vadd.f32 %v4966, %v4978
        %v4983 = vadd.f32 %v4967, %v4978
        %v4984 = vadd.f32 %v4968, %v4978
        %v4985 = vadd.f32 %v4969, %v4978
        %v4986 = vadd.f32 %v4970, %v4978
        %v4987 = vadd.f32 %v4971, %v4978
        %v4988 = vadd.f32 %v4972, %v4978
        %v4989 = vadd.f32 %v4980, %v3561
        %v4990 = vadd.f32 %v4981, %v3562
        %v4991 = vadd.f32 %v4982, %v3563
        %v4992 = vadd.f32 %v4983, %v3564
        %v4993 = vadd.f32 %v4984, %v3565
        %v4994 = vadd.f32 %v4985, %v3566
        %v4995 = vadd.f32 %v4986, %v3567
        %v4996 = vadd.f32 %v4987, %v3568
        %v4997 = vadd.f32 %v4988, %v3569
        %4999 = vset.pattern.permute.xlu0 0
        %5000 = vperm.xlu0 %4999, %v524
        %v5001 = vpop.permute.xlu0 %5000
        %5004 = vset.pattern.permute.xlu0 0
        %5005 = vperm.xlu0 %5004, %v525
        %v5006 = vpop.permute.xlu0 %5005
        %5009 = vset.pattern.permute.xlu0 0
        %5010 = vperm.xlu0 %5009, %v526
        %v5011 = vpop.permute.xlu0 %5010
        %5014 = vset.pattern.permute.xlu0 0
        %5015 = vperm.xlu0 %5014, %v527
        %v5016 = vpop.permute.xlu0 %5015
        %5019 = vset.pattern.permute.xlu0 0
        %5020 = vperm.xlu0 %5019, %v528
        %v5021 = vpop.permute.xlu0 %5020
        %5024 = vset.pattern.permute.xlu0 0
        %5025 = vperm.xlu0 %5024, %v529
        %v5026 = vpop.permute.xlu0 %5025
        %5029 = vset.pattern.permute.xlu0 0
        %5030 = vperm.xlu0 %5029, %v530
        %v5031 = vpop.permute.xlu0 %5030
        %5034 = vset.pattern.permute.xlu0 0
        %5035 = vperm.xlu0 %5034, %v531
        %v5036 = vpop.permute.xlu0 %5035
        %5039 = vset.pattern.permute.xlu0 0
        %5040 = vperm.xlu0 %5039, %v532
        %v5041 = vpop.permute.xlu0 %5040
        %v5043 = vmul.f32 %v4989, %v5001
        %v5044 = vmul.f32 %v4990, %v5006
        %v5045 = vmul.f32 %v4991, %v5011
        %v5046 = vmul.f32 %v4992, %v5016
        %v5047 = vmul.f32 %v4993, %v5021
        %v5048 = vmul.f32 %v4994, %v5026
        %v5049 = vmul.f32 %v4995, %v5031
        %v5050 = vmul.f32 %v4996, %v5036
        %v5051 = vmul.f32 %v4997, %v5041
        %s5052 = scalar_lea.vmem [#allocation4], %s2133
        %5053 = vst.msk [vmem:[%s5052] sm:$0xff] %vm414, %v5043
        %5054 = vst.msk [vmem:[%s5052 + $0x8] sm:$0xff] %vm414, %v5044
        %5055 = vst.msk [vmem:[%s5052 + $0x10] sm:$0xff] %vm414, %v5045
        %5056 = vst.msk [vmem:[%s5052 + $0x18] sm:$0xff] %vm414, %v5046
        %5057 = vst.msk [vmem:[%s5052 + $0x20] sm:$0xff] %vm414, %v5047
        %5058 = vst.msk [vmem:[%s5052 + $0x28] sm:$0xff] %vm414, %v5048
        %5059 = vst.msk [vmem:[%s5052 + $0x30] sm:$0xff] %vm414, %v5049
        %5060 = vst.msk [vmem:[%s5052 + $0x38] sm:$0xff] %vm414, %v5050
        %5061 = vst.msk [vmem:[%s5052 + $0x40] sm:$0xff] %vm414, %v5051
      $region80: #{tpu_custom_call.1} parent=67 // loop_footer
        %s2129 = sadd.s32 1, %s2125
      $region81: #{tpu_custom_call.1} parent=67 // loop_footer_branch
        %2124 = sbr.rel target = $region77
      $region82: #{tpu_custom_call.1} parent=67 // loop_exit
        _
      loop: start=0, step=1, limit=4
      $region83: #{tpu_custom_call.1} parent=67 // loop_pre_header
        _
      $region84: #{tpu_custom_call.1} parent=67 // loop_header
        %s5063 = sphi 0, %s5067
        %p5064 = scmp.ge.s32.totalorder %s5063, 4
      $region85: #{tpu_custom_call.1} parent=67 // loop_header_branch
        %5066 = sbr.rel (%p5064) target = $region89
      $region86: #{tpu_custom_call.1} parent=67 // loop_body
        %s5068 = smul.u32 %s5063, 4
        %s5069 = sadd.s32 %s5068, 1
        %s5070 = smul.u32 %s5069, 18
        %s5071 = sadd.s32 %s5070, 8
        %s5072 = sadd.s32 %s5070, 4294967285
        %s5073 = scalar_lea.vmem [#allocation4], %s5072
        %v5074 = vld [vmem:[%s5073] sm:$0xff]
        %v5075 = vld [vmem:[%s5073 + $0x8] sm:$0xff]
        %v5076 = vld [vmem:[%s5073 + $0x10] sm:$0xff]
        %v5077 = vld [vmem:[%s5073 + $0x18] sm:$0xff]
        %v5078 = vld [vmem:[%s5073 + $0x20] sm:$0xff]
        %v5079 = vld [vmem:[%s5073 + $0x28] sm:$0xff]
        %v5080 = vld [vmem:[%s5073 + $0x30] sm:$0xff]
        %v5081 = vld [vmem:[%s5073 + $0x38] sm:$0xff]
        %v5082 = vld [vmem:[%s5073 + $0x40] sm:$0xff]
        %v5083 = vmax.f32 %v5074, 0.0
        %v5084 = vmax.f32 %v5075, 0.0
        %v5085 = vmax.f32 %v5076, 0.0
        %v5086 = vmax.f32 %v5077, 0.0
        %v5087 = vmax.f32 %v5078, 0.0
        %v5088 = vmax.f32 %v5079, 0.0
        %v5089 = vmax.f32 %v5080, 0.0
        %v5090 = vmax.f32 %v5081, 0.0
        %v5091 = vmax.f32 %v5082, 0.0
        %v5092 = vld [vmem:[%s8] sm:$0xff]
        %v5093 = vld [vmem:[%s8 + $0x8] sm:$0xff]
        %s5094 = sadd.s32 %s5070, 4294967286
        %s5095 = scalar_lea.vmem [#allocation4], %s5094
        %v5096 = vld [vmem:[%s5095] sm:$0xff]
        %v5097 = vld [vmem:[%s5095 + $0x8] sm:$0xff]
        %v5098 = vld [vmem:[%s5095 + $0x10] sm:$0xff]
        %v5099 = vld [vmem:[%s5095 + $0x18] sm:$0xff]
        %v5100 = vld [vmem:[%s5095 + $0x20] sm:$0xff]
        %v5101 = vld [vmem:[%s5095 + $0x28] sm:$0xff]
        %v5102 = vld [vmem:[%s5095 + $0x30] sm:$0xff]
        %v5103 = vld [vmem:[%s5095 + $0x38] sm:$0xff]
        %v5104 = vld [vmem:[%s5095 + $0x40] sm:$0xff]
        %v5105 = vmax.f32 %v5096, 0.0
        %v5106 = vmax.f32 %v5097, 0.0
        %v5107 = vmax.f32 %v5098, 0.0
        %v5108 = vmax.f32 %v5099, 0.0
        %v5109 = vmax.f32 %v5100, 0.0
        %v5110 = vmax.f32 %v5101, 0.0
        %v5111 = vmax.f32 %v5102, 0.0
        %v5112 = vmax.f32 %v5103, 0.0
        %v5113 = vmax.f32 %v5104, 0.0
        %s5114 = scalar_lea.vmem %s8, 16
        %v5115 = vld [vmem:[%s5114] sm:$0xff]
        %v5116 = vld [vmem:[%s5114 + $0x8] sm:$0xff]
        %v5118 = vsel %vm414, %v5105, 0
        %v5121 = vsel %vm414, %v5106, 0
        %v5124 = vsel %vm414, %v5107, 0
        %v5127 = vsel %vm414, %v5108, 0
        %v5130 = vsel %vm414, %v5109, 0
        %v5133 = vsel %vm414, %v5110, 0
        %v5136 = vsel %vm414, %v5111, 0
        %v5139 = vsel %vm414, %v5112, 0
        %v5142 = vsel %vm414, %v5113, 0
        %5144 = vmatprep.subr.mxu0 0.0
        %5145 = vmatpush1.msra.mxu0 %v5115
        %5146 = vmatprep.subr.mxu0 0.0
        %5147 = vmatpush1.msra.mxu0 %v5116
        %5148 = vmatprep.subr.mxu0 0.0
        %5149 = vmatpush1.msra.mxu0 0.0
        %5150 = vmatprep.subr.mxu0 0.0
        %5151 = vmatpush1.msra.mxu0 0.0
        %5152 = vmatprep.subr.mxu0 0.0
        %5153 = vmatpush1.msra.mxu0 0.0
        %5154 = vmatprep.subr.mxu0 0.0
        %5155 = vmatpush1.msra.mxu0 0.0
        %5156 = vmatprep.subr.mxu0 0.0
        %5157 = vmatpush1.msra.mxu0 0.0
        %5158 = vmatprep.subr.mxu0 0.0
        %5159 = vmatpush1.msra.mxu0 0.0
        %5160 = vmatprep.subr.mxu0 0.0
        %5161 = vmatpush1.msra.mxu0 0.0
        %5162 = vmatprep.subr.mxu0 0.0
        %5163 = vmatpush1.msra.mxu0 0.0
        %5164 = vmatprep.subr.mxu0 0.0
        %5165 = vmatpush1.msra.mxu0 0.0
        %5166 = vmatprep.subr.mxu0 0.0
        %5167 = vmatpush1.msra.mxu0 0.0
        %5168 = vmatprep.subr.mxu0 0.0
        %5169 = vmatpush1.msra.mxu0 0.0
        %5170 = vmatprep.subr.mxu0 0.0
        %5171 = vmatpush1.msra.mxu0 0.0
        %5172 = vmatprep.subr.mxu0 0.0
        %5173 = vmatpush1.msra.mxu0 0.0
        %5174 = vmatprep.subr.mxu0 0.0
        %5175 = vmatpush1.msra.mxu0 0.0
        %5176 = vmatprep.subr.mxu0 0.0
        %5177 = vmatpush1.msra.mxu0 0.0
        %5178 = vmatprep.subr.mxu0 0.0
        %5179 = vmatpush1.msra.mxu0 0.0
        %5180 = vmatprep.subr.mxu0 0.0
        %5181 = vmatpush1.msra.mxu0 0.0
        %5182 = vmatprep.subr.mxu0 0.0
        %5183 = vmatpush1.msra.mxu0 0.0
        %5184 = vmatprep.subr.mxu0 0.0
        %5185 = vmatpush1.msra.mxu0 0.0
        %5186 = vmatprep.subr.mxu0 0.0
        %5187 = vmatpush1.msra.mxu0 0.0
        %5188 = vmatprep.subr.mxu0 0.0
        %5189 = vmatpush1.msra.mxu0 0.0
        %5190 = vmatprep.subr.mxu0 0.0
        %5191 = vmatpush1.msra.mxu0 0.0
        %5192 = vmatprep.subr.mxu0 0.0
        %5193 = vmatpush1.msra.mxu0 0.0
        %5194 = vmatprep.subr.mxu0 0.0
        %5195 = vmatpush1.msra.mxu0 0.0
        %5196 = vmatprep.subr.mxu0 0.0
        %5197 = vmatpush1.msra.mxu0 0.0
        %5198 = vmatprep.subr.mxu0 0.0
        %5199 = vmatpush1.msra.mxu0 0.0
        %5200 = vmatprep.subr.mxu0 0.0
        %5201 = vmatpush1.msra.mxu0 0.0
        %5202 = vmatprep.subr.mxu0 0.0
        %5203 = vmatpush1.msra.mxu0 0.0
        %5204 = vmatprep.subr.mxu0 0.0
        %5205 = vmatpush1.msra.mxu0 0.0
        %5206 = vmatprep.subr.mxu0 0.0
        %5207 = vmatpush1.msra.mxu0 0.0
        %5208 = vmatprep.mubr.f32.mxu0 0.0
        %5209 = vmatmul.mubr.f32.gmra.mrb[0].mxu0 %v5118
        %v5210 = vpop.f32.mrb[0].mxu0
        %v5211 = vadd.f32 0.0, %v5210
        %v5212 = vpop.f32.mrb[0].mxu0
        %5213 = vmatprep.mubr.f32.mxu0 0.0
        %5214 = vmatmul.mubr.f32.gmra.mrb[0].mxu0 %v5121
        %v5215 = vpop.f32.mrb[0].mxu0
        %v5216 = vadd.f32 0.0, %v5215
        %v5217 = vpop.f32.mrb[0].mxu0
        %5218 = vmatprep.mubr.f32.mxu0 0.0
        %5219 = vmatmul.mubr.f32.gmra.mrb[0].mxu0 %v5124
        %v5220 = vpop.f32.mrb[0].mxu0
        %v5221 = vadd.f32 0.0, %v5220
        %v5222 = vpop.f32.mrb[0].mxu0
        %5223 = vmatprep.mubr.f32.mxu0 0.0
        %5224 = vmatmul.mubr.f32.gmra.mrb[0].mxu0 %v5127
        %v5225 = vpop.f32.mrb[0].mxu0
        %v5226 = vadd.f32 0.0, %v5225
        %v5227 = vpop.f32.mrb[0].mxu0
        %5228 = vmatprep.mubr.f32.mxu0 0.0
        %5229 = vmatmul.mubr.f32.gmra.mrb[0].mxu0 %v5130
        %v5230 = vpop.f32.mrb[0].mxu0
        %v5231 = vadd.f32 0.0, %v5230
        %v5232 = vpop.f32.mrb[0].mxu0
        %5233 = vmatprep.mubr.f32.mxu0 0.0
        %5234 = vmatmul.mubr.f32.gmra.mrb[0].mxu0 %v5133
        %v5235 = vpop.f32.mrb[0].mxu0
        %v5236 = vadd.f32 0.0, %v5235
        %v5237 = vpop.f32.mrb[0].mxu0
        %5238 = vmatprep.mubr.f32.mxu0 0.0
        %5239 = vmatmul.mubr.f32.gmra.mrb[0].mxu0 %v5136
        %v5240 = vpop.f32.mrb[0].mxu0
        %v5241 = vadd.f32 0.0, %v5240
        %v5242 = vpop.f32.mrb[0].mxu0
        %5243 = vmatprep.mubr.f32.mxu0 0.0
        %5244 = vmatmul.mubr.f32.gmra.mrb[0].mxu0 %v5139
        %v5245 = vpop.f32.mrb[0].mxu0
        %v5246 = vadd.f32 0.0, %v5245
        %v5247 = vpop.f32.mrb[0].mxu0
        %5248 = vmatprep.mubr.f32.mxu0 0.0
        %5249 = vmatmul.mubr.f32.gmra.mrb[0].mxu0 %v5142
        %v5250 = vpop.f32.mrb[0].mxu0
        %v5251 = vadd.f32 0.0, %v5250
        %v5252 = vpop.f32.mrb[0].mxu0
        %5253 = vdwg.mxu0
        %v5255 = vsel %vm414, %v5083, 0
        %v5258 = vsel %vm414, %v5084, 0
        %v5261 = vsel %vm414, %v5085, 0
        %v5264 = vsel %vm414, %v5086, 0
        %v5267 = vsel %vm414, %v5087, 0
        %v5270 = vsel %vm414, %v5088, 0
        %v5273 = vsel %vm414, %v5089, 0
        %v5276 = vsel %vm414, %v5090, 0
        %v5279 = vsel %vm414, %v5091, 0
        %5281 = vmatprep.subr.mxu0 0.0
        %5282 = vmatpush1.msra.mxu0 %v5092
        %5283 = vmatprep.subr.mxu0 0.0
        %5284 = vmatpush1.msra.mxu0 %v5093
        %5285 = vmatprep.subr.mxu0 0.0
        %5286 = vmatpush1.msra.mxu0 0.0
        %5287 = vmatprep.subr.mxu0 0.0
        %5288 = vmatpush1.msra.mxu0 0.0
        %5289 = vmatprep.subr.mxu0 0.0
        %5290 = vmatpush1.msra.mxu0 0.0
        %5291 = vmatprep.subr.mxu0 0.0
        %5292 = vmatpush1.msra.mxu0 0.0
        %5293 = vmatprep.subr.mxu0 0.0
        %5294 = vmatpush1.msra.mxu0 0.0
        %5295 = vmatprep.subr.mxu0 0.0
        %5296 = vmatpush1.msra.mxu0 0.0
        %5297 = vmatprep.subr.mxu0 0.0
        %5298 = vmatpush1.msra.mxu0 0.0
        %5299 = vmatprep.subr.mxu0 0.0
        %5300 = vmatpush1.msra.mxu0 0.0
        %5301 = vmatprep.subr.mxu0 0.0
        %5302 = vmatpush1.msra.mxu0 0.0
        %5303 = vmatprep.subr.mxu0 0.0
        %5304 = vmatpush1.msra.mxu0 0.0
        %5305 = vmatprep.subr.mxu0 0.0
        %5306 = vmatpush1.msra.mxu0 0.0
        %5307 = vmatprep.subr.mxu0 0.0
        %5308 = vmatpush1.msra.mxu0 0.0
        %5309 = vmatprep.subr.mxu0 0.0
        %5310 = vmatpush1.msra.mxu0 0.0
        %5311 = vmatprep.subr.mxu0 0.0
        %5312 = vmatpush1.msra.mxu0 0.0
        %5313 = vmatprep.subr.mxu0 0.0
        %5314 = vmatpush1.msra.mxu0 0.0
        %5315 = vmatprep.subr.mxu0 0.0
        %5316 = vmatpush1.msra.mxu0 0.0
        %5317 = vmatprep.subr.mxu0 0.0
        %5318 = vmatpush1.msra.mxu0 0.0
        %5319 = vmatprep.subr.mxu0 0.0
        %5320 = vmatpush1.msra.mxu0 0.0
        %5321 = vmatprep.subr.mxu0 0.0
        %5322 = vmatpush1.msra.mxu0 0.0
        %5323 = vmatprep.subr.mxu0 0.0
        %5324 = vmatpush1.msra.mxu0 0.0
        %5325 = vmatprep.subr.mxu0 0.0
        %5326 = vmatpush1.msra.mxu0 0.0
        %5327 = vmatprep.subr.mxu0 0.0
        %5328 = vmatpush1.msra.mxu0 0.0
        %5329 = vmatprep.subr.mxu0 0.0
        %5330 = vmatpush1.msra.mxu0 0.0
        %5331 = vmatprep.subr.mxu0 0.0
        %5332 = vmatpush1.msra.mxu0 0.0
        %5333 = vmatprep.subr.mxu0 0.0
        %5334 = vmatpush1.msra.mxu0 0.0
        %5335 = vmatprep.subr.mxu0 0.0
        %5336 = vmatpush1.msra.mxu0 0.0
        %5337 = vmatprep.subr.mxu0 0.0
        %5338 = vmatpush1.msra.mxu0 0.0
        %5339 = vmatprep.subr.mxu0 0.0
        %5340 = vmatpush1.msra.mxu0 0.0
        %5341 = vmatprep.subr.mxu0 0.0
        %5342 = vmatpush1.msra.mxu0 0.0
        %5343 = vmatprep.subr.mxu0 0.0
        %5344 = vmatpush1.msra.mxu0 0.0
        %5345 = vmatprep.mubr.f32.mxu0 0.0
        %5346 = vmatmul.mubr.f32.gmra.mrb[0].mxu0 %v5255
        %v5347 = vpop.f32.mrb[0].mxu0
        %v5348 = vadd.f32 %v5211, %v5347
        %v5349 = vpop.f32.mrb[0].mxu0
        %5350 = vmatprep.mubr.f32.mxu0 0.0
        %5351 = vmatmul.mubr.f32.gmra.mrb[0].mxu0 %v5258
        %v5352 = vpop.f32.mrb[0].mxu0
        %v5353 = vadd.f32 %v5216, %v5352
        %v5354 = vpop.f32.mrb[0].mxu0
        %5355 = vmatprep.mubr.f32.mxu0 0.0
        %5356 = vmatmul.mubr.f32.gmra.mrb[0].mxu0 %v5261
        %v5357 = vpop.f32.mrb[0].mxu0
        %v5358 = vadd.f32 %v5221, %v5357
        %v5359 = vpop.f32.mrb[0].mxu0
        %5360 = vmatprep.mubr.f32.mxu0 0.0
        %5361 = vmatmul.mubr.f32.gmra.mrb[0].mxu0 %v5264
        %v5362 = vpop.f32.mrb[0].mxu0
        %v5363 = vadd.f32 %v5226, %v5362
        %v5364 = vpop.f32.mrb[0].mxu0
        %5365 = vmatprep.mubr.f32.mxu0 0.0
        %5366 = vmatmul.mubr.f32.gmra.mrb[0].mxu0 %v5267
        %v5367 = vpop.f32.mrb[0].mxu0
        %v5368 = vadd.f32 %v5231, %v5367
        %v5369 = vpop.f32.mrb[0].mxu0
        %5370 = vmatprep.mubr.f32.mxu0 0.0
        %5371 = vmatmul.mubr.f32.gmra.mrb[0].mxu0 %v5270
        %v5372 = vpop.f32.mrb[0].mxu0
        %v5373 = vadd.f32 %v5236, %v5372
        %v5374 = vpop.f32.mrb[0].mxu0
        %5375 = vmatprep.mubr.f32.mxu0 0.0
        %5376 = vmatmul.mubr.f32.gmra.mrb[0].mxu0 %v5273
        %v5377 = vpop.f32.mrb[0].mxu0
        %v5378 = vadd.f32 %v5241, %v5377
        %v5379 = vpop.f32.mrb[0].mxu0
        %5380 = vmatprep.mubr.f32.mxu0 0.0
        %5381 = vmatmul.mubr.f32.gmra.mrb[0].mxu0 %v5276
        %v5382 = vpop.f32.mrb[0].mxu0
        %v5383 = vadd.f32 %v5246, %v5382
        %v5384 = vpop.f32.mrb[0].mxu0
        %5385 = vmatprep.mubr.f32.mxu0 0.0
        %5386 = vmatmul.mubr.f32.gmra.mrb[0].mxu0 %v5279
        %v5387 = vpop.f32.mrb[0].mxu0
        %v5388 = vadd.f32 %v5251, %v5387
        %v5389 = vpop.f32.mrb[0].mxu0
        %5390 = vdwg.mxu0
        %s5391 = sadd.s32 %s5070, 4294967287
        %s5392 = scalar_lea.vmem [#allocation4], %s5391
        %v5393 = vld [vmem:[%s5392] sm:$0xff]
        %v5394 = vld [vmem:[%s5392 + $0x8] sm:$0xff]
        %v5395 = vld [vmem:[%s5392 + $0x10] sm:$0xff]
        %v5396 = vld [vmem:[%s5392 + $0x18] sm:$0xff]
        %v5397 = vld [vmem:[%s5392 + $0x20] sm:$0xff]
        %v5398 = vld [vmem:[%s5392 + $0x28] sm:$0xff]
        %v5399 = vld [vmem:[%s5392 + $0x30] sm:$0xff]
        %v5400 = vld [vmem:[%s5392 + $0x38] sm:$0xff]
        %v5401 = vld [vmem:[%s5392 + $0x40] sm:$0xff]
        %v5402 = vmax.f32 %v5393, 0.0
        %v5403 = vmax.f32 %v5394, 0.0
        %v5404 = vmax.f32 %v5395, 0.0
        %v5405 = vmax.f32 %v5396, 0.0
        %v5406 = vmax.f32 %v5397, 0.0
        %v5407 = vmax.f32 %v5398, 0.0
        %v5408 = vmax.f32 %v5399, 0.0
        %v5409 = vmax.f32 %v5400, 0.0
        %v5410 = vmax.f32 %v5401, 0.0
        %s5411 = scalar_lea.vmem %s8, 32
        %v5412 = vld [vmem:[%s5411] sm:$0xff]
        %v5413 = vld [vmem:[%s5411 + $0x8] sm:$0xff]
        %v5415 = vsel %vm414, %v5402, 0
        %v5418 = vsel %vm414, %v5403, 0
        %v5421 = vsel %vm414, %v5404, 0
        %v5424 = vsel %vm414, %v5405, 0
        %v5427 = vsel %vm414, %v5406, 0
        %v5430 = vsel %vm414, %v5407, 0
        %v5433 = vsel %vm414, %v5408, 0
        %v5436 = vsel %vm414, %v5409, 0
        %v5439 = vsel %vm414, %v5410, 0
        %5441 = vmatprep.subr.mxu0 0.0
        %5442 = vmatpush1.msra.mxu0 %v5412
        %5443 = vmatprep.subr.mxu0 0.0
        %5444 = vmatpush1.msra.mxu0 %v5413
        %5445 = vmatprep.subr.mxu0 0.0
        %5446 = vmatpush1.msra.mxu0 0.0
        %5447 = vmatprep.subr.mxu0 0.0
        %5448 = vmatpush1.msra.mxu0 0.0
        %5449 = vmatprep.subr.mxu0 0.0
        %5450 = vmatpush1.msra.mxu0 0.0
        %5451 = vmatprep.subr.mxu0 0.0
        %5452 = vmatpush1.msra.mxu0 0.0
        %5453 = vmatprep.subr.mxu0 0.0
        %5454 = vmatpush1.msra.mxu0 0.0
        %5455 = vmatprep.subr.mxu0 0.0
        %5456 = vmatpush1.msra.mxu0 0.0
        %5457 = vmatprep.subr.mxu0 0.0
        %5458 = vmatpush1.msra.mxu0 0.0
        %5459 = vmatprep.subr.mxu0 0.0
        %5460 = vmatpush1.msra.mxu0 0.0
        %5461 = vmatprep.subr.mxu0 0.0
        %5462 = vmatpush1.msra.mxu0 0.0
        %5463 = vmatprep.subr.mxu0 0.0
        %5464 = vmatpush1.msra.mxu0 0.0
        %5465 = vmatprep.subr.mxu0 0.0
        %5466 = vmatpush1.msra.mxu0 0.0
        %5467 = vmatprep.subr.mxu0 0.0
        %5468 = vmatpush1.msra.mxu0 0.0
        %5469 = vmatprep.subr.mxu0 0.0
        %5470 = vmatpush1.msra.mxu0 0.0
        %5471 = vmatprep.subr.mxu0 0.0
        %5472 = vmatpush1.msra.mxu0 0.0
        %5473 = vmatprep.subr.mxu0 0.0
        %5474 = vmatpush1.msra.mxu0 0.0
        %5475 = vmatprep.subr.mxu0 0.0
        %5476 = vmatpush1.msra.mxu0 0.0
        %5477 = vmatprep.subr.mxu0 0.0
        %5478 = vmatpush1.msra.mxu0 0.0
        %5479 = vmatprep.subr.mxu0 0.0
        %5480 = vmatpush1.msra.mxu0 0.0
        %5481 = vmatprep.subr.mxu0 0.0
        %5482 = vmatpush1.msra.mxu0 0.0
        %5483 = vmatprep.subr.mxu0 0.0
        %5484 = vmatpush1.msra.mxu0 0.0
        %5485 = vmatprep.subr.mxu0 0.0
        %5486 = vmatpush1.msra.mxu0 0.0
        %5487 = vmatprep.subr.mxu0 0.0
        %5488 = vmatpush1.msra.mxu0 0.0
        %5489 = vmatprep.subr.mxu0 0.0
        %5490 = vmatpush1.msra.mxu0 0.0
        %5491 = vmatprep.subr.mxu0 0.0
        %5492 = vmatpush1.msra.mxu0 0.0
        %5493 = vmatprep.subr.mxu0 0.0
        %5494 = vmatpush1.msra.mxu0 0.0
        %5495 = vmatprep.subr.mxu0 0.0
        %5496 = vmatpush1.msra.mxu0 0.0
        %5497 = vmatprep.subr.mxu0 0.0
        %5498 = vmatpush1.msra.mxu0 0.0
        %5499 = vmatprep.subr.mxu0 0.0
        %5500 = vmatpush1.msra.mxu0 0.0
        %5501 = vmatprep.subr.mxu0 0.0
        %5502 = vmatpush1.msra.mxu0 0.0
        %5503 = vmatprep.subr.mxu0 0.0
        %5504 = vmatpush1.msra.mxu0 0.0
        %5505 = vmatprep.mubr.f32.mxu0 0.0
        %5506 = vmatmul.mubr.f32.gmra.mrb[0].mxu0 %v5415
        %v5507 = vpop.f32.mrb[0].mxu0
        %v5508 = vadd.f32 0.0, %v5507
        %v5509 = vpop.f32.mrb[0].mxu0
        %5510 = vmatprep.mubr.f32.mxu0 0.0
        %5511 = vmatmul.mubr.f32.gmra.mrb[0].mxu0 %v5418
        %v5512 = vpop.f32.mrb[0].mxu0
        %v5513 = vadd.f32 0.0, %v5512
        %v5514 = vpop.f32.mrb[0].mxu0
        %5515 = vmatprep.mubr.f32.mxu0 0.0
        %5516 = vmatmul.mubr.f32.gmra.mrb[0].mxu0 %v5421
        %v5517 = vpop.f32.mrb[0].mxu0
        %v5518 = vadd.f32 0.0, %v5517
        %v5519 = vpop.f32.mrb[0].mxu0
        %5520 = vmatprep.mubr.f32.mxu0 0.0
        %5521 = vmatmul.mubr.f32.gmra.mrb[0].mxu0 %v5424
        %v5522 = vpop.f32.mrb[0].mxu0
        %v5523 = vadd.f32 0.0, %v5522
        %v5524 = vpop.f32.mrb[0].mxu0
        %5525 = vmatprep.mubr.f32.mxu0 0.0
        %5526 = vmatmul.mubr.f32.gmra.mrb[0].mxu0 %v5427
        %v5527 = vpop.f32.mrb[0].mxu0
        %v5528 = vadd.f32 0.0, %v5527
        %v5529 = vpop.f32.mrb[0].mxu0
        %5530 = vmatprep.mubr.f32.mxu0 0.0
        %5531 = vmatmul.mubr.f32.gmra.mrb[0].mxu0 %v5430
        %v5532 = vpop.f32.mrb[0].mxu0
        %v5533 = vadd.f32 0.0, %v5532
        %v5534 = vpop.f32.mrb[0].mxu0
        %5535 = vmatprep.mubr.f32.mxu0 0.0
        %5536 = vmatmul.mubr.f32.gmra.mrb[0].mxu0 %v5433
        %v5537 = vpop.f32.mrb[0].mxu0
        %v5538 = vadd.f32 0.0, %v5537
        %v5539 = vpop.f32.mrb[0].mxu0
        %5540 = vmatprep.mubr.f32.mxu0 0.0
        %5541 = vmatmul.mubr.f32.gmra.mrb[0].mxu0 %v5436
        %v5542 = vpop.f32.mrb[0].mxu0
        %v5543 = vadd.f32 0.0, %v5542
        %v5544 = vpop.f32.mrb[0].mxu0
        %5545 = vmatprep.mubr.f32.mxu0 0.0
        %5546 = vmatmul.mubr.f32.gmra.mrb[0].mxu0 %v5439
        %v5547 = vpop.f32.mrb[0].mxu0
        %v5548 = vadd.f32 0.0, %v5547
        %v5549 = vpop.f32.mrb[0].mxu0
        %5550 = vdwg.mxu0
        %v5551 = vadd.f32 %v5348, %v5508
        %v5552 = vadd.f32 %v5353, %v5513
        %v5553 = vadd.f32 %v5358, %v5518
        %v5554 = vadd.f32 %v5363, %v5523
        %v5555 = vadd.f32 %v5368, %v5528
        %v5556 = vadd.f32 %v5373, %v5533
        %v5557 = vadd.f32 %v5378, %v5538
        %v5558 = vadd.f32 %v5383, %v5543
        %v5559 = vadd.f32 %v5388, %v5548
        %s5560 = sadd.s32 %s5070, 7
        %s5561 = scalar_lea.vmem [#allocation4], %s5560
        %v5562 = vld [vmem:[%s5561] sm:$0xff]
        %v5563 = vld [vmem:[%s5561 + $0x8] sm:$0xff]
        %v5564 = vld [vmem:[%s5561 + $0x10] sm:$0xff]
        %v5565 = vld [vmem:[%s5561 + $0x18] sm:$0xff]
        %v5566 = vld [vmem:[%s5561 + $0x20] sm:$0xff]
        %v5567 = vld [vmem:[%s5561 + $0x28] sm:$0xff]
        %v5568 = vld [vmem:[%s5561 + $0x30] sm:$0xff]
        %v5569 = vld [vmem:[%s5561 + $0x38] sm:$0xff]
        %v5570 = vld [vmem:[%s5561 + $0x40] sm:$0xff]
        %v5571 = vmax.f32 %v5562, 0.0
        %v5572 = vmax.f32 %v5563, 0.0
        %v5573 = vmax.f32 %v5564, 0.0
        %v5574 = vmax.f32 %v5565, 0.0
        %v5575 = vmax.f32 %v5566, 0.0
        %v5576 = vmax.f32 %v5567, 0.0
        %v5577 = vmax.f32 %v5568, 0.0
        %v5578 = vmax.f32 %v5569, 0.0
        %v5579 = vmax.f32 %v5570, 0.0
        %s5580 = scalar_lea.vmem %s8, 48
        %v5581 = vld [vmem:[%s5580] sm:$0xff]
        %v5582 = vld [vmem:[%s5580 + $0x8] sm:$0xff]
        %v5584 = vsel %vm414, %v5571, 0
        %v5587 = vsel %vm414, %v5572, 0
        %v5590 = vsel %vm414, %v5573, 0
        %v5593 = vsel %vm414, %v5574, 0
        %v5596 = vsel %vm414, %v5575, 0
        %v5599 = vsel %vm414, %v5576, 0
        %v5602 = vsel %vm414, %v5577, 0
        %v5605 = vsel %vm414, %v5578, 0
        %v5608 = vsel %vm414, %v5579, 0
        %5610 = vmatprep.subr.mxu0 0.0
        %5611 = vmatpush1.msra.mxu0 %v5581
        %5612 = vmatprep.subr.mxu0 0.0
        %5613 = vmatpush1.msra.mxu0 %v5582
        %5614 = vmatprep.subr.mxu0 0.0
        %5615 = vmatpush1.msra.mxu0 0.0
        %5616 = vmatprep.subr.mxu0 0.0
        %5617 = vmatpush1.msra.mxu0 0.0
        %5618 = vmatprep.subr.mxu0 0.0
        %5619 = vmatpush1.msra.mxu0 0.0
        %5620 = vmatprep.subr.mxu0 0.0
        %5621 = vmatpush1.msra.mxu0 0.0
        %5622 = vmatprep.subr.mxu0 0.0
        %5623 = vmatpush1.msra.mxu0 0.0
        %5624 = vmatprep.subr.mxu0 0.0
        %5625 = vmatpush1.msra.mxu0 0.0
        %5626 = vmatprep.subr.mxu0 0.0
        %5627 = vmatpush1.msra.mxu0 0.0
        %5628 = vmatprep.subr.mxu0 0.0
        %5629 = vmatpush1.msra.mxu0 0.0
        %5630 = vmatprep.subr.mxu0 0.0
        %5631 = vmatpush1.msra.mxu0 0.0
        %5632 = vmatprep.subr.mxu0 0.0
        %5633 = vmatpush1.msra.mxu0 0.0
        %5634 = vmatprep.subr.mxu0 0.0
        %5635 = vmatpush1.msra.mxu0 0.0
        %5636 = vmatprep.subr.mxu0 0.0
        %5637 = vmatpush1.msra.mxu0 0.0
        %5638 = vmatprep.subr.mxu0 0.0
        %5639 = vmatpush1.msra.mxu0 0.0
        %5640 = vmatprep.subr.mxu0 0.0
        %5641 = vmatpush1.msra.mxu0 0.0
        %5642 = vmatprep.subr.mxu0 0.0
        %5643 = vmatpush1.msra.mxu0 0.0
        %5644 = vmatprep.subr.mxu0 0.0
        %5645 = vmatpush1.msra.mxu0 0.0
        %5646 = vmatprep.subr.mxu0 0.0
        %5647 = vmatpush1.msra.mxu0 0.0
        %5648 = vmatprep.subr.mxu0 0.0
        %5649 = vmatpush1.msra.mxu0 0.0
        %5650 = vmatprep.subr.mxu0 0.0
        %5651 = vmatpush1.msra.mxu0 0.0
        %5652 = vmatprep.subr.mxu0 0.0
        %5653 = vmatpush1.msra.mxu0 0.0
        %5654 = vmatprep.subr.mxu0 0.0
        %5655 = vmatpush1.msra.mxu0 0.0
        %5656 = vmatprep.subr.mxu0 0.0
        %5657 = vmatpush1.msra.mxu0 0.0
        %5658 = vmatprep.subr.mxu0 0.0
        %5659 = vmatpush1.msra.mxu0 0.0
        %5660 = vmatprep.subr.mxu0 0.0
        %5661 = vmatpush1.msra.mxu0 0.0
        %5662 = vmatprep.subr.mxu0 0.0
        %5663 = vmatpush1.msra.mxu0 0.0
        %5664 = vmatprep.subr.mxu0 0.0
        %5665 = vmatpush1.msra.mxu0 0.0
        %5666 = vmatprep.subr.mxu0 0.0
        %5667 = vmatpush1.msra.mxu0 0.0
        %5668 = vmatprep.subr.mxu0 0.0
        %5669 = vmatpush1.msra.mxu0 0.0
        %5670 = vmatprep.subr.mxu0 0.0
        %5671 = vmatpush1.msra.mxu0 0.0
        %5672 = vmatprep.subr.mxu0 0.0
        %5673 = vmatpush1.msra.mxu0 0.0
        %5674 = vmatprep.mubr.f32.mxu0 0.0
        %5675 = vmatmul.mubr.f32.gmra.mrb[0].mxu0 %v5584
        %v5676 = vpop.f32.mrb[0].mxu0
        %v5677 = vadd.f32 0.0, %v5676
        %v5678 = vpop.f32.mrb[0].mxu0
        %5679 = vmatprep.mubr.f32.mxu0 0.0
        %5680 = vmatmul.mubr.f32.gmra.mrb[0].mxu0 %v5587
        %v5681 = vpop.f32.mrb[0].mxu0
        %v5682 = vadd.f32 0.0, %v5681
        %v5683 = vpop.f32.mrb[0].mxu0
        %5684 = vmatprep.mubr.f32.mxu0 0.0
        %5685 = vmatmul.mubr.f32.gmra.mrb[0].mxu0 %v5590
        %v5686 = vpop.f32.mrb[0].mxu0
        %v5687 = vadd.f32 0.0, %v5686
        %v5688 = vpop.f32.mrb[0].mxu0
        %5689 = vmatprep.mubr.f32.mxu0 0.0
        %5690 = vmatmul.mubr.f32.gmra.mrb[0].mxu0 %v5593
        %v5691 = vpop.f32.mrb[0].mxu0
        %v5692 = vadd.f32 0.0, %v5691
        %v5693 = vpop.f32.mrb[0].mxu0
        %5694 = vmatprep.mubr.f32.mxu0 0.0
        %5695 = vmatmul.mubr.f32.gmra.mrb[0].mxu0 %v5596
        %v5696 = vpop.f32.mrb[0].mxu0
        %v5697 = vadd.f32 0.0, %v5696
        %v5698 = vpop.f32.mrb[0].mxu0
        %5699 = vmatprep.mubr.f32.mxu0 0.0
        %5700 = vmatmul.mubr.f32.gmra.mrb[0].mxu0 %v5599
        %v5701 = vpop.f32.mrb[0].mxu0
        %v5702 = vadd.f32 0.0, %v5701
        %v5703 = vpop.f32.mrb[0].mxu0
        %5704 = vmatprep.mubr.f32.mxu0 0.0
        %5705 = vmatmul.mubr.f32.gmra.mrb[0].mxu0 %v5602
        %v5706 = vpop.f32.mrb[0].mxu0
        %v5707 = vadd.f32 0.0, %v5706
        %v5708 = vpop.f32.mrb[0].mxu0
        %5709 = vmatprep.mubr.f32.mxu0 0.0
        %5710 = vmatmul.mubr.f32.gmra.mrb[0].mxu0 %v5605
        %v5711 = vpop.f32.mrb[0].mxu0
        %v5712 = vadd.f32 0.0, %v5711
        %v5713 = vpop.f32.mrb[0].mxu0
        %5714 = vmatprep.mubr.f32.mxu0 0.0
        %5715 = vmatmul.mubr.f32.gmra.mrb[0].mxu0 %v5608
        %v5716 = vpop.f32.mrb[0].mxu0
        %v5717 = vadd.f32 0.0, %v5716
        %v5718 = vpop.f32.mrb[0].mxu0
        %5719 = vdwg.mxu0
        %v5720 = vadd.f32 %v5551, %v5677
        %v5721 = vadd.f32 %v5552, %v5682
        %v5722 = vadd.f32 %v5553, %v5687
        %v5723 = vadd.f32 %v5554, %v5692
        %v5724 = vadd.f32 %v5555, %v5697
        %v5725 = vadd.f32 %v5556, %v5702
        %v5726 = vadd.f32 %v5557, %v5707
        %v5727 = vadd.f32 %v5558, %v5712
        %v5728 = vadd.f32 %v5559, %v5717
        %s5729 = scalar_lea.vmem [#allocation4], %s5071
        %v5730 = vld [vmem:[%s5729] sm:$0xff]
        %v5731 = vld [vmem:[%s5729 + $0x8] sm:$0xff]
        %v5732 = vld [vmem:[%s5729 + $0x10] sm:$0xff]
        %v5733 = vld [vmem:[%s5729 + $0x18] sm:$0xff]
        %v5734 = vld [vmem:[%s5729 + $0x20] sm:$0xff]
        %v5735 = vld [vmem:[%s5729 + $0x28] sm:$0xff]
        %v5736 = vld [vmem:[%s5729 + $0x30] sm:$0xff]
        %v5737 = vld [vmem:[%s5729 + $0x38] sm:$0xff]
        %v5738 = vld [vmem:[%s5729 + $0x40] sm:$0xff]
        %v5739 = vmax.f32 %v5730, 0.0
        %v5740 = vmax.f32 %v5731, 0.0
        %v5741 = vmax.f32 %v5732, 0.0
        %v5742 = vmax.f32 %v5733, 0.0
        %v5743 = vmax.f32 %v5734, 0.0
        %v5744 = vmax.f32 %v5735, 0.0
        %v5745 = vmax.f32 %v5736, 0.0
        %v5746 = vmax.f32 %v5737, 0.0
        %v5747 = vmax.f32 %v5738, 0.0
        %s5748 = scalar_lea.vmem %s8, 64
        %v5749 = vld [vmem:[%s5748] sm:$0xff]
        %v5750 = vld [vmem:[%s5748 + $0x8] sm:$0xff]
        %v5752 = vsel %vm414, %v5739, 0
        %v5755 = vsel %vm414, %v5740, 0
        %v5758 = vsel %vm414, %v5741, 0
        %v5761 = vsel %vm414, %v5742, 0
        %v5764 = vsel %vm414, %v5743, 0
        %v5767 = vsel %vm414, %v5744, 0
        %v5770 = vsel %vm414, %v5745, 0
        %v5773 = vsel %vm414, %v5746, 0
        %v5776 = vsel %vm414, %v5747, 0
        %5778 = vmatprep.subr.mxu0 0.0
        %5779 = vmatpush1.msra.mxu0 %v5749
        %5780 = vmatprep.subr.mxu0 0.0
        %5781 = vmatpush1.msra.mxu0 %v5750
        %5782 = vmatprep.subr.mxu0 0.0
        %5783 = vmatpush1.msra.mxu0 0.0
        %5784 = vmatprep.subr.mxu0 0.0
        %5785 = vmatpush1.msra.mxu0 0.0
        %5786 = vmatprep.subr.mxu0 0.0
        %5787 = vmatpush1.msra.mxu0 0.0
        %5788 = vmatprep.subr.mxu0 0.0
        %5789 = vmatpush1.msra.mxu0 0.0
        %5790 = vmatprep.subr.mxu0 0.0
        %5791 = vmatpush1.msra.mxu0 0.0
        %5792 = vmatprep.subr.mxu0 0.0
        %5793 = vmatpush1.msra.mxu0 0.0
        %5794 = vmatprep.subr.mxu0 0.0
        %5795 = vmatpush1.msra.mxu0 0.0
        %5796 = vmatprep.subr.mxu0 0.0
        %5797 = vmatpush1.msra.mxu0 0.0
        %5798 = vmatprep.subr.mxu0 0.0
        %5799 = vmatpush1.msra.mxu0 0.0
        %5800 = vmatprep.subr.mxu0 0.0
        %5801 = vmatpush1.msra.mxu0 0.0
        %5802 = vmatprep.subr.mxu0 0.0
        %5803 = vmatpush1.msra.mxu0 0.0
        %5804 = vmatprep.subr.mxu0 0.0
        %5805 = vmatpush1.msra.mxu0 0.0
        %5806 = vmatprep.subr.mxu0 0.0
        %5807 = vmatpush1.msra.mxu0 0.0
        %5808 = vmatprep.subr.mxu0 0.0
        %5809 = vmatpush1.msra.mxu0 0.0
        %5810 = vmatprep.subr.mxu0 0.0
        %5811 = vmatpush1.msra.mxu0 0.0
        %5812 = vmatprep.subr.mxu0 0.0
        %5813 = vmatpush1.msra.mxu0 0.0
        %5814 = vmatprep.subr.mxu0 0.0
        %5815 = vmatpush1.msra.mxu0 0.0
        %5816 = vmatprep.subr.mxu0 0.0
        %5817 = vmatpush1.msra.mxu0 0.0
        %5818 = vmatprep.subr.mxu0 0.0
        %5819 = vmatpush1.msra.mxu0 0.0
        %5820 = vmatprep.subr.mxu0 0.0
        %5821 = vmatpush1.msra.mxu0 0.0
        %5822 = vmatprep.subr.mxu0 0.0
        %5823 = vmatpush1.msra.mxu0 0.0
        %5824 = vmatprep.subr.mxu0 0.0
        %5825 = vmatpush1.msra.mxu0 0.0
        %5826 = vmatprep.subr.mxu0 0.0
        %5827 = vmatpush1.msra.mxu0 0.0
        %5828 = vmatprep.subr.mxu0 0.0
        %5829 = vmatpush1.msra.mxu0 0.0
        %5830 = vmatprep.subr.mxu0 0.0
        %5831 = vmatpush1.msra.mxu0 0.0
        %5832 = vmatprep.subr.mxu0 0.0
        %5833 = vmatpush1.msra.mxu0 0.0
        %5834 = vmatprep.subr.mxu0 0.0
        %5835 = vmatpush1.msra.mxu0 0.0
        %5836 = vmatprep.subr.mxu0 0.0
        %5837 = vmatpush1.msra.mxu0 0.0
        %5838 = vmatprep.subr.mxu0 0.0
        %5839 = vmatpush1.msra.mxu0 0.0
        %5840 = vmatprep.subr.mxu0 0.0
        %5841 = vmatpush1.msra.mxu0 0.0
        %5842 = vmatprep.mubr.f32.mxu0 0.0
        %5843 = vmatmul.mubr.f32.gmra.mrb[0].mxu0 %v5752
        %v5844 = vpop.f32.mrb[0].mxu0
        %v5845 = vadd.f32 0.0, %v5844
        %v5846 = vpop.f32.mrb[0].mxu0
        %5847 = vmatprep.mubr.f32.mxu0 0.0
        %5848 = vmatmul.mubr.f32.gmra.mrb[0].mxu0 %v5755
        %v5849 = vpop.f32.mrb[0].mxu0
        %v5850 = vadd.f32 0.0, %v5849
        %v5851 = vpop.f32.mrb[0].mxu0
        %5852 = vmatprep.mubr.f32.mxu0 0.0
        %5853 = vmatmul.mubr.f32.gmra.mrb[0].mxu0 %v5758
        %v5854 = vpop.f32.mrb[0].mxu0
        %v5855 = vadd.f32 0.0, %v5854
        %v5856 = vpop.f32.mrb[0].mxu0
        %5857 = vmatprep.mubr.f32.mxu0 0.0
        %5858 = vmatmul.mubr.f32.gmra.mrb[0].mxu0 %v5761
        %v5859 = vpop.f32.mrb[0].mxu0
        %v5860 = vadd.f32 0.0, %v5859
        %v5861 = vpop.f32.mrb[0].mxu0
        %5862 = vmatprep.mubr.f32.mxu0 0.0
        %5863 = vmatmul.mubr.f32.gmra.mrb[0].mxu0 %v5764
        %v5864 = vpop.f32.mrb[0].mxu0
        %v5865 = vadd.f32 0.0, %v5864
        %v5866 = vpop.f32.mrb[0].mxu0
        %5867 = vmatprep.mubr.f32.mxu0 0.0
        %5868 = vmatmul.mubr.f32.gmra.mrb[0].mxu0 %v5767
        %v5869 = vpop.f32.mrb[0].mxu0
        %v5870 = vadd.f32 0.0, %v5869
        %v5871 = vpop.f32.mrb[0].mxu0
        %5872 = vmatprep.mubr.f32.mxu0 0.0
        %5873 = vmatmul.mubr.f32.gmra.mrb[0].mxu0 %v5770
        %v5874 = vpop.f32.mrb[0].mxu0
        %v5875 = vadd.f32 0.0, %v5874
        %v5876 = vpop.f32.mrb[0].mxu0
        %5877 = vmatprep.mubr.f32.mxu0 0.0
        %5878 = vmatmul.mubr.f32.gmra.mrb[0].mxu0 %v5773
        %v5879 = vpop.f32.mrb[0].mxu0
        %v5880 = vadd.f32 0.0, %v5879
        %v5881 = vpop.f32.mrb[0].mxu0
        %5882 = vmatprep.mubr.f32.mxu0 0.0
        %5883 = vmatmul.mubr.f32.gmra.mrb[0].mxu0 %v5776
        %v5884 = vpop.f32.mrb[0].mxu0
        %v5885 = vadd.f32 0.0, %v5884
        %v5886 = vpop.f32.mrb[0].mxu0
        %5887 = vdwg.mxu0
        %v5888 = vadd.f32 %v5720, %v5845
        %v5889 = vadd.f32 %v5721, %v5850
        %v5890 = vadd.f32 %v5722, %v5855
        %v5891 = vadd.f32 %v5723, %v5860
        %v5892 = vadd.f32 %v5724, %v5865
        %v5893 = vadd.f32 %v5725, %v5870
        %v5894 = vadd.f32 %v5726, %v5875
        %v5895 = vadd.f32 %v5727, %v5880
        %v5896 = vadd.f32 %v5728, %v5885
        %s5897 = sadd.s32 %s5070, 9
        %s5898 = scalar_lea.vmem [#allocation4], %s5897
        %v5899 = vld [vmem:[%s5898] sm:$0xff]
        %v5900 = vld [vmem:[%s5898 + $0x8] sm:$0xff]
        %v5901 = vld [vmem:[%s5898 + $0x10] sm:$0xff]
        %v5902 = vld [vmem:[%s5898 + $0x18] sm:$0xff]
        %v5903 = vld [vmem:[%s5898 + $0x20] sm:$0xff]
        %v5904 = vld [vmem:[%s5898 + $0x28] sm:$0xff]
        %v5905 = vld [vmem:[%s5898 + $0x30] sm:$0xff]
        %v5906 = vld [vmem:[%s5898 + $0x38] sm:$0xff]
        %v5907 = vld [vmem:[%s5898 + $0x40] sm:$0xff]
        %v5908 = vmax.f32 %v5899, 0.0
        %v5909 = vmax.f32 %v5900, 0.0
        %v5910 = vmax.f32 %v5901, 0.0
        %v5911 = vmax.f32 %v5902, 0.0
        %v5912 = vmax.f32 %v5903, 0.0
        %v5913 = vmax.f32 %v5904, 0.0
        %v5914 = vmax.f32 %v5905, 0.0
        %v5915 = vmax.f32 %v5906, 0.0
        %v5916 = vmax.f32 %v5907, 0.0
        %s5917 = scalar_lea.vmem %s8, 80
        %v5918 = vld [vmem:[%s5917] sm:$0xff]
        %v5919 = vld [vmem:[%s5917 + $0x8] sm:$0xff]
        %v5921 = vsel %vm414, %v5908, 0
        %v5924 = vsel %vm414, %v5909, 0
        %v5927 = vsel %vm414, %v5910, 0
        %v5930 = vsel %vm414, %v5911, 0
        %v5933 = vsel %vm414, %v5912, 0
        %v5936 = vsel %vm414, %v5913, 0
        %v5939 = vsel %vm414, %v5914, 0
        %v5942 = vsel %vm414, %v5915, 0
        %v5945 = vsel %vm414, %v5916, 0
        %5947 = vmatprep.subr.mxu0 0.0
        %5948 = vmatpush1.msra.mxu0 %v5918
        %5949 = vmatprep.subr.mxu0 0.0
        %5950 = vmatpush1.msra.mxu0 %v5919
        %5951 = vmatprep.subr.mxu0 0.0
        %5952 = vmatpush1.msra.mxu0 0.0
        %5953 = vmatprep.subr.mxu0 0.0
        %5954 = vmatpush1.msra.mxu0 0.0
        %5955 = vmatprep.subr.mxu0 0.0
        %5956 = vmatpush1.msra.mxu0 0.0
        %5957 = vmatprep.subr.mxu0 0.0
        %5958 = vmatpush1.msra.mxu0 0.0
        %5959 = vmatprep.subr.mxu0 0.0
        %5960 = vmatpush1.msra.mxu0 0.0
        %5961 = vmatprep.subr.mxu0 0.0
        %5962 = vmatpush1.msra.mxu0 0.0
        %5963 = vmatprep.subr.mxu0 0.0
        %5964 = vmatpush1.msra.mxu0 0.0
        %5965 = vmatprep.subr.mxu0 0.0
        %5966 = vmatpush1.msra.mxu0 0.0
        %5967 = vmatprep.subr.mxu0 0.0
        %5968 = vmatpush1.msra.mxu0 0.0
        %5969 = vmatprep.subr.mxu0 0.0
        %5970 = vmatpush1.msra.mxu0 0.0
        %5971 = vmatprep.subr.mxu0 0.0
        %5972 = vmatpush1.msra.mxu0 0.0
        %5973 = vmatprep.subr.mxu0 0.0
        %5974 = vmatpush1.msra.mxu0 0.0
        %5975 = vmatprep.subr.mxu0 0.0
        %5976 = vmatpush1.msra.mxu0 0.0
        %5977 = vmatprep.subr.mxu0 0.0
        %5978 = vmatpush1.msra.mxu0 0.0
        %5979 = vmatprep.subr.mxu0 0.0
        %5980 = vmatpush1.msra.mxu0 0.0
        %5981 = vmatprep.subr.mxu0 0.0
        %5982 = vmatpush1.msra.mxu0 0.0
        %5983 = vmatprep.subr.mxu0 0.0
        %5984 = vmatpush1.msra.mxu0 0.0
        %5985 = vmatprep.subr.mxu0 0.0
        %5986 = vmatpush1.msra.mxu0 0.0
        %5987 = vmatprep.subr.mxu0 0.0
        %5988 = vmatpush1.msra.mxu0 0.0
        %5989 = vmatprep.subr.mxu0 0.0
        %5990 = vmatpush1.msra.mxu0 0.0
        %5991 = vmatprep.subr.mxu0 0.0
        %5992 = vmatpush1.msra.mxu0 0.0
        %5993 = vmatprep.subr.mxu0 0.0
        %5994 = vmatpush1.msra.mxu0 0.0
        %5995 = vmatprep.subr.mxu0 0.0
        %5996 = vmatpush1.msra.mxu0 0.0
        %5997 = vmatprep.subr.mxu0 0.0
        %5998 = vmatpush1.msra.mxu0 0.0
        %5999 = vmatprep.subr.mxu0 0.0
        %6000 = vmatpush1.msra.mxu0 0.0
        %6001 = vmatprep.subr.mxu0 0.0
        %6002 = vmatpush1.msra.mxu0 0.0
        %6003 = vmatprep.subr.mxu0 0.0
        %6004 = vmatpush1.msra.mxu0 0.0
        %6005 = vmatprep.subr.mxu0 0.0
        %6006 = vmatpush1.msra.mxu0 0.0
        %6007 = vmatprep.subr.mxu0 0.0
        %6008 = vmatpush1.msra.mxu0 0.0
        %6009 = vmatprep.subr.mxu0 0.0
        %6010 = vmatpush1.msra.mxu0 0.0
        %6011 = vmatprep.mubr.f32.mxu0 0.0
        %6012 = vmatmul.mubr.f32.gmra.mrb[0].mxu0 %v5921
        %v6013 = vpop.f32.mrb[0].mxu0
        %v6014 = vadd.f32 0.0, %v6013
        %v6015 = vpop.f32.mrb[0].mxu0
        %6016 = vmatprep.mubr.f32.mxu0 0.0
        %6017 = vmatmul.mubr.f32.gmra.mrb[0].mxu0 %v5924
        %v6018 = vpop.f32.mrb[0].mxu0
        %v6019 = vadd.f32 0.0, %v6018
        %v6020 = vpop.f32.mrb[0].mxu0
        %6021 = vmatprep.mubr.f32.mxu0 0.0
        %6022 = vmatmul.mubr.f32.gmra.mrb[0].mxu0 %v5927
        %v6023 = vpop.f32.mrb[0].mxu0
        %v6024 = vadd.f32 0.0, %v6023
        %v6025 = vpop.f32.mrb[0].mxu0
        %6026 = vmatprep.mubr.f32.mxu0 0.0
        %6027 = vmatmul.mubr.f32.gmra.mrb[0].mxu0 %v5930
        %v6028 = vpop.f32.mrb[0].mxu0
        %v6029 = vadd.f32 0.0, %v6028
        %v6030 = vpop.f32.mrb[0].mxu0
        %6031 = vmatprep.mubr.f32.mxu0 0.0
        %6032 = vmatmul.mubr.f32.gmra.mrb[0].mxu0 %v5933
        %v6033 = vpop.f32.mrb[0].mxu0
        %v6034 = vadd.f32 0.0, %v6033
        %v6035 = vpop.f32.mrb[0].mxu0
        %6036 = vmatprep.mubr.f32.mxu0 0.0
        %6037 = vmatmul.mubr.f32.gmra.mrb[0].mxu0 %v5936
        %v6038 = vpop.f32.mrb[0].mxu0
        %v6039 = vadd.f32 0.0, %v6038
        %v6040 = vpop.f32.mrb[0].mxu0
        %6041 = vmatprep.mubr.f32.mxu0 0.0
        %6042 = vmatmul.mubr.f32.gmra.mrb[0].mxu0 %v5939
        %v6043 = vpop.f32.mrb[0].mxu0
        %v6044 = vadd.f32 0.0, %v6043
        %v6045 = vpop.f32.mrb[0].mxu0
        %6046 = vmatprep.mubr.f32.mxu0 0.0
        %6047 = vmatmul.mubr.f32.gmra.mrb[0].mxu0 %v5942
        %v6048 = vpop.f32.mrb[0].mxu0
        %v6049 = vadd.f32 0.0, %v6048
        %v6050 = vpop.f32.mrb[0].mxu0
        %6051 = vmatprep.mubr.f32.mxu0 0.0
        %6052 = vmatmul.mubr.f32.gmra.mrb[0].mxu0 %v5945
        %v6053 = vpop.f32.mrb[0].mxu0
        %v6054 = vadd.f32 0.0, %v6053
        %v6055 = vpop.f32.mrb[0].mxu0
        %6056 = vdwg.mxu0
        %v6057 = vadd.f32 %v5888, %v6014
        %v6058 = vadd.f32 %v5889, %v6019
        %v6059 = vadd.f32 %v5890, %v6024
        %v6060 = vadd.f32 %v5891, %v6029
        %v6061 = vadd.f32 %v5892, %v6034
        %v6062 = vadd.f32 %v5893, %v6039
        %v6063 = vadd.f32 %v5894, %v6044
        %v6064 = vadd.f32 %v5895, %v6049
        %v6065 = vadd.f32 %v5896, %v6054
        %s6066 = sadd.s32 %s5070, 25
        %s6067 = scalar_lea.vmem [#allocation4], %s6066
        %v6068 = vld [vmem:[%s6067] sm:$0xff]
        %v6069 = vld [vmem:[%s6067 + $0x8] sm:$0xff]
        %v6070 = vld [vmem:[%s6067 + $0x10] sm:$0xff]
        %v6071 = vld [vmem:[%s6067 + $0x18] sm:$0xff]
        %v6072 = vld [vmem:[%s6067 + $0x20] sm:$0xff]
        %v6073 = vld [vmem:[%s6067 + $0x28] sm:$0xff]
        %v6074 = vld [vmem:[%s6067 + $0x30] sm:$0xff]
        %v6075 = vld [vmem:[%s6067 + $0x38] sm:$0xff]
        %v6076 = vld [vmem:[%s6067 + $0x40] sm:$0xff]
        %v6077 = vmax.f32 %v6068, 0.0
        %v6078 = vmax.f32 %v6069, 0.0
        %v6079 = vmax.f32 %v6070, 0.0
        %v6080 = vmax.f32 %v6071, 0.0
        %v6081 = vmax.f32 %v6072, 0.0
        %v6082 = vmax.f32 %v6073, 0.0
        %v6083 = vmax.f32 %v6074, 0.0
        %v6084 = vmax.f32 %v6075, 0.0
        %v6085 = vmax.f32 %v6076, 0.0
        %s6086 = scalar_lea.vmem %s8, 96
        %v6087 = vld [vmem:[%s6086] sm:$0xff]
        %v6088 = vld [vmem:[%s6086 + $0x8] sm:$0xff]
        %v6090 = vsel %vm414, %v6077, 0
        %v6093 = vsel %vm414, %v6078, 0
        %v6096 = vsel %vm414, %v6079, 0
        %v6099 = vsel %vm414, %v6080, 0
        %v6102 = vsel %vm414, %v6081, 0
        %v6105 = vsel %vm414, %v6082, 0
        %v6108 = vsel %vm414, %v6083, 0
        %v6111 = vsel %vm414, %v6084, 0
        %v6114 = vsel %vm414, %v6085, 0
        %6116 = vmatprep.subr.mxu0 0.0
        %6117 = vmatpush1.msra.mxu0 %v6087
        %6118 = vmatprep.subr.mxu0 0.0
        %6119 = vmatpush1.msra.mxu0 %v6088
        %6120 = vmatprep.subr.mxu0 0.0
        %6121 = vmatpush1.msra.mxu0 0.0
        %6122 = vmatprep.subr.mxu0 0.0
        %6123 = vmatpush1.msra.mxu0 0.0
        %6124 = vmatprep.subr.mxu0 0.0
        %6125 = vmatpush1.msra.mxu0 0.0
        %6126 = vmatprep.subr.mxu0 0.0
        %6127 = vmatpush1.msra.mxu0 0.0
        %6128 = vmatprep.subr.mxu0 0.0
        %6129 = vmatpush1.msra.mxu0 0.0
        %6130 = vmatprep.subr.mxu0 0.0
        %6131 = vmatpush1.msra.mxu0 0.0
        %6132 = vmatprep.subr.mxu0 0.0
        %6133 = vmatpush1.msra.mxu0 0.0
        %6134 = vmatprep.subr.mxu0 0.0
        %6135 = vmatpush1.msra.mxu0 0.0
        %6136 = vmatprep.subr.mxu0 0.0
        %6137 = vmatpush1.msra.mxu0 0.0
        %6138 = vmatprep.subr.mxu0 0.0
        %6139 = vmatpush1.msra.mxu0 0.0
        %6140 = vmatprep.subr.mxu0 0.0
        %6141 = vmatpush1.msra.mxu0 0.0
        %6142 = vmatprep.subr.mxu0 0.0
        %6143 = vmatpush1.msra.mxu0 0.0
        %6144 = vmatprep.subr.mxu0 0.0
        %6145 = vmatpush1.msra.mxu0 0.0
        %6146 = vmatprep.subr.mxu0 0.0
        %6147 = vmatpush1.msra.mxu0 0.0
        %6148 = vmatprep.subr.mxu0 0.0
        %6149 = vmatpush1.msra.mxu0 0.0
        %6150 = vmatprep.subr.mxu0 0.0
        %6151 = vmatpush1.msra.mxu0 0.0
        %6152 = vmatprep.subr.mxu0 0.0
        %6153 = vmatpush1.msra.mxu0 0.0
        %6154 = vmatprep.subr.mxu0 0.0
        %6155 = vmatpush1.msra.mxu0 0.0
        %6156 = vmatprep.subr.mxu0 0.0
        %6157 = vmatpush1.msra.mxu0 0.0
        %6158 = vmatprep.subr.mxu0 0.0
        %6159 = vmatpush1.msra.mxu0 0.0
        %6160 = vmatprep.subr.mxu0 0.0
        %6161 = vmatpush1.msra.mxu0 0.0
        %6162 = vmatprep.subr.mxu0 0.0
        %6163 = vmatpush1.msra.mxu0 0.0
        %6164 = vmatprep.subr.mxu0 0.0
        %6165 = vmatpush1.msra.mxu0 0.0
        %6166 = vmatprep.subr.mxu0 0.0
        %6167 = vmatpush1.msra.mxu0 0.0
        %6168 = vmatprep.subr.mxu0 0.0
        %6169 = vmatpush1.msra.mxu0 0.0
        %6170 = vmatprep.subr.mxu0 0.0
        %6171 = vmatpush1.msra.mxu0 0.0
        %6172 = vmatprep.subr.mxu0 0.0
        %6173 = vmatpush1.msra.mxu0 0.0
        %6174 = vmatprep.subr.mxu0 0.0
        %6175 = vmatpush1.msra.mxu0 0.0
        %6176 = vmatprep.subr.mxu0 0.0
        %6177 = vmatpush1.msra.mxu0 0.0
        %6178 = vmatprep.subr.mxu0 0.0
        %6179 = vmatpush1.msra.mxu0 0.0
        %6180 = vmatprep.mubr.f32.mxu0 0.0
        %6181 = vmatmul.mubr.f32.gmra.mrb[0].mxu0 %v6090
        %v6182 = vpop.f32.mrb[0].mxu0
        %v6183 = vadd.f32 0.0, %v6182
        %v6184 = vpop.f32.mrb[0].mxu0
        %6185 = vmatprep.mubr.f32.mxu0 0.0
        %6186 = vmatmul.mubr.f32.gmra.mrb[0].mxu0 %v6093
        %v6187 = vpop.f32.mrb[0].mxu0
        %v6188 = vadd.f32 0.0, %v6187
        %v6189 = vpop.f32.mrb[0].mxu0
        %6190 = vmatprep.mubr.f32.mxu0 0.0
        %6191 = vmatmul.mubr.f32.gmra.mrb[0].mxu0 %v6096
        %v6192 = vpop.f32.mrb[0].mxu0
        %v6193 = vadd.f32 0.0, %v6192
        %v6194 = vpop.f32.mrb[0].mxu0
        %6195 = vmatprep.mubr.f32.mxu0 0.0
        %6196 = vmatmul.mubr.f32.gmra.mrb[0].mxu0 %v6099
        %v6197 = vpop.f32.mrb[0].mxu0
        %v6198 = vadd.f32 0.0, %v6197
        %v6199 = vpop.f32.mrb[0].mxu0
        %6200 = vmatprep.mubr.f32.mxu0 0.0
        %6201 = vmatmul.mubr.f32.gmra.mrb[0].mxu0 %v6102
        %v6202 = vpop.f32.mrb[0].mxu0
        %v6203 = vadd.f32 0.0, %v6202
        %v6204 = vpop.f32.mrb[0].mxu0
        %6205 = vmatprep.mubr.f32.mxu0 0.0
        %6206 = vmatmul.mubr.f32.gmra.mrb[0].mxu0 %v6105
        %v6207 = vpop.f32.mrb[0].mxu0
        %v6208 = vadd.f32 0.0, %v6207
        %v6209 = vpop.f32.mrb[0].mxu0
        %6210 = vmatprep.mubr.f32.mxu0 0.0
        %6211 = vmatmul.mubr.f32.gmra.mrb[0].mxu0 %v6108
        %v6212 = vpop.f32.mrb[0].mxu0
        %v6213 = vadd.f32 0.0, %v6212
        %v6214 = vpop.f32.mrb[0].mxu0
        %6215 = vmatprep.mubr.f32.mxu0 0.0
        %6216 = vmatmul.mubr.f32.gmra.mrb[0].mxu0 %v6111
        %v6217 = vpop.f32.mrb[0].mxu0
        %v6218 = vadd.f32 0.0, %v6217
        %v6219 = vpop.f32.mrb[0].mxu0
        %6220 = vmatprep.mubr.f32.mxu0 0.0
        %6221 = vmatmul.mubr.f32.gmra.mrb[0].mxu0 %v6114
        %v6222 = vpop.f32.mrb[0].mxu0
        %v6223 = vadd.f32 0.0, %v6222
        %v6224 = vpop.f32.mrb[0].mxu0
        %6225 = vdwg.mxu0
        %v6226 = vadd.f32 %v6057, %v6183
        %v6227 = vadd.f32 %v6058, %v6188
        %v6228 = vadd.f32 %v6059, %v6193
        %v6229 = vadd.f32 %v6060, %v6198
        %v6230 = vadd.f32 %v6061, %v6203
        %v6231 = vadd.f32 %v6062, %v6208
        %v6232 = vadd.f32 %v6063, %v6213
        %v6233 = vadd.f32 %v6064, %v6218
        %v6234 = vadd.f32 %v6065, %v6223
        %s6235 = sadd.s32 %s5070, 26
        %s6236 = scalar_lea.vmem [#allocation4], %s6235
        %v6237 = vld [vmem:[%s6236] sm:$0xff]
        %v6238 = vld [vmem:[%s6236 + $0x8] sm:$0xff]
        %v6239 = vld [vmem:[%s6236 + $0x10] sm:$0xff]
        %v6240 = vld [vmem:[%s6236 + $0x18] sm:$0xff]
        %v6241 = vld [vmem:[%s6236 + $0x20] sm:$0xff]
        %v6242 = vld [vmem:[%s6236 + $0x28] sm:$0xff]
        %v6243 = vld [vmem:[%s6236 + $0x30] sm:$0xff]
        %v6244 = vld [vmem:[%s6236 + $0x38] sm:$0xff]
        %v6245 = vld [vmem:[%s6236 + $0x40] sm:$0xff]
        %v6246 = vmax.f32 %v6237, 0.0
        %v6247 = vmax.f32 %v6238, 0.0
        %v6248 = vmax.f32 %v6239, 0.0
        %v6249 = vmax.f32 %v6240, 0.0
        %v6250 = vmax.f32 %v6241, 0.0
        %v6251 = vmax.f32 %v6242, 0.0
        %v6252 = vmax.f32 %v6243, 0.0
        %v6253 = vmax.f32 %v6244, 0.0
        %v6254 = vmax.f32 %v6245, 0.0
        %s6255 = scalar_lea.vmem %s8, 112
        %v6256 = vld [vmem:[%s6255] sm:$0xff]
        %v6257 = vld [vmem:[%s6255 + $0x8] sm:$0xff]
        %v6259 = vsel %vm414, %v6246, 0
        %v6262 = vsel %vm414, %v6247, 0
        %v6265 = vsel %vm414, %v6248, 0
        %v6268 = vsel %vm414, %v6249, 0
        %v6271 = vsel %vm414, %v6250, 0
        %v6274 = vsel %vm414, %v6251, 0
        %v6277 = vsel %vm414, %v6252, 0
        %v6280 = vsel %vm414, %v6253, 0
        %v6283 = vsel %vm414, %v6254, 0
        %6285 = vmatprep.subr.mxu0 0.0
        %6286 = vmatpush1.msra.mxu0 %v6256
        %6287 = vmatprep.subr.mxu0 0.0
        %6288 = vmatpush1.msra.mxu0 %v6257
        %6289 = vmatprep.subr.mxu0 0.0
        %6290 = vmatpush1.msra.mxu0 0.0
        %6291 = vmatprep.subr.mxu0 0.0
        %6292 = vmatpush1.msra.mxu0 0.0
        %6293 = vmatprep.subr.mxu0 0.0
        %6294 = vmatpush1.msra.mxu0 0.0
        %6295 = vmatprep.subr.mxu0 0.0
        %6296 = vmatpush1.msra.mxu0 0.0
        %6297 = vmatprep.subr.mxu0 0.0
        %6298 = vmatpush1.msra.mxu0 0.0
        %6299 = vmatprep.subr.mxu0 0.0
        %6300 = vmatpush1.msra.mxu0 0.0
        %6301 = vmatprep.subr.mxu0 0.0
        %6302 = vmatpush1.msra.mxu0 0.0
        %6303 = vmatprep.subr.mxu0 0.0
        %6304 = vmatpush1.msra.mxu0 0.0
        %6305 = vmatprep.subr.mxu0 0.0
        %6306 = vmatpush1.msra.mxu0 0.0
        %6307 = vmatprep.subr.mxu0 0.0
        %6308 = vmatpush1.msra.mxu0 0.0
        %6309 = vmatprep.subr.mxu0 0.0
        %6310 = vmatpush1.msra.mxu0 0.0
        %6311 = vmatprep.subr.mxu0 0.0
        %6312 = vmatpush1.msra.mxu0 0.0
        %6313 = vmatprep.subr.mxu0 0.0
        %6314 = vmatpush1.msra.mxu0 0.0
        %6315 = vmatprep.subr.mxu0 0.0
        %6316 = vmatpush1.msra.mxu0 0.0
        %6317 = vmatprep.subr.mxu0 0.0
        %6318 = vmatpush1.msra.mxu0 0.0
        %6319 = vmatprep.subr.mxu0 0.0
        %6320 = vmatpush1.msra.mxu0 0.0
        %6321 = vmatprep.subr.mxu0 0.0
        %6322 = vmatpush1.msra.mxu0 0.0
        %6323 = vmatprep.subr.mxu0 0.0
        %6324 = vmatpush1.msra.mxu0 0.0
        %6325 = vmatprep.subr.mxu0 0.0
        %6326 = vmatpush1.msra.mxu0 0.0
        %6327 = vmatprep.subr.mxu0 0.0
        %6328 = vmatpush1.msra.mxu0 0.0
        %6329 = vmatprep.subr.mxu0 0.0
        %6330 = vmatpush1.msra.mxu0 0.0
        %6331 = vmatprep.subr.mxu0 0.0
        %6332 = vmatpush1.msra.mxu0 0.0
        %6333 = vmatprep.subr.mxu0 0.0
        %6334 = vmatpush1.msra.mxu0 0.0
        %6335 = vmatprep.subr.mxu0 0.0
        %6336 = vmatpush1.msra.mxu0 0.0
        %6337 = vmatprep.subr.mxu0 0.0
        %6338 = vmatpush1.msra.mxu0 0.0
        %6339 = vmatprep.subr.mxu0 0.0
        %6340 = vmatpush1.msra.mxu0 0.0
        %6341 = vmatprep.subr.mxu0 0.0
        %6342 = vmatpush1.msra.mxu0 0.0
        %6343 = vmatprep.subr.mxu0 0.0
        %6344 = vmatpush1.msra.mxu0 0.0
        %6345 = vmatprep.subr.mxu0 0.0
        %6346 = vmatpush1.msra.mxu0 0.0
        %6347 = vmatprep.subr.mxu0 0.0
        %6348 = vmatpush1.msra.mxu0 0.0
        %6349 = vmatprep.mubr.f32.mxu0 0.0
        %6350 = vmatmul.mubr.f32.gmra.mrb[0].mxu0 %v6259
        %v6351 = vpop.f32.mrb[0].mxu0
        %v6352 = vadd.f32 0.0, %v6351
        %v6353 = vpop.f32.mrb[0].mxu0
        %6354 = vmatprep.mubr.f32.mxu0 0.0
        %6355 = vmatmul.mubr.f32.gmra.mrb[0].mxu0 %v6262
        %v6356 = vpop.f32.mrb[0].mxu0
        %v6357 = vadd.f32 0.0, %v6356
        %v6358 = vpop.f32.mrb[0].mxu0
        %6359 = vmatprep.mubr.f32.mxu0 0.0
        %6360 = vmatmul.mubr.f32.gmra.mrb[0].mxu0 %v6265
        %v6361 = vpop.f32.mrb[0].mxu0
        %v6362 = vadd.f32 0.0, %v6361
        %v6363 = vpop.f32.mrb[0].mxu0
        %6364 = vmatprep.mubr.f32.mxu0 0.0
        %6365 = vmatmul.mubr.f32.gmra.mrb[0].mxu0 %v6268
        %v6366 = vpop.f32.mrb[0].mxu0
        %v6367 = vadd.f32 0.0, %v6366
        %v6368 = vpop.f32.mrb[0].mxu0
        %6369 = vmatprep.mubr.f32.mxu0 0.0
        %6370 = vmatmul.mubr.f32.gmra.mrb[0].mxu0 %v6271
        %v6371 = vpop.f32.mrb[0].mxu0
        %v6372 = vadd.f32 0.0, %v6371
        %v6373 = vpop.f32.mrb[0].mxu0
        %6374 = vmatprep.mubr.f32.mxu0 0.0
        %6375 = vmatmul.mubr.f32.gmra.mrb[0].mxu0 %v6274
        %v6376 = vpop.f32.mrb[0].mxu0
        %v6377 = vadd.f32 0.0, %v6376
        %v6378 = vpop.f32.mrb[0].mxu0
        %6379 = vmatprep.mubr.f32.mxu0 0.0
        %6380 = vmatmul.mubr.f32.gmra.mrb[0].mxu0 %v6277
        %v6381 = vpop.f32.mrb[0].mxu0
        %v6382 = vadd.f32 0.0, %v6381
        %v6383 = vpop.f32.mrb[0].mxu0
        %6384 = vmatprep.mubr.f32.mxu0 0.0
        %6385 = vmatmul.mubr.f32.gmra.mrb[0].mxu0 %v6280
        %v6386 = vpop.f32.mrb[0].mxu0
        %v6387 = vadd.f32 0.0, %v6386
        %v6388 = vpop.f32.mrb[0].mxu0
        %6389 = vmatprep.mubr.f32.mxu0 0.0
        %6390 = vmatmul.mubr.f32.gmra.mrb[0].mxu0 %v6283
        %v6391 = vpop.f32.mrb[0].mxu0
        %v6392 = vadd.f32 0.0, %v6391
        %v6393 = vpop.f32.mrb[0].mxu0
        %6394 = vdwg.mxu0
        %v6395 = vadd.f32 %v6226, %v6352
        %v6396 = vadd.f32 %v6227, %v6357
        %v6397 = vadd.f32 %v6228, %v6362
        %v6398 = vadd.f32 %v6229, %v6367
        %v6399 = vadd.f32 %v6230, %v6372
        %v6400 = vadd.f32 %v6231, %v6377
        %v6401 = vadd.f32 %v6232, %v6382
        %v6402 = vadd.f32 %v6233, %v6387
        %v6403 = vadd.f32 %v6234, %v6392
        %s6404 = sadd.s32 %s5070, 27
        %s6405 = scalar_lea.vmem [#allocation4], %s6404
        %v6406 = vld [vmem:[%s6405] sm:$0xff]
        %v6407 = vld [vmem:[%s6405 + $0x8] sm:$0xff]
        %v6408 = vld [vmem:[%s6405 + $0x10] sm:$0xff]
        %v6409 = vld [vmem:[%s6405 + $0x18] sm:$0xff]
        %v6410 = vld [vmem:[%s6405 + $0x20] sm:$0xff]
        %v6411 = vld [vmem:[%s6405 + $0x28] sm:$0xff]
        %v6412 = vld [vmem:[%s6405 + $0x30] sm:$0xff]
        %v6413 = vld [vmem:[%s6405 + $0x38] sm:$0xff]
        %v6414 = vld [vmem:[%s6405 + $0x40] sm:$0xff]
        %v6415 = vmax.f32 %v6406, 0.0
        %v6416 = vmax.f32 %v6407, 0.0
        %v6417 = vmax.f32 %v6408, 0.0
        %v6418 = vmax.f32 %v6409, 0.0
        %v6419 = vmax.f32 %v6410, 0.0
        %v6420 = vmax.f32 %v6411, 0.0
        %v6421 = vmax.f32 %v6412, 0.0
        %v6422 = vmax.f32 %v6413, 0.0
        %v6423 = vmax.f32 %v6414, 0.0
        %s6424 = scalar_lea.vmem %s8, 128
        %v6425 = vld [vmem:[%s6424] sm:$0xff]
        %v6426 = vld [vmem:[%s6424 + $0x8] sm:$0xff]
        %v6428 = vsel %vm414, %v6415, 0
        %v6431 = vsel %vm414, %v6416, 0
        %v6434 = vsel %vm414, %v6417, 0
        %v6437 = vsel %vm414, %v6418, 0
        %v6440 = vsel %vm414, %v6419, 0
        %v6443 = vsel %vm414, %v6420, 0
        %v6446 = vsel %vm414, %v6421, 0
        %v6449 = vsel %vm414, %v6422, 0
        %v6452 = vsel %vm414, %v6423, 0
        %6454 = vmatprep.subr.mxu0 0.0
        %6455 = vmatpush1.msra.mxu0 %v6425
        %6456 = vmatprep.subr.mxu0 0.0
        %6457 = vmatpush1.msra.mxu0 %v6426
        %6458 = vmatprep.subr.mxu0 0.0
        %6459 = vmatpush1.msra.mxu0 0.0
        %6460 = vmatprep.subr.mxu0 0.0
        %6461 = vmatpush1.msra.mxu0 0.0
        %6462 = vmatprep.subr.mxu0 0.0
        %6463 = vmatpush1.msra.mxu0 0.0
        %6464 = vmatprep.subr.mxu0 0.0
        %6465 = vmatpush1.msra.mxu0 0.0
        %6466 = vmatprep.subr.mxu0 0.0
        %6467 = vmatpush1.msra.mxu0 0.0
        %6468 = vmatprep.subr.mxu0 0.0
        %6469 = vmatpush1.msra.mxu0 0.0
        %6470 = vmatprep.subr.mxu0 0.0
        %6471 = vmatpush1.msra.mxu0 0.0
        %6472 = vmatprep.subr.mxu0 0.0
        %6473 = vmatpush1.msra.mxu0 0.0
        %6474 = vmatprep.subr.mxu0 0.0
        %6475 = vmatpush1.msra.mxu0 0.0
        %6476 = vmatprep.subr.mxu0 0.0
        %6477 = vmatpush1.msra.mxu0 0.0
        %6478 = vmatprep.subr.mxu0 0.0
        %6479 = vmatpush1.msra.mxu0 0.0
        %6480 = vmatprep.subr.mxu0 0.0
        %6481 = vmatpush1.msra.mxu0 0.0
        %6482 = vmatprep.subr.mxu0 0.0
        %6483 = vmatpush1.msra.mxu0 0.0
        %6484 = vmatprep.subr.mxu0 0.0
        %6485 = vmatpush1.msra.mxu0 0.0
        %6486 = vmatprep.subr.mxu0 0.0
        %6487 = vmatpush1.msra.mxu0 0.0
        %6488 = vmatprep.subr.mxu0 0.0
        %6489 = vmatpush1.msra.mxu0 0.0
        %6490 = vmatprep.subr.mxu0 0.0
        %6491 = vmatpush1.msra.mxu0 0.0
        %6492 = vmatprep.subr.mxu0 0.0
        %6493 = vmatpush1.msra.mxu0 0.0
        %6494 = vmatprep.subr.mxu0 0.0
        %6495 = vmatpush1.msra.mxu0 0.0
        %6496 = vmatprep.subr.mxu0 0.0
        %6497 = vmatpush1.msra.mxu0 0.0
        %6498 = vmatprep.subr.mxu0 0.0
        %6499 = vmatpush1.msra.mxu0 0.0
        %6500 = vmatprep.subr.mxu0 0.0
        %6501 = vmatpush1.msra.mxu0 0.0
        %6502 = vmatprep.subr.mxu0 0.0
        %6503 = vmatpush1.msra.mxu0 0.0
        %6504 = vmatprep.subr.mxu0 0.0
        %6505 = vmatpush1.msra.mxu0 0.0
        %6506 = vmatprep.subr.mxu0 0.0
        %6507 = vmatpush1.msra.mxu0 0.0
        %6508 = vmatprep.subr.mxu0 0.0
        %6509 = vmatpush1.msra.mxu0 0.0
        %6510 = vmatprep.subr.mxu0 0.0
        %6511 = vmatpush1.msra.mxu0 0.0
        %6512 = vmatprep.subr.mxu0 0.0
        %6513 = vmatpush1.msra.mxu0 0.0
        %6514 = vmatprep.subr.mxu0 0.0
        %6515 = vmatpush1.msra.mxu0 0.0
        %6516 = vmatprep.subr.mxu0 0.0
        %6517 = vmatpush1.msra.mxu0 0.0
        %6518 = vmatprep.mubr.f32.mxu0 0.0
        %6519 = vmatmul.mubr.f32.gmra.mrb[0].mxu0 %v6428
        %v6520 = vpop.f32.mrb[0].mxu0
        %v6521 = vadd.f32 0.0, %v6520
        %v6522 = vpop.f32.mrb[0].mxu0
        %6523 = vmatprep.mubr.f32.mxu0 0.0
        %6524 = vmatmul.mubr.f32.gmra.mrb[0].mxu0 %v6431
        %v6525 = vpop.f32.mrb[0].mxu0
        %v6526 = vadd.f32 0.0, %v6525
        %v6527 = vpop.f32.mrb[0].mxu0
        %6528 = vmatprep.mubr.f32.mxu0 0.0
        %6529 = vmatmul.mubr.f32.gmra.mrb[0].mxu0 %v6434
        %v6530 = vpop.f32.mrb[0].mxu0
        %v6531 = vadd.f32 0.0, %v6530
        %v6532 = vpop.f32.mrb[0].mxu0
        %6533 = vmatprep.mubr.f32.mxu0 0.0
        %6534 = vmatmul.mubr.f32.gmra.mrb[0].mxu0 %v6437
        %v6535 = vpop.f32.mrb[0].mxu0
        %v6536 = vadd.f32 0.0, %v6535
        %v6537 = vpop.f32.mrb[0].mxu0
        %6538 = vmatprep.mubr.f32.mxu0 0.0
        %6539 = vmatmul.mubr.f32.gmra.mrb[0].mxu0 %v6440
        %v6540 = vpop.f32.mrb[0].mxu0
        %v6541 = vadd.f32 0.0, %v6540
        %v6542 = vpop.f32.mrb[0].mxu0
        %6543 = vmatprep.mubr.f32.mxu0 0.0
        %6544 = vmatmul.mubr.f32.gmra.mrb[0].mxu0 %v6443
        %v6545 = vpop.f32.mrb[0].mxu0
        %v6546 = vadd.f32 0.0, %v6545
        %v6547 = vpop.f32.mrb[0].mxu0
        %6548 = vmatprep.mubr.f32.mxu0 0.0
        %6549 = vmatmul.mubr.f32.gmra.mrb[0].mxu0 %v6446
        %v6550 = vpop.f32.mrb[0].mxu0
        %v6551 = vadd.f32 0.0, %v6550
        %v6552 = vpop.f32.mrb[0].mxu0
        %6553 = vmatprep.mubr.f32.mxu0 0.0
        %6554 = vmatmul.mubr.f32.gmra.mrb[0].mxu0 %v6449
        %v6555 = vpop.f32.mrb[0].mxu0
        %v6556 = vadd.f32 0.0, %v6555
        %v6557 = vpop.f32.mrb[0].mxu0
        %6558 = vmatprep.mubr.f32.mxu0 0.0
        %6559 = vmatmul.mubr.f32.gmra.mrb[0].mxu0 %v6452
        %v6560 = vpop.f32.mrb[0].mxu0
        %v6561 = vadd.f32 0.0, %v6560
        %v6562 = vpop.f32.mrb[0].mxu0
        %6563 = vdwg.mxu0
        %v6564 = vadd.f32 %v6395, %v6521
        %v6565 = vadd.f32 %v6396, %v6526
        %v6566 = vadd.f32 %v6397, %v6531
        %v6567 = vadd.f32 %v6398, %v6536
        %v6568 = vadd.f32 %v6399, %v6541
        %v6569 = vadd.f32 %v6400, %v6546
        %v6570 = vadd.f32 %v6401, %v6551
        %v6571 = vadd.f32 %v6402, %v6556
        %v6572 = vadd.f32 %v6403, %v6561
        %v6573 = vld [vmem:[%s9] sm:$0x1]
        %v6575 = vlaneseq
        %v6576 = vshrl.u32 %v6575, 7
        %v6577 = vsub.s32 0, %v6576
        %v6578 = vrot.slane %v6573, %v6577
        %v6580 = vadd.f32 %v6564, %v6578
        %v6581 = vadd.f32 %v6565, %v6578
        %v6582 = vadd.f32 %v6566, %v6578
        %v6583 = vadd.f32 %v6567, %v6578
        %v6584 = vadd.f32 %v6568, %v6578
        %v6585 = vadd.f32 %v6569, %v6578
        %v6586 = vadd.f32 %v6570, %v6578
        %v6587 = vadd.f32 %v6571, %v6578
        %v6588 = vadd.f32 %v6572, %v6578
        %v6589 = vmax.f32 %v6580, 0.0
        %v6590 = vmax.f32 %v6581, 0.0
        %v6591 = vmax.f32 %v6582, 0.0
        %v6592 = vmax.f32 %v6583, 0.0
        %v6593 = vmax.f32 %v6584, 0.0
        %v6594 = vmax.f32 %v6585, 0.0
        %v6595 = vmax.f32 %v6586, 0.0
        %v6596 = vmax.f32 %v6587, 0.0
        %v6597 = vmax.f32 %v6588, 0.0
        %6599 = vset.pattern.permute.xlu0 0
        %6600 = vperm.xlu0 %6599, %v524
        %v6601 = vpop.permute.xlu0 %6600
        %6604 = vset.pattern.permute.xlu0 0
        %6605 = vperm.xlu0 %6604, %v525
        %v6606 = vpop.permute.xlu0 %6605
        %6609 = vset.pattern.permute.xlu0 0
        %6610 = vperm.xlu0 %6609, %v526
        %v6611 = vpop.permute.xlu0 %6610
        %6614 = vset.pattern.permute.xlu0 0
        %6615 = vperm.xlu0 %6614, %v527
        %v6616 = vpop.permute.xlu0 %6615
        %6619 = vset.pattern.permute.xlu0 0
        %6620 = vperm.xlu0 %6619, %v528
        %v6621 = vpop.permute.xlu0 %6620
        %6624 = vset.pattern.permute.xlu0 0
        %6625 = vperm.xlu0 %6624, %v529
        %v6626 = vpop.permute.xlu0 %6625
        %6629 = vset.pattern.permute.xlu0 0
        %6630 = vperm.xlu0 %6629, %v530
        %v6631 = vpop.permute.xlu0 %6630
        %6634 = vset.pattern.permute.xlu0 0
        %6635 = vperm.xlu0 %6634, %v531
        %v6636 = vpop.permute.xlu0 %6635
        %6639 = vset.pattern.permute.xlu0 0
        %6640 = vperm.xlu0 %6639, %v532
        %v6641 = vpop.permute.xlu0 %6640
        %v6643 = vmul.f32 %v6589, %v6601
        %v6644 = vmul.f32 %v6590, %v6606
        %v6645 = vmul.f32 %v6591, %v6611
        %v6646 = vmul.f32 %v6592, %v6616
        %v6647 = vmul.f32 %v6593, %v6621
        %v6648 = vmul.f32 %v6594, %v6626
        %v6649 = vmul.f32 %v6595, %v6631
        %v6650 = vmul.f32 %v6596, %v6636
        %v6651 = vmul.f32 %v6597, %v6641
        %s6652 = scalar_lea.vmem [#allocation2], %s5071
        %6653 = vst.msk [vmem:[%s6652] sm:$0xff] %vm414, %v6643
        %6654 = vst.msk [vmem:[%s6652 + $0x8] sm:$0xff] %vm414, %v6644
        %6655 = vst.msk [vmem:[%s6652 + $0x10] sm:$0xff] %vm414, %v6645
        %6656 = vst.msk [vmem:[%s6652 + $0x18] sm:$0xff] %vm414, %v6646
        %6657 = vst.msk [vmem:[%s6652 + $0x20] sm:$0xff] %vm414, %v6647
        %6658 = vst.msk [vmem:[%s6652 + $0x28] sm:$0xff] %vm414, %v6648
        %6659 = vst.msk [vmem:[%s6652 + $0x30] sm:$0xff] %vm414, %v6649
        %6660 = vst.msk [vmem:[%s6652 + $0x38] sm:$0xff] %vm414, %v6650
        %6661 = vst.msk [vmem:[%s6652 + $0x40] sm:$0xff] %vm414, %v6651
      $region87: #{tpu_custom_call.1} parent=67 // loop_footer
        %s5067 = sadd.s32 1, %s5063
      $region88: #{tpu_custom_call.1} parent=67 // loop_footer_branch
        %5062 = sbr.rel target = $region84
      $region89: #{tpu_custom_call.1} parent=67 // loop_exit
        _
      loop: start=0, step=1, limit=4
      $region90: #{tpu_custom_call.1} parent=67 // loop_pre_header
        _
      $region91: #{tpu_custom_call.1} parent=67 // loop_header
        %s6663 = sphi 0, %s6667
        %p6664 = scmp.ge.s32.totalorder %s6663, 4
      $region92: #{tpu_custom_call.1} parent=67 // loop_header_branch
        %6666 = sbr.rel (%p6664) target = $region96
      $region93: #{tpu_custom_call.1} parent=67 // loop_body
        %s6668 = smul.u32 %s6663, 4
        %s6669 = sadd.s32 %s6668, 1
        %s6670 = smul.u32 %s6669, 18
        %s6671 = sadd.s32 %s6670, 8
        %s6672 = sadd.s32 %s6670, 4294967285
        %s6673 = scalar_lea.vmem [#allocation2], %s6672
        %v6674 = vld [vmem:[%s6673] sm:$0xff]
        %v6675 = vld [vmem:[%s6673 + $0x8] sm:$0xff]
        %v6676 = vld [vmem:[%s6673 + $0x10] sm:$0xff]
        %v6677 = vld [vmem:[%s6673 + $0x18] sm:$0xff]
        %v6678 = vld [vmem:[%s6673 + $0x20] sm:$0xff]
        %v6679 = vld [vmem:[%s6673 + $0x28] sm:$0xff]
        %v6680 = vld [vmem:[%s6673 + $0x30] sm:$0xff]
        %v6681 = vld [vmem:[%s6673 + $0x38] sm:$0xff]
        %v6682 = vld [vmem:[%s6673 + $0x40] sm:$0xff]
        %v6683 = vld [vmem:[%s10] sm:$0xff]
        %v6684 = vld [vmem:[%s10 + $0x8] sm:$0xff]
        %s6685 = sadd.s32 %s6670, 4294967286
        %s6686 = scalar_lea.vmem [#allocation2], %s6685
        %v6687 = vld [vmem:[%s6686] sm:$0xff]
        %v6688 = vld [vmem:[%s6686 + $0x8] sm:$0xff]
        %v6689 = vld [vmem:[%s6686 + $0x10] sm:$0xff]
        %v6690 = vld [vmem:[%s6686 + $0x18] sm:$0xff]
        %v6691 = vld [vmem:[%s6686 + $0x20] sm:$0xff]
        %v6692 = vld [vmem:[%s6686 + $0x28] sm:$0xff]
        %v6693 = vld [vmem:[%s6686 + $0x30] sm:$0xff]
        %v6694 = vld [vmem:[%s6686 + $0x38] sm:$0xff]
        %v6695 = vld [vmem:[%s6686 + $0x40] sm:$0xff]
        %s6696 = scalar_lea.vmem %s10, 16
        %v6697 = vld [vmem:[%s6696] sm:$0xff]
        %v6698 = vld [vmem:[%s6696 + $0x8] sm:$0xff]
        %v6700 = vsel %vm414, %v6687, 0
        %v6703 = vsel %vm414, %v6688, 0
        %v6706 = vsel %vm414, %v6689, 0
        %v6709 = vsel %vm414, %v6690, 0
        %v6712 = vsel %vm414, %v6691, 0
        %v6715 = vsel %vm414, %v6692, 0
        %v6718 = vsel %vm414, %v6693, 0
        %v6721 = vsel %vm414, %v6694, 0
        %v6724 = vsel %vm414, %v6695, 0
        %6726 = vmatprep.subr.mxu0 0.0
        %6727 = vmatpush1.msra.mxu0 %v6697
        %6728 = vmatprep.subr.mxu0 0.0
        %6729 = vmatpush1.msra.mxu0 %v6698
        %6730 = vmatprep.subr.mxu0 0.0
        %6731 = vmatpush1.msra.mxu0 0.0
        %6732 = vmatprep.subr.mxu0 0.0
        %6733 = vmatpush1.msra.mxu0 0.0
        %6734 = vmatprep.subr.mxu0 0.0
        %6735 = vmatpush1.msra.mxu0 0.0
        %6736 = vmatprep.subr.mxu0 0.0
        %6737 = vmatpush1.msra.mxu0 0.0
        %6738 = vmatprep.subr.mxu0 0.0
        %6739 = vmatpush1.msra.mxu0 0.0
        %6740 = vmatprep.subr.mxu0 0.0
        %6741 = vmatpush1.msra.mxu0 0.0
        %6742 = vmatprep.subr.mxu0 0.0
        %6743 = vmatpush1.msra.mxu0 0.0
        %6744 = vmatprep.subr.mxu0 0.0
        %6745 = vmatpush1.msra.mxu0 0.0
        %6746 = vmatprep.subr.mxu0 0.0
        %6747 = vmatpush1.msra.mxu0 0.0
        %6748 = vmatprep.subr.mxu0 0.0
        %6749 = vmatpush1.msra.mxu0 0.0
        %6750 = vmatprep.subr.mxu0 0.0
        %6751 = vmatpush1.msra.mxu0 0.0
        %6752 = vmatprep.subr.mxu0 0.0
        %6753 = vmatpush1.msra.mxu0 0.0
        %6754 = vmatprep.subr.mxu0 0.0
        %6755 = vmatpush1.msra.mxu0 0.0
        %6756 = vmatprep.subr.mxu0 0.0
        %6757 = vmatpush1.msra.mxu0 0.0
        %6758 = vmatprep.subr.mxu0 0.0
        %6759 = vmatpush1.msra.mxu0 0.0
        %6760 = vmatprep.subr.mxu0 0.0
        %6761 = vmatpush1.msra.mxu0 0.0
        %6762 = vmatprep.subr.mxu0 0.0
        %6763 = vmatpush1.msra.mxu0 0.0
        %6764 = vmatprep.subr.mxu0 0.0
        %6765 = vmatpush1.msra.mxu0 0.0
        %6766 = vmatprep.subr.mxu0 0.0
        %6767 = vmatpush1.msra.mxu0 0.0
        %6768 = vmatprep.subr.mxu0 0.0
        %6769 = vmatpush1.msra.mxu0 0.0
        %6770 = vmatprep.subr.mxu0 0.0
        %6771 = vmatpush1.msra.mxu0 0.0
        %6772 = vmatprep.subr.mxu0 0.0
        %6773 = vmatpush1.msra.mxu0 0.0
        %6774 = vmatprep.subr.mxu0 0.0
        %6775 = vmatpush1.msra.mxu0 0.0
        %6776 = vmatprep.subr.mxu0 0.0
        %6777 = vmatpush1.msra.mxu0 0.0
        %6778 = vmatprep.subr.mxu0 0.0
        %6779 = vmatpush1.msra.mxu0 0.0
        %6780 = vmatprep.subr.mxu0 0.0
        %6781 = vmatpush1.msra.mxu0 0.0
        %6782 = vmatprep.subr.mxu0 0.0
        %6783 = vmatpush1.msra.mxu0 0.0
        %6784 = vmatprep.subr.mxu0 0.0
        %6785 = vmatpush1.msra.mxu0 0.0
        %6786 = vmatprep.subr.mxu0 0.0
        %6787 = vmatpush1.msra.mxu0 0.0
        %6788 = vmatprep.subr.mxu0 0.0
        %6789 = vmatpush1.msra.mxu0 0.0
        %6790 = vmatprep.mubr.f32.mxu0 0.0
        %6791 = vmatmul.mubr.f32.gmra.mrb[0].mxu0 %v6700
        %v6792 = vpop.f32.mrb[0].mxu0
        %v6793 = vadd.f32 0.0, %v6792
        %v6794 = vpop.f32.mrb[0].mxu0
        %6795 = vmatprep.mubr.f32.mxu0 0.0
        %6796 = vmatmul.mubr.f32.gmra.mrb[0].mxu0 %v6703
        %v6797 = vpop.f32.mrb[0].mxu0
        %v6798 = vadd.f32 0.0, %v6797
        %v6799 = vpop.f32.mrb[0].mxu0
        %6800 = vmatprep.mubr.f32.mxu0 0.0
        %6801 = vmatmul.mubr.f32.gmra.mrb[0].mxu0 %v6706
        %v6802 = vpop.f32.mrb[0].mxu0
        %v6803 = vadd.f32 0.0, %v6802
        %v6804 = vpop.f32.mrb[0].mxu0
        %6805 = vmatprep.mubr.f32.mxu0 0.0
        %6806 = vmatmul.mubr.f32.gmra.mrb[0].mxu0 %v6709
        %v6807 = vpop.f32.mrb[0].mxu0
        %v6808 = vadd.f32 0.0, %v6807
        %v6809 = vpop.f32.mrb[0].mxu0
        %6810 = vmatprep.mubr.f32.mxu0 0.0
        %6811 = vmatmul.mubr.f32.gmra.mrb[0].mxu0 %v6712
        %v6812 = vpop.f32.mrb[0].mxu0
        %v6813 = vadd.f32 0.0, %v6812
        %v6814 = vpop.f32.mrb[0].mxu0
        %6815 = vmatprep.mubr.f32.mxu0 0.0
        %6816 = vmatmul.mubr.f32.gmra.mrb[0].mxu0 %v6715
        %v6817 = vpop.f32.mrb[0].mxu0
        %v6818 = vadd.f32 0.0, %v6817
        %v6819 = vpop.f32.mrb[0].mxu0
        %6820 = vmatprep.mubr.f32.mxu0 0.0
        %6821 = vmatmul.mubr.f32.gmra.mrb[0].mxu0 %v6718
        %v6822 = vpop.f32.mrb[0].mxu0
        %v6823 = vadd.f32 0.0, %v6822
        %v6824 = vpop.f32.mrb[0].mxu0
        %6825 = vmatprep.mubr.f32.mxu0 0.0
        %6826 = vmatmul.mubr.f32.gmra.mrb[0].mxu0 %v6721
        %v6827 = vpop.f32.mrb[0].mxu0
        %v6828 = vadd.f32 0.0, %v6827
        %v6829 = vpop.f32.mrb[0].mxu0
        %6830 = vmatprep.mubr.f32.mxu0 0.0
        %6831 = vmatmul.mubr.f32.gmra.mrb[0].mxu0 %v6724
        %v6832 = vpop.f32.mrb[0].mxu0
        %v6833 = vadd.f32 0.0, %v6832
        %v6834 = vpop.f32.mrb[0].mxu0
        %6835 = vdwg.mxu0
        %v6837 = vsel %vm414, %v6674, 0
        %v6840 = vsel %vm414, %v6675, 0
        %v6843 = vsel %vm414, %v6676, 0
        %v6846 = vsel %vm414, %v6677, 0
        %v6849 = vsel %vm414, %v6678, 0
        %v6852 = vsel %vm414, %v6679, 0
        %v6855 = vsel %vm414, %v6680, 0
        %v6858 = vsel %vm414, %v6681, 0
        %v6861 = vsel %vm414, %v6682, 0
        %6863 = vmatprep.subr.mxu0 0.0
        %6864 = vmatpush1.msra.mxu0 %v6683
        %6865 = vmatprep.subr.mxu0 0.0
        %6866 = vmatpush1.msra.mxu0 %v6684
        %6867 = vmatprep.subr.mxu0 0.0
        %6868 = vmatpush1.msra.mxu0 0.0
        %6869 = vmatprep.subr.mxu0 0.0
        %6870 = vmatpush1.msra.mxu0 0.0
        %6871 = vmatprep.subr.mxu0 0.0
        %6872 = vmatpush1.msra.mxu0 0.0
        %6873 = vmatprep.subr.mxu0 0.0
        %6874 = vmatpush1.msra.mxu0 0.0
        %6875 = vmatprep.subr.mxu0 0.0
        %6876 = vmatpush1.msra.mxu0 0.0
        %6877 = vmatprep.subr.mxu0 0.0
        %6878 = vmatpush1.msra.mxu0 0.0
        %6879 = vmatprep.subr.mxu0 0.0
        %6880 = vmatpush1.msra.mxu0 0.0
        %6881 = vmatprep.subr.mxu0 0.0
        %6882 = vmatpush1.msra.mxu0 0.0
        %6883 = vmatprep.subr.mxu0 0.0
        %6884 = vmatpush1.msra.mxu0 0.0
        %6885 = vmatprep.subr.mxu0 0.0
        %6886 = vmatpush1.msra.mxu0 0.0
        %6887 = vmatprep.subr.mxu0 0.0
        %6888 = vmatpush1.msra.mxu0 0.0
        %6889 = vmatprep.subr.mxu0 0.0
        %6890 = vmatpush1.msra.mxu0 0.0
        %6891 = vmatprep.subr.mxu0 0.0
        %6892 = vmatpush1.msra.mxu0 0.0
        %6893 = vmatprep.subr.mxu0 0.0
        %6894 = vmatpush1.msra.mxu0 0.0
        %6895 = vmatprep.subr.mxu0 0.0
        %6896 = vmatpush1.msra.mxu0 0.0
        %6897 = vmatprep.subr.mxu0 0.0
        %6898 = vmatpush1.msra.mxu0 0.0
        %6899 = vmatprep.subr.mxu0 0.0
        %6900 = vmatpush1.msra.mxu0 0.0
        %6901 = vmatprep.subr.mxu0 0.0
        %6902 = vmatpush1.msra.mxu0 0.0
        %6903 = vmatprep.subr.mxu0 0.0
        %6904 = vmatpush1.msra.mxu0 0.0
        %6905 = vmatprep.subr.mxu0 0.0
        %6906 = vmatpush1.msra.mxu0 0.0
        %6907 = vmatprep.subr.mxu0 0.0
        %6908 = vmatpush1.msra.mxu0 0.0
        %6909 = vmatprep.subr.mxu0 0.0
        %6910 = vmatpush1.msra.mxu0 0.0
        %6911 = vmatprep.subr.mxu0 0.0
        %6912 = vmatpush1.msra.mxu0 0.0
        %6913 = vmatprep.subr.mxu0 0.0
        %6914 = vmatpush1.msra.mxu0 0.0
        %6915 = vmatprep.subr.mxu0 0.0
        %6916 = vmatpush1.msra.mxu0 0.0
        %6917 = vmatprep.subr.mxu0 0.0
        %6918 = vmatpush1.msra.mxu0 0.0
        %6919 = vmatprep.subr.mxu0 0.0
        %6920 = vmatpush1.msra.mxu0 0.0
        %6921 = vmatprep.subr.mxu0 0.0
        %6922 = vmatpush1.msra.mxu0 0.0
        %6923 = vmatprep.subr.mxu0 0.0
        %6924 = vmatpush1.msra.mxu0 0.0
        %6925 = vmatprep.subr.mxu0 0.0
        %6926 = vmatpush1.msra.mxu0 0.0
        %6927 = vmatprep.mubr.f32.mxu0 0.0
        %6928 = vmatmul.mubr.f32.gmra.mrb[0].mxu0 %v6837
        %v6929 = vpop.f32.mrb[0].mxu0
        %v6930 = vadd.f32 %v6793, %v6929
        %v6931 = vpop.f32.mrb[0].mxu0
        %6932 = vmatprep.mubr.f32.mxu0 0.0
        %6933 = vmatmul.mubr.f32.gmra.mrb[0].mxu0 %v6840
        %v6934 = vpop.f32.mrb[0].mxu0
        %v6935 = vadd.f32 %v6798, %v6934
        %v6936 = vpop.f32.mrb[0].mxu0
        %6937 = vmatprep.mubr.f32.mxu0 0.0
        %6938 = vmatmul.mubr.f32.gmra.mrb[0].mxu0 %v6843
        %v6939 = vpop.f32.mrb[0].mxu0
        %v6940 = vadd.f32 %v6803, %v6939
        %v6941 = vpop.f32.mrb[0].mxu0
        %6942 = vmatprep.mubr.f32.mxu0 0.0
        %6943 = vmatmul.mubr.f32.gmra.mrb[0].mxu0 %v6846
        %v6944 = vpop.f32.mrb[0].mxu0
        %v6945 = vadd.f32 %v6808, %v6944
        %v6946 = vpop.f32.mrb[0].mxu0
        %6947 = vmatprep.mubr.f32.mxu0 0.0
        %6948 = vmatmul.mubr.f32.gmra.mrb[0].mxu0 %v6849
        %v6949 = vpop.f32.mrb[0].mxu0
        %v6950 = vadd.f32 %v6813, %v6949
        %v6951 = vpop.f32.mrb[0].mxu0
        %6952 = vmatprep.mubr.f32.mxu0 0.0
        %6953 = vmatmul.mubr.f32.gmra.mrb[0].mxu0 %v6852
        %v6954 = vpop.f32.mrb[0].mxu0
        %v6955 = vadd.f32 %v6818, %v6954
        %v6956 = vpop.f32.mrb[0].mxu0
        %6957 = vmatprep.mubr.f32.mxu0 0.0
        %6958 = vmatmul.mubr.f32.gmra.mrb[0].mxu0 %v6855
        %v6959 = vpop.f32.mrb[0].mxu0
        %v6960 = vadd.f32 %v6823, %v6959
        %v6961 = vpop.f32.mrb[0].mxu0
        %6962 = vmatprep.mubr.f32.mxu0 0.0
        %6963 = vmatmul.mubr.f32.gmra.mrb[0].mxu0 %v6858
        %v6964 = vpop.f32.mrb[0].mxu0
        %v6965 = vadd.f32 %v6828, %v6964
        %v6966 = vpop.f32.mrb[0].mxu0
        %6967 = vmatprep.mubr.f32.mxu0 0.0
        %6968 = vmatmul.mubr.f32.gmra.mrb[0].mxu0 %v6861
        %v6969 = vpop.f32.mrb[0].mxu0
        %v6970 = vadd.f32 %v6833, %v6969
        %v6971 = vpop.f32.mrb[0].mxu0
        %6972 = vdwg.mxu0
        %s6973 = sadd.s32 %s6670, 4294967287
        %s6974 = scalar_lea.vmem [#allocation2], %s6973
        %v6975 = vld [vmem:[%s6974] sm:$0xff]
        %v6976 = vld [vmem:[%s6974 + $0x8] sm:$0xff]
        %v6977 = vld [vmem:[%s6974 + $0x10] sm:$0xff]
        %v6978 = vld [vmem:[%s6974 + $0x18] sm:$0xff]
        %v6979 = vld [vmem:[%s6974 + $0x20] sm:$0xff]
        %v6980 = vld [vmem:[%s6974 + $0x28] sm:$0xff]
        %v6981 = vld [vmem:[%s6974 + $0x30] sm:$0xff]
        %v6982 = vld [vmem:[%s6974 + $0x38] sm:$0xff]
        %v6983 = vld [vmem:[%s6974 + $0x40] sm:$0xff]
        %s6984 = scalar_lea.vmem %s10, 32
        %v6985 = vld [vmem:[%s6984] sm:$0xff]
        %v6986 = vld [vmem:[%s6984 + $0x8] sm:$0xff]
        %v6988 = vsel %vm414, %v6975, 0
        %v6991 = vsel %vm414, %v6976, 0
        %v6994 = vsel %vm414, %v6977, 0
        %v6997 = vsel %vm414, %v6978, 0
        %v7000 = vsel %vm414, %v6979, 0
        %v7003 = vsel %vm414, %v6980, 0
        %v7006 = vsel %vm414, %v6981, 0
        %v7009 = vsel %vm414, %v6982, 0
        %v7012 = vsel %vm414, %v6983, 0
        %7014 = vmatprep.subr.mxu0 0.0
        %7015 = vmatpush1.msra.mxu0 %v6985
        %7016 = vmatprep.subr.mxu0 0.0
        %7017 = vmatpush1.msra.mxu0 %v6986
        %7018 = vmatprep.subr.mxu0 0.0
        %7019 = vmatpush1.msra.mxu0 0.0
        %7020 = vmatprep.subr.mxu0 0.0
        %7021 = vmatpush1.msra.mxu0 0.0
        %7022 = vmatprep.subr.mxu0 0.0
        %7023 = vmatpush1.msra.mxu0 0.0
        %7024 = vmatprep.subr.mxu0 0.0
        %7025 = vmatpush1.msra.mxu0 0.0
        %7026 = vmatprep.subr.mxu0 0.0
        %7027 = vmatpush1.msra.mxu0 0.0
        %7028 = vmatprep.subr.mxu0 0.0
        %7029 = vmatpush1.msra.mxu0 0.0
        %7030 = vmatprep.subr.mxu0 0.0
        %7031 = vmatpush1.msra.mxu0 0.0
        %7032 = vmatprep.subr.mxu0 0.0
        %7033 = vmatpush1.msra.mxu0 0.0
        %7034 = vmatprep.subr.mxu0 0.0
        %7035 = vmatpush1.msra.mxu0 0.0
        %7036 = vmatprep.subr.mxu0 0.0
        %7037 = vmatpush1.msra.mxu0 0.0
        %7038 = vmatprep.subr.mxu0 0.0
        %7039 = vmatpush1.msra.mxu0 0.0
        %7040 = vmatprep.subr.mxu0 0.0
        %7041 = vmatpush1.msra.mxu0 0.0
        %7042 = vmatprep.subr.mxu0 0.0
        %7043 = vmatpush1.msra.mxu0 0.0
        %7044 = vmatprep.subr.mxu0 0.0
        %7045 = vmatpush1.msra.mxu0 0.0
        %7046 = vmatprep.subr.mxu0 0.0
        %7047 = vmatpush1.msra.mxu0 0.0
        %7048 = vmatprep.subr.mxu0 0.0
        %7049 = vmatpush1.msra.mxu0 0.0
        %7050 = vmatprep.subr.mxu0 0.0
        %7051 = vmatpush1.msra.mxu0 0.0
        %7052 = vmatprep.subr.mxu0 0.0
        %7053 = vmatpush1.msra.mxu0 0.0
        %7054 = vmatprep.subr.mxu0 0.0
        %7055 = vmatpush1.msra.mxu0 0.0
        %7056 = vmatprep.subr.mxu0 0.0
        %7057 = vmatpush1.msra.mxu0 0.0
        %7058 = vmatprep.subr.mxu0 0.0
        %7059 = vmatpush1.msra.mxu0 0.0
        %7060 = vmatprep.subr.mxu0 0.0
        %7061 = vmatpush1.msra.mxu0 0.0
        %7062 = vmatprep.subr.mxu0 0.0
        %7063 = vmatpush1.msra.mxu0 0.0
        %7064 = vmatprep.subr.mxu0 0.0
        %7065 = vmatpush1.msra.mxu0 0.0
        %7066 = vmatprep.subr.mxu0 0.0
        %7067 = vmatpush1.msra.mxu0 0.0
        %7068 = vmatprep.subr.mxu0 0.0
        %7069 = vmatpush1.msra.mxu0 0.0
        %7070 = vmatprep.subr.mxu0 0.0
        %7071 = vmatpush1.msra.mxu0 0.0
        %7072 = vmatprep.subr.mxu0 0.0
        %7073 = vmatpush1.msra.mxu0 0.0
        %7074 = vmatprep.subr.mxu0 0.0
        %7075 = vmatpush1.msra.mxu0 0.0
        %7076 = vmatprep.subr.mxu0 0.0
        %7077 = vmatpush1.msra.mxu0 0.0
        %7078 = vmatprep.mubr.f32.mxu0 0.0
        %7079 = vmatmul.mubr.f32.gmra.mrb[0].mxu0 %v6988
        %v7080 = vpop.f32.mrb[0].mxu0
        %v7081 = vadd.f32 0.0, %v7080
        %v7082 = vpop.f32.mrb[0].mxu0
        %7083 = vmatprep.mubr.f32.mxu0 0.0
        %7084 = vmatmul.mubr.f32.gmra.mrb[0].mxu0 %v6991
        %v7085 = vpop.f32.mrb[0].mxu0
        %v7086 = vadd.f32 0.0, %v7085
        %v7087 = vpop.f32.mrb[0].mxu0
        %7088 = vmatprep.mubr.f32.mxu0 0.0
        %7089 = vmatmul.mubr.f32.gmra.mrb[0].mxu0 %v6994
        %v7090 = vpop.f32.mrb[0].mxu0
        %v7091 = vadd.f32 0.0, %v7090
        %v7092 = vpop.f32.mrb[0].mxu0
        %7093 = vmatprep.mubr.f32.mxu0 0.0
        %7094 = vmatmul.mubr.f32.gmra.mrb[0].mxu0 %v6997
        %v7095 = vpop.f32.mrb[0].mxu0
        %v7096 = vadd.f32 0.0, %v7095
        %v7097 = vpop.f32.mrb[0].mxu0
        %7098 = vmatprep.mubr.f32.mxu0 0.0
        %7099 = vmatmul.mubr.f32.gmra.mrb[0].mxu0 %v7000
        %v7100 = vpop.f32.mrb[0].mxu0
        %v7101 = vadd.f32 0.0, %v7100
        %v7102 = vpop.f32.mrb[0].mxu0
        %7103 = vmatprep.mubr.f32.mxu0 0.0
        %7104 = vmatmul.mubr.f32.gmra.mrb[0].mxu0 %v7003
        %v7105 = vpop.f32.mrb[0].mxu0
        %v7106 = vadd.f32 0.0, %v7105
        %v7107 = vpop.f32.mrb[0].mxu0
        %7108 = vmatprep.mubr.f32.mxu0 0.0
        %7109 = vmatmul.mubr.f32.gmra.mrb[0].mxu0 %v7006
        %v7110 = vpop.f32.mrb[0].mxu0
        %v7111 = vadd.f32 0.0, %v7110
        %v7112 = vpop.f32.mrb[0].mxu0
        %7113 = vmatprep.mubr.f32.mxu0 0.0
        %7114 = vmatmul.mubr.f32.gmra.mrb[0].mxu0 %v7009
        %v7115 = vpop.f32.mrb[0].mxu0
        %v7116 = vadd.f32 0.0, %v7115
        %v7117 = vpop.f32.mrb[0].mxu0
        %7118 = vmatprep.mubr.f32.mxu0 0.0
        %7119 = vmatmul.mubr.f32.gmra.mrb[0].mxu0 %v7012
        %v7120 = vpop.f32.mrb[0].mxu0
        %v7121 = vadd.f32 0.0, %v7120
        %v7122 = vpop.f32.mrb[0].mxu0
        %7123 = vdwg.mxu0
        %v7124 = vadd.f32 %v6930, %v7081
        %v7125 = vadd.f32 %v6935, %v7086
        %v7126 = vadd.f32 %v6940, %v7091
        %v7127 = vadd.f32 %v6945, %v7096
        %v7128 = vadd.f32 %v6950, %v7101
        %v7129 = vadd.f32 %v6955, %v7106
        %v7130 = vadd.f32 %v6960, %v7111
        %v7131 = vadd.f32 %v6965, %v7116
        %v7132 = vadd.f32 %v6970, %v7121
        %s7133 = sadd.s32 %s6670, 7
        %s7134 = scalar_lea.vmem [#allocation2], %s7133
        %v7135 = vld [vmem:[%s7134] sm:$0xff]
        %v7136 = vld [vmem:[%s7134 + $0x8] sm:$0xff]
        %v7137 = vld [vmem:[%s7134 + $0x10] sm:$0xff]
        %v7138 = vld [vmem:[%s7134 + $0x18] sm:$0xff]
        %v7139 = vld [vmem:[%s7134 + $0x20] sm:$0xff]
        %v7140 = vld [vmem:[%s7134 + $0x28] sm:$0xff]
        %v7141 = vld [vmem:[%s7134 + $0x30] sm:$0xff]
        %v7142 = vld [vmem:[%s7134 + $0x38] sm:$0xff]
        %v7143 = vld [vmem:[%s7134 + $0x40] sm:$0xff]
        %s7144 = scalar_lea.vmem %s10, 48
        %v7145 = vld [vmem:[%s7144] sm:$0xff]
        %v7146 = vld [vmem:[%s7144 + $0x8] sm:$0xff]
        %v7148 = vsel %vm414, %v7135, 0
        %v7151 = vsel %vm414, %v7136, 0
        %v7154 = vsel %vm414, %v7137, 0
        %v7157 = vsel %vm414, %v7138, 0
        %v7160 = vsel %vm414, %v7139, 0
        %v7163 = vsel %vm414, %v7140, 0
        %v7166 = vsel %vm414, %v7141, 0
        %v7169 = vsel %vm414, %v7142, 0
        %v7172 = vsel %vm414, %v7143, 0
        %7174 = vmatprep.subr.mxu0 0.0
        %7175 = vmatpush1.msra.mxu0 %v7145
        %7176 = vmatprep.subr.mxu0 0.0
        %7177 = vmatpush1.msra.mxu0 %v7146
        %7178 = vmatprep.subr.mxu0 0.0
        %7179 = vmatpush1.msra.mxu0 0.0
        %7180 = vmatprep.subr.mxu0 0.0
        %7181 = vmatpush1.msra.mxu0 0.0
        %7182 = vmatprep.subr.mxu0 0.0
        %7183 = vmatpush1.msra.mxu0 0.0
        %7184 = vmatprep.subr.mxu0 0.0
        %7185 = vmatpush1.msra.mxu0 0.0
        %7186 = vmatprep.subr.mxu0 0.0
        %7187 = vmatpush1.msra.mxu0 0.0
        %7188 = vmatprep.subr.mxu0 0.0
        %7189 = vmatpush1.msra.mxu0 0.0
        %7190 = vmatprep.subr.mxu0 0.0
        %7191 = vmatpush1.msra.mxu0 0.0
        %7192 = vmatprep.subr.mxu0 0.0
        %7193 = vmatpush1.msra.mxu0 0.0
        %7194 = vmatprep.subr.mxu0 0.0
        %7195 = vmatpush1.msra.mxu0 0.0
        %7196 = vmatprep.subr.mxu0 0.0
        %7197 = vmatpush1.msra.mxu0 0.0
        %7198 = vmatprep.subr.mxu0 0.0
        %7199 = vmatpush1.msra.mxu0 0.0
        %7200 = vmatprep.subr.mxu0 0.0
        %7201 = vmatpush1.msra.mxu0 0.0
        %7202 = vmatprep.subr.mxu0 0.0
        %7203 = vmatpush1.msra.mxu0 0.0
        %7204 = vmatprep.subr.mxu0 0.0
        %7205 = vmatpush1.msra.mxu0 0.0
        %7206 = vmatprep.subr.mxu0 0.0
        %7207 = vmatpush1.msra.mxu0 0.0
        %7208 = vmatprep.subr.mxu0 0.0
        %7209 = vmatpush1.msra.mxu0 0.0
        %7210 = vmatprep.subr.mxu0 0.0
        %7211 = vmatpush1.msra.mxu0 0.0
        %7212 = vmatprep.subr.mxu0 0.0
        %7213 = vmatpush1.msra.mxu0 0.0
        %7214 = vmatprep.subr.mxu0 0.0
        %7215 = vmatpush1.msra.mxu0 0.0
        %7216 = vmatprep.subr.mxu0 0.0
        %7217 = vmatpush1.msra.mxu0 0.0
        %7218 = vmatprep.subr.mxu0 0.0
        %7219 = vmatpush1.msra.mxu0 0.0
        %7220 = vmatprep.subr.mxu0 0.0
        %7221 = vmatpush1.msra.mxu0 0.0
        %7222 = vmatprep.subr.mxu0 0.0
        %7223 = vmatpush1.msra.mxu0 0.0
        %7224 = vmatprep.subr.mxu0 0.0
        %7225 = vmatpush1.msra.mxu0 0.0
        %7226 = vmatprep.subr.mxu0 0.0
        %7227 = vmatpush1.msra.mxu0 0.0
        %7228 = vmatprep.subr.mxu0 0.0
        %7229 = vmatpush1.msra.mxu0 0.0
        %7230 = vmatprep.subr.mxu0 0.0
        %7231 = vmatpush1.msra.mxu0 0.0
        %7232 = vmatprep.subr.mxu0 0.0
        %7233 = vmatpush1.msra.mxu0 0.0
        %7234 = vmatprep.subr.mxu0 0.0
        %7235 = vmatpush1.msra.mxu0 0.0
        %7236 = vmatprep.subr.mxu0 0.0
        %7237 = vmatpush1.msra.mxu0 0.0
        %7238 = vmatprep.mubr.f32.mxu0 0.0
        %7239 = vmatmul.mubr.f32.gmra.mrb[0].mxu0 %v7148
        %v7240 = vpop.f32.mrb[0].mxu0
        %v7241 = vadd.f32 0.0, %v7240
        %v7242 = vpop.f32.mrb[0].mxu0
        %7243 = vmatprep.mubr.f32.mxu0 0.0
        %7244 = vmatmul.mubr.f32.gmra.mrb[0].mxu0 %v7151
        %v7245 = vpop.f32.mrb[0].mxu0
        %v7246 = vadd.f32 0.0, %v7245
        %v7247 = vpop.f32.mrb[0].mxu0
        %7248 = vmatprep.mubr.f32.mxu0 0.0
        %7249 = vmatmul.mubr.f32.gmra.mrb[0].mxu0 %v7154
        %v7250 = vpop.f32.mrb[0].mxu0
        %v7251 = vadd.f32 0.0, %v7250
        %v7252 = vpop.f32.mrb[0].mxu0
        %7253 = vmatprep.mubr.f32.mxu0 0.0
        %7254 = vmatmul.mubr.f32.gmra.mrb[0].mxu0 %v7157
        %v7255 = vpop.f32.mrb[0].mxu0
        %v7256 = vadd.f32 0.0, %v7255
        %v7257 = vpop.f32.mrb[0].mxu0
        %7258 = vmatprep.mubr.f32.mxu0 0.0
        %7259 = vmatmul.mubr.f32.gmra.mrb[0].mxu0 %v7160
        %v7260 = vpop.f32.mrb[0].mxu0
        %v7261 = vadd.f32 0.0, %v7260
        %v7262 = vpop.f32.mrb[0].mxu0
        %7263 = vmatprep.mubr.f32.mxu0 0.0
        %7264 = vmatmul.mubr.f32.gmra.mrb[0].mxu0 %v7163
        %v7265 = vpop.f32.mrb[0].mxu0
        %v7266 = vadd.f32 0.0, %v7265
        %v7267 = vpop.f32.mrb[0].mxu0
        %7268 = vmatprep.mubr.f32.mxu0 0.0
        %7269 = vmatmul.mubr.f32.gmra.mrb[0].mxu0 %v7166
        %v7270 = vpop.f32.mrb[0].mxu0
        %v7271 = vadd.f32 0.0, %v7270
        %v7272 = vpop.f32.mrb[0].mxu0
        %7273 = vmatprep.mubr.f32.mxu0 0.0
        %7274 = vmatmul.mubr.f32.gmra.mrb[0].mxu0 %v7169
        %v7275 = vpop.f32.mrb[0].mxu0
        %v7276 = vadd.f32 0.0, %v7275
        %v7277 = vpop.f32.mrb[0].mxu0
        %7278 = vmatprep.mubr.f32.mxu0 0.0
        %7279 = vmatmul.mubr.f32.gmra.mrb[0].mxu0 %v7172
        %v7280 = vpop.f32.mrb[0].mxu0
        %v7281 = vadd.f32 0.0, %v7280
        %v7282 = vpop.f32.mrb[0].mxu0
        %7283 = vdwg.mxu0
        %v7284 = vadd.f32 %v7124, %v7241
        %v7285 = vadd.f32 %v7125, %v7246
        %v7286 = vadd.f32 %v7126, %v7251
        %v7287 = vadd.f32 %v7127, %v7256
        %v7288 = vadd.f32 %v7128, %v7261
        %v7289 = vadd.f32 %v7129, %v7266
        %v7290 = vadd.f32 %v7130, %v7271
        %v7291 = vadd.f32 %v7131, %v7276
        %v7292 = vadd.f32 %v7132, %v7281
        %s7293 = scalar_lea.vmem [#allocation2], %s6671
        %v7294 = vld [vmem:[%s7293] sm:$0xff]
        %v7295 = vld [vmem:[%s7293 + $0x8] sm:$0xff]
        %v7296 = vld [vmem:[%s7293 + $0x10] sm:$0xff]
        %v7297 = vld [vmem:[%s7293 + $0x18] sm:$0xff]
        %v7298 = vld [vmem:[%s7293 + $0x20] sm:$0xff]
        %v7299 = vld [vmem:[%s7293 + $0x28] sm:$0xff]
        %v7300 = vld [vmem:[%s7293 + $0x30] sm:$0xff]
        %v7301 = vld [vmem:[%s7293 + $0x38] sm:$0xff]
        %v7302 = vld [vmem:[%s7293 + $0x40] sm:$0xff]
        %s7303 = scalar_lea.vmem %s10, 64
        %v7304 = vld [vmem:[%s7303] sm:$0xff]
        %v7305 = vld [vmem:[%s7303 + $0x8] sm:$0xff]
        %v7307 = vsel %vm414, %v7294, 0
        %v7310 = vsel %vm414, %v7295, 0
        %v7313 = vsel %vm414, %v7296, 0
        %v7316 = vsel %vm414, %v7297, 0
        %v7319 = vsel %vm414, %v7298, 0
        %v7322 = vsel %vm414, %v7299, 0
        %v7325 = vsel %vm414, %v7300, 0
        %v7328 = vsel %vm414, %v7301, 0
        %v7331 = vsel %vm414, %v7302, 0
        %7333 = vmatprep.subr.mxu0 0.0
        %7334 = vmatpush1.msra.mxu0 %v7304
        %7335 = vmatprep.subr.mxu0 0.0
        %7336 = vmatpush1.msra.mxu0 %v7305
        %7337 = vmatprep.subr.mxu0 0.0
        %7338 = vmatpush1.msra.mxu0 0.0
        %7339 = vmatprep.subr.mxu0 0.0
        %7340 = vmatpush1.msra.mxu0 0.0
        %7341 = vmatprep.subr.mxu0 0.0
        %7342 = vmatpush1.msra.mxu0 0.0
        %7343 = vmatprep.subr.mxu0 0.0
        %7344 = vmatpush1.msra.mxu0 0.0
        %7345 = vmatprep.subr.mxu0 0.0
        %7346 = vmatpush1.msra.mxu0 0.0
        %7347 = vmatprep.subr.mxu0 0.0
        %7348 = vmatpush1.msra.mxu0 0.0
        %7349 = vmatprep.subr.mxu0 0.0
        %7350 = vmatpush1.msra.mxu0 0.0
        %7351 = vmatprep.subr.mxu0 0.0
        %7352 = vmatpush1.msra.mxu0 0.0
        %7353 = vmatprep.subr.mxu0 0.0
        %7354 = vmatpush1.msra.mxu0 0.0
        %7355 = vmatprep.subr.mxu0 0.0
        %7356 = vmatpush1.msra.mxu0 0.0
        %7357 = vmatprep.subr.mxu0 0.0
        %7358 = vmatpush1.msra.mxu0 0.0
        %7359 = vmatprep.subr.mxu0 0.0
        %7360 = vmatpush1.msra.mxu0 0.0
        %7361 = vmatprep.subr.mxu0 0.0
        %7362 = vmatpush1.msra.mxu0 0.0
        %7363 = vmatprep.subr.mxu0 0.0
        %7364 = vmatpush1.msra.mxu0 0.0
        %7365 = vmatprep.subr.mxu0 0.0
        %7366 = vmatpush1.msra.mxu0 0.0
        %7367 = vmatprep.subr.mxu0 0.0
        %7368 = vmatpush1.msra.mxu0 0.0
        %7369 = vmatprep.subr.mxu0 0.0
        %7370 = vmatpush1.msra.mxu0 0.0
        %7371 = vmatprep.subr.mxu0 0.0
        %7372 = vmatpush1.msra.mxu0 0.0
        %7373 = vmatprep.subr.mxu0 0.0
        %7374 = vmatpush1.msra.mxu0 0.0
        %7375 = vmatprep.subr.mxu0 0.0
        %7376 = vmatpush1.msra.mxu0 0.0
        %7377 = vmatprep.subr.mxu0 0.0
        %7378 = vmatpush1.msra.mxu0 0.0
        %7379 = vmatprep.subr.mxu0 0.0
        %7380 = vmatpush1.msra.mxu0 0.0
        %7381 = vmatprep.subr.mxu0 0.0
        %7382 = vmatpush1.msra.mxu0 0.0
        %7383 = vmatprep.subr.mxu0 0.0
        %7384 = vmatpush1.msra.mxu0 0.0
        %7385 = vmatprep.subr.mxu0 0.0
        %7386 = vmatpush1.msra.mxu0 0.0
        %7387 = vmatprep.subr.mxu0 0.0
        %7388 = vmatpush1.msra.mxu0 0.0
        %7389 = vmatprep.subr.mxu0 0.0
        %7390 = vmatpush1.msra.mxu0 0.0
        %7391 = vmatprep.subr.mxu0 0.0
        %7392 = vmatpush1.msra.mxu0 0.0
        %7393 = vmatprep.subr.mxu0 0.0
        %7394 = vmatpush1.msra.mxu0 0.0
        %7395 = vmatprep.subr.mxu0 0.0
        %7396 = vmatpush1.msra.mxu0 0.0
        %7397 = vmatprep.mubr.f32.mxu0 0.0
        %7398 = vmatmul.mubr.f32.gmra.mrb[0].mxu0 %v7307
        %v7399 = vpop.f32.mrb[0].mxu0
        %v7400 = vadd.f32 0.0, %v7399
        %v7401 = vpop.f32.mrb[0].mxu0
        %7402 = vmatprep.mubr.f32.mxu0 0.0
        %7403 = vmatmul.mubr.f32.gmra.mrb[0].mxu0 %v7310
        %v7404 = vpop.f32.mrb[0].mxu0
        %v7405 = vadd.f32 0.0, %v7404
        %v7406 = vpop.f32.mrb[0].mxu0
        %7407 = vmatprep.mubr.f32.mxu0 0.0
        %7408 = vmatmul.mubr.f32.gmra.mrb[0].mxu0 %v7313
        %v7409 = vpop.f32.mrb[0].mxu0
        %v7410 = vadd.f32 0.0, %v7409
        %v7411 = vpop.f32.mrb[0].mxu0
        %7412 = vmatprep.mubr.f32.mxu0 0.0
        %7413 = vmatmul.mubr.f32.gmra.mrb[0].mxu0 %v7316
        %v7414 = vpop.f32.mrb[0].mxu0
        %v7415 = vadd.f32 0.0, %v7414
        %v7416 = vpop.f32.mrb[0].mxu0
        %7417 = vmatprep.mubr.f32.mxu0 0.0
        %7418 = vmatmul.mubr.f32.gmra.mrb[0].mxu0 %v7319
        %v7419 = vpop.f32.mrb[0].mxu0
        %v7420 = vadd.f32 0.0, %v7419
        %v7421 = vpop.f32.mrb[0].mxu0
        %7422 = vmatprep.mubr.f32.mxu0 0.0
        %7423 = vmatmul.mubr.f32.gmra.mrb[0].mxu0 %v7322
        %v7424 = vpop.f32.mrb[0].mxu0
        %v7425 = vadd.f32 0.0, %v7424
        %v7426 = vpop.f32.mrb[0].mxu0
        %7427 = vmatprep.mubr.f32.mxu0 0.0
        %7428 = vmatmul.mubr.f32.gmra.mrb[0].mxu0 %v7325
        %v7429 = vpop.f32.mrb[0].mxu0
        %v7430 = vadd.f32 0.0, %v7429
        %v7431 = vpop.f32.mrb[0].mxu0
        %7432 = vmatprep.mubr.f32.mxu0 0.0
        %7433 = vmatmul.mubr.f32.gmra.mrb[0].mxu0 %v7328
        %v7434 = vpop.f32.mrb[0].mxu0
        %v7435 = vadd.f32 0.0, %v7434
        %v7436 = vpop.f32.mrb[0].mxu0
        %7437 = vmatprep.mubr.f32.mxu0 0.0
        %7438 = vmatmul.mubr.f32.gmra.mrb[0].mxu0 %v7331
        %v7439 = vpop.f32.mrb[0].mxu0
        %v7440 = vadd.f32 0.0, %v7439
        %v7441 = vpop.f32.mrb[0].mxu0
        %7442 = vdwg.mxu0
        %v7443 = vadd.f32 %v7284, %v7400
        %v7444 = vadd.f32 %v7285, %v7405
        %v7445 = vadd.f32 %v7286, %v7410
        %v7446 = vadd.f32 %v7287, %v7415
        %v7447 = vadd.f32 %v7288, %v7420
        %v7448 = vadd.f32 %v7289, %v7425
        %v7449 = vadd.f32 %v7290, %v7430
        %v7450 = vadd.f32 %v7291, %v7435
        %v7451 = vadd.f32 %v7292, %v7440
        %s7452 = sadd.s32 %s6670, 9
        %s7453 = scalar_lea.vmem [#allocation2], %s7452
        %v7454 = vld [vmem:[%s7453] sm:$0xff]
        %v7455 = vld [vmem:[%s7453 + $0x8] sm:$0xff]
        %v7456 = vld [vmem:[%s7453 + $0x10] sm:$0xff]
        %v7457 = vld [vmem:[%s7453 + $0x18] sm:$0xff]
        %v7458 = vld [vmem:[%s7453 + $0x20] sm:$0xff]
        %v7459 = vld [vmem:[%s7453 + $0x28] sm:$0xff]
        %v7460 = vld [vmem:[%s7453 + $0x30] sm:$0xff]
        %v7461 = vld [vmem:[%s7453 + $0x38] sm:$0xff]
        %v7462 = vld [vmem:[%s7453 + $0x40] sm:$0xff]
        %s7463 = scalar_lea.vmem %s10, 80
        %v7464 = vld [vmem:[%s7463] sm:$0xff]
        %v7465 = vld [vmem:[%s7463 + $0x8] sm:$0xff]
        %v7467 = vsel %vm414, %v7454, 0
        %v7470 = vsel %vm414, %v7455, 0
        %v7473 = vsel %vm414, %v7456, 0
        %v7476 = vsel %vm414, %v7457, 0
        %v7479 = vsel %vm414, %v7458, 0
        %v7482 = vsel %vm414, %v7459, 0
        %v7485 = vsel %vm414, %v7460, 0
        %v7488 = vsel %vm414, %v7461, 0
        %v7491 = vsel %vm414, %v7462, 0
        %7493 = vmatprep.subr.mxu0 0.0
        %7494 = vmatpush1.msra.mxu0 %v7464
        %7495 = vmatprep.subr.mxu0 0.0
        %7496 = vmatpush1.msra.mxu0 %v7465
        %7497 = vmatprep.subr.mxu0 0.0
        %7498 = vmatpush1.msra.mxu0 0.0
        %7499 = vmatprep.subr.mxu0 0.0
        %7500 = vmatpush1.msra.mxu0 0.0
        %7501 = vmatprep.subr.mxu0 0.0
        %7502 = vmatpush1.msra.mxu0 0.0
        %7503 = vmatprep.subr.mxu0 0.0
        %7504 = vmatpush1.msra.mxu0 0.0
        %7505 = vmatprep.subr.mxu0 0.0
        %7506 = vmatpush1.msra.mxu0 0.0
        %7507 = vmatprep.subr.mxu0 0.0
        %7508 = vmatpush1.msra.mxu0 0.0
        %7509 = vmatprep.subr.mxu0 0.0
        %7510 = vmatpush1.msra.mxu0 0.0
        %7511 = vmatprep.subr.mxu0 0.0
        %7512 = vmatpush1.msra.mxu0 0.0
        %7513 = vmatprep.subr.mxu0 0.0
        %7514 = vmatpush1.msra.mxu0 0.0
        %7515 = vmatprep.subr.mxu0 0.0
        %7516 = vmatpush1.msra.mxu0 0.0
        %7517 = vmatprep.subr.mxu0 0.0
        %7518 = vmatpush1.msra.mxu0 0.0
        %7519 = vmatprep.subr.mxu0 0.0
        %7520 = vmatpush1.msra.mxu0 0.0
        %7521 = vmatprep.subr.mxu0 0.0
        %7522 = vmatpush1.msra.mxu0 0.0
        %7523 = vmatprep.subr.mxu0 0.0
        %7524 = vmatpush1.msra.mxu0 0.0
        %7525 = vmatprep.subr.mxu0 0.0
        %7526 = vmatpush1.msra.mxu0 0.0
        %7527 = vmatprep.subr.mxu0 0.0
        %7528 = vmatpush1.msra.mxu0 0.0
        %7529 = vmatprep.subr.mxu0 0.0
        %7530 = vmatpush1.msra.mxu0 0.0
        %7531 = vmatprep.subr.mxu0 0.0
        %7532 = vmatpush1.msra.mxu0 0.0
        %7533 = vmatprep.subr.mxu0 0.0
        %7534 = vmatpush1.msra.mxu0 0.0
        %7535 = vmatprep.subr.mxu0 0.0
        %7536 = vmatpush1.msra.mxu0 0.0
        %7537 = vmatprep.subr.mxu0 0.0
        %7538 = vmatpush1.msra.mxu0 0.0
        %7539 = vmatprep.subr.mxu0 0.0
        %7540 = vmatpush1.msra.mxu0 0.0
        %7541 = vmatprep.subr.mxu0 0.0
        %7542 = vmatpush1.msra.mxu0 0.0
        %7543 = vmatprep.subr.mxu0 0.0
        %7544 = vmatpush1.msra.mxu0 0.0
        %7545 = vmatprep.subr.mxu0 0.0
        %7546 = vmatpush1.msra.mxu0 0.0
        %7547 = vmatprep.subr.mxu0 0.0
        %7548 = vmatpush1.msra.mxu0 0.0
        %7549 = vmatprep.subr.mxu0 0.0
        %7550 = vmatpush1.msra.mxu0 0.0
        %7551 = vmatprep.subr.mxu0 0.0
        %7552 = vmatpush1.msra.mxu0 0.0
        %7553 = vmatprep.subr.mxu0 0.0
        %7554 = vmatpush1.msra.mxu0 0.0
        %7555 = vmatprep.subr.mxu0 0.0
        %7556 = vmatpush1.msra.mxu0 0.0
        %7557 = vmatprep.mubr.f32.mxu0 0.0
        %7558 = vmatmul.mubr.f32.gmra.mrb[0].mxu0 %v7467
        %v7559 = vpop.f32.mrb[0].mxu0
        %v7560 = vadd.f32 0.0, %v7559
        %v7561 = vpop.f32.mrb[0].mxu0
        %7562 = vmatprep.mubr.f32.mxu0 0.0
        %7563 = vmatmul.mubr.f32.gmra.mrb[0].mxu0 %v7470
        %v7564 = vpop.f32.mrb[0].mxu0
        %v7565 = vadd.f32 0.0, %v7564
        %v7566 = vpop.f32.mrb[0].mxu0
        %7567 = vmatprep.mubr.f32.mxu0 0.0
        %7568 = vmatmul.mubr.f32.gmra.mrb[0].mxu0 %v7473
        %v7569 = vpop.f32.mrb[0].mxu0
        %v7570 = vadd.f32 0.0, %v7569
        %v7571 = vpop.f32.mrb[0].mxu0
        %7572 = vmatprep.mubr.f32.mxu0 0.0
        %7573 = vmatmul.mubr.f32.gmra.mrb[0].mxu0 %v7476
        %v7574 = vpop.f32.mrb[0].mxu0
        %v7575 = vadd.f32 0.0, %v7574
        %v7576 = vpop.f32.mrb[0].mxu0
        %7577 = vmatprep.mubr.f32.mxu0 0.0
        %7578 = vmatmul.mubr.f32.gmra.mrb[0].mxu0 %v7479
        %v7579 = vpop.f32.mrb[0].mxu0
        %v7580 = vadd.f32 0.0, %v7579
        %v7581 = vpop.f32.mrb[0].mxu0
        %7582 = vmatprep.mubr.f32.mxu0 0.0
        %7583 = vmatmul.mubr.f32.gmra.mrb[0].mxu0 %v7482
        %v7584 = vpop.f32.mrb[0].mxu0
        %v7585 = vadd.f32 0.0, %v7584
        %v7586 = vpop.f32.mrb[0].mxu0
        %7587 = vmatprep.mubr.f32.mxu0 0.0
        %7588 = vmatmul.mubr.f32.gmra.mrb[0].mxu0 %v7485
        %v7589 = vpop.f32.mrb[0].mxu0
        %v7590 = vadd.f32 0.0, %v7589
        %v7591 = vpop.f32.mrb[0].mxu0
        %7592 = vmatprep.mubr.f32.mxu0 0.0
        %7593 = vmatmul.mubr.f32.gmra.mrb[0].mxu0 %v7488
        %v7594 = vpop.f32.mrb[0].mxu0
        %v7595 = vadd.f32 0.0, %v7594
        %v7596 = vpop.f32.mrb[0].mxu0
        %7597 = vmatprep.mubr.f32.mxu0 0.0
        %7598 = vmatmul.mubr.f32.gmra.mrb[0].mxu0 %v7491
        %v7599 = vpop.f32.mrb[0].mxu0
        %v7600 = vadd.f32 0.0, %v7599
        %v7601 = vpop.f32.mrb[0].mxu0
        %7602 = vdwg.mxu0
        %v7603 = vadd.f32 %v7443, %v7560
        %v7604 = vadd.f32 %v7444, %v7565
        %v7605 = vadd.f32 %v7445, %v7570
        %v7606 = vadd.f32 %v7446, %v7575
        %v7607 = vadd.f32 %v7447, %v7580
        %v7608 = vadd.f32 %v7448, %v7585
        %v7609 = vadd.f32 %v7449, %v7590
        %v7610 = vadd.f32 %v7450, %v7595
        %v7611 = vadd.f32 %v7451, %v7600
        %s7612 = sadd.s32 %s6670, 25
        %s7613 = scalar_lea.vmem [#allocation2], %s7612
        %v7614 = vld [vmem:[%s7613] sm:$0xff]
        %v7615 = vld [vmem:[%s7613 + $0x8] sm:$0xff]
        %v7616 = vld [vmem:[%s7613 + $0x10] sm:$0xff]
        %v7617 = vld [vmem:[%s7613 + $0x18] sm:$0xff]
        %v7618 = vld [vmem:[%s7613 + $0x20] sm:$0xff]
        %v7619 = vld [vmem:[%s7613 + $0x28] sm:$0xff]
        %v7620 = vld [vmem:[%s7613 + $0x30] sm:$0xff]
        %v7621 = vld [vmem:[%s7613 + $0x38] sm:$0xff]
        %v7622 = vld [vmem:[%s7613 + $0x40] sm:$0xff]
        %s7623 = scalar_lea.vmem %s10, 96
        %v7624 = vld [vmem:[%s7623] sm:$0xff]
        %v7625 = vld [vmem:[%s7623 + $0x8] sm:$0xff]
        %v7627 = vsel %vm414, %v7614, 0
        %v7630 = vsel %vm414, %v7615, 0
        %v7633 = vsel %vm414, %v7616, 0
        %v7636 = vsel %vm414, %v7617, 0
        %v7639 = vsel %vm414, %v7618, 0
        %v7642 = vsel %vm414, %v7619, 0
        %v7645 = vsel %vm414, %v7620, 0
        %v7648 = vsel %vm414, %v7621, 0
        %v7651 = vsel %vm414, %v7622, 0
        %7653 = vmatprep.subr.mxu0 0.0
        %7654 = vmatpush1.msra.mxu0 %v7624
        %7655 = vmatprep.subr.mxu0 0.0
        %7656 = vmatpush1.msra.mxu0 %v7625
        %7657 = vmatprep.subr.mxu0 0.0
        %7658 = vmatpush1.msra.mxu0 0.0
        %7659 = vmatprep.subr.mxu0 0.0
        %7660 = vmatpush1.msra.mxu0 0.0
        %7661 = vmatprep.subr.mxu0 0.0
        %7662 = vmatpush1.msra.mxu0 0.0
        %7663 = vmatprep.subr.mxu0 0.0
        %7664 = vmatpush1.msra.mxu0 0.0
        %7665 = vmatprep.subr.mxu0 0.0
        %7666 = vmatpush1.msra.mxu0 0.0
        %7667 = vmatprep.subr.mxu0 0.0
        %7668 = vmatpush1.msra.mxu0 0.0
        %7669 = vmatprep.subr.mxu0 0.0
        %7670 = vmatpush1.msra.mxu0 0.0
        %7671 = vmatprep.subr.mxu0 0.0
        %7672 = vmatpush1.msra.mxu0 0.0
        %7673 = vmatprep.subr.mxu0 0.0
        %7674 = vmatpush1.msra.mxu0 0.0
        %7675 = vmatprep.subr.mxu0 0.0
        %7676 = vmatpush1.msra.mxu0 0.0
        %7677 = vmatprep.subr.mxu0 0.0
        %7678 = vmatpush1.msra.mxu0 0.0
        %7679 = vmatprep.subr.mxu0 0.0
        %7680 = vmatpush1.msra.mxu0 0.0
        %7681 = vmatprep.subr.mxu0 0.0
        %7682 = vmatpush1.msra.mxu0 0.0
        %7683 = vmatprep.subr.mxu0 0.0
        %7684 = vmatpush1.msra.mxu0 0.0
        %7685 = vmatprep.subr.mxu0 0.0
        %7686 = vmatpush1.msra.mxu0 0.0
        %7687 = vmatprep.subr.mxu0 0.0
        %7688 = vmatpush1.msra.mxu0 0.0
        %7689 = vmatprep.subr.mxu0 0.0
        %7690 = vmatpush1.msra.mxu0 0.0
        %7691 = vmatprep.subr.mxu0 0.0
        %7692 = vmatpush1.msra.mxu0 0.0
        %7693 = vmatprep.subr.mxu0 0.0
        %7694 = vmatpush1.msra.mxu0 0.0
        %7695 = vmatprep.subr.mxu0 0.0
        %7696 = vmatpush1.msra.mxu0 0.0
        %7697 = vmatprep.subr.mxu0 0.0
        %7698 = vmatpush1.msra.mxu0 0.0
        %7699 = vmatprep.subr.mxu0 0.0
        %7700 = vmatpush1.msra.mxu0 0.0
        %7701 = vmatprep.subr.mxu0 0.0
        %7702 = vmatpush1.msra.mxu0 0.0
        %7703 = vmatprep.subr.mxu0 0.0
        %7704 = vmatpush1.msra.mxu0 0.0
        %7705 = vmatprep.subr.mxu0 0.0
        %7706 = vmatpush1.msra.mxu0 0.0
        %7707 = vmatprep.subr.mxu0 0.0
        %7708 = vmatpush1.msra.mxu0 0.0
        %7709 = vmatprep.subr.mxu0 0.0
        %7710 = vmatpush1.msra.mxu0 0.0
        %7711 = vmatprep.subr.mxu0 0.0
        %7712 = vmatpush1.msra.mxu0 0.0
        %7713 = vmatprep.subr.mxu0 0.0
        %7714 = vmatpush1.msra.mxu0 0.0
        %7715 = vmatprep.subr.mxu0 0.0
        %7716 = vmatpush1.msra.mxu0 0.0
        %7717 = vmatprep.mubr.f32.mxu0 0.0
        %7718 = vmatmul.mubr.f32.gmra.mrb[0].mxu0 %v7627
        %v7719 = vpop.f32.mrb[0].mxu0
        %v7720 = vadd.f32 0.0, %v7719
        %v7721 = vpop.f32.mrb[0].mxu0
        %7722 = vmatprep.mubr.f32.mxu0 0.0
        %7723 = vmatmul.mubr.f32.gmra.mrb[0].mxu0 %v7630
        %v7724 = vpop.f32.mrb[0].mxu0
        %v7725 = vadd.f32 0.0, %v7724
        %v7726 = vpop.f32.mrb[0].mxu0
        %7727 = vmatprep.mubr.f32.mxu0 0.0
        %7728 = vmatmul.mubr.f32.gmra.mrb[0].mxu0 %v7633
        %v7729 = vpop.f32.mrb[0].mxu0
        %v7730 = vadd.f32 0.0, %v7729
        %v7731 = vpop.f32.mrb[0].mxu0
        %7732 = vmatprep.mubr.f32.mxu0 0.0
        %7733 = vmatmul.mubr.f32.gmra.mrb[0].mxu0 %v7636
        %v7734 = vpop.f32.mrb[0].mxu0
        %v7735 = vadd.f32 0.0, %v7734
        %v7736 = vpop.f32.mrb[0].mxu0
        %7737 = vmatprep.mubr.f32.mxu0 0.0
        %7738 = vmatmul.mubr.f32.gmra.mrb[0].mxu0 %v7639
        %v7739 = vpop.f32.mrb[0].mxu0
        %v7740 = vadd.f32 0.0, %v7739
        %v7741 = vpop.f32.mrb[0].mxu0
        %7742 = vmatprep.mubr.f32.mxu0 0.0
        %7743 = vmatmul.mubr.f32.gmra.mrb[0].mxu0 %v7642
        %v7744 = vpop.f32.mrb[0].mxu0
        %v7745 = vadd.f32 0.0, %v7744
        %v7746 = vpop.f32.mrb[0].mxu0
        %7747 = vmatprep.mubr.f32.mxu0 0.0
        %7748 = vmatmul.mubr.f32.gmra.mrb[0].mxu0 %v7645
        %v7749 = vpop.f32.mrb[0].mxu0
        %v7750 = vadd.f32 0.0, %v7749
        %v7751 = vpop.f32.mrb[0].mxu0
        %7752 = vmatprep.mubr.f32.mxu0 0.0
        %7753 = vmatmul.mubr.f32.gmra.mrb[0].mxu0 %v7648
        %v7754 = vpop.f32.mrb[0].mxu0
        %v7755 = vadd.f32 0.0, %v7754
        %v7756 = vpop.f32.mrb[0].mxu0
        %7757 = vmatprep.mubr.f32.mxu0 0.0
        %7758 = vmatmul.mubr.f32.gmra.mrb[0].mxu0 %v7651
        %v7759 = vpop.f32.mrb[0].mxu0
        %v7760 = vadd.f32 0.0, %v7759
        %v7761 = vpop.f32.mrb[0].mxu0
        %7762 = vdwg.mxu0
        %v7763 = vadd.f32 %v7603, %v7720
        %v7764 = vadd.f32 %v7604, %v7725
        %v7765 = vadd.f32 %v7605, %v7730
        %v7766 = vadd.f32 %v7606, %v7735
        %v7767 = vadd.f32 %v7607, %v7740
        %v7768 = vadd.f32 %v7608, %v7745
        %v7769 = vadd.f32 %v7609, %v7750
        %v7770 = vadd.f32 %v7610, %v7755
        %v7771 = vadd.f32 %v7611, %v7760
        %s7772 = sadd.s32 %s6670, 26
        %s7773 = scalar_lea.vmem [#allocation2], %s7772
        %v7774 = vld [vmem:[%s7773] sm:$0xff]
        %v7775 = vld [vmem:[%s7773 + $0x8] sm:$0xff]
        %v7776 = vld [vmem:[%s7773 + $0x10] sm:$0xff]
        %v7777 = vld [vmem:[%s7773 + $0x18] sm:$0xff]
        %v7778 = vld [vmem:[%s7773 + $0x20] sm:$0xff]
        %v7779 = vld [vmem:[%s7773 + $0x28] sm:$0xff]
        %v7780 = vld [vmem:[%s7773 + $0x30] sm:$0xff]
        %v7781 = vld [vmem:[%s7773 + $0x38] sm:$0xff]
        %v7782 = vld [vmem:[%s7773 + $0x40] sm:$0xff]
        %s7783 = scalar_lea.vmem %s10, 112
        %v7784 = vld [vmem:[%s7783] sm:$0xff]
        %v7785 = vld [vmem:[%s7783 + $0x8] sm:$0xff]
        %v7787 = vsel %vm414, %v7774, 0
        %v7790 = vsel %vm414, %v7775, 0
        %v7793 = vsel %vm414, %v7776, 0
        %v7796 = vsel %vm414, %v7777, 0
        %v7799 = vsel %vm414, %v7778, 0
        %v7802 = vsel %vm414, %v7779, 0
        %v7805 = vsel %vm414, %v7780, 0
        %v7808 = vsel %vm414, %v7781, 0
        %v7811 = vsel %vm414, %v7782, 0
        %7813 = vmatprep.subr.mxu0 0.0
        %7814 = vmatpush1.msra.mxu0 %v7784
        %7815 = vmatprep.subr.mxu0 0.0
        %7816 = vmatpush1.msra.mxu0 %v7785
        %7817 = vmatprep.subr.mxu0 0.0
        %7818 = vmatpush1.msra.mxu0 0.0
        %7819 = vmatprep.subr.mxu0 0.0
        %7820 = vmatpush1.msra.mxu0 0.0
        %7821 = vmatprep.subr.mxu0 0.0
        %7822 = vmatpush1.msra.mxu0 0.0
        %7823 = vmatprep.subr.mxu0 0.0
        %7824 = vmatpush1.msra.mxu0 0.0
        %7825 = vmatprep.subr.mxu0 0.0
        %7826 = vmatpush1.msra.mxu0 0.0
        %7827 = vmatprep.subr.mxu0 0.0
        %7828 = vmatpush1.msra.mxu0 0.0
        %7829 = vmatprep.subr.mxu0 0.0
        %7830 = vmatpush1.msra.mxu0 0.0
        %7831 = vmatprep.subr.mxu0 0.0
        %7832 = vmatpush1.msra.mxu0 0.0
        %7833 = vmatprep.subr.mxu0 0.0
        %7834 = vmatpush1.msra.mxu0 0.0
        %7835 = vmatprep.subr.mxu0 0.0
        %7836 = vmatpush1.msra.mxu0 0.0
        %7837 = vmatprep.subr.mxu0 0.0
        %7838 = vmatpush1.msra.mxu0 0.0
        %7839 = vmatprep.subr.mxu0 0.0
        %7840 = vmatpush1.msra.mxu0 0.0
        %7841 = vmatprep.subr.mxu0 0.0
        %7842 = vmatpush1.msra.mxu0 0.0
        %7843 = vmatprep.subr.mxu0 0.0
        %7844 = vmatpush1.msra.mxu0 0.0
        %7845 = vmatprep.subr.mxu0 0.0
        %7846 = vmatpush1.msra.mxu0 0.0
        %7847 = vmatprep.subr.mxu0 0.0
        %7848 = vmatpush1.msra.mxu0 0.0
        %7849 = vmatprep.subr.mxu0 0.0
        %7850 = vmatpush1.msra.mxu0 0.0
        %7851 = vmatprep.subr.mxu0 0.0
        %7852 = vmatpush1.msra.mxu0 0.0
        %7853 = vmatprep.subr.mxu0 0.0
        %7854 = vmatpush1.msra.mxu0 0.0
        %7855 = vmatprep.subr.mxu0 0.0
        %7856 = vmatpush1.msra.mxu0 0.0
        %7857 = vmatprep.subr.mxu0 0.0
        %7858 = vmatpush1.msra.mxu0 0.0
        %7859 = vmatprep.subr.mxu0 0.0
        %7860 = vmatpush1.msra.mxu0 0.0
        %7861 = vmatprep.subr.mxu0 0.0
        %7862 = vmatpush1.msra.mxu0 0.0
        %7863 = vmatprep.subr.mxu0 0.0
        %7864 = vmatpush1.msra.mxu0 0.0
        %7865 = vmatprep.subr.mxu0 0.0
        %7866 = vmatpush1.msra.mxu0 0.0
        %7867 = vmatprep.subr.mxu0 0.0
        %7868 = vmatpush1.msra.mxu0 0.0
        %7869 = vmatprep.subr.mxu0 0.0
        %7870 = vmatpush1.msra.mxu0 0.0
        %7871 = vmatprep.subr.mxu0 0.0
        %7872 = vmatpush1.msra.mxu0 0.0
        %7873 = vmatprep.subr.mxu0 0.0
        %7874 = vmatpush1.msra.mxu0 0.0
        %7875 = vmatprep.subr.mxu0 0.0
        %7876 = vmatpush1.msra.mxu0 0.0
        %7877 = vmatprep.mubr.f32.mxu0 0.0
        %7878 = vmatmul.mubr.f32.gmra.mrb[0].mxu0 %v7787
        %v7879 = vpop.f32.mrb[0].mxu0
        %v7880 = vadd.f32 0.0, %v7879
        %v7881 = vpop.f32.mrb[0].mxu0
        %7882 = vmatprep.mubr.f32.mxu0 0.0
        %7883 = vmatmul.mubr.f32.gmra.mrb[0].mxu0 %v7790
        %v7884 = vpop.f32.mrb[0].mxu0
        %v7885 = vadd.f32 0.0, %v7884
        %v7886 = vpop.f32.mrb[0].mxu0
        %7887 = vmatprep.mubr.f32.mxu0 0.0
        %7888 = vmatmul.mubr.f32.gmra.mrb[0].mxu0 %v7793
        %v7889 = vpop.f32.mrb[0].mxu0
        %v7890 = vadd.f32 0.0, %v7889
        %v7891 = vpop.f32.mrb[0].mxu0
        %7892 = vmatprep.mubr.f32.mxu0 0.0
        %7893 = vmatmul.mubr.f32.gmra.mrb[0].mxu0 %v7796
        %v7894 = vpop.f32.mrb[0].mxu0
        %v7895 = vadd.f32 0.0, %v7894
        %v7896 = vpop.f32.mrb[0].mxu0
        %7897 = vmatprep.mubr.f32.mxu0 0.0
        %7898 = vmatmul.mubr.f32.gmra.mrb[0].mxu0 %v7799
        %v7899 = vpop.f32.mrb[0].mxu0
        %v7900 = vadd.f32 0.0, %v7899
        %v7901 = vpop.f32.mrb[0].mxu0
        %7902 = vmatprep.mubr.f32.mxu0 0.0
        %7903 = vmatmul.mubr.f32.gmra.mrb[0].mxu0 %v7802
        %v7904 = vpop.f32.mrb[0].mxu0
        %v7905 = vadd.f32 0.0, %v7904
        %v7906 = vpop.f32.mrb[0].mxu0
        %7907 = vmatprep.mubr.f32.mxu0 0.0
        %7908 = vmatmul.mubr.f32.gmra.mrb[0].mxu0 %v7805
        %v7909 = vpop.f32.mrb[0].mxu0
        %v7910 = vadd.f32 0.0, %v7909
        %v7911 = vpop.f32.mrb[0].mxu0
        %7912 = vmatprep.mubr.f32.mxu0 0.0
        %7913 = vmatmul.mubr.f32.gmra.mrb[0].mxu0 %v7808
        %v7914 = vpop.f32.mrb[0].mxu0
        %v7915 = vadd.f32 0.0, %v7914
        %v7916 = vpop.f32.mrb[0].mxu0
        %7917 = vmatprep.mubr.f32.mxu0 0.0
        %7918 = vmatmul.mubr.f32.gmra.mrb[0].mxu0 %v7811
        %v7919 = vpop.f32.mrb[0].mxu0
        %v7920 = vadd.f32 0.0, %v7919
        %v7921 = vpop.f32.mrb[0].mxu0
        %7922 = vdwg.mxu0
        %v7923 = vadd.f32 %v7763, %v7880
        %v7924 = vadd.f32 %v7764, %v7885
        %v7925 = vadd.f32 %v7765, %v7890
        %v7926 = vadd.f32 %v7766, %v7895
        %v7927 = vadd.f32 %v7767, %v7900
        %v7928 = vadd.f32 %v7768, %v7905
        %v7929 = vadd.f32 %v7769, %v7910
        %v7930 = vadd.f32 %v7770, %v7915
        %v7931 = vadd.f32 %v7771, %v7920
        %s7932 = sadd.s32 %s6670, 27
        %s7933 = scalar_lea.vmem [#allocation2], %s7932
        %v7934 = vld [vmem:[%s7933] sm:$0xff]
        %v7935 = vld [vmem:[%s7933 + $0x8] sm:$0xff]
        %v7936 = vld [vmem:[%s7933 + $0x10] sm:$0xff]
        %v7937 = vld [vmem:[%s7933 + $0x18] sm:$0xff]
        %v7938 = vld [vmem:[%s7933 + $0x20] sm:$0xff]
        %v7939 = vld [vmem:[%s7933 + $0x28] sm:$0xff]
        %v7940 = vld [vmem:[%s7933 + $0x30] sm:$0xff]
        %v7941 = vld [vmem:[%s7933 + $0x38] sm:$0xff]
        %v7942 = vld [vmem:[%s7933 + $0x40] sm:$0xff]
        %s7943 = scalar_lea.vmem %s10, 128
        %v7944 = vld [vmem:[%s7943] sm:$0xff]
        %v7945 = vld [vmem:[%s7943 + $0x8] sm:$0xff]
        %v7947 = vsel %vm414, %v7934, 0
        %v7950 = vsel %vm414, %v7935, 0
        %v7953 = vsel %vm414, %v7936, 0
        %v7956 = vsel %vm414, %v7937, 0
        %v7959 = vsel %vm414, %v7938, 0
        %v7962 = vsel %vm414, %v7939, 0
        %v7965 = vsel %vm414, %v7940, 0
        %v7968 = vsel %vm414, %v7941, 0
        %v7971 = vsel %vm414, %v7942, 0
        %7973 = vmatprep.subr.mxu0 0.0
        %7974 = vmatpush1.msra.mxu0 %v7944
        %7975 = vmatprep.subr.mxu0 0.0
        %7976 = vmatpush1.msra.mxu0 %v7945
        %7977 = vmatprep.subr.mxu0 0.0
        %7978 = vmatpush1.msra.mxu0 0.0
        %7979 = vmatprep.subr.mxu0 0.0
        %7980 = vmatpush1.msra.mxu0 0.0
        %7981 = vmatprep.subr.mxu0 0.0
        %7982 = vmatpush1.msra.mxu0 0.0
        %7983 = vmatprep.subr.mxu0 0.0
        %7984 = vmatpush1.msra.mxu0 0.0
        %7985 = vmatprep.subr.mxu0 0.0
        %7986 = vmatpush1.msra.mxu0 0.0
        %7987 = vmatprep.subr.mxu0 0.0
        %7988 = vmatpush1.msra.mxu0 0.0
        %7989 = vmatprep.subr.mxu0 0.0
        %7990 = vmatpush1.msra.mxu0 0.0
        %7991 = vmatprep.subr.mxu0 0.0
        %7992 = vmatpush1.msra.mxu0 0.0
        %7993 = vmatprep.subr.mxu0 0.0
        %7994 = vmatpush1.msra.mxu0 0.0
        %7995 = vmatprep.subr.mxu0 0.0
        %7996 = vmatpush1.msra.mxu0 0.0
        %7997 = vmatprep.subr.mxu0 0.0
        %7998 = vmatpush1.msra.mxu0 0.0
        %7999 = vmatprep.subr.mxu0 0.0
        %8000 = vmatpush1.msra.mxu0 0.0
        %8001 = vmatprep.subr.mxu0 0.0
        %8002 = vmatpush1.msra.mxu0 0.0
        %8003 = vmatprep.subr.mxu0 0.0
        %8004 = vmatpush1.msra.mxu0 0.0
        %8005 = vmatprep.subr.mxu0 0.0
        %8006 = vmatpush1.msra.mxu0 0.0
        %8007 = vmatprep.subr.mxu0 0.0
        %8008 = vmatpush1.msra.mxu0 0.0
        %8009 = vmatprep.subr.mxu0 0.0
        %8010 = vmatpush1.msra.mxu0 0.0
        %8011 = vmatprep.subr.mxu0 0.0
        %8012 = vmatpush1.msra.mxu0 0.0
        %8013 = vmatprep.subr.mxu0 0.0
        %8014 = vmatpush1.msra.mxu0 0.0
        %8015 = vmatprep.subr.mxu0 0.0
        %8016 = vmatpush1.msra.mxu0 0.0
        %8017 = vmatprep.subr.mxu0 0.0
        %8018 = vmatpush1.msra.mxu0 0.0
        %8019 = vmatprep.subr.mxu0 0.0
        %8020 = vmatpush1.msra.mxu0 0.0
        %8021 = vmatprep.subr.mxu0 0.0
        %8022 = vmatpush1.msra.mxu0 0.0
        %8023 = vmatprep.subr.mxu0 0.0
        %8024 = vmatpush1.msra.mxu0 0.0
        %8025 = vmatprep.subr.mxu0 0.0
        %8026 = vmatpush1.msra.mxu0 0.0
        %8027 = vmatprep.subr.mxu0 0.0
        %8028 = vmatpush1.msra.mxu0 0.0
        %8029 = vmatprep.subr.mxu0 0.0
        %8030 = vmatpush1.msra.mxu0 0.0
        %8031 = vmatprep.subr.mxu0 0.0
        %8032 = vmatpush1.msra.mxu0 0.0
        %8033 = vmatprep.subr.mxu0 0.0
        %8034 = vmatpush1.msra.mxu0 0.0
        %8035 = vmatprep.subr.mxu0 0.0
        %8036 = vmatpush1.msra.mxu0 0.0
        %8037 = vmatprep.mubr.f32.mxu0 0.0
        %8038 = vmatmul.mubr.f32.gmra.mrb[0].mxu0 %v7947
        %v8039 = vpop.f32.mrb[0].mxu0
        %v8040 = vadd.f32 0.0, %v8039
        %v8041 = vpop.f32.mrb[0].mxu0
        %8042 = vmatprep.mubr.f32.mxu0 0.0
        %8043 = vmatmul.mubr.f32.gmra.mrb[0].mxu0 %v7950
        %v8044 = vpop.f32.mrb[0].mxu0
        %v8045 = vadd.f32 0.0, %v8044
        %v8046 = vpop.f32.mrb[0].mxu0
        %8047 = vmatprep.mubr.f32.mxu0 0.0
        %8048 = vmatmul.mubr.f32.gmra.mrb[0].mxu0 %v7953
        %v8049 = vpop.f32.mrb[0].mxu0
        %v8050 = vadd.f32 0.0, %v8049
        %v8051 = vpop.f32.mrb[0].mxu0
        %8052 = vmatprep.mubr.f32.mxu0 0.0
        %8053 = vmatmul.mubr.f32.gmra.mrb[0].mxu0 %v7956
        %v8054 = vpop.f32.mrb[0].mxu0
        %v8055 = vadd.f32 0.0, %v8054
        %v8056 = vpop.f32.mrb[0].mxu0
        %8057 = vmatprep.mubr.f32.mxu0 0.0
        %8058 = vmatmul.mubr.f32.gmra.mrb[0].mxu0 %v7959
        %v8059 = vpop.f32.mrb[0].mxu0
        %v8060 = vadd.f32 0.0, %v8059
        %v8061 = vpop.f32.mrb[0].mxu0
        %8062 = vmatprep.mubr.f32.mxu0 0.0
        %8063 = vmatmul.mubr.f32.gmra.mrb[0].mxu0 %v7962
        %v8064 = vpop.f32.mrb[0].mxu0
        %v8065 = vadd.f32 0.0, %v8064
        %v8066 = vpop.f32.mrb[0].mxu0
        %8067 = vmatprep.mubr.f32.mxu0 0.0
        %8068 = vmatmul.mubr.f32.gmra.mrb[0].mxu0 %v7965
        %v8069 = vpop.f32.mrb[0].mxu0
        %v8070 = vadd.f32 0.0, %v8069
        %v8071 = vpop.f32.mrb[0].mxu0
        %8072 = vmatprep.mubr.f32.mxu0 0.0
        %8073 = vmatmul.mubr.f32.gmra.mrb[0].mxu0 %v7968
        %v8074 = vpop.f32.mrb[0].mxu0
        %v8075 = vadd.f32 0.0, %v8074
        %v8076 = vpop.f32.mrb[0].mxu0
        %8077 = vmatprep.mubr.f32.mxu0 0.0
        %8078 = vmatmul.mubr.f32.gmra.mrb[0].mxu0 %v7971
        %v8079 = vpop.f32.mrb[0].mxu0
        %v8080 = vadd.f32 0.0, %v8079
        %v8081 = vpop.f32.mrb[0].mxu0
        %8082 = vdwg.mxu0
        %v8083 = vadd.f32 %v7923, %v8040
        %v8084 = vadd.f32 %v7924, %v8045
        %v8085 = vadd.f32 %v7925, %v8050
        %v8086 = vadd.f32 %v7926, %v8055
        %v8087 = vadd.f32 %v7927, %v8060
        %v8088 = vadd.f32 %v7928, %v8065
        %v8089 = vadd.f32 %v7929, %v8070
        %v8090 = vadd.f32 %v7930, %v8075
        %v8091 = vadd.f32 %v7931, %v8080
        %v8092 = vld [vmem:[%s11] sm:$0x1]
        %v8094 = vlaneseq
        %v8095 = vshrl.u32 %v8094, 7
        %v8096 = vsub.s32 0, %v8095
        %v8097 = vrot.slane %v8092, %v8096
        %v8099 = vadd.f32 %v8083, %v8097
        %v8100 = vadd.f32 %v8084, %v8097
        %v8101 = vadd.f32 %v8085, %v8097
        %v8102 = vadd.f32 %v8086, %v8097
        %v8103 = vadd.f32 %v8087, %v8097
        %v8104 = vadd.f32 %v8088, %v8097
        %v8105 = vadd.f32 %v8089, %v8097
        %v8106 = vadd.f32 %v8090, %v8097
        %v8107 = vadd.f32 %v8091, %v8097
        %s8108 = scalar_lea.vmem [#allocation4], %s6671
        %v8109 = vld [vmem:[%s8108] sm:$0xff]
        %v8110 = vld [vmem:[%s8108 + $0x8] sm:$0xff]
        %v8111 = vld [vmem:[%s8108 + $0x10] sm:$0xff]
        %v8112 = vld [vmem:[%s8108 + $0x18] sm:$0xff]
        %v8113 = vld [vmem:[%s8108 + $0x20] sm:$0xff]
        %v8114 = vld [vmem:[%s8108 + $0x28] sm:$0xff]
        %v8115 = vld [vmem:[%s8108 + $0x30] sm:$0xff]
        %v8116 = vld [vmem:[%s8108 + $0x38] sm:$0xff]
        %v8117 = vld [vmem:[%s8108 + $0x40] sm:$0xff]
        %v8118 = vadd.f32 %v8109, %v8099
        %v8119 = vadd.f32 %v8110, %v8100
        %v8120 = vadd.f32 %v8111, %v8101
        %v8121 = vadd.f32 %v8112, %v8102
        %v8122 = vadd.f32 %v8113, %v8103
        %v8123 = vadd.f32 %v8114, %v8104
        %v8124 = vadd.f32 %v8115, %v8105
        %v8125 = vadd.f32 %v8116, %v8106
        %v8126 = vadd.f32 %v8117, %v8107
        %s8127 = scalar_lea.vmem %s413, %s6670
        %8128 = vst.msk [vmem:[%s8127] sm:$0xff] %vm414, %v8118
        %8129 = vst.msk [vmem:[%s8127 + $0x8] sm:$0xff] %vm414, %v8119
        %8130 = vst.msk [vmem:[%s8127 + $0x10] sm:$0xff] %vm414, %v8120
        %8131 = vst.msk [vmem:[%s8127 + $0x18] sm:$0xff] %vm414, %v8121
        %8132 = vst.msk [vmem:[%s8127 + $0x20] sm:$0xff] %vm414, %v8122
        %8133 = vst.msk [vmem:[%s8127 + $0x28] sm:$0xff] %vm414, %v8123
        %8134 = vst.msk [vmem:[%s8127 + $0x30] sm:$0xff] %vm414, %v8124
        %8135 = vst.msk [vmem:[%s8127 + $0x38] sm:$0xff] %vm414, %v8125
        %8136 = vst.msk [vmem:[%s8127 + $0x40] sm:$0xff] %vm414, %v8126
      $region94: #{tpu_custom_call.1} parent=67 // loop_footer
        %s6667 = sadd.s32 1, %s6663
      $region95: #{tpu_custom_call.1} parent=67 // loop_footer_branch
        %6662 = sbr.rel target = $region91
      $region96: #{tpu_custom_call.1} parent=67 // loop_exit
        _
      %p8137 = scmp.lt.s32.totalorder %s23, 1
      %s8138 = scalar_select %p8137, %s23, 1
      %s8139 = smul.addr %s8138, 41
      %s8140 = smul.addr %s8139, 8
      %s8141 = scalar_lea.vmem %s12, %s8140
      // Predicated region
      $region97: #{tpu_custom_call.1} parent=67 // pred_check
        %p8142 = pneg %p298
      $region98: #{tpu_custom_call.1} parent=67 // pred_check_branch
        %8144 = sbr.rel (%p8142) target = $region100
      $region99: #{tpu_custom_call.1} parent=67 // pred_region
        _
      $region100: #{tpu_custom_call.1} parent=67 // pred_fallthru
        _
    $region68: #{tpu_custom_call.1} parent=5 // pred_fallthru
      _
    %p8145 = scmp.le.s32.totalorder 2, %s18
    // Predicated region
    $region101: #{tpu_custom_call.1} parent=5 // pred_check
      %p8146 = pneg %p8145
    $region102: #{tpu_custom_call.1} parent=5 // pred_check_branch
      %8148 = sbr.rel (%p8146) target = $region104
    $region103: #{tpu_custom_call.1} parent=5 // pred_region
      %s8149 = ssub.s32 %s18, 2
      // Predicated region
      $region105: #{tpu_custom_call.1} parent=103 // pred_check
        %p8150 = pneg %p304
      $region106: #{tpu_custom_call.1} parent=103 // pred_check_branch
        %8152 = sbr.rel (%p8150) target = $region108
      $region107: #{tpu_custom_call.1} parent=103 // pred_region
        %p8153 = scmp.lt.s32.totalorder %s24, 1
        %s8154 = scalar_select %p8153, %s24, 1
        %s8155 = smul.addr %s8154, 41
        %s8156 = smul.addr %s8155, 8
        %s8157 = scalar_lea.vmem %s12, %s8156
      $region108: #{tpu_custom_call.1} parent=103 // pred_fallthru
        _
    $region104: #{tpu_custom_call.1} parent=5 // pred_fallthru
      _
  $region6: #{tpu_custom_call.1} parent=0 // loop_footer
    %s22 = sadd.s32 1, %s18
  $region7: #{tpu_custom_call.1} parent=0 // loop_footer_branch
    %17 = sbr.rel target = $region3
  $region8: #{tpu_custom_call.1} parent=0 // loop_exit
    _

</llo_original>
